<compile_context>
chip_gen: v7x
topology: tpu7x:2x2x1
jax: 0.10.0
libtpu: 0.0.40
codegen_flags: <defaults>
</compile_context>

<pallas_src>
import functools

import numpy as np
import jax
import jax.numpy as jnp
from jax.experimental import pallas as pl
from jax.experimental.pallas import tpu as pltpu


def _net3_kernel(packed_ref, ant_ref, wg_ref, bg_ref, wx_ref, wh_ref, bl_ref,
                 woh_ref, wog_ref, bo_ref,
                 out_ref, hout_ref, cout_ref,
                 prev_sc, *, TT, DH, T_real, mask_tail):
    """One grid step == TT time steps of one lane-packed batch chunk.

    Layout: features on sublanes, (Bt batch elements x N nodes) on lanes,
    L = Bt*N (multiple of 128 when possible).

      packed_ref : [1, TT, 2, L]   row 0 = ind*val, row 1 = 1-ind
      ant_ref    : [L, L]          kron(I_Bt, kron(A0, A1))^T (block-diagonal)
      wg/bg      : [DG, 1]
      wx/wh      : [4DH, DG] / [4DH, DH]
      bl         : [4DH, 1]
      woh/wog    : [1, DH] / [1, DG]
      bo         : [1, 1]
      out_ref    : [1, TT, 1, L]
      hout/cout  : [1, DH, L]      grid-resident recurrent carry
      prev_sc    : [1, L]          previous prediction (imputation feedback)
    """
    tc = pl.program_id(1)

    @pl.when(tc == 0)
    def _():
        # hx=None -> zero initial hidden/cell state; no previous prediction.
        hout_ref[...] = jnp.zeros_like(hout_ref)
        cout_ref[...] = jnp.zeros_like(cout_ref)
        prev_sc[...] = jnp.zeros_like(prev_sc)

    # Load carry + constants ONCE per TT-chunk (hoisted out of the unroll).
    h = hout_ref[0]                         # [DH, L]
    c = cout_ref[0]                         # [DH, L]
    prev = prev_sc[...]                     # [1, L]
    L = h.shape[-1]
    DG = wg_ref.shape[0]

    ant = ant_ref[...]                      # [L, L]
    wx = wx_ref[...]                        # [4DH, DG]
    wh = wh_ref[...]                        # [4DH, DH]
    woh = woh_ref[...]                      # [1, DH]
    wog = wog_ref[...]                      # [1, DG]
    wg_b = jnp.broadcast_to(wg_ref[...], (DG, L))
    bg_b = jnp.broadcast_to(bg_ref[...], (DG, L))
    bl_b = jnp.broadcast_to(bl_ref[...], (4 * DH, L))
    bo_b = jnp.broadcast_to(bo_ref[...], (1, L))

    # Static unroll: TT is small, gives the LLO scheduler full visibility.
    for s in range(TT):
        blk = packed_ref[0, s]                            # [2, L]
        # missing-value imputation with previous step's prediction
        x = blk[0:1, :] + blk[1:2, :] * prev              # [1, L]

        # ---- TGCN: tensor graph conv (block-diag kron) + Linear(1->DG)+ReLU
        y = jnp.dot(x, ant, preferred_element_type=jnp.float32)      # [1, L]
        emb = jax.nn.relu(wg_b * y + bg_b)                            # [DG, L]

        # ---- TLSTM: node-shared LSTM cell (split matmuls, no concat) ----
        gates = (jnp.dot(wx, emb, preferred_element_type=jnp.float32)
                 + jnp.dot(wh, h, preferred_element_type=jnp.float32)
                 + bl_b)                                              # [4DH, L]
        i_g = jax.nn.sigmoid(gates[0 * DH:1 * DH, :])
        f_g = jax.nn.sigmoid(gates[1 * DH:2 * DH, :])
        g_g = jnp.tanh(gates[2 * DH:3 * DH, :])
        o_g = jax.nn.sigmoid(gates[3 * DH:4 * DH, :])
        c_new = f_g * c + i_g * g_g
        h_new = o_g * jnp.tanh(c_new)

        # ---- Output head: Linear(cat([h, emb]) -> 1), split (no concat) ----
        p_new = (jnp.dot(woh, h_new, preferred_element_type=jnp.float32)
                 + jnp.dot(wog, emb, preferred_element_type=jnp.float32)
                 + bo_b)                                              # [1, L]

        if mask_tail:
            # padded tail steps: carry passes through unchanged
            valid = (tc * TT + s) < T_real
            h = jnp.where(valid, h_new, h)
            c = jnp.where(valid, c_new, c)
            prev = jnp.where(valid, p_new, prev)
        else:
            h, c, prev = h_new, c_new, p_new

        out_ref[0, s] = prev       # [1, L] lane-dense (unmasked) store

    hout_ref[0] = h
    cout_ref[0] = c
    prev_sc[...] = prev


def net3_forward(values, indicators, a0, a1, params, *, tt_max=16):
    """values, indicators: [B, n0, n1, T]; returns (output [B,n0,n1,T], (h, c))."""
    B, n0, n1, T = values.shape
    N = n0 * n1
    DG = params["wg"].shape[1]
    DH = params["wh"].shape[0]

    # ---- lane packing: fold Bt batch elements onto the lane axis so the lane
    # width L = Bt*N is (ideally) a multiple of 128.  The remaining B//Bt stays
    # on the outer "parallel" grid axis (megacore sharding on v7x).
    bt = max(1, 128 // N) if N < 128 else 1
    bt = min(bt, B)
    while B % bt != 0:
        bt -= 1
    L = bt * N
    B_out = B // bt

    # ---- time chunking: prefer an exact divisor of T; else pad the tail ----
    tt = 1
    for cand in range(min(T, tt_max), 0, -1):
        if T % cand == 0:
            tt = cand
            break
    if tt < min(T, 8):               # degenerate (e.g. prime T): pad instead
        tt = min(T, tt_max)
    T_pad = int(pl.cdiv(T, tt)) * tt
    n_chunks = T_pad // tt
    mask_tail = (T_pad != T)

    # ---- parameter / input glue (plain JAX, done once) ----
    # Block-diagonal graph operator for the packed lane layout, transposed so
    # the kernel keeps (batch_tile, node) on lanes:  y_row = x_row @ op^T.
    k01 = jnp.kron(jnp.asarray(a0, jnp.float32), jnp.asarray(a1, jnp.float32))
    ant = jnp.kron(jnp.eye(bt, dtype=jnp.float32), k01).T            # [L, L]

    # pack (ind*val, 1-ind) time-major, lane axis = (batch_tile, node)
    vi = (indicators * values).astype(jnp.float32).reshape(B, N, T)
    omi = (1.0 - indicators).astype(jnp.float32).reshape(B, N, T)
    packed = jnp.stack([vi, omi], axis=1)                            # [B,2,N,T]
    if mask_tail:
        packed = jnp.pad(packed, ((0, 0), (0, 0), (0, 0), (0, T_pad - T)))
    packed = packed.reshape(B_out, bt, 2, N, T_pad)
    packed = jnp.transpose(packed, (0, 4, 2, 1, 3))                  # [B_out,T,2,bt,N]
    packed = packed.reshape(B_out, T_pad, 2, L)

    # transposed weights (features on sublanes); NOT concat-fused (see kernel).
    wg_t = params["wg"].astype(jnp.float32).T                        # [DG, 1]
    bg_t = params["bg"].astype(jnp.float32).T                        # [DG, 1]
    wx_t = params["wx"].astype(jnp.float32).T                        # [4DH, DG]
    wh_t = params["wh"].astype(jnp.float32).T                        # [4DH, DH]
    bl_t = params["bl"].astype(jnp.float32).T                        # [4DH, 1]
    woh_t = params["woh"].astype(jnp.float32).T                      # [1, DH]
    wog_t = params["wog"].astype(jnp.float32).T                      # [1, DG]
    bo_p = params["bo"].astype(jnp.float32)                          # [1, 1]

    def const_spec(shape):
        nd = len(shape)
        return pl.BlockSpec(shape, lambda b, t, _nd=nd: (0,) * _nd)

    grid_spec = pltpu.PrefetchScalarGridSpec(
        num_scalar_prefetch=0,
        grid=(B_out, n_chunks),
        in_specs=[
            pl.BlockSpec((1, tt, 2, L), lambda b, t: (b, t, 0, 0)),  # inputs
            const_spec((L, L)),              # block-diag kron operator^T
            const_spec((DG, 1)),             # TGCN weight (d_in = 1)
            const_spec((DG, 1)),             # TGCN bias
            const_spec((4 * DH, DG)),        # LSTM Wx^T
            const_spec((4 * DH, DH)),        # LSTM Wh^T
            const_spec((4 * DH, 1)),         # LSTM bias
            const_spec((1, DH)),             # output Woh^T
            const_spec((1, DG)),             # output Wog^T
            const_spec((1, 1)),              # output bias
        ],
        out_specs=[
            pl.BlockSpec((1, tt, 1, L), lambda b, t: (b, t, 0, 0)),  # predictions
            pl.BlockSpec((1, DH, L), lambda b, t: (b, 0, 0)),        # h carry/out
            pl.BlockSpec((1, DH, L), lambda b, t: (b, 0, 0)),        # c carry/out
        ],
        scratch_shapes=[
            pltpu.VMEM((1, L), jnp.float32),   # previous prediction
        ],
    )

    out, h_fin, c_fin = pl.pallas_call(
        functools.partial(_net3_kernel, TT=tt, DH=DH, T_real=T,
                          mask_tail=mask_tail),
        out_shape=(
            jax.ShapeDtypeStruct((B_out, T_pad, 1, L), jnp.float32),
            jax.ShapeDtypeStruct((B_out, DH, L), jnp.float32),
            jax.ShapeDtypeStruct((B_out, DH, L), jnp.float32),
        ),
        grid_spec=grid_spec,
        compiler_params=pltpu.CompilerParams(
            # batch-chunks are independent (operator is block-diag per element,
            # LSTM is node-wise) -> "parallel"; time is the recurrence and must
            # stay sequential -> "arbitrary".
            dimension_semantics=("parallel", "arbitrary")),
    )(packed, ant, wg_t, bg_t, wx_t, wh_t, bl_t, woh_t, wog_t, bo_p)

    # unpack lane-packed outputs back to [B, n0, n1, ...]
    out = out[:, :T, 0, :].reshape(B_out, T, bt, N)
    out = jnp.transpose(out, (0, 2, 3, 1)).reshape(B, n0, n1, T)
    h_fin = jnp.transpose(h_fin.reshape(B_out, DH, bt, N),
                          (0, 2, 3, 1)).reshape(B, n0, n1, DH)
    c_fin = jnp.transpose(c_fin.reshape(B_out, DH, bt, N),
                          (0, 2, 3, 1)).reshape(B, n0, n1, DH)
    return out, (h_fin, c_fin)


def net3_reference(values, indicators, a0, a1, params):
    """Pure-JAX reference, written mode-wise (validates kron flattening)."""
    B, n0, n1, T = values.shape
    DH = params["wh"].shape[0]
    hp = jax.lax.Precision.HIGHEST
    h = jnp.zeros((B, n0, n1, DH), jnp.float32)
    c = jnp.zeros((B, n0, n1, DH), jnp.float32)
    prev = jnp.zeros((B, n0, n1), jnp.float32)
    outs = []
    for t in range(T):
        v = values[..., t]
        m = indicators[..., t]
        x = m * v + (1.0 - m) * prev
        y = jnp.einsum('ip,bpj->bij', a0, x, precision=hp)
        y = jnp.einsum('jq,biq->bij', a1, y, precision=hp)
        g = jax.nn.relu(y[..., None] * params["wg"][0] + params["bg"][0])
        gates = (jnp.einsum('bijd,de->bije', g, params["wx"], precision=hp)
                 + jnp.einsum('bijd,de->bije', h, params["wh"], precision=hp)
                 + params["bl"][0])
        i_g = jax.nn.sigmoid(gates[..., 0 * DH:1 * DH])
        f_g = jax.nn.sigmoid(gates[..., 1 * DH:2 * DH])
        g_g = jnp.tanh(gates[..., 2 * DH:3 * DH])
        o_g = jax.nn.sigmoid(gates[..., 3 * DH:4 * DH])
        c = f_g * c + i_g * g_g
        h = o_g * jnp.tanh(c)
        out = (jnp.einsum('bijd,do->bijo', h, params["woh"], precision=hp)
               + jnp.einsum('bijd,do->bijo', g, params["wog"], precision=hp)
               + params["bo"][0])[..., 0]
        prev = out
        outs.append(out)
    return jnp.stack(outs, axis=-1), (h, c)


if __name__ == "__main__":
    # small shapes consistent with the module: values [B, n0, n1, T]
    # B=8, N=32 -> 4 batch elements packed per 128-lane row, outer grid = 2
    # (keeps both v7x TCs busy); T=24 -> tt=12, 2 time chunks (exercises the
    # grid-resident recurrent carry).
    B, n0, n1, T = 8, 8, 4, 24
    DG, DH = 16, 16     # TGCN dim_output, TLSTM dim_output

    key = jax.random.PRNGKey(0)
    ks = jax.random.split(key, 12)

    def make_adj(k, n):
        a = jax.random.uniform(k, (n, n), jnp.float32)
        a = 0.5 * (a + a.T) + jnp.eye(n, dtype=jnp.float32)
        return a / jnp.sum(a, axis=1, keepdims=True)

    a0 = make_adj(ks[0], n0)                 # adjacency for mode 0
    a1 = make_adj(ks[1], n1)                 # adjacency for mode 1
    values = jax.random.normal(ks[2], (B, n0, n1, T), jnp.float32)
    indicators = (jax.random.uniform(ks[3], (B, n0, n1, T)) > 0.3).astype(jnp.float32)

    s = 0.1
    params = {
        "wg":  s * jax.random.normal(ks[4], (1, DG), jnp.float32),
        "bg":  s * jax.random.normal(ks[5], (1, DG), jnp.float32),
        "wx":  s * jax.random.normal(ks[6], (DG, 4 * DH), jnp.float32),
        "wh":  s * jax.random.normal(ks[7], (DH, 4 * DH), jnp.float32),
        "bl":  s * jax.random.normal(ks[8], (1, 4 * DH), jnp.float32),
        "woh": s * jax.random.normal(ks[9], (DH, 1), jnp.float32),
        "wog": s * jax.random.normal(ks[10], (DG, 1), jnp.float32),
        "bo":  s * jax.random.normal(ks[11], (1, 1), jnp.float32),
    }

    out, (h_fin, c_fin) = net3_forward(values, indicators, a0, a1, params)
    jax.block_until_ready((out, h_fin, c_fin))

    ref_out, (ref_h, ref_c) = net3_reference(values, indicators, a0, a1, params)
    np.testing.assert_allclose(np.asarray(out), np.asarray(ref_out), rtol=1e-3, atol=1e-3)
    np.testing.assert_allclose(np.asarray(h_fin), np.asarray(ref_h), rtol=1e-3, atol=1e-3)
    np.testing.assert_allclose(np.asarray(c_fin), np.asarray(ref_c), rtol=1e-3, atol=1e-3)

    print("KERNEL_OK")
</pallas_src>

<mosaic_0001>
module attributes {stable_mosaic.version = 11 : i64} {
  func.func @_net3_kernel(%arg0: i32, %arg1: i32, %arg2: memref<1x12x2x128xf32, #tpu.memory_space<vmem>>, %arg3: memref<128x128xf32, #tpu.memory_space<vmem>>, %arg4: memref<16x1xf32, #tpu.memory_space<vmem>>, %arg5: memref<16x1xf32, #tpu.memory_space<vmem>>, %arg6: memref<64x16xf32, #tpu.memory_space<vmem>>, %arg7: memref<64x16xf32, #tpu.memory_space<vmem>>, %arg8: memref<64x1xf32, #tpu.memory_space<vmem>>, %arg9: memref<1x16xf32, #tpu.memory_space<vmem>>, %arg10: memref<1x16xf32, #tpu.memory_space<vmem>>, %arg11: memref<1x1xf32, #tpu.memory_space<vmem>>, %arg12: memref<1x12x1x128xf32, #tpu.memory_space<vmem>>, %arg13: memref<1x16x128xf32, #tpu.memory_space<vmem>>, %arg14: memref<1x16x128xf32, #tpu.memory_space<vmem>>, %arg15: memref<1x128xf32, #tpu.memory_space<vmem>>) attributes {dimension_semantics = [#tpu.dimension_semantics<parallel>, #tpu.dimension_semantics<arbitrary>], iteration_bounds = array<i64: 2, 2>, scalar_prefetch = 0 : i64, scratch_operands = 1 : i64, tpu.core_type = #tpu.core_type<tc>, window_params = [{transform_indices = @transform_0, window_bounds = array<i64: 1, 12, 2, 128>}, {pipeline_mode = #tpu.pipeline_mode<synchronous>, transform_indices = @transform_1, window_bounds = array<i64: 128, 128>}, {pipeline_mode = #tpu.pipeline_mode<synchronous>, transform_indices = @transform_2, window_bounds = array<i64: 16, 1>}, {pipeline_mode = #tpu.pipeline_mode<synchronous>, transform_indices = @transform_3, window_bounds = array<i64: 16, 1>}, {pipeline_mode = #tpu.pipeline_mode<synchronous>, transform_indices = @transform_4, window_bounds = array<i64: 64, 16>}, {pipeline_mode = #tpu.pipeline_mode<synchronous>, transform_indices = @transform_5, window_bounds = array<i64: 64, 16>}, {pipeline_mode = #tpu.pipeline_mode<synchronous>, transform_indices = @transform_6, window_bounds = array<i64: 64, 1>}, {pipeline_mode = #tpu.pipeline_mode<synchronous>, transform_indices = @transform_7, window_bounds = array<i64: 1, 16>}, {pipeline_mode = #tpu.pipeline_mode<synchronous>, transform_indices = @transform_8, window_bounds = array<i64: 1, 16>}, {pipeline_mode = #tpu.pipeline_mode<synchronous>, transform_indices = @transform_9, window_bounds = array<i64: 1, 1>}, {transform_indices = @transform_10, window_bounds = array<i64: 1, 12, 1, 128>}, {transform_indices = @transform_11, window_bounds = array<i64: 1, 16, 128>}, {transform_indices = @transform_12, window_bounds = array<i64: 1, 16, 128>}]} {
    %c0_i32 = arith.constant 0 : i32
    %0 = arith.cmpi eq, %arg1, %c0_i32 : i32
    %1 = arith.extui %0 : i1 to i32
    %c0_i32_0 = arith.constant 0 : i32
    %2 = arith.cmpi ne, %1, %c0_i32_0 : i32
    scf.if %2 {
      %cst_226 = arith.constant 0.000000e+00 : f32
      %608 = vector.broadcast %cst_226 : f32 to vector<1x16x128xf32>
      %c0_227 = arith.constant 0 : index
      %c0_228 = arith.constant 0 : index
      %c0_229 = arith.constant 0 : index
      %609 = vector.load %arg13[%c0_227, %c0_228, %c0_229] : memref<1x16x128xf32, #tpu.memory_space<vmem>>, vector<1x16x128xf32>
      tpu.vector_store %arg13[%c0_227, %c0_228, %c0_229], %608 {strides = array<i32>} : memref<1x16x128xf32, #tpu.memory_space<vmem>>, vector<1x16x128xf32>,
      %cst_230 = arith.constant 0.000000e+00 : f32
      %610 = vector.broadcast %cst_230 : f32 to vector<1x16x128xf32>
      %c0_231 = arith.constant 0 : index
      %c0_232 = arith.constant 0 : index
      %c0_233 = arith.constant 0 : index
      %611 = vector.load %arg14[%c0_231, %c0_232, %c0_233] : memref<1x16x128xf32, #tpu.memory_space<vmem>>, vector<1x16x128xf32>
      tpu.vector_store %arg14[%c0_231, %c0_232, %c0_233], %610 {strides = array<i32>} : memref<1x16x128xf32, #tpu.memory_space<vmem>>, vector<1x16x128xf32>,
      %cst_234 = arith.constant 0.000000e+00 : f32
      %612 = vector.broadcast %cst_234 : f32 to vector<1x128xf32>
      %c0_235 = arith.constant 0 : index
      %c0_236 = arith.constant 0 : index
      %613 = vector.load %arg15[%c0_235, %c0_236] : memref<1x128xf32, #tpu.memory_space<vmem>>, vector<1x128xf32>
      tpu.vector_store %arg15[%c0_235, %c0_236], %612 {strides = array<i32>} : memref<1x128xf32, #tpu.memory_space<vmem>>, vector<1x128xf32>,
    } else {
    }
    %c0 = arith.constant 0 : index
    %c0_1 = arith.constant 0 : index
    %c0_2 = arith.constant 0 : index
    %3 = vector.load %arg13[%c0, %c0_1, %c0_2] : memref<1x16x128xf32, #tpu.memory_space<vmem>>, vector<1x16x128xf32>
    %4 = vector.shape_cast %3 : vector<1x16x128xf32> to vector<16x128xf32>
    %c0_3 = arith.constant 0 : index
    %c0_4 = arith.constant 0 : index
    %c0_5 = arith.constant 0 : index
    %5 = vector.load %arg14[%c0_3, %c0_4, %c0_5] : memref<1x16x128xf32, #tpu.memory_space<vmem>>, vector<1x16x128xf32>
    %6 = vector.shape_cast %5 : vector<1x16x128xf32> to vector<16x128xf32>
    %c0_6 = arith.constant 0 : index
    %c0_7 = arith.constant 0 : index
    %7 = vector.load %arg15[%c0_6, %c0_7] : memref<1x128xf32, #tpu.memory_space<vmem>>, vector<1x128xf32>
    %c0_8 = arith.constant 0 : index
    %c0_9 = arith.constant 0 : index
    %8 = vector.load %arg3[%c0_8, %c0_9] : memref<128x128xf32, #tpu.memory_space<vmem>>, vector<128x128xf32>
    %c0_10 = arith.constant 0 : index
    %c0_11 = arith.constant 0 : index
    %9 = vector.load %arg6[%c0_10, %c0_11] : memref<64x16xf32, #tpu.memory_space<vmem>>, vector<64x16xf32>
    %c0_12 = arith.constant 0 : index
    %c0_13 = arith.constant 0 : index
    %10 = vector.load %arg7[%c0_12, %c0_13] : memref<64x16xf32, #tpu.memory_space<vmem>>, vector<64x16xf32>
    %c0_14 = arith.constant 0 : index
    %c0_15 = arith.constant 0 : index
    %11 = vector.load %arg9[%c0_14, %c0_15] : memref<1x16xf32, #tpu.memory_space<vmem>>, vector<1x16xf32>
    %c0_16 = arith.constant 0 : index
    %c0_17 = arith.constant 0 : index
    %12 = vector.load %arg10[%c0_16, %c0_17] : memref<1x16xf32, #tpu.memory_space<vmem>>, vector<1x16xf32>
    %c0_18 = arith.constant 0 : index
    %c0_19 = arith.constant 0 : index
    %13 = vector.load %arg4[%c0_18, %c0_19] : memref<16x1xf32, #tpu.memory_space<vmem>>, vector<16x1xf32>
    %14 = vector.shape_cast %13 : vector<16x1xf32> to vector<16x1xf32>
    %15 = vector.broadcast %14 : vector<16x1xf32> to vector<16x128xf32>
    %c0_20 = arith.constant 0 : index
    %c0_21 = arith.constant 0 : index
    %16 = vector.load %arg5[%c0_20, %c0_21] : memref<16x1xf32, #tpu.memory_space<vmem>>, vector<16x1xf32>
    %17 = vector.shape_cast %16 : vector<16x1xf32> to vector<16x1xf32>
    %18 = vector.broadcast %17 : vector<16x1xf32> to vector<16x128xf32>
    %c0_22 = arith.constant 0 : index
    %c0_23 = arith.constant 0 : index
    %19 = vector.load %arg8[%c0_22, %c0_23] : memref<64x1xf32, #tpu.memory_space<vmem>>, vector<64x1xf32>
    %20 = vector.shape_cast %19 : vector<64x1xf32> to vector<64x1xf32>
    %21 = vector.broadcast %20 : vector<64x1xf32> to vector<64x128xf32>
    %c0_24 = arith.constant 0 : index
    %c0_25 = arith.constant 0 : index
    %22 = vector.load %arg11[%c0_24, %c0_25] : memref<1x1xf32, #tpu.memory_space<vmem>>, vector<1x1xf32>
    %23 = vector.shape_cast %22 : vector<1x1xf32> to vector<1x1xf32>
    %24 = vector.broadcast %23 : vector<1x1xf32> to vector<1x128xf32>
    %c0_26 = arith.constant 0 : index
    %c0_27 = arith.constant 0 : index
    %c0_28 = arith.constant 0 : index
    %c0_29 = arith.constant 0 : index
    %25 = vector.load %arg2[%c0_26, %c0_27, %c0_28, %c0_29] : memref<1x12x2x128xf32, #tpu.memory_space<vmem>>, vector<1x1x2x128xf32>
    %26 = vector.shape_cast %25 : vector<1x1x2x128xf32> to vector<2x128xf32>
    %27 = vector.extract_strided_slice %26 {offsets = [0, 0], sizes = [1, 128], strides = [1, 1]} : vector<2x128xf32> to vector<1x128xf32>
    %28 = vector.extract_strided_slice %26 {offsets = [1, 0], sizes = [1, 128], strides = [1, 1]} : vector<2x128xf32> to vector<1x128xf32>
    %29 = arith.mulf %28, %7 : vector<1x128xf32>
    %30 = arith.addf %27, %29 : vector<1x128xf32>
    %cst = arith.constant dense<0.000000e+00> : vector<1x128xf32>
    %31 = tpu.matmul %30, %8, %cst {dimension_numbers = #tpu.dot_dimension_numbers<[1], [0], [0], [1], [0, 0, 1, 1], [], []>} : vector<1x128xf32>, vector<128x128xf32>, vector<1x128xf32> -> vector<1x128xf32>
    %32 = vector.broadcast %31 : vector<1x128xf32> to vector<16x128xf32>
    %33 = arith.mulf %15, %32 : vector<16x128xf32>
    %34 = arith.addf %33, %18 : vector<16x128xf32>
    %cst_30 = arith.constant 0.000000e+00 : f32
    %35 = vector.broadcast %cst_30 : f32 to vector<16x128xf32>
    %36 = arith.maximumf %34, %35 : vector<16x128xf32>
    %cst_31 = arith.constant dense<0.000000e+00> : vector<64x128xf32>
    %37 = tpu.matmul %9, %36, %cst_31 {dimension_numbers = #tpu.dot_dimension_numbers<[1], [0], [0], [1], [0, 0, 1, 1], [], []>} : vector<64x16xf32>, vector<16x128xf32>, vector<64x128xf32> -> vector<64x128xf32>
    %cst_32 = arith.constant dense<0.000000e+00> : vector<64x128xf32>
    %38 = tpu.matmul %10, %4, %cst_32 {dimension_numbers = #tpu.dot_dimension_numbers<[1], [0], [0], [1], [0, 0, 1, 1], [], []>} : vector<64x16xf32>, vector<16x128xf32>, vector<64x128xf32> -> vector<64x128xf32>
    %39 = arith.addf %37, %38 : vector<64x128xf32>
    %40 = arith.addf %39, %21 : vector<64x128xf32>
    %41 = vector.extract_strided_slice %40 {offsets = [0, 0], sizes = [16, 128], strides = [1, 1]} : vector<64x128xf32> to vector<16x128xf32>
    %42 = arith.negf %41 : vector<16x128xf32>
    %43 = math.exp %42 : vector<16x128xf32>
    %cst_33 = arith.constant 1.000000e+00 : f32
    %44 = vector.broadcast %cst_33 : f32 to vector<16x128xf32>
    %45 = arith.addf %44, %43 : vector<16x128xf32>
    %46 = arith.divf %44, %45 : vector<16x128xf32>
    %47 = vector.extract_strided_slice %40 {offsets = [16, 0], sizes = [16, 128], strides = [1, 1]} : vector<64x128xf32> to vector<16x128xf32>
    %48 = arith.negf %47 : vector<16x128xf32>
    %49 = math.exp %48 : vector<16x128xf32>
    %cst_34 = arith.constant 1.000000e+00 : f32
    %50 = vector.broadcast %cst_34 : f32 to vector<16x128xf32>
    %51 = arith.addf %50, %49 : vector<16x128xf32>
    %52 = arith.divf %50, %51 : vector<16x128xf32>
    %53 = vector.extract_strided_slice %40 {offsets = [32, 0], sizes = [16, 128], strides = [1, 1]} : vector<64x128xf32> to vector<16x128xf32>
    %54 = math.tanh %53 : vector<16x128xf32>
    %55 = vector.extract_strided_slice %40 {offsets = [48, 0], sizes = [16, 128], strides = [1, 1]} : vector<64x128xf32> to vector<16x128xf32>
    %56 = arith.negf %55 : vector<16x128xf32>
    %57 = math.exp %56 : vector<16x128xf32>
    %cst_35 = arith.constant 1.000000e+00 : f32
    %58 = vector.broadcast %cst_35 : f32 to vector<16x128xf32>
    %59 = arith.addf %58, %57 : vector<16x128xf32>
    %60 = arith.divf %58, %59 : vector<16x128xf32>
    %61 = arith.mulf %52, %6 : vector<16x128xf32>
    %62 = arith.mulf %46, %54 : vector<16x128xf32>
    %63 = arith.addf %61, %62 : vector<16x128xf32>
    %64 = math.tanh %63 : vector<16x128xf32>
    %65 = arith.mulf %60, %64 : vector<16x128xf32>
    %cst_36 = arith.constant dense<0.000000e+00> : vector<1x128xf32>
    %66 = tpu.matmul %11, %65, %cst_36 {dimension_numbers = #tpu.dot_dimension_numbers<[1], [0], [0], [1], [0, 0, 1, 1], [], []>} : vector<1x16xf32>, vector<16x128xf32>, vector<1x128xf32> -> vector<1x128xf32>
    %cst_37 = arith.constant dense<0.000000e+00> : vector<1x128xf32>
    %67 = tpu.matmul %12, %36, %cst_37 {dimension_numbers = #tpu.dot_dimension_numbers<[1], [0], [0], [1], [0, 0, 1, 1], [], []>} : vector<1x16xf32>, vector<16x128xf32>, vector<1x128xf32> -> vector<1x128xf32>
    %68 = arith.addf %66, %67 : vector<1x128xf32>
    %69 = arith.addf %68, %24 : vector<1x128xf32>
    %c0_38 = arith.constant 0 : index
    %c0_39 = arith.constant 0 : index
    %c0_40 = arith.constant 0 : index
    %c0_41 = arith.constant 0 : index
    %70 = vector.load %arg12[%c0_38, %c0_39, %c0_40, %c0_41] : memref<1x12x1x128xf32, #tpu.memory_space<vmem>>, vector<1x1x1x128xf32>
    %71 = vector.shape_cast %70 : vector<1x1x1x128xf32> to vector<1x128xf32>
    %72 = vector.shape_cast %69 : vector<1x128xf32> to vector<1x1x1x128xf32>
    tpu.vector_store %arg12[%c0_38, %c0_39, %c0_40, %c0_41], %72 {strides = array<i32>} : memref<1x12x1x128xf32, #tpu.memory_space<vmem>>, vector<1x1x1x128xf32>,
    %c0_42 = arith.constant 0 : index
    %c1 = arith.constant 1 : index
    %c0_43 = arith.constant 0 : index
    %c0_44 = arith.constant 0 : index
    %73 = vector.load %arg2[%c0_42, %c1, %c0_43, %c0_44] : memref<1x12x2x128xf32, #tpu.memory_space<vmem>>, vector<1x1x2x128xf32>
    %74 = vector.shape_cast %73 : vector<1x1x2x128xf32> to vector<2x128xf32>
    %75 = vector.extract_strided_slice %74 {offsets = [0, 0], sizes = [1, 128], strides = [1, 1]} : vector<2x128xf32> to vector<1x128xf32>
    %76 = vector.extract_strided_slice %74 {offsets = [1, 0], sizes = [1, 128], strides = [1, 1]} : vector<2x128xf32> to vector<1x128xf32>
    %77 = arith.mulf %76, %69 : vector<1x128xf32>
    %78 = arith.addf %75, %77 : vector<1x128xf32>
    %cst_45 = arith.constant dense<0.000000e+00> : vector<1x128xf32>
    %79 = tpu.matmul %78, %8, %cst_45 {dimension_numbers = #tpu.dot_dimension_numbers<[1], [0], [0], [1], [0, 0, 1, 1], [], []>} : vector<1x128xf32>, vector<128x128xf32>, vector<1x128xf32> -> vector<1x128xf32>
    %80 = vector.broadcast %79 : vector<1x128xf32> to vector<16x128xf32>
    %81 = arith.mulf %15, %80 : vector<16x128xf32>
    %82 = arith.addf %81, %18 : vector<16x128xf32>
    %cst_46 = arith.constant 0.000000e+00 : f32
    %83 = vector.broadcast %cst_46 : f32 to vector<16x128xf32>
    %84 = arith.maximumf %82, %83 : vector<16x128xf32>
    %cst_47 = arith.constant dense<0.000000e+00> : vector<64x128xf32>
    %85 = tpu.matmul %9, %84, %cst_47 {dimension_numbers = #tpu.dot_dimension_numbers<[1], [0], [0], [1], [0, 0, 1, 1], [], []>} : vector<64x16xf32>, vector<16x128xf32>, vector<64x128xf32> -> vector<64x128xf32>
    %cst_48 = arith.constant dense<0.000000e+00> : vector<64x128xf32>
    %86 = tpu.matmul %10, %65, %cst_48 {dimension_numbers = #tpu.dot_dimension_numbers<[1], [0], [0], [1], [0, 0, 1, 1], [], []>} : vector<64x16xf32>, vector<16x128xf32>, vector<64x128xf32> -> vector<64x128xf32>
    %87 = arith.addf %85, %86 : vector<64x128xf32>
    %88 = arith.addf %87, %21 : vector<64x128xf32>
    %89 = vector.extract_strided_slice %88 {offsets = [0, 0], sizes = [16, 128], strides = [1, 1]} : vector<64x128xf32> to vector<16x128xf32>
    %90 = arith.negf %89 : vector<16x128xf32>
    %91 = math.exp %90 : vector<16x128xf32>
    %cst_49 = arith.constant 1.000000e+00 : f32
    %92 = vector.broadcast %cst_49 : f32 to vector<16x128xf32>
    %93 = arith.addf %92, %91 : vector<16x128xf32>
    %94 = arith.divf %92, %93 : vector<16x128xf32>
    %95 = vector.extract_strided_slice %88 {offsets = [16, 0], sizes = [16, 128], strides = [1, 1]} : vector<64x128xf32> to vector<16x128xf32>
    %96 = arith.negf %95 : vector<16x128xf32>
    %97 = math.exp %96 : vector<16x128xf32>
    %cst_50 = arith.constant 1.000000e+00 : f32
    %98 = vector.broadcast %cst_50 : f32 to vector<16x128xf32>
    %99 = arith.addf %98, %97 : vector<16x128xf32>
    %100 = arith.divf %98, %99 : vector<16x128xf32>
    %101 = vector.extract_strided_slice %88 {offsets = [32, 0], sizes = [16, 128], strides = [1, 1]} : vector<64x128xf32> to vector<16x128xf32>
    %102 = math.tanh %101 : vector<16x128xf32>
    %103 = vector.extract_strided_slice %88 {offsets = [48, 0], sizes = [16, 128], strides = [1, 1]} : vector<64x128xf32> to vector<16x128xf32>
    %104 = arith.negf %103 : vector<16x128xf32>
    %105 = math.exp %104 : vector<16x128xf32>
    %cst_51 = arith.constant 1.000000e+00 : f32
    %106 = vector.broadcast %cst_51 : f32 to vector<16x128xf32>
    %107 = arith.addf %106, %105 : vector<16x128xf32>
    %108 = arith.divf %106, %107 : vector<16x128xf32>
    %109 = arith.mulf %100, %63 : vector<16x128xf32>
    %110 = arith.mulf %94, %102 : vector<16x128xf32>
    %111 = arith.addf %109, %110 : vector<16x128xf32>
    %112 = math.tanh %111 : vector<16x128xf32>
    %113 = arith.mulf %108, %112 : vector<16x128xf32>
    %cst_52 = arith.constant dense<0.000000e+00> : vector<1x128xf32>
    %114 = tpu.matmul %11, %113, %cst_52 {dimension_numbers = #tpu.dot_dimension_numbers<[1], [0], [0], [1], [0, 0, 1, 1], [], []>} : vector<1x16xf32>, vector<16x128xf32>, vector<1x128xf32> -> vector<1x128xf32>
    %cst_53 = arith.constant dense<0.000000e+00> : vector<1x128xf32>
    %115 = tpu.matmul %12, %84, %cst_53 {dimension_numbers = #tpu.dot_dimension_numbers<[1], [0], [0], [1], [0, 0, 1, 1], [], []>} : vector<1x16xf32>, vector<16x128xf32>, vector<1x128xf32> -> vector<1x128xf32>
    %116 = arith.addf %114, %115 : vector<1x128xf32>
    %117 = arith.addf %116, %24 : vector<1x128xf32>
    %c0_54 = arith.constant 0 : index
    %c1_55 = arith.constant 1 : index
    %c0_56 = arith.constant 0 : index
    %c0_57 = arith.constant 0 : index
    %118 = vector.load %arg12[%c0_54, %c1_55, %c0_56, %c0_57] : memref<1x12x1x128xf32, #tpu.memory_space<vmem>>, vector<1x1x1x128xf32>
    %119 = vector.shape_cast %118 : vector<1x1x1x128xf32> to vector<1x128xf32>
    %120 = vector.shape_cast %117 : vector<1x128xf32> to vector<1x1x1x128xf32>
    tpu.vector_store %arg12[%c0_54, %c1_55, %c0_56, %c0_57], %120 {strides = array<i32>} : memref<1x12x1x128xf32, #tpu.memory_space<vmem>>, vector<1x1x1x128xf32>,
    %c0_58 = arith.constant 0 : index
    %c2 = arith.constant 2 : index
    %c0_59 = arith.constant 0 : index
    %c0_60 = arith.constant 0 : index
    %121 = vector.load %arg2[%c0_58, %c2, %c0_59, %c0_60] : memref<1x12x2x128xf32, #tpu.memory_space<vmem>>, vector<1x1x2x128xf32>
    %122 = vector.shape_cast %121 : vector<1x1x2x128xf32> to vector<2x128xf32>
    %123 = vector.extract_strided_slice %122 {offsets = [0, 0], sizes = [1, 128], strides = [1, 1]} : vector<2x128xf32> to vector<1x128xf32>
    %124 = vector.extract_strided_slice %122 {offsets = [1, 0], sizes = [1, 128], strides = [1, 1]} : vector<2x128xf32> to vector<1x128xf32>
    %125 = arith.mulf %124, %117 : vector<1x128xf32>
    %126 = arith.addf %123, %125 : vector<1x128xf32>
    %cst_61 = arith.constant dense<0.000000e+00> : vector<1x128xf32>
    %127 = tpu.matmul %126, %8, %cst_61 {dimension_numbers = #tpu.dot_dimension_numbers<[1], [0], [0], [1], [0, 0, 1, 1], [], []>} : vector<1x128xf32>, vector<128x128xf32>, vector<1x128xf32> -> vector<1x128xf32>
    %128 = vector.broadcast %127 : vector<1x128xf32> to vector<16x128xf32>
    %129 = arith.mulf %15, %128 : vector<16x128xf32>
    %130 = arith.addf %129, %18 : vector<16x128xf32>
    %cst_62 = arith.constant 0.000000e+00 : f32
    %131 = vector.broadcast %cst_62 : f32 to vector<16x128xf32>
    %132 = arith.maximumf %130, %131 : vector<16x128xf32>
    %cst_63 = arith.constant dense<0.000000e+00> : vector<64x128xf32>
    %133 = tpu.matmul %9, %132, %cst_63 {dimension_numbers = #tpu.dot_dimension_numbers<[1], [0], [0], [1], [0, 0, 1, 1], [], []>} : vector<64x16xf32>, vector<16x128xf32>, vector<64x128xf32> -> vector<64x128xf32>
    %cst_64 = arith.constant dense<0.000000e+00> : vector<64x128xf32>
    %134 = tpu.matmul %10, %113, %cst_64 {dimension_numbers = #tpu.dot_dimension_numbers<[1], [0], [0], [1], [0, 0, 1, 1], [], []>} : vector<64x16xf32>, vector<16x128xf32>, vector<64x128xf32> -> vector<64x128xf32>
    %135 = arith.addf %133, %134 : vector<64x128xf32>
    %136 = arith.addf %135, %21 : vector<64x128xf32>
    %137 = vector.extract_strided_slice %136 {offsets = [0, 0], sizes = [16, 128], strides = [1, 1]} : vector<64x128xf32> to vector<16x128xf32>
    %138 = arith.negf %137 : vector<16x128xf32>
    %139 = math.exp %138 : vector<16x128xf32>
    %cst_65 = arith.constant 1.000000e+00 : f32
    %140 = vector.broadcast %cst_65 : f32 to vector<16x128xf32>
    %141 = arith.addf %140, %139 : vector<16x128xf32>
    %142 = arith.divf %140, %141 : vector<16x128xf32>
    %143 = vector.extract_strided_slice %136 {offsets = [16, 0], sizes = [16, 128], strides = [1, 1]} : vector<64x128xf32> to vector<16x128xf32>
    %144 = arith.negf %143 : vector<16x128xf32>
    %145 = math.exp %144 : vector<16x128xf32>
    %cst_66 = arith.constant 1.000000e+00 : f32
    %146 = vector.broadcast %cst_66 : f32 to vector<16x128xf32>
    %147 = arith.addf %146, %145 : vector<16x128xf32>
    %148 = arith.divf %146, %147 : vector<16x128xf32>
    %149 = vector.extract_strided_slice %136 {offsets = [32, 0], sizes = [16, 128], strides = [1, 1]} : vector<64x128xf32> to vector<16x128xf32>
    %150 = math.tanh %149 : vector<16x128xf32>
    %151 = vector.extract_strided_slice %136 {offsets = [48, 0], sizes = [16, 128], strides = [1, 1]} : vector<64x128xf32> to vector<16x128xf32>
    %152 = arith.negf %151 : vector<16x128xf32>
    %153 = math.exp %152 : vector<16x128xf32>
    %cst_67 = arith.constant 1.000000e+00 : f32
    %154 = vector.broadcast %cst_67 : f32 to vector<16x128xf32>
    %155 = arith.addf %154, %153 : vector<16x128xf32>
    %156 = arith.divf %154, %155 : vector<16x128xf32>
    %157 = arith.mulf %148, %111 : vector<16x128xf32>
    %158 = arith.mulf %142, %150 : vector<16x128xf32>
    %159 = arith.addf %157, %158 : vector<16x128xf32>
    %160 = math.tanh %159 : vector<16x128xf32>
    %161 = arith.mulf %156, %160 : vector<16x128xf32>
    %cst_68 = arith.constant dense<0.000000e+00> : vector<1x128xf32>
    %162 = tpu.matmul %11, %161, %cst_68 {dimension_numbers = #tpu.dot_dimension_numbers<[1], [0], [0], [1], [0, 0, 1, 1], [], []>} : vector<1x16xf32>, vector<16x128xf32>, vector<1x128xf32> -> vector<1x128xf32>
    %cst_69 = arith.constant dense<0.000000e+00> : vector<1x128xf32>
    %163 = tpu.matmul %12, %132, %cst_69 {dimension_numbers = #tpu.dot_dimension_numbers<[1], [0], [0], [1], [0, 0, 1, 1], [], []>} : vector<1x16xf32>, vector<16x128xf32>, vector<1x128xf32> -> vector<1x128xf32>
    %164 = arith.addf %162, %163 : vector<1x128xf32>
    %165 = arith.addf %164, %24 : vector<1x128xf32>
    %c0_70 = arith.constant 0 : index
    %c2_71 = arith.constant 2 : index
    %c0_72 = arith.constant 0 : index
    %c0_73 = arith.constant 0 : index
    %166 = vector.load %arg12[%c0_70, %c2_71, %c0_72, %c0_73] : memref<1x12x1x128xf32, #tpu.memory_space<vmem>>, vector<1x1x1x128xf32>
    %167 = vector.shape_cast %166 : vector<1x1x1x128xf32> to vector<1x128xf32>
    %168 = vector.shape_cast %165 : vector<1x128xf32> to vector<1x1x1x128xf32>
    tpu.vector_store %arg12[%c0_70, %c2_71, %c0_72, %c0_73], %168 {strides = array<i32>} : memref<1x12x1x128xf32, #tpu.memory_space<vmem>>, vector<1x1x1x128xf32>,
    %c0_74 = arith.constant 0 : index
    %c3 = arith.constant 3 : index
    %c0_75 = arith.constant 0 : index
    %c0_76 = arith.constant 0 : index
    %169 = vector.load %arg2[%c0_74, %c3, %c0_75, %c0_76] : memref<1x12x2x128xf32, #tpu.memory_space<vmem>>, vector<1x1x2x128xf32>
    %170 = vector.shape_cast %169 : vector<1x1x2x128xf32> to vector<2x128xf32>
    %171 = vector.extract_strided_slice %170 {offsets = [0, 0], sizes = [1, 128], strides = [1, 1]} : vector<2x128xf32> to vector<1x128xf32>
    %172 = vector.extract_strided_slice %170 {offsets = [1, 0], sizes = [1, 128], strides = [1, 1]} : vector<2x128xf32> to vector<1x128xf32>
    %173 = arith.mulf %172, %165 : vector<1x128xf32>
    %174 = arith.addf %171, %173 : vector<1x128xf32>
    %cst_77 = arith.constant dense<0.000000e+00> : vector<1x128xf32>
    %175 = tpu.matmul %174, %8, %cst_77 {dimension_numbers = #tpu.dot_dimension_numbers<[1], [0], [0], [1], [0, 0, 1, 1], [], []>} : vector<1x128xf32>, vector<128x128xf32>, vector<1x128xf32> -> vector<1x128xf32>
    %176 = vector.broadcast %175 : vector<1x128xf32> to vector<16x128xf32>
    %177 = arith.mulf %15, %176 : vector<16x128xf32>
    %178 = arith.addf %177, %18 : vector<16x128xf32>
    %cst_78 = arith.constant 0.000000e+00 : f32
    %179 = vector.broadcast %cst_78 : f32 to vector<16x128xf32>
    %180 = arith.maximumf %178, %179 : vector<16x128xf32>
    %cst_79 = arith.constant dense<0.000000e+00> : vector<64x128xf32>
    %181 = tpu.matmul %9, %180, %cst_79 {dimension_numbers = #tpu.dot_dimension_numbers<[1], [0], [0], [1], [0, 0, 1, 1], [], []>} : vector<64x16xf32>, vector<16x128xf32>, vector<64x128xf32> -> vector<64x128xf32>
    %cst_80 = arith.constant dense<0.000000e+00> : vector<64x128xf32>
    %182 = tpu.matmul %10, %161, %cst_80 {dimension_numbers = #tpu.dot_dimension_numbers<[1], [0], [0], [1], [0, 0, 1, 1], [], []>} : vector<64x16xf32>, vector<16x128xf32>, vector<64x128xf32> -> vector<64x128xf32>
    %183 = arith.addf %181, %182 : vector<64x128xf32>
    %184 = arith.addf %183, %21 : vector<64x128xf32>
    %185 = vector.extract_strided_slice %184 {offsets = [0, 0], sizes = [16, 128], strides = [1, 1]} : vector<64x128xf32> to vector<16x128xf32>
    %186 = arith.negf %185 : vector<16x128xf32>
    %187 = math.exp %186 : vector<16x128xf32>
    %cst_81 = arith.constant 1.000000e+00 : f32
    %188 = vector.broadcast %cst_81 : f32 to vector<16x128xf32>
    %189 = arith.addf %188, %187 : vector<16x128xf32>
    %190 = arith.divf %188, %189 : vector<16x128xf32>
    %191 = vector.extract_strided_slice %184 {offsets = [16, 0], sizes = [16, 128], strides = [1, 1]} : vector<64x128xf32> to vector<16x128xf32>
    %192 = arith.negf %191 : vector<16x128xf32>
    %193 = math.exp %192 : vector<16x128xf32>
    %cst_82 = arith.constant 1.000000e+00 : f32
    %194 = vector.broadcast %cst_82 : f32 to vector<16x128xf32>
    %195 = arith.addf %194, %193 : vector<16x128xf32>
    %196 = arith.divf %194, %195 : vector<16x128xf32>
    %197 = vector.extract_strided_slice %184 {offsets = [32, 0], sizes = [16, 128], strides = [1, 1]} : vector<64x128xf32> to vector<16x128xf32>
    %198 = math.tanh %197 : vector<16x128xf32>
    %199 = vector.extract_strided_slice %184 {offsets = [48, 0], sizes = [16, 128], strides = [1, 1]} : vector<64x128xf32> to vector<16x128xf32>
    %200 = arith.negf %199 : vector<16x128xf32>
    %201 = math.exp %200 : vector<16x128xf32>
    %cst_83 = arith.constant 1.000000e+00 : f32
    %202 = vector.broadcast %cst_83 : f32 to vector<16x128xf32>
    %203 = arith.addf %202, %201 : vector<16x128xf32>
    %204 = arith.divf %202, %203 : vector<16x128xf32>
    %205 = arith.mulf %196, %159 : vector<16x128xf32>
    %206 = arith.mulf %190, %198 : vector<16x128xf32>
    %207 = arith.addf %205, %206 : vector<16x128xf32>
    %208 = math.tanh %207 : vector<16x128xf32>
    %209 = arith.mulf %204, %208 : vector<16x128xf32>
    %cst_84 = arith.constant dense<0.000000e+00> : vector<1x128xf32>
    %210 = tpu.matmul %11, %209, %cst_84 {dimension_numbers = #tpu.dot_dimension_numbers<[1], [0], [0], [1], [0, 0, 1, 1], [], []>} : vector<1x16xf32>, vector<16x128xf32>, vector<1x128xf32> -> vector<1x128xf32>
    %cst_85 = arith.constant dense<0.000000e+00> : vector<1x128xf32>
    %211 = tpu.matmul %12, %180, %cst_85 {dimension_numbers = #tpu.dot_dimension_numbers<[1], [0], [0], [1], [0, 0, 1, 1], [], []>} : vector<1x16xf32>, vector<16x128xf32>, vector<1x128xf32> -> vector<1x128xf32>
    %212 = arith.addf %210, %211 : vector<1x128xf32>
    %213 = arith.addf %212, %24 : vector<1x128xf32>
    %c0_86 = arith.constant 0 : index
    %c3_87 = arith.constant 3 : index
    %c0_88 = arith.constant 0 : index
    %c0_89 = arith.constant 0 : index
    %214 = vector.load %arg12[%c0_86, %c3_87, %c0_88, %c0_89] : memref<1x12x1x128xf32, #tpu.memory_space<vmem>>, vector<1x1x1x128xf32>
    %215 = vector.shape_cast %214 : vector<1x1x1x128xf32> to vector<1x128xf32>
    %216 = vector.shape_cast %213 : vector<1x128xf32> to vector<1x1x1x128xf32>
    tpu.vector_store %arg12[%c0_86, %c3_87, %c0_88, %c0_89], %216 {strides = array<i32>} : memref<1x12x1x128xf32, #tpu.memory_space<vmem>>, vector<1x1x1x128xf32>,
    %c0_90 = arith.constant 0 : index
    %c4 = arith.constant 4 : index
    %c0_91 = arith.constant 0 : index
    %c0_92 = arith.constant 0 : index
    %217 = vector.load %arg2[%c0_90, %c4, %c0_91, %c0_92] : memref<1x12x2x128xf32, #tpu.memory_space<vmem>>, vector<1x1x2x128xf32>
    %218 = vector.shape_cast %217 : vector<1x1x2x128xf32> to vector<2x128xf32>
    %219 = vector.extract_strided_slice %218 {offsets = [0, 0], sizes = [1, 128], strides = [1, 1]} : vector<2x128xf32> to vector<1x128xf32>
    %220 = vector.extract_strided_slice %218 {offsets = [1, 0], sizes = [1, 128], strides = [1, 1]} : vector<2x128xf32> to vector<1x128xf32>
    %221 = arith.mulf %220, %213 : vector<1x128xf32>
    %222 = arith.addf %219, %221 : vector<1x128xf32>
    %cst_93 = arith.constant dense<0.000000e+00> : vector<1x128xf32>
    %223 = tpu.matmul %222, %8, %cst_93 {dimension_numbers = #tpu.dot_dimension_numbers<[1], [0], [0], [1], [0, 0, 1, 1], [], []>} : vector<1x128xf32>, vector<128x128xf32>, vector<1x128xf32> -> vector<1x128xf32>
    %224 = vector.broadcast %223 : vector<1x128xf32> to vector<16x128xf32>
    %225 = arith.mulf %15, %224 : vector<16x128xf32>
    %226 = arith.addf %225, %18 : vector<16x128xf32>
    %cst_94 = arith.constant 0.000000e+00 : f32
    %227 = vector.broadcast %cst_94 : f32 to vector<16x128xf32>
    %228 = arith.maximumf %226, %227 : vector<16x128xf32>
    %cst_95 = arith.constant dense<0.000000e+00> : vector<64x128xf32>
    %229 = tpu.matmul %9, %228, %cst_95 {dimension_numbers = #tpu.dot_dimension_numbers<[1], [0], [0], [1], [0, 0, 1, 1], [], []>} : vector<64x16xf32>, vector<16x128xf32>, vector<64x128xf32> -> vector<64x128xf32>
    %cst_96 = arith.constant dense<0.000000e+00> : vector<64x128xf32>
    %230 = tpu.matmul %10, %209, %cst_96 {dimension_numbers = #tpu.dot_dimension_numbers<[1], [0], [0], [1], [0, 0, 1, 1], [], []>} : vector<64x16xf32>, vector<16x128xf32>, vector<64x128xf32> -> vector<64x128xf32>
    %231 = arith.addf %229, %230 : vector<64x128xf32>
    %232 = arith.addf %231, %21 : vector<64x128xf32>
    %233 = vector.extract_strided_slice %232 {offsets = [0, 0], sizes = [16, 128], strides = [1, 1]} : vector<64x128xf32> to vector<16x128xf32>
    %234 = arith.negf %233 : vector<16x128xf32>
    %235 = math.exp %234 : vector<16x128xf32>
    %cst_97 = arith.constant 1.000000e+00 : f32
    %236 = vector.broadcast %cst_97 : f32 to vector<16x128xf32>
    %237 = arith.addf %236, %235 : vector<16x128xf32>
    %238 = arith.divf %236, %237 : vector<16x128xf32>
    %239 = vector.extract_strided_slice %232 {offsets = [16, 0], sizes = [16, 128], strides = [1, 1]} : vector<64x128xf32> to vector<16x128xf32>
    %240 = arith.negf %239 : vector<16x128xf32>
    %241 = math.exp %240 : vector<16x128xf32>
    %cst_98 = arith.constant 1.000000e+00 : f32
    %242 = vector.broadcast %cst_98 : f32 to vector<16x128xf32>
    %243 = arith.addf %242, %241 : vector<16x128xf32>
    %244 = arith.divf %242, %243 : vector<16x128xf32>
    %245 = vector.extract_strided_slice %232 {offsets = [32, 0], sizes = [16, 128], strides = [1, 1]} : vector<64x128xf32> to vector<16x128xf32>
    %246 = math.tanh %245 : vector<16x128xf32>
    %247 = vector.extract_strided_slice %232 {offsets = [48, 0], sizes = [16, 128], strides = [1, 1]} : vector<64x128xf32> to vector<16x128xf32>
    %248 = arith.negf %247 : vector<16x128xf32>
    %249 = math.exp %248 : vector<16x128xf32>
    %cst_99 = arith.constant 1.000000e+00 : f32
    %250 = vector.broadcast %cst_99 : f32 to vector<16x128xf32>
    %251 = arith.addf %250, %249 : vector<16x128xf32>
    %252 = arith.divf %250, %251 : vector<16x128xf32>
    %253 = arith.mulf %244, %207 : vector<16x128xf32>
    %254 = arith.mulf %238, %246 : vector<16x128xf32>
    %255 = arith.addf %253, %254 : vector<16x128xf32>
    %256 = math.tanh %255 : vector<16x128xf32>
    %257 = arith.mulf %252, %256 : vector<16x128xf32>
    %cst_100 = arith.constant dense<0.000000e+00> : vector<1x128xf32>
    %258 = tpu.matmul %11, %257, %cst_100 {dimension_numbers = #tpu.dot_dimension_numbers<[1], [0], [0], [1], [0, 0, 1, 1], [], []>} : vector<1x16xf32>, vector<16x128xf32>, vector<1x128xf32> -> vector<1x128xf32>
    %cst_101 = arith.constant dense<0.000000e+00> : vector<1x128xf32>
    %259 = tpu.matmul %12, %228, %cst_101 {dimension_numbers = #tpu.dot_dimension_numbers<[1], [0], [0], [1], [0, 0, 1, 1], [], []>} : vector<1x16xf32>, vector<16x128xf32>, vector<1x128xf32> -> vector<1x128xf32>
    %260 = arith.addf %258, %259 : vector<1x128xf32>
    %261 = arith.addf %260, %24 : vector<1x128xf32>
    %c0_102 = arith.constant 0 : index
    %c4_103 = arith.constant 4 : index
    %c0_104 = arith.constant 0 : index
    %c0_105 = arith.constant 0 : index
    %262 = vector.load %arg12[%c0_102, %c4_103, %c0_104, %c0_105] : memref<1x12x1x128xf32, #tpu.memory_space<vmem>>, vector<1x1x1x128xf32>
    %263 = vector.shape_cast %262 : vector<1x1x1x128xf32> to vector<1x128xf32>
    %264 = vector.shape_cast %261 : vector<1x128xf32> to vector<1x1x1x128xf32>
    tpu.vector_store %arg12[%c0_102, %c4_103, %c0_104, %c0_105], %264 {strides = array<i32>} : memref<1x12x1x128xf32, #tpu.memory_space<vmem>>, vector<1x1x1x128xf32>,
    %c0_106 = arith.constant 0 : index
    %c5 = arith.constant 5 : index
    %c0_107 = arith.constant 0 : index
    %c0_108 = arith.constant 0 : index
    %265 = vector.load %arg2[%c0_106, %c5, %c0_107, %c0_108] : memref<1x12x2x128xf32, #tpu.memory_space<vmem>>, vector<1x1x2x128xf32>
    %266 = vector.shape_cast %265 : vector<1x1x2x128xf32> to vector<2x128xf32>
    %267 = vector.extract_strided_slice %266 {offsets = [0, 0], sizes = [1, 128], strides = [1, 1]} : vector<2x128xf32> to vector<1x128xf32>
    %268 = vector.extract_strided_slice %266 {offsets = [1, 0], sizes = [1, 128], strides = [1, 1]} : vector<2x128xf32> to vector<1x128xf32>
    %269 = arith.mulf %268, %261 : vector<1x128xf32>
    %270 = arith.addf %267, %269 : vector<1x128xf32>
    %cst_109 = arith.constant dense<0.000000e+00> : vector<1x128xf32>
    %271 = tpu.matmul %270, %8, %cst_109 {dimension_numbers = #tpu.dot_dimension_numbers<[1], [0], [0], [1], [0, 0, 1, 1], [], []>} : vector<1x128xf32>, vector<128x128xf32>, vector<1x128xf32> -> vector<1x128xf32>
    %272 = vector.broadcast %271 : vector<1x128xf32> to vector<16x128xf32>
    %273 = arith.mulf %15, %272 : vector<16x128xf32>
    %274 = arith.addf %273, %18 : vector<16x128xf32>
    %cst_110 = arith.constant 0.000000e+00 : f32
    %275 = vector.broadcast %cst_110 : f32 to vector<16x128xf32>
    %276 = arith.maximumf %274, %275 : vector<16x128xf32>
    %cst_111 = arith.constant dense<0.000000e+00> : vector<64x128xf32>
    %277 = tpu.matmul %9, %276, %cst_111 {dimension_numbers = #tpu.dot_dimension_numbers<[1], [0], [0], [1], [0, 0, 1, 1], [], []>} : vector<64x16xf32>, vector<16x128xf32>, vector<64x128xf32> -> vector<64x128xf32>
    %cst_112 = arith.constant dense<0.000000e+00> : vector<64x128xf32>
    %278 = tpu.matmul %10, %257, %cst_112 {dimension_numbers = #tpu.dot_dimension_numbers<[1], [0], [0], [1], [0, 0, 1, 1], [], []>} : vector<64x16xf32>, vector<16x128xf32>, vector<64x128xf32> -> vector<64x128xf32>
    %279 = arith.addf %277, %278 : vector<64x128xf32>
    %280 = arith.addf %279, %21 : vector<64x128xf32>
    %281 = vector.extract_strided_slice %280 {offsets = [0, 0], sizes = [16, 128], strides = [1, 1]} : vector<64x128xf32> to vector<16x128xf32>
    %282 = arith.negf %281 : vector<16x128xf32>
    %283 = math.exp %282 : vector<16x128xf32>
    %cst_113 = arith.constant 1.000000e+00 : f32
    %284 = vector.broadcast %cst_113 : f32 to vector<16x128xf32>
    %285 = arith.addf %284, %283 : vector<16x128xf32>
    %286 = arith.divf %284, %285 : vector<16x128xf32>
    %287 = vector.extract_strided_slice %280 {offsets = [16, 0], sizes = [16, 128], strides = [1, 1]} : vector<64x128xf32> to vector<16x128xf32>
    %288 = arith.negf %287 : vector<16x128xf32>
    %289 = math.exp %288 : vector<16x128xf32>
    %cst_114 = arith.constant 1.000000e+00 : f32
    %290 = vector.broadcast %cst_114 : f32 to vector<16x128xf32>
    %291 = arith.addf %290, %289 : vector<16x128xf32>
    %292 = arith.divf %290, %291 : vector<16x128xf32>
    %293 = vector.extract_strided_slice %280 {offsets = [32, 0], sizes = [16, 128], strides = [1, 1]} : vector<64x128xf32> to vector<16x128xf32>
    %294 = math.tanh %293 : vector<16x128xf32>
    %295 = vector.extract_strided_slice %280 {offsets = [48, 0], sizes = [16, 128], strides = [1, 1]} : vector<64x128xf32> to vector<16x128xf32>
    %296 = arith.negf %295 : vector<16x128xf32>
    %297 = math.exp %296 : vector<16x128xf32>
    %cst_115 = arith.constant 1.000000e+00 : f32
    %298 = vector.broadcast %cst_115 : f32 to vector<16x128xf32>
    %299 = arith.addf %298, %297 : vector<16x128xf32>
    %300 = arith.divf %298, %299 : vector<16x128xf32>
    %301 = arith.mulf %292, %255 : vector<16x128xf32>
    %302 = arith.mulf %286, %294 : vector<16x128xf32>
    %303 = arith.addf %301, %302 : vector<16x128xf32>
    %304 = math.tanh %303 : vector<16x128xf32>
    %305 = arith.mulf %300, %304 : vector<16x128xf32>
    %cst_116 = arith.constant dense<0.000000e+00> : vector<1x128xf32>
    %306 = tpu.matmul %11, %305, %cst_116 {dimension_numbers = #tpu.dot_dimension_numbers<[1], [0], [0], [1], [0, 0, 1, 1], [], []>} : vector<1x16xf32>, vector<16x128xf32>, vector<1x128xf32> -> vector<1x128xf32>
    %cst_117 = arith.constant dense<0.000000e+00> : vector<1x128xf32>
    %307 = tpu.matmul %12, %276, %cst_117 {dimension_numbers = #tpu.dot_dimension_numbers<[1], [0], [0], [1], [0, 0, 1, 1], [], []>} : vector<1x16xf32>, vector<16x128xf32>, vector<1x128xf32> -> vector<1x128xf32>
    %308 = arith.addf %306, %307 : vector<1x128xf32>
    %309 = arith.addf %308, %24 : vector<1x128xf32>
    %c0_118 = arith.constant 0 : index
    %c5_119 = arith.constant 5 : index
    %c0_120 = arith.constant 0 : index
    %c0_121 = arith.constant 0 : index
    %310 = vector.load %arg12[%c0_118, %c5_119, %c0_120, %c0_121] : memref<1x12x1x128xf32, #tpu.memory_space<vmem>>, vector<1x1x1x128xf32>
    %311 = vector.shape_cast %310 : vector<1x1x1x128xf32> to vector<1x128xf32>
    %312 = vector.shape_cast %309 : vector<1x128xf32> to vector<1x1x1x128xf32>
    tpu.vector_store %arg12[%c0_118, %c5_119, %c0_120, %c0_121], %312 {strides = array<i32>} : memref<1x12x1x128xf32, #tpu.memory_space<vmem>>, vector<1x1x1x128xf32>,
    %c0_122 = arith.constant 0 : index
    %c6 = arith.constant 6 : index
    %c0_123 = arith.constant 0 : index
    %c0_124 = arith.constant 0 : index
    %313 = vector.load %arg2[%c0_122, %c6, %c0_123, %c0_124] : memref<1x12x2x128xf32, #tpu.memory_space<vmem>>, vector<1x1x2x128xf32>
    %314 = vector.shape_cast %313 : vector<1x1x2x128xf32> to vector<2x128xf32>
    %315 = vector.extract_strided_slice %314 {offsets = [0, 0], sizes = [1, 128], strides = [1, 1]} : vector<2x128xf32> to vector<1x128xf32>
    %316 = vector.extract_strided_slice %314 {offsets = [1, 0], sizes = [1, 128], strides = [1, 1]} : vector<2x128xf32> to vector<1x128xf32>
    %317 = arith.mulf %316, %309 : vector<1x128xf32>
    %318 = arith.addf %315, %317 : vector<1x128xf32>
    %cst_125 = arith.constant dense<0.000000e+00> : vector<1x128xf32>
    %319 = tpu.matmul %318, %8, %cst_125 {dimension_numbers = #tpu.dot_dimension_numbers<[1], [0], [0], [1], [0, 0, 1, 1], [], []>} : vector<1x128xf32>, vector<128x128xf32>, vector<1x128xf32> -> vector<1x128xf32>
    %320 = vector.broadcast %319 : vector<1x128xf32> to vector<16x128xf32>
    %321 = arith.mulf %15, %320 : vector<16x128xf32>
    %322 = arith.addf %321, %18 : vector<16x128xf32>
    %cst_126 = arith.constant 0.000000e+00 : f32
    %323 = vector.broadcast %cst_126 : f32 to vector<16x128xf32>
    %324 = arith.maximumf %322, %323 : vector<16x128xf32>
    %cst_127 = arith.constant dense<0.000000e+00> : vector<64x128xf32>
    %325 = tpu.matmul %9, %324, %cst_127 {dimension_numbers = #tpu.dot_dimension_numbers<[1], [0], [0], [1], [0, 0, 1, 1], [], []>} : vector<64x16xf32>, vector<16x128xf32>, vector<64x128xf32> -> vector<64x128xf32>
    %cst_128 = arith.constant dense<0.000000e+00> : vector<64x128xf32>
    %326 = tpu.matmul %10, %305, %cst_128 {dimension_numbers = #tpu.dot_dimension_numbers<[1], [0], [0], [1], [0, 0, 1, 1], [], []>} : vector<64x16xf32>, vector<16x128xf32>, vector<64x128xf32> -> vector<64x128xf32>
    %327 = arith.addf %325, %326 : vector<64x128xf32>
    %328 = arith.addf %327, %21 : vector<64x128xf32>
    %329 = vector.extract_strided_slice %328 {offsets = [0, 0], sizes = [16, 128], strides = [1, 1]} : vector<64x128xf32> to vector<16x128xf32>
    %330 = arith.negf %329 : vector<16x128xf32>
    %331 = math.exp %330 : vector<16x128xf32>
    %cst_129 = arith.constant 1.000000e+00 : f32
    %332 = vector.broadcast %cst_129 : f32 to vector<16x128xf32>
    %333 = arith.addf %332, %331 : vector<16x128xf32>
    %334 = arith.divf %332, %333 : vector<16x128xf32>
    %335 = vector.extract_strided_slice %328 {offsets = [16, 0], sizes = [16, 128], strides = [1, 1]} : vector<64x128xf32> to vector<16x128xf32>
    %336 = arith.negf %335 : vector<16x128xf32>
    %337 = math.exp %336 : vector<16x128xf32>
    %cst_130 = arith.constant 1.000000e+00 : f32
    %338 = vector.broadcast %cst_130 : f32 to vector<16x128xf32>
    %339 = arith.addf %338, %337 : vector<16x128xf32>
    %340 = arith.divf %338, %339 : vector<16x128xf32>
    %341 = vector.extract_strided_slice %328 {offsets = [32, 0], sizes = [16, 128], strides = [1, 1]} : vector<64x128xf32> to vector<16x128xf32>
    %342 = math.tanh %341 : vector<16x128xf32>
    %343 = vector.extract_strided_slice %328 {offsets = [48, 0], sizes = [16, 128], strides = [1, 1]} : vector<64x128xf32> to vector<16x128xf32>
    %344 = arith.negf %343 : vector<16x128xf32>
    %345 = math.exp %344 : vector<16x128xf32>
    %cst_131 = arith.constant 1.000000e+00 : f32
    %346 = vector.broadcast %cst_131 : f32 to vector<16x128xf32>
    %347 = arith.addf %346, %345 : vector<16x128xf32>
    %348 = arith.divf %346, %347 : vector<16x128xf32>
    %349 = arith.mulf %340, %303 : vector<16x128xf32>
    %350 = arith.mulf %334, %342 : vector<16x128xf32>
    %351 = arith.addf %349, %350 : vector<16x128xf32>
    %352 = math.tanh %351 : vector<16x128xf32>
    %353 = arith.mulf %348, %352 : vector<16x128xf32>
    %cst_132 = arith.constant dense<0.000000e+00> : vector<1x128xf32>
    %354 = tpu.matmul %11, %353, %cst_132 {dimension_numbers = #tpu.dot_dimension_numbers<[1], [0], [0], [1], [0, 0, 1, 1], [], []>} : vector<1x16xf32>, vector<16x128xf32>, vector<1x128xf32> -> vector<1x128xf32>
    %cst_133 = arith.constant dense<0.000000e+00> : vector<1x128xf32>
    %355 = tpu.matmul %12, %324, %cst_133 {dimension_numbers = #tpu.dot_dimension_numbers<[1], [0], [0], [1], [0, 0, 1, 1], [], []>} : vector<1x16xf32>, vector<16x128xf32>, vector<1x128xf32> -> vector<1x128xf32>
    %356 = arith.addf %354, %355 : vector<1x128xf32>
    %357 = arith.addf %356, %24 : vector<1x128xf32>
    %c0_134 = arith.constant 0 : index
    %c6_135 = arith.constant 6 : index
    %c0_136 = arith.constant 0 : index
    %c0_137 = arith.constant 0 : index
    %358 = vector.load %arg12[%c0_134, %c6_135, %c0_136, %c0_137] : memref<1x12x1x128xf32, #tpu.memory_space<vmem>>, vector<1x1x1x128xf32>
    %359 = vector.shape_cast %358 : vector<1x1x1x128xf32> to vector<1x128xf32>
    %360 = vector.shape_cast %357 : vector<1x128xf32> to vector<1x1x1x128xf32>
    tpu.vector_store %arg12[%c0_134, %c6_135, %c0_136, %c0_137], %360 {strides = array<i32>} : memref<1x12x1x128xf32, #tpu.memory_space<vmem>>, vector<1x1x1x128xf32>,
    %c0_138 = arith.constant 0 : index
    %c7 = arith.constant 7 : index
    %c0_139 = arith.constant 0 : index
    %c0_140 = arith.constant 0 : index
    %361 = vector.load %arg2[%c0_138, %c7, %c0_139, %c0_140] : memref<1x12x2x128xf32, #tpu.memory_space<vmem>>, vector<1x1x2x128xf32>
    %362 = vector.shape_cast %361 : vector<1x1x2x128xf32> to vector<2x128xf32>
    %363 = vector.extract_strided_slice %362 {offsets = [0, 0], sizes = [1, 128], strides = [1, 1]} : vector<2x128xf32> to vector<1x128xf32>
    %364 = vector.extract_strided_slice %362 {offsets = [1, 0], sizes = [1, 128], strides = [1, 1]} : vector<2x128xf32> to vector<1x128xf32>
    %365 = arith.mulf %364, %357 : vector<1x128xf32>
    %366 = arith.addf %363, %365 : vector<1x128xf32>
    %cst_141 = arith.constant dense<0.000000e+00> : vector<1x128xf32>
    %367 = tpu.matmul %366, %8, %cst_141 {dimension_numbers = #tpu.dot_dimension_numbers<[1], [0], [0], [1], [0, 0, 1, 1], [], []>} : vector<1x128xf32>, vector<128x128xf32>, vector<1x128xf32> -> vector<1x128xf32>
    %368 = vector.broadcast %367 : vector<1x128xf32> to vector<16x128xf32>
    %369 = arith.mulf %15, %368 : vector<16x128xf32>
    %370 = arith.addf %369, %18 : vector<16x128xf32>
    %cst_142 = arith.constant 0.000000e+00 : f32
    %371 = vector.broadcast %cst_142 : f32 to vector<16x128xf32>
    %372 = arith.maximumf %370, %371 : vector<16x128xf32>
    %cst_143 = arith.constant dense<0.000000e+00> : vector<64x128xf32>
    %373 = tpu.matmul %9, %372, %cst_143 {dimension_numbers = #tpu.dot_dimension_numbers<[1], [0], [0], [1], [0, 0, 1, 1], [], []>} : vector<64x16xf32>, vector<16x128xf32>, vector<64x128xf32> -> vector<64x128xf32>
    %cst_144 = arith.constant dense<0.000000e+00> : vector<64x128xf32>
    %374 = tpu.matmul %10, %353, %cst_144 {dimension_numbers = #tpu.dot_dimension_numbers<[1], [0], [0], [1], [0, 0, 1, 1], [], []>} : vector<64x16xf32>, vector<16x128xf32>, vector<64x128xf32> -> vector<64x128xf32>
    %375 = arith.addf %373, %374 : vector<64x128xf32>
    %376 = arith.addf %375, %21 : vector<64x128xf32>
    %377 = vector.extract_strided_slice %376 {offsets = [0, 0], sizes = [16, 128], strides = [1, 1]} : vector<64x128xf32> to vector<16x128xf32>
    %378 = arith.negf %377 : vector<16x128xf32>
    %379 = math.exp %378 : vector<16x128xf32>
    %cst_145 = arith.constant 1.000000e+00 : f32
    %380 = vector.broadcast %cst_145 : f32 to vector<16x128xf32>
    %381 = arith.addf %380, %379 : vector<16x128xf32>
    %382 = arith.divf %380, %381 : vector<16x128xf32>
    %383 = vector.extract_strided_slice %376 {offsets = [16, 0], sizes = [16, 128], strides = [1, 1]} : vector<64x128xf32> to vector<16x128xf32>
    %384 = arith.negf %383 : vector<16x128xf32>
    %385 = math.exp %384 : vector<16x128xf32>
    %cst_146 = arith.constant 1.000000e+00 : f32
    %386 = vector.broadcast %cst_146 : f32 to vector<16x128xf32>
    %387 = arith.addf %386, %385 : vector<16x128xf32>
    %388 = arith.divf %386, %387 : vector<16x128xf32>
    %389 = vector.extract_strided_slice %376 {offsets = [32, 0], sizes = [16, 128], strides = [1, 1]} : vector<64x128xf32> to vector<16x128xf32>
    %390 = math.tanh %389 : vector<16x128xf32>
    %391 = vector.extract_strided_slice %376 {offsets = [48, 0], sizes = [16, 128], strides = [1, 1]} : vector<64x128xf32> to vector<16x128xf32>
    %392 = arith.negf %391 : vector<16x128xf32>
    %393 = math.exp %392 : vector<16x128xf32>
    %cst_147 = arith.constant 1.000000e+00 : f32
    %394 = vector.broadcast %cst_147 : f32 to vector<16x128xf32>
    %395 = arith.addf %394, %393 : vector<16x128xf32>
    %396 = arith.divf %394, %395 : vector<16x128xf32>
    %397 = arith.mulf %388, %351 : vector<16x128xf32>
    %398 = arith.mulf %382, %390 : vector<16x128xf32>
    %399 = arith.addf %397, %398 : vector<16x128xf32>
    %400 = math.tanh %399 : vector<16x128xf32>
    %401 = arith.mulf %396, %400 : vector<16x128xf32>
    %cst_148 = arith.constant dense<0.000000e+00> : vector<1x128xf32>
    %402 = tpu.matmul %11, %401, %cst_148 {dimension_numbers = #tpu.dot_dimension_numbers<[1], [0], [0], [1], [0, 0, 1, 1], [], []>} : vector<1x16xf32>, vector<16x128xf32>, vector<1x128xf32> -> vector<1x128xf32>
    %cst_149 = arith.constant dense<0.000000e+00> : vector<1x128xf32>
    %403 = tpu.matmul %12, %372, %cst_149 {dimension_numbers = #tpu.dot_dimension_numbers<[1], [0], [0], [1], [0, 0, 1, 1], [], []>} : vector<1x16xf32>, vector<16x128xf32>, vector<1x128xf32> -> vector<1x128xf32>
    %404 = arith.addf %402, %403 : vector<1x128xf32>
    %405 = arith.addf %404, %24 : vector<1x128xf32>
    %c0_150 = arith.constant 0 : index
    %c7_151 = arith.constant 7 : index
    %c0_152 = arith.constant 0 : index
    %c0_153 = arith.constant 0 : index
    %406 = vector.load %arg12[%c0_150, %c7_151, %c0_152, %c0_153] : memref<1x12x1x128xf32, #tpu.memory_space<vmem>>, vector<1x1x1x128xf32>
    %407 = vector.shape_cast %406 : vector<1x1x1x128xf32> to vector<1x128xf32>
    %408 = vector.shape_cast %405 : vector<1x128xf32> to vector<1x1x1x128xf32>
    tpu.vector_store %arg12[%c0_150, %c7_151, %c0_152, %c0_153], %408 {strides = array<i32>} : memref<1x12x1x128xf32, #tpu.memory_space<vmem>>, vector<1x1x1x128xf32>,
    %c0_154 = arith.constant 0 : index
    %c8 = arith.constant 8 : index
    %c0_155 = arith.constant 0 : index
    %c0_156 = arith.constant 0 : index
    %409 = vector.load %arg2[%c0_154, %c8, %c0_155, %c0_156] : memref<1x12x2x128xf32, #tpu.memory_space<vmem>>, vector<1x1x2x128xf32>
    %410 = vector.shape_cast %409 : vector<1x1x2x128xf32> to vector<2x128xf32>
    %411 = vector.extract_strided_slice %410 {offsets = [0, 0], sizes = [1, 128], strides = [1, 1]} : vector<2x128xf32> to vector<1x128xf32>
    %412 = vector.extract_strided_slice %410 {offsets = [1, 0], sizes = [1, 128], strides = [1, 1]} : vector<2x128xf32> to vector<1x128xf32>
    %413 = arith.mulf %412, %405 : vector<1x128xf32>
    %414 = arith.addf %411, %413 : vector<1x128xf32>
    %cst_157 = arith.constant dense<0.000000e+00> : vector<1x128xf32>
    %415 = tpu.matmul %414, %8, %cst_157 {dimension_numbers = #tpu.dot_dimension_numbers<[1], [0], [0], [1], [0, 0, 1, 1], [], []>} : vector<1x128xf32>, vector<128x128xf32>, vector<1x128xf32> -> vector<1x128xf32>
    %416 = vector.broadcast %415 : vector<1x128xf32> to vector<16x128xf32>
    %417 = arith.mulf %15, %416 : vector<16x128xf32>
    %418 = arith.addf %417, %18 : vector<16x128xf32>
    %cst_158 = arith.constant 0.000000e+00 : f32
    %419 = vector.broadcast %cst_158 : f32 to vector<16x128xf32>
    %420 = arith.maximumf %418, %419 : vector<16x128xf32>
    %cst_159 = arith.constant dense<0.000000e+00> : vector<64x128xf32>
    %421 = tpu.matmul %9, %420, %cst_159 {dimension_numbers = #tpu.dot_dimension_numbers<[1], [0], [0], [1], [0, 0, 1, 1], [], []>} : vector<64x16xf32>, vector<16x128xf32>, vector<64x128xf32> -> vector<64x128xf32>
    %cst_160 = arith.constant dense<0.000000e+00> : vector<64x128xf32>
    %422 = tpu.matmul %10, %401, %cst_160 {dimension_numbers = #tpu.dot_dimension_numbers<[1], [0], [0], [1], [0, 0, 1, 1], [], []>} : vector<64x16xf32>, vector<16x128xf32>, vector<64x128xf32> -> vector<64x128xf32>
    %423 = arith.addf %421, %422 : vector<64x128xf32>
    %424 = arith.addf %423, %21 : vector<64x128xf32>
    %425 = vector.extract_strided_slice %424 {offsets = [0, 0], sizes = [16, 128], strides = [1, 1]} : vector<64x128xf32> to vector<16x128xf32>
    %426 = arith.negf %425 : vector<16x128xf32>
    %427 = math.exp %426 : vector<16x128xf32>
    %cst_161 = arith.constant 1.000000e+00 : f32
    %428 = vector.broadcast %cst_161 : f32 to vector<16x128xf32>
    %429 = arith.addf %428, %427 : vector<16x128xf32>
    %430 = arith.divf %428, %429 : vector<16x128xf32>
    %431 = vector.extract_strided_slice %424 {offsets = [16, 0], sizes = [16, 128], strides = [1, 1]} : vector<64x128xf32> to vector<16x128xf32>
    %432 = arith.negf %431 : vector<16x128xf32>
    %433 = math.exp %432 : vector<16x128xf32>
    %cst_162 = arith.constant 1.000000e+00 : f32
    %434 = vector.broadcast %cst_162 : f32 to vector<16x128xf32>
    %435 = arith.addf %434, %433 : vector<16x128xf32>
    %436 = arith.divf %434, %435 : vector<16x128xf32>
    %437 = vector.extract_strided_slice %424 {offsets = [32, 0], sizes = [16, 128], strides = [1, 1]} : vector<64x128xf32> to vector<16x128xf32>
    %438 = math.tanh %437 : vector<16x128xf32>
    %439 = vector.extract_strided_slice %424 {offsets = [48, 0], sizes = [16, 128], strides = [1, 1]} : vector<64x128xf32> to vector<16x128xf32>
    %440 = arith.negf %439 : vector<16x128xf32>
    %441 = math.exp %440 : vector<16x128xf32>
    %cst_163 = arith.constant 1.000000e+00 : f32
    %442 = vector.broadcast %cst_163 : f32 to vector<16x128xf32>
    %443 = arith.addf %442, %441 : vector<16x128xf32>
    %444 = arith.divf %442, %443 : vector<16x128xf32>
    %445 = arith.mulf %436, %399 : vector<16x128xf32>
    %446 = arith.mulf %430, %438 : vector<16x128xf32>
    %447 = arith.addf %445, %446 : vector<16x128xf32>
    %448 = math.tanh %447 : vector<16x128xf32>
    %449 = arith.mulf %444, %448 : vector<16x128xf32>
    %cst_164 = arith.constant dense<0.000000e+00> : vector<1x128xf32>
    %450 = tpu.matmul %11, %449, %cst_164 {dimension_numbers = #tpu.dot_dimension_numbers<[1], [0], [0], [1], [0, 0, 1, 1], [], []>} : vector<1x16xf32>, vector<16x128xf32>, vector<1x128xf32> -> vector<1x128xf32>
    %cst_165 = arith.constant dense<0.000000e+00> : vector<1x128xf32>
    %451 = tpu.matmul %12, %420, %cst_165 {dimension_numbers = #tpu.dot_dimension_numbers<[1], [0], [0], [1], [0, 0, 1, 1], [], []>} : vector<1x16xf32>, vector<16x128xf32>, vector<1x128xf32> -> vector<1x128xf32>
    %452 = arith.addf %450, %451 : vector<1x128xf32>
    %453 = arith.addf %452, %24 : vector<1x128xf32>
    %c0_166 = arith.constant 0 : index
    %c8_167 = arith.constant 8 : index
    %c0_168 = arith.constant 0 : index
    %c0_169 = arith.constant 0 : index
    %454 = vector.load %arg12[%c0_166, %c8_167, %c0_168, %c0_169] : memref<1x12x1x128xf32, #tpu.memory_space<vmem>>, vector<1x1x1x128xf32>
    %455 = vector.shape_cast %454 : vector<1x1x1x128xf32> to vector<1x128xf32>
    %456 = vector.shape_cast %453 : vector<1x128xf32> to vector<1x1x1x128xf32>
    tpu.vector_store %arg12[%c0_166, %c8_167, %c0_168, %c0_169], %456 {strides = array<i32>} : memref<1x12x1x128xf32, #tpu.memory_space<vmem>>, vector<1x1x1x128xf32>,
    %c0_170 = arith.constant 0 : index
    %c9 = arith.constant 9 : index
    %c0_171 = arith.constant 0 : index
    %c0_172 = arith.constant 0 : index
    %457 = vector.load %arg2[%c0_170, %c9, %c0_171, %c0_172] : memref<1x12x2x128xf32, #tpu.memory_space<vmem>>, vector<1x1x2x128xf32>
    %458 = vector.shape_cast %457 : vector<1x1x2x128xf32> to vector<2x128xf32>
    %459 = vector.extract_strided_slice %458 {offsets = [0, 0], sizes = [1, 128], strides = [1, 1]} : vector<2x128xf32> to vector<1x128xf32>
    %460 = vector.extract_strided_slice %458 {offsets = [1, 0], sizes = [1, 128], strides = [1, 1]} : vector<2x128xf32> to vector<1x128xf32>
    %461 = arith.mulf %460, %453 : vector<1x128xf32>
    %462 = arith.addf %459, %461 : vector<1x128xf32>
    %cst_173 = arith.constant dense<0.000000e+00> : vector<1x128xf32>
    %463 = tpu.matmul %462, %8, %cst_173 {dimension_numbers = #tpu.dot_dimension_numbers<[1], [0], [0], [1], [0, 0, 1, 1], [], []>} : vector<1x128xf32>, vector<128x128xf32>, vector<1x128xf32> -> vector<1x128xf32>
    %464 = vector.broadcast %463 : vector<1x128xf32> to vector<16x128xf32>
    %465 = arith.mulf %15, %464 : vector<16x128xf32>
    %466 = arith.addf %465, %18 : vector<16x128xf32>
    %cst_174 = arith.constant 0.000000e+00 : f32
    %467 = vector.broadcast %cst_174 : f32 to vector<16x128xf32>
    %468 = arith.maximumf %466, %467 : vector<16x128xf32>
    %cst_175 = arith.constant dense<0.000000e+00> : vector<64x128xf32>
    %469 = tpu.matmul %9, %468, %cst_175 {dimension_numbers = #tpu.dot_dimension_numbers<[1], [0], [0], [1], [0, 0, 1, 1], [], []>} : vector<64x16xf32>, vector<16x128xf32>, vector<64x128xf32> -> vector<64x128xf32>
    %cst_176 = arith.constant dense<0.000000e+00> : vector<64x128xf32>
    %470 = tpu.matmul %10, %449, %cst_176 {dimension_numbers = #tpu.dot_dimension_numbers<[1], [0], [0], [1], [0, 0, 1, 1], [], []>} : vector<64x16xf32>, vector<16x128xf32>, vector<64x128xf32> -> vector<64x128xf32>
    %471 = arith.addf %469, %470 : vector<64x128xf32>
    %472 = arith.addf %471, %21 : vector<64x128xf32>
    %473 = vector.extract_strided_slice %472 {offsets = [0, 0], sizes = [16, 128], strides = [1, 1]} : vector<64x128xf32> to vector<16x128xf32>
    %474 = arith.negf %473 : vector<16x128xf32>
    %475 = math.exp %474 : vector<16x128xf32>
    %cst_177 = arith.constant 1.000000e+00 : f32
    %476 = vector.broadcast %cst_177 : f32 to vector<16x128xf32>
    %477 = arith.addf %476, %475 : vector<16x128xf32>
    %478 = arith.divf %476, %477 : vector<16x128xf32>
    %479 = vector.extract_strided_slice %472 {offsets = [16, 0], sizes = [16, 128], strides = [1, 1]} : vector<64x128xf32> to vector<16x128xf32>
    %480 = arith.negf %479 : vector<16x128xf32>
    %481 = math.exp %480 : vector<16x128xf32>
    %cst_178 = arith.constant 1.000000e+00 : f32
    %482 = vector.broadcast %cst_178 : f32 to vector<16x128xf32>
    %483 = arith.addf %482, %481 : vector<16x128xf32>
    %484 = arith.divf %482, %483 : vector<16x128xf32>
    %485 = vector.extract_strided_slice %472 {offsets = [32, 0], sizes = [16, 128], strides = [1, 1]} : vector<64x128xf32> to vector<16x128xf32>
    %486 = math.tanh %485 : vector<16x128xf32>
    %487 = vector.extract_strided_slice %472 {offsets = [48, 0], sizes = [16, 128], strides = [1, 1]} : vector<64x128xf32> to vector<16x128xf32>
    %488 = arith.negf %487 : vector<16x128xf32>
    %489 = math.exp %488 : vector<16x128xf32>
    %cst_179 = arith.constant 1.000000e+00 : f32
    %490 = vector.broadcast %cst_179 : f32 to vector<16x128xf32>
    %491 = arith.addf %490, %489 : vector<16x128xf32>
    %492 = arith.divf %490, %491 : vector<16x128xf32>
    %493 = arith.mulf %484, %447 : vector<16x128xf32>
    %494 = arith.mulf %478, %486 : vector<16x128xf32>
    %495 = arith.addf %493, %494 : vector<16x128xf32>
    %496 = math.tanh %495 : vector<16x128xf32>
    %497 = arith.mulf %492, %496 : vector<16x128xf32>
    %cst_180 = arith.constant dense<0.000000e+00> : vector<1x128xf32>
    %498 = tpu.matmul %11, %497, %cst_180 {dimension_numbers = #tpu.dot_dimension_numbers<[1], [0], [0], [1], [0, 0, 1, 1], [], []>} : vector<1x16xf32>, vector<16x128xf32>, vector<1x128xf32> -> vector<1x128xf32>
    %cst_181 = arith.constant dense<0.000000e+00> : vector<1x128xf32>
    %499 = tpu.matmul %12, %468, %cst_181 {dimension_numbers = #tpu.dot_dimension_numbers<[1], [0], [0], [1], [0, 0, 1, 1], [], []>} : vector<1x16xf32>, vector<16x128xf32>, vector<1x128xf32> -> vector<1x128xf32>
    %500 = arith.addf %498, %499 : vector<1x128xf32>
    %501 = arith.addf %500, %24 : vector<1x128xf32>
    %c0_182 = arith.constant 0 : index
    %c9_183 = arith.constant 9 : index
    %c0_184 = arith.constant 0 : index
    %c0_185 = arith.constant 0 : index
    %502 = vector.load %arg12[%c0_182, %c9_183, %c0_184, %c0_185] : memref<1x12x1x128xf32, #tpu.memory_space<vmem>>, vector<1x1x1x128xf32>
    %503 = vector.shape_cast %502 : vector<1x1x1x128xf32> to vector<1x128xf32>
    %504 = vector.shape_cast %501 : vector<1x128xf32> to vector<1x1x1x128xf32>
    tpu.vector_store %arg12[%c0_182, %c9_183, %c0_184, %c0_185], %504 {strides = array<i32>} : memref<1x12x1x128xf32, #tpu.memory_space<vmem>>, vector<1x1x1x128xf32>,
    %c0_186 = arith.constant 0 : index
    %c10 = arith.constant 10 : index
    %c0_187 = arith.constant 0 : index
    %c0_188 = arith.constant 0 : index
    %505 = vector.load %arg2[%c0_186, %c10, %c0_187, %c0_188] : memref<1x12x2x128xf32, #tpu.memory_space<vmem>>, vector<1x1x2x128xf32>
    %506 = vector.shape_cast %505 : vector<1x1x2x128xf32> to vector<2x128xf32>
    %507 = vector.extract_strided_slice %506 {offsets = [0, 0], sizes = [1, 128], strides = [1, 1]} : vector<2x128xf32> to vector<1x128xf32>
    %508 = vector.extract_strided_slice %506 {offsets = [1, 0], sizes = [1, 128], strides = [1, 1]} : vector<2x128xf32> to vector<1x128xf32>
    %509 = arith.mulf %508, %501 : vector<1x128xf32>
    %510 = arith.addf %507, %509 : vector<1x128xf32>
    %cst_189 = arith.constant dense<0.000000e+00> : vector<1x128xf32>
    %511 = tpu.matmul %510, %8, %cst_189 {dimension_numbers = #tpu.dot_dimension_numbers<[1], [0], [0], [1], [0, 0, 1, 1], [], []>} : vector<1x128xf32>, vector<128x128xf32>, vector<1x128xf32> -> vector<1x128xf32>
    %512 = vector.broadcast %511 : vector<1x128xf32> to vector<16x128xf32>
    %513 = arith.mulf %15, %512 : vector<16x128xf32>
    %514 = arith.addf %513, %18 : vector<16x128xf32>
    %cst_190 = arith.constant 0.000000e+00 : f32
    %515 = vector.broadcast %cst_190 : f32 to vector<16x128xf32>
    %516 = arith.maximumf %514, %515 : vector<16x128xf32>
    %cst_191 = arith.constant dense<0.000000e+00> : vector<64x128xf32>
    %517 = tpu.matmul %9, %516, %cst_191 {dimension_numbers = #tpu.dot_dimension_numbers<[1], [0], [0], [1], [0, 0, 1, 1], [], []>} : vector<64x16xf32>, vector<16x128xf32>, vector<64x128xf32> -> vector<64x128xf32>
    %cst_192 = arith.constant dense<0.000000e+00> : vector<64x128xf32>
    %518 = tpu.matmul %10, %497, %cst_192 {dimension_numbers = #tpu.dot_dimension_numbers<[1], [0], [0], [1], [0, 0, 1, 1], [], []>} : vector<64x16xf32>, vector<16x128xf32>, vector<64x128xf32> -> vector<64x128xf32>
    %519 = arith.addf %517, %518 : vector<64x128xf32>
    %520 = arith.addf %519, %21 : vector<64x128xf32>
    %521 = vector.extract_strided_slice %520 {offsets = [0, 0], sizes = [16, 128], strides = [1, 1]} : vector<64x128xf32> to vector<16x128xf32>
    %522 = arith.negf %521 : vector<16x128xf32>
    %523 = math.exp %522 : vector<16x128xf32>
    %cst_193 = arith.constant 1.000000e+00 : f32
    %524 = vector.broadcast %cst_193 : f32 to vector<16x128xf32>
    %525 = arith.addf %524, %523 : vector<16x128xf32>
    %526 = arith.divf %524, %525 : vector<16x128xf32>
    %527 = vector.extract_strided_slice %520 {offsets = [16, 0], sizes = [16, 128], strides = [1, 1]} : vector<64x128xf32> to vector<16x128xf32>
    %528 = arith.negf %527 : vector<16x128xf32>
    %529 = math.exp %528 : vector<16x128xf32>
    %cst_194 = arith.constant 1.000000e+00 : f32
    %530 = vector.broadcast %cst_194 : f32 to vector<16x128xf32>
    %531 = arith.addf %530, %529 : vector<16x128xf32>
    %532 = arith.divf %530, %531 : vector<16x128xf32>
    %533 = vector.extract_strided_slice %520 {offsets = [32, 0], sizes = [16, 128], strides = [1, 1]} : vector<64x128xf32> to vector<16x128xf32>
    %534 = math.tanh %533 : vector<16x128xf32>
    %535 = vector.extract_strided_slice %520 {offsets = [48, 0], sizes = [16, 128], strides = [1, 1]} : vector<64x128xf32> to vector<16x128xf32>
    %536 = arith.negf %535 : vector<16x128xf32>
    %537 = math.exp %536 : vector<16x128xf32>
    %cst_195 = arith.constant 1.000000e+00 : f32
    %538 = vector.broadcast %cst_195 : f32 to vector<16x128xf32>
    %539 = arith.addf %538, %537 : vector<16x128xf32>
    %540 = arith.divf %538, %539 : vector<16x128xf32>
    %541 = arith.mulf %532, %495 : vector<16x128xf32>
    %542 = arith.mulf %526, %534 : vector<16x128xf32>
    %543 = arith.addf %541, %542 : vector<16x128xf32>
    %544 = math.tanh %543 : vector<16x128xf32>
    %545 = arith.mulf %540, %544 : vector<16x128xf32>
    %cst_196 = arith.constant dense<0.000000e+00> : vector<1x128xf32>
    %546 = tpu.matmul %11, %545, %cst_196 {dimension_numbers = #tpu.dot_dimension_numbers<[1], [0], [0], [1], [0, 0, 1, 1], [], []>} : vector<1x16xf32>, vector<16x128xf32>, vector<1x128xf32> -> vector<1x128xf32>
    %cst_197 = arith.constant dense<0.000000e+00> : vector<1x128xf32>
    %547 = tpu.matmul %12, %516, %cst_197 {dimension_numbers = #tpu.dot_dimension_numbers<[1], [0], [0], [1], [0, 0, 1, 1], [], []>} : vector<1x16xf32>, vector<16x128xf32>, vector<1x128xf32> -> vector<1x128xf32>
    %548 = arith.addf %546, %547 : vector<1x128xf32>
    %549 = arith.addf %548, %24 : vector<1x128xf32>
    %c0_198 = arith.constant 0 : index
    %c10_199 = arith.constant 10 : index
    %c0_200 = arith.constant 0 : index
    %c0_201 = arith.constant 0 : index
    %550 = vector.load %arg12[%c0_198, %c10_199, %c0_200, %c0_201] : memref<1x12x1x128xf32, #tpu.memory_space<vmem>>, vector<1x1x1x128xf32>
    %551 = vector.shape_cast %550 : vector<1x1x1x128xf32> to vector<1x128xf32>
    %552 = vector.shape_cast %549 : vector<1x128xf32> to vector<1x1x1x128xf32>
    tpu.vector_store %arg12[%c0_198, %c10_199, %c0_200, %c0_201], %552 {strides = array<i32>} : memref<1x12x1x128xf32, #tpu.memory_space<vmem>>, vector<1x1x1x128xf32>,
    %c0_202 = arith.constant 0 : index
    %c11 = arith.constant 11 : index
    %c0_203 = arith.constant 0 : index
    %c0_204 = arith.constant 0 : index
    %553 = vector.load %arg2[%c0_202, %c11, %c0_203, %c0_204] : memref<1x12x2x128xf32, #tpu.memory_space<vmem>>, vector<1x1x2x128xf32>
    %554 = vector.shape_cast %553 : vector<1x1x2x128xf32> to vector<2x128xf32>
    %555 = vector.extract_strided_slice %554 {offsets = [0, 0], sizes = [1, 128], strides = [1, 1]} : vector<2x128xf32> to vector<1x128xf32>
    %556 = vector.extract_strided_slice %554 {offsets = [1, 0], sizes = [1, 128], strides = [1, 1]} : vector<2x128xf32> to vector<1x128xf32>
    %557 = arith.mulf %556, %549 : vector<1x128xf32>
    %558 = arith.addf %555, %557 : vector<1x128xf32>
    %cst_205 = arith.constant dense<0.000000e+00> : vector<1x128xf32>
    %559 = tpu.matmul %558, %8, %cst_205 {dimension_numbers = #tpu.dot_dimension_numbers<[1], [0], [0], [1], [0, 0, 1, 1], [], []>} : vector<1x128xf32>, vector<128x128xf32>, vector<1x128xf32> -> vector<1x128xf32>
    %560 = vector.broadcast %559 : vector<1x128xf32> to vector<16x128xf32>
    %561 = arith.mulf %15, %560 : vector<16x128xf32>
    %562 = arith.addf %561, %18 : vector<16x128xf32>
    %cst_206 = arith.constant 0.000000e+00 : f32
    %563 = vector.broadcast %cst_206 : f32 to vector<16x128xf32>
    %564 = arith.maximumf %562, %563 : vector<16x128xf32>
    %cst_207 = arith.constant dense<0.000000e+00> : vector<64x128xf32>
    %565 = tpu.matmul %9, %564, %cst_207 {dimension_numbers = #tpu.dot_dimension_numbers<[1], [0], [0], [1], [0, 0, 1, 1], [], []>} : vector<64x16xf32>, vector<16x128xf32>, vector<64x128xf32> -> vector<64x128xf32>
    %cst_208 = arith.constant dense<0.000000e+00> : vector<64x128xf32>
    %566 = tpu.matmul %10, %545, %cst_208 {dimension_numbers = #tpu.dot_dimension_numbers<[1], [0], [0], [1], [0, 0, 1, 1], [], []>} : vector<64x16xf32>, vector<16x128xf32>, vector<64x128xf32> -> vector<64x128xf32>
    %567 = arith.addf %565, %566 : vector<64x128xf32>
    %568 = arith.addf %567, %21 : vector<64x128xf32>
    %569 = vector.extract_strided_slice %568 {offsets = [0, 0], sizes = [16, 128], strides = [1, 1]} : vector<64x128xf32> to vector<16x128xf32>
    %570 = arith.negf %569 : vector<16x128xf32>
    %571 = math.exp %570 : vector<16x128xf32>
    %cst_209 = arith.constant 1.000000e+00 : f32
    %572 = vector.broadcast %cst_209 : f32 to vector<16x128xf32>
    %573 = arith.addf %572, %571 : vector<16x128xf32>
    %574 = arith.divf %572, %573 : vector<16x128xf32>
    %575 = vector.extract_strided_slice %568 {offsets = [16, 0], sizes = [16, 128], strides = [1, 1]} : vector<64x128xf32> to vector<16x128xf32>
    %576 = arith.negf %575 : vector<16x128xf32>
    %577 = math.exp %576 : vector<16x128xf32>
    %cst_210 = arith.constant 1.000000e+00 : f32
    %578 = vector.broadcast %cst_210 : f32 to vector<16x128xf32>
    %579 = arith.addf %578, %577 : vector<16x128xf32>
    %580 = arith.divf %578, %579 : vector<16x128xf32>
    %581 = vector.extract_strided_slice %568 {offsets = [32, 0], sizes = [16, 128], strides = [1, 1]} : vector<64x128xf32> to vector<16x128xf32>
    %582 = math.tanh %581 : vector<16x128xf32>
    %583 = vector.extract_strided_slice %568 {offsets = [48, 0], sizes = [16, 128], strides = [1, 1]} : vector<64x128xf32> to vector<16x128xf32>
    %584 = arith.negf %583 : vector<16x128xf32>
    %585 = math.exp %584 : vector<16x128xf32>
    %cst_211 = arith.constant 1.000000e+00 : f32
    %586 = vector.broadcast %cst_211 : f32 to vector<16x128xf32>
    %587 = arith.addf %586, %585 : vector<16x128xf32>
    %588 = arith.divf %586, %587 : vector<16x128xf32>
    %589 = arith.mulf %580, %543 : vector<16x128xf32>
    %590 = arith.mulf %574, %582 : vector<16x128xf32>
    %591 = arith.addf %589, %590 : vector<16x128xf32>
    %592 = math.tanh %591 : vector<16x128xf32>
    %593 = arith.mulf %588, %592 : vector<16x128xf32>
    %cst_212 = arith.constant dense<0.000000e+00> : vector<1x128xf32>
    %594 = tpu.matmul %11, %593, %cst_212 {dimension_numbers = #tpu.dot_dimension_numbers<[1], [0], [0], [1], [0, 0, 1, 1], [], []>} : vector<1x16xf32>, vector<16x128xf32>, vector<1x128xf32> -> vector<1x128xf32>
    %cst_213 = arith.constant dense<0.000000e+00> : vector<1x128xf32>
    %595 = tpu.matmul %12, %564, %cst_213 {dimension_numbers = #tpu.dot_dimension_numbers<[1], [0], [0], [1], [0, 0, 1, 1], [], []>} : vector<1x16xf32>, vector<16x128xf32>, vector<1x128xf32> -> vector<1x128xf32>
    %596 = arith.addf %594, %595 : vector<1x128xf32>
    %597 = arith.addf %596, %24 : vector<1x128xf32>
    %c0_214 = arith.constant 0 : index
    %c11_215 = arith.constant 11 : index
    %c0_216 = arith.constant 0 : index
    %c0_217 = arith.constant 0 : index
    %598 = vector.load %arg12[%c0_214, %c11_215, %c0_216, %c0_217] : memref<1x12x1x128xf32, #tpu.memory_space<vmem>>, vector<1x1x1x128xf32>
    %599 = vector.shape_cast %598 : vector<1x1x1x128xf32> to vector<1x128xf32>
    %600 = vector.shape_cast %597 : vector<1x128xf32> to vector<1x1x1x128xf32>
    tpu.vector_store %arg12[%c0_214, %c11_215, %c0_216, %c0_217], %600 {strides = array<i32>} : memref<1x12x1x128xf32, #tpu.memory_space<vmem>>, vector<1x1x1x128xf32>,
    %c0_218 = arith.constant 0 : index
    %c0_219 = arith.constant 0 : index
    %c0_220 = arith.constant 0 : index
    %601 = vector.load %arg13[%c0_218, %c0_219, %c0_220] : memref<1x16x128xf32, #tpu.memory_space<vmem>>, vector<1x16x128xf32>
    %602 = vector.shape_cast %601 : vector<1x16x128xf32> to vector<16x128xf32>
    %603 = vector.shape_cast %593 : vector<16x128xf32> to vector<1x16x128xf32>
    tpu.vector_store %arg13[%c0_218, %c0_219, %c0_220], %603 {strides = array<i32>} : memref<1x16x128xf32, #tpu.memory_space<vmem>>, vector<1x16x128xf32>,
    %c0_221 = arith.constant 0 : index
    %c0_222 = arith.constant 0 : index
    %c0_223 = arith.constant 0 : index
    %604 = vector.load %arg14[%c0_221, %c0_222, %c0_223] : memref<1x16x128xf32, #tpu.memory_space<vmem>>, vector<1x16x128xf32>
    %605 = vector.shape_cast %604 : vector<1x16x128xf32> to vector<16x128xf32>
    %606 = vector.shape_cast %591 : vector<16x128xf32> to vector<1x16x128xf32>
    tpu.vector_store %arg14[%c0_221, %c0_222, %c0_223], %606 {strides = array<i32>} : memref<1x16x128xf32, #tpu.memory_space<vmem>>, vector<1x16x128xf32>,
    %c0_224 = arith.constant 0 : index
    %c0_225 = arith.constant 0 : index
    %607 = vector.load %arg15[%c0_224, %c0_225] : memref<1x128xf32, #tpu.memory_space<vmem>>, vector<1x128xf32>
    tpu.vector_store %arg15[%c0_224, %c0_225], %597 {strides = array<i32>} : memref<1x128xf32, #tpu.memory_space<vmem>>, vector<1x128xf32>,
    return
  }
  func.func @transform_0(%arg0: i32, %arg1: i32) -> (i32, i32, i32, i32) {
    %c0_i32 = arith.constant 0 : i32
    %c0_i32_0 = arith.constant 0 : i32
    %c0_i32_1 = arith.constant 0 : i32
    return %arg0, %arg1, %c0_i32, %c0_i32_0 : i32, i32, i32, i32
  }
  func.func @transform_1(%arg0: i32, %arg1: i32) -> (i32, i32) {
    %c0_i32 = arith.constant 0 : i32
    %c0_i32_0 = arith.constant 0 : i32
    %c0_i32_1 = arith.constant 0 : i32
    return %c0_i32, %c0_i32_0 : i32, i32
  }
  func.func @transform_2(%arg0: i32, %arg1: i32) -> (i32, i32) {
    %c0_i32 = arith.constant 0 : i32
    %c0_i32_0 = arith.constant 0 : i32
    %c0_i32_1 = arith.constant 0 : i32
    return %c0_i32, %c0_i32_0 : i32, i32
  }
  func.func @transform_3(%arg0: i32, %arg1: i32) -> (i32, i32) {
    %c0_i32 = arith.constant 0 : i32
    %c0_i32_0 = arith.constant 0 : i32
    %c0_i32_1 = arith.constant 0 : i32
    return %c0_i32, %c0_i32_0 : i32, i32
  }
  func.func @transform_4(%arg0: i32, %arg1: i32) -> (i32, i32) {
    %c0_i32 = arith.constant 0 : i32
    %c0_i32_0 = arith.constant 0 : i32
    %c0_i32_1 = arith.constant 0 : i32
    return %c0_i32, %c0_i32_0 : i32, i32
  }
  func.func @transform_5(%arg0: i32, %arg1: i32) -> (i32, i32) {
    %c0_i32 = arith.constant 0 : i32
    %c0_i32_0 = arith.constant 0 : i32
    %c0_i32_1 = arith.constant 0 : i32
    return %c0_i32, %c0_i32_0 : i32, i32
  }
  func.func @transform_6(%arg0: i32, %arg1: i32) -> (i32, i32) {
    %c0_i32 = arith.constant 0 : i32
    %c0_i32_0 = arith.constant 0 : i32
    %c0_i32_1 = arith.constant 0 : i32
    return %c0_i32, %c0_i32_0 : i32, i32
  }
  func.func @transform_7(%arg0: i32, %arg1: i32) -> (i32, i32) {
    %c0_i32 = arith.constant 0 : i32
    %c0_i32_0 = arith.constant 0 : i32
    %c0_i32_1 = arith.constant 0 : i32
    return %c0_i32, %c0_i32_0 : i32, i32
  }
  func.func @transform_8(%arg0: i32, %arg1: i32) -> (i32, i32) {
    %c0_i32 = arith.constant 0 : i32
    %c0_i32_0 = arith.constant 0 : i32
    %c0_i32_1 = arith.constant 0 : i32
    return %c0_i32, %c0_i32_0 : i32, i32
  }
  func.func @transform_9(%arg0: i32, %arg1: i32) -> (i32, i32) {
    %c0_i32 = arith.constant 0 : i32
    %c0_i32_0 = arith.constant 0 : i32
    %c0_i32_1 = arith.constant 0 : i32
    return %c0_i32, %c0_i32_0 : i32, i32
  }
  func.func @transform_10(%arg0: i32, %arg1: i32) -> (i32, i32, i32, i32) {
    %c0_i32 = arith.constant 0 : i32
    %c0_i32_0 = arith.constant 0 : i32
    %c0_i32_1 = arith.constant 0 : i32
    return %arg0, %arg1, %c0_i32, %c0_i32_0 : i32, i32, i32, i32
  }
  func.func @transform_11(%arg0: i32, %arg1: i32) -> (i32, i32, i32) {
    %c0_i32 = arith.constant 0 : i32
    %c0_i32_0 = arith.constant 0 : i32
    %c0_i32_1 = arith.constant 0 : i32
    return %arg0, %c0_i32, %c0_i32_0 : i32, i32, i32
  }
  func.func @transform_12(%arg0: i32, %arg1: i32) -> (i32, i32, i32) {
    %c0_i32 = arith.constant 0 : i32
    %c0_i32_0 = arith.constant 0 : i32
    %c0_i32_1 = arith.constant 0 : i32
    return %arg0, %c0_i32, %c0_i32_0 : i32, i32, i32
  }
}

</mosaic_0001>

<llo_original>
// kernel: tpu_custom_call.1
$region0: #{tpu_custom_call.1}
  #allocation0 [shape = 'u32[]', space=smem, size = 0x4, offset = 0x4, fixed_abs, tag = 'smem constant byte address 0x4 - core index']
  #allocation1 [shape = 'u32[144,128]{1,0:T(1,128)}', space=vmem, size = 0x12000, scoped, tag = 'internal scratch']
  #allocation2 [shape = 'f32[1,128]{1,0:T(1,128)}', space=vmem, size = 0x200, scoped, tag = 'scratch operand']
  #allocation3 [shape = 'f32[1,1]{1,0:T(1,128)S(1)}', space=vmem, size = 0x200, scoped, tag = 'scoped memory for tpu_custom_call.1']
  %s0 = inlined_call_operand.vmem [shape: f32[2,24,2,128], index: 0, kind: input, shape index: {}]
  %s1 = inlined_call_operand.vmem [shape: f32[128,128], index: 1, kind: input, shape index: {}]
  %s2 = inlined_call_operand.vmem [shape: f32[16,1], index: 2, kind: input, shape index: {}]
  %s3 = inlined_call_operand.vmem [shape: f32[16,1], index: 3, kind: input, shape index: {}]
  %s4 = inlined_call_operand.vmem [shape: f32[64,16], index: 4, kind: input, shape index: {}]
  %s5 = inlined_call_operand.vmem [shape: f32[64,16], index: 5, kind: input, shape index: {}]
  %s6 = inlined_call_operand.vmem [shape: f32[64,1], index: 6, kind: input, shape index: {}]
  %s7 = inlined_call_operand.vmem [shape: f32[1,16], index: 7, kind: input, shape index: {}]
  %s8 = inlined_call_operand.vmem [shape: f32[1,16], index: 8, kind: input, shape index: {}]
  %s9 = inlined_call_operand.<no memory space> [shape: f32[1,1], index: 9, kind: input, shape index: {}]
  %s10 = inlined_call_operand.hbm [shape: f32[2,24,1,128], index: 10, kind: output, shape index: {0}]
  %s11 = inlined_call_operand.hbm [shape: f32[2,16,128], index: 11, kind: output, shape index: {1}]
  %s12 = inlined_call_operand.hbm [shape: f32[2,16,128], index: 12, kind: output, shape index: {2}]
  %13 = xla_tuple %s10, %s11, %s12
  %s14 = sld [smem:[#allocation0]]
  $region93: #{tpu_custom_call.1} parent=0
    _
  %s16 = ssub.s32 1, %s14
  %s17 = scalar_select 0, %s16, %s14
  %v18 = vstv %s9
  %19 = vst [vmem:[#allocation3] sm:$0x1] %v18
  $region1: #{tpu_custom_call.1} parent=0
    #allocation4 [shape = 'u8[12288]{0}', space=vmem, size = 0x3000, scoped, tag = 'output window, operand 0']
    #allocation5 [shape = 's32[2]{0}', space=sflag, size = 0x8, scoped, tag = 'scoped memory for tpu_custom_call.1']
    #allocation6 [shape = 'u8[16384]{0}', space=vmem, size = 0x4000, scoped, tag = 'output window, operand 1']
    #allocation7 [shape = 's32[2]{0}', space=sflag, size = 0x8, scoped, tag = 'scoped memory for tpu_custom_call.1']
    #allocation8 [shape = 'u8[16384]{0}', space=vmem, size = 0x4000, scoped, tag = 'output window, operand 2']
    %20 = vsyncpa [#allocation5], 0
    %s21 = scalar_lea.sflag [#allocation5], 1
    %22 = vsyncpa %s21, 0
    %23 = vsyncpa [#allocation7], 0
    %s24 = scalar_lea.sflag [#allocation7], 1
    %25 = vsyncpa %s24, 0
    loop: start=0, step=1, limit=6
    $region2: #{tpu_custom_call.1} parent=1 // loop_pre_header
      _
    $region3: #{tpu_custom_call.1} parent=1 // loop_header
      %s27 = sphi 0, %s31
      %p28 = scmp.ge.s32.totalorder %s27, 6
      %s34 = sphi 0, %s46
      %s35 = sphi 0, %s42
      %s36 = sphi 0, %s34
      %s37 = sphi 0, %s35
      %s38 = sphi 0, %s36
      %s39 = sphi 0, %s37
      %s51 = sphi 0, %s53
      %s54 = sphi 0, %s51
      %s55 = sphi 0, %s54
      %s71 = sphi 0, %s55
      %s75 = sphi 0, %s75
      %s77 = sphi 0, %s75
      %s78 = sphi 0, %s77
      %s92 = sphi 0, %s78
      %s96 = sphi 0, %s96
      %s98 = sphi 0, %s96
      %s99 = sphi 0, %s98
      %s113 = sphi 0, %s99
      %s117 = sphi 0, %s117
      %s119 = sphi 0, %s117
      %s120 = sphi 0, %s119
      %s134 = sphi 0, %s120
      %s138 = sphi 0, %s138
      %s140 = sphi 0, %s138
      %s141 = sphi 0, %s140
      %s155 = sphi 0, %s141
      %s159 = sphi 0, %s159
      %s161 = sphi 0, %s159
      %s162 = sphi 0, %s161
      %s176 = sphi 0, %s162
      %s180 = sphi 0, %s180
      %s182 = sphi 0, %s180
      %s183 = sphi 0, %s182
      %s197 = sphi 0, %s183
      %s201 = sphi 0, %s201
      %s203 = sphi 0, %s201
      %s204 = sphi 0, %s203
      %s218 = sphi 0, %s204
      %s222 = sphi 0, %s222
      %s224 = sphi 0, %s222
      %s225 = sphi 0, %s224
      %s239 = sphi 0, %s225
      %s243 = sphi 0, %s243
      %s245 = sphi 0, %s243
      %s246 = sphi 0, %s245
      %s260 = sphi 0, %s246
      %s268 = sphi 0, %s270
      %s271 = sphi 0, %s268
      %s272 = sphi 0, %s271
      %s288 = sphi 0, %s272
      %s294 = sphi 0, %s296
      %s297 = sphi 0, %s294
      %s298 = sphi 0, %s297
      %s314 = sphi 0, %s298
      %s320 = sphi 0, %s322
      %s323 = sphi 0, %s320
      %s324 = sphi 0, %s323
      %s340 = sphi 0, %s324
    $region4: #{tpu_custom_call.1} parent=1 // loop_header_branch
      %30 = sbr.rel (%p28) target = $region8
    $region5: #{tpu_custom_call.1} parent=1 // loop_body
      %s32 = ssub.s32 %s27, 1
      %s33 = ssub.s32 %s27, 2
      %s40 = sadd.s32 1, %s35
      %p41 = scmp.ge.s32.totalorder %s40, 2
      %s42 = scalar_select %p41, 0, %s40
      %s43 = sadd.s32 1, %s34
      %s44 = scalar_select %p41, %s43, %s34
      %p45 = scmp.ge.s32.totalorder %s44, 2
      %s46 = scalar_select %p45, 0, %s44
      %s47 = ssub.s32 %s34, %s46
      %s48 = ssub.s32 %s35, %s42
      %s49 = sor.u32 %s47, %s48
      %p50 = scmp.eq.s32.totalorder %s49, 0
      %s52 = sadd.s32 %s51, 1
      %s53 = scalar_select %p50, %s51, %s52
      %p56 = pneg %p50
      %p57 = scmp.eq.s32.totalorder %s27, 3
      %p58 = por %p56, %p57
      %p59 = scmp.ne.s32.totalorder %s51, %s54
      %p60 = scmp.eq.s32.totalorder %s27, 0
      %p61 = por %p59, %p60
      %p62 = scmp.ne.s32.totalorder %s51, %s54
      %p63 = scmp.eq.s32.totalorder %s32, 3
      %p64 = por %p62, %p63
      %p65 = scmp.ne.s32.totalorder %s54, %s55
      %p66 = scmp.eq.s32.totalorder %s32, 0
      %p67 = por %p65, %p66
      %p68 = scmp.ne.s32.totalorder %s54, %s55
      %p69 = scmp.eq.s32.totalorder %s33, 3
      %p70 = por %p68, %p69
      %p72 = scmp.ne.s32.totalorder %s55, %s71
      %p73 = scmp.eq.s32.totalorder %s33, 0
      %p74 = por %p72, %p73
      %s76 = sadd.s32 %s75, 1
      %p79 = scmp.eq.s32.totalorder %s27, 3
      %p80 = scmp.ne.s32.totalorder %s75, %s77
      %p81 = scmp.eq.s32.totalorder %s27, 0
      %p82 = por %p80, %p81
      %p83 = scmp.ne.s32.totalorder %s75, %s77
      %p84 = scmp.eq.s32.totalorder %s32, 3
      %p85 = por %p83, %p84
      %p86 = scmp.ne.s32.totalorder %s77, %s78
      %p87 = scmp.eq.s32.totalorder %s32, 0
      %p88 = por %p86, %p87
      %p89 = scmp.ne.s32.totalorder %s77, %s78
      %p90 = scmp.eq.s32.totalorder %s33, 3
      %p91 = por %p89, %p90
      %p93 = scmp.ne.s32.totalorder %s78, %s92
      %p94 = scmp.eq.s32.totalorder %s33, 0
      %p95 = por %p93, %p94
      %s97 = sadd.s32 %s96, 1
      %p100 = scmp.eq.s32.totalorder %s27, 3
      %p101 = scmp.ne.s32.totalorder %s96, %s98
      %p102 = scmp.eq.s32.totalorder %s27, 0
      %p103 = por %p101, %p102
      %p104 = scmp.ne.s32.totalorder %s96, %s98
      %p105 = scmp.eq.s32.totalorder %s32, 3
      %p106 = por %p104, %p105
      %p107 = scmp.ne.s32.totalorder %s98, %s99
      %p108 = scmp.eq.s32.totalorder %s32, 0
      %p109 = por %p107, %p108
      %p110 = scmp.ne.s32.totalorder %s98, %s99
      %p111 = scmp.eq.s32.totalorder %s33, 3
      %p112 = por %p110, %p111
      %p114 = scmp.ne.s32.totalorder %s99, %s113
      %p115 = scmp.eq.s32.totalorder %s33, 0
      %p116 = por %p114, %p115
      %s118 = sadd.s32 %s117, 1
      %p121 = scmp.eq.s32.totalorder %s27, 3
      %p122 = scmp.ne.s32.totalorder %s117, %s119
      %p123 = scmp.eq.s32.totalorder %s27, 0
      %p124 = por %p122, %p123
      %p125 = scmp.ne.s32.totalorder %s117, %s119
      %p126 = scmp.eq.s32.totalorder %s32, 3
      %p127 = por %p125, %p126
      %p128 = scmp.ne.s32.totalorder %s119, %s120
      %p129 = scmp.eq.s32.totalorder %s32, 0
      %p130 = por %p128, %p129
      %p131 = scmp.ne.s32.totalorder %s119, %s120
      %p132 = scmp.eq.s32.totalorder %s33, 3
      %p133 = por %p131, %p132
      %p135 = scmp.ne.s32.totalorder %s120, %s134
      %p136 = scmp.eq.s32.totalorder %s33, 0
      %p137 = por %p135, %p136
      %s139 = sadd.s32 %s138, 1
      %p142 = scmp.eq.s32.totalorder %s27, 3
      %p143 = scmp.ne.s32.totalorder %s138, %s140
      %p144 = scmp.eq.s32.totalorder %s27, 0
      %p145 = por %p143, %p144
      %p146 = scmp.ne.s32.totalorder %s138, %s140
      %p147 = scmp.eq.s32.totalorder %s32, 3
      %p148 = por %p146, %p147
      %p149 = scmp.ne.s32.totalorder %s140, %s141
      %p150 = scmp.eq.s32.totalorder %s32, 0
      %p151 = por %p149, %p150
      %p152 = scmp.ne.s32.totalorder %s140, %s141
      %p153 = scmp.eq.s32.totalorder %s33, 3
      %p154 = por %p152, %p153
      %p156 = scmp.ne.s32.totalorder %s141, %s155
      %p157 = scmp.eq.s32.totalorder %s33, 0
      %p158 = por %p156, %p157
      %s160 = sadd.s32 %s159, 1
      %p163 = scmp.eq.s32.totalorder %s27, 3
      %p164 = scmp.ne.s32.totalorder %s159, %s161
      %p165 = scmp.eq.s32.totalorder %s27, 0
      %p166 = por %p164, %p165
      %p167 = scmp.ne.s32.totalorder %s159, %s161
      %p168 = scmp.eq.s32.totalorder %s32, 3
      %p169 = por %p167, %p168
      %p170 = scmp.ne.s32.totalorder %s161, %s162
      %p171 = scmp.eq.s32.totalorder %s32, 0
      %p172 = por %p170, %p171
      %p173 = scmp.ne.s32.totalorder %s161, %s162
      %p174 = scmp.eq.s32.totalorder %s33, 3
      %p175 = por %p173, %p174
      %p177 = scmp.ne.s32.totalorder %s162, %s176
      %p178 = scmp.eq.s32.totalorder %s33, 0
      %p179 = por %p177, %p178
      %s181 = sadd.s32 %s180, 1
      %p184 = scmp.eq.s32.totalorder %s27, 3
      %p185 = scmp.ne.s32.totalorder %s180, %s182
      %p186 = scmp.eq.s32.totalorder %s27, 0
      %p187 = por %p185, %p186
      %p188 = scmp.ne.s32.totalorder %s180, %s182
      %p189 = scmp.eq.s32.totalorder %s32, 3
      %p190 = por %p188, %p189
      %p191 = scmp.ne.s32.totalorder %s182, %s183
      %p192 = scmp.eq.s32.totalorder %s32, 0
      %p193 = por %p191, %p192
      %p194 = scmp.ne.s32.totalorder %s182, %s183
      %p195 = scmp.eq.s32.totalorder %s33, 3
      %p196 = por %p194, %p195
      %p198 = scmp.ne.s32.totalorder %s183, %s197
      %p199 = scmp.eq.s32.totalorder %s33, 0
      %p200 = por %p198, %p199
      %s202 = sadd.s32 %s201, 1
      %p205 = scmp.eq.s32.totalorder %s27, 3
      %p206 = scmp.ne.s32.totalorder %s201, %s203
      %p207 = scmp.eq.s32.totalorder %s27, 0
      %p208 = por %p206, %p207
      %p209 = scmp.ne.s32.totalorder %s201, %s203
      %p210 = scmp.eq.s32.totalorder %s32, 3
      %p211 = por %p209, %p210
      %p212 = scmp.ne.s32.totalorder %s203, %s204
      %p213 = scmp.eq.s32.totalorder %s32, 0
      %p214 = por %p212, %p213
      %p215 = scmp.ne.s32.totalorder %s203, %s204
      %p216 = scmp.eq.s32.totalorder %s33, 3
      %p217 = por %p215, %p216
      %p219 = scmp.ne.s32.totalorder %s204, %s218
      %p220 = scmp.eq.s32.totalorder %s33, 0
      %p221 = por %p219, %p220
      %s223 = sadd.s32 %s222, 1
      %p226 = scmp.eq.s32.totalorder %s27, 3
      %p227 = scmp.ne.s32.totalorder %s222, %s224
      %p228 = scmp.eq.s32.totalorder %s27, 0
      %p229 = por %p227, %p228
      %p230 = scmp.ne.s32.totalorder %s222, %s224
      %p231 = scmp.eq.s32.totalorder %s32, 3
      %p232 = por %p230, %p231
      %p233 = scmp.ne.s32.totalorder %s224, %s225
      %p234 = scmp.eq.s32.totalorder %s32, 0
      %p235 = por %p233, %p234
      %p236 = scmp.ne.s32.totalorder %s224, %s225
      %p237 = scmp.eq.s32.totalorder %s33, 3
      %p238 = por %p236, %p237
      %p240 = scmp.ne.s32.totalorder %s225, %s239
      %p241 = scmp.eq.s32.totalorder %s33, 0
      %p242 = por %p240, %p241
      %s244 = sadd.s32 %s243, 1
      %p247 = scmp.eq.s32.totalorder %s27, 3
      %p248 = scmp.ne.s32.totalorder %s243, %s245
      %p249 = scmp.eq.s32.totalorder %s27, 0
      %p250 = por %p248, %p249
      %p251 = scmp.ne.s32.totalorder %s243, %s245
      %p252 = scmp.eq.s32.totalorder %s32, 3
      %p253 = por %p251, %p252
      %p254 = scmp.ne.s32.totalorder %s245, %s246
      %p255 = scmp.eq.s32.totalorder %s32, 0
      %p256 = por %p254, %p255
      %p257 = scmp.ne.s32.totalorder %s245, %s246
      %p258 = scmp.eq.s32.totalorder %s33, 3
      %p259 = por %p257, %p258
      %p261 = scmp.ne.s32.totalorder %s246, %s260
      %p262 = scmp.eq.s32.totalorder %s33, 0
      %p263 = por %p261, %p262
      %s264 = ssub.s32 %s34, %s46
      %s265 = ssub.s32 %s35, %s42
      %s266 = sor.u32 %s264, %s265
      %p267 = scmp.eq.s32.totalorder %s266, 0
      %s269 = sadd.s32 %s268, 1
      %s270 = scalar_select %p267, %s268, %s269
      %p273 = pneg %p267
      %p274 = scmp.eq.s32.totalorder %s27, 3
      %p275 = por %p273, %p274
      %p276 = scmp.ne.s32.totalorder %s268, %s271
      %p277 = scmp.eq.s32.totalorder %s27, 0
      %p278 = por %p276, %p277
      %p279 = scmp.ne.s32.totalorder %s268, %s271
      %p280 = scmp.eq.s32.totalorder %s32, 3
      %p281 = por %p279, %p280
      %p282 = scmp.ne.s32.totalorder %s271, %s272
      %p283 = scmp.eq.s32.totalorder %s32, 0
      %p284 = por %p282, %p283
      %p285 = scmp.ne.s32.totalorder %s271, %s272
      %p286 = scmp.eq.s32.totalorder %s33, 3
      %p287 = por %p285, %p286
      %p289 = scmp.ne.s32.totalorder %s272, %s288
      %p290 = scmp.eq.s32.totalorder %s33, 0
      %p291 = por %p289, %p290
      %s292 = ssub.s32 %s34, %s46
      %p293 = scmp.eq.s32.totalorder %s292, 0
      %s295 = sadd.s32 %s294, 1
      %s296 = scalar_select %p293, %s294, %s295
      %p299 = pneg %p293
      %p300 = scmp.eq.s32.totalorder %s27, 3
      %p301 = por %p299, %p300
      %p302 = scmp.ne.s32.totalorder %s294, %s297
      %p303 = scmp.eq.s32.totalorder %s27, 0
      %p304 = por %p302, %p303
      %p305 = scmp.ne.s32.totalorder %s294, %s297
      %p306 = scmp.eq.s32.totalorder %s32, 3
      %p307 = por %p305, %p306
      %p308 = scmp.ne.s32.totalorder %s297, %s298
      %p309 = scmp.eq.s32.totalorder %s32, 0
      %p310 = por %p308, %p309
      %p311 = scmp.ne.s32.totalorder %s297, %s298
      %p312 = scmp.eq.s32.totalorder %s33, 3
      %p313 = por %p311, %p312
      %p315 = scmp.ne.s32.totalorder %s298, %s314
      %p316 = scmp.eq.s32.totalorder %s33, 0
      %p317 = por %p315, %p316
      %s318 = ssub.s32 %s34, %s46
      %p319 = scmp.eq.s32.totalorder %s318, 0
      %s321 = sadd.s32 %s320, 1
      %s322 = scalar_select %p319, %s320, %s321
      %p325 = pneg %p319
      %p326 = scmp.eq.s32.totalorder %s27, 3
      %p327 = por %p325, %p326
      %p328 = scmp.ne.s32.totalorder %s320, %s323
      %p329 = scmp.eq.s32.totalorder %s27, 0
      %p330 = por %p328, %p329
      %p331 = scmp.ne.s32.totalorder %s320, %s323
      %p332 = scmp.eq.s32.totalorder %s32, 3
      %p333 = por %p331, %p332
      %p334 = scmp.ne.s32.totalorder %s323, %s324
      %p335 = scmp.eq.s32.totalorder %s32, 0
      %p336 = por %p334, %p335
      %p337 = scmp.ne.s32.totalorder %s323, %s324
      %p338 = scmp.eq.s32.totalorder %s33, 3
      %p339 = por %p337, %p338
      %p341 = scmp.ne.s32.totalorder %s324, %s340
      %p342 = scmp.eq.s32.totalorder %s33, 0
      %p343 = por %p341, %p342
      %p344 = scmp.le.s32.totalorder 1, %s27
      %p345 = scmp.lt.s32.totalorder %s27, 5
      %p346 = pnand %p344, %p345
      %p347 = pneg %p346
      // Predicated region
      $region9: #{tpu_custom_call.1} parent=5 // pred_check
        _
      $region10: #{tpu_custom_call.1} parent=5 // pred_check_branch
        %349 = sbr.rel (%p346) target = $region12
      $region11: #{tpu_custom_call.1} parent=5 // pred_region
        %s350 = ssub.s32 %s27, 1
        // Predicated region
        $region13: #{tpu_custom_call.1} parent=11 // pred_check
          %p351 = pneg %p88
        $region14: #{tpu_custom_call.1} parent=11 // pred_check_branch
          %353 = sbr.rel (%p351) target = $region16
        $region15: #{tpu_custom_call.1} parent=11 // pred_region
          _
        $region16: #{tpu_custom_call.1} parent=11 // pred_fallthru
          _
        // Predicated region
        $region17: #{tpu_custom_call.1} parent=11 // pred_check
          %p354 = pneg %p109
        $region18: #{tpu_custom_call.1} parent=11 // pred_check_branch
          %356 = sbr.rel (%p354) target = $region20
        $region19: #{tpu_custom_call.1} parent=11 // pred_region
          _
        $region20: #{tpu_custom_call.1} parent=11 // pred_fallthru
          _
        // Predicated region
        $region21: #{tpu_custom_call.1} parent=11 // pred_check
          %p357 = pneg %p130
        $region22: #{tpu_custom_call.1} parent=11 // pred_check_branch
          %359 = sbr.rel (%p357) target = $region24
        $region23: #{tpu_custom_call.1} parent=11 // pred_region
          _
        $region24: #{tpu_custom_call.1} parent=11 // pred_fallthru
          _
        // Predicated region
        $region25: #{tpu_custom_call.1} parent=11 // pred_check
          %p360 = pneg %p151
        $region26: #{tpu_custom_call.1} parent=11 // pred_check_branch
          %362 = sbr.rel (%p360) target = $region28
        $region27: #{tpu_custom_call.1} parent=11 // pred_region
          _
        $region28: #{tpu_custom_call.1} parent=11 // pred_fallthru
          _
        // Predicated region
        $region29: #{tpu_custom_call.1} parent=11 // pred_check
          %p363 = pneg %p172
        $region30: #{tpu_custom_call.1} parent=11 // pred_check_branch
          %365 = sbr.rel (%p363) target = $region32
        $region31: #{tpu_custom_call.1} parent=11 // pred_region
          _
        $region32: #{tpu_custom_call.1} parent=11 // pred_fallthru
          _
        // Predicated region
        $region33: #{tpu_custom_call.1} parent=11 // pred_check
          %p366 = pneg %p193
        $region34: #{tpu_custom_call.1} parent=11 // pred_check_branch
          %368 = sbr.rel (%p366) target = $region36
        $region35: #{tpu_custom_call.1} parent=11 // pred_region
          _
        $region36: #{tpu_custom_call.1} parent=11 // pred_fallthru
          _
        // Predicated region
        $region37: #{tpu_custom_call.1} parent=11 // pred_check
          %p369 = pneg %p214
        $region38: #{tpu_custom_call.1} parent=11 // pred_check_branch
          %371 = sbr.rel (%p369) target = $region40
        $region39: #{tpu_custom_call.1} parent=11 // pred_region
          _
        $region40: #{tpu_custom_call.1} parent=11 // pred_fallthru
          _
        // Predicated region
        $region41: #{tpu_custom_call.1} parent=11 // pred_check
          %p372 = pneg %p235
        $region42: #{tpu_custom_call.1} parent=11 // pred_check_branch
          %374 = sbr.rel (%p372) target = $region44
        $region43: #{tpu_custom_call.1} parent=11 // pred_region
          _
        $region44: #{tpu_custom_call.1} parent=11 // pred_fallthru
          _
        // Predicated region
        $region45: #{tpu_custom_call.1} parent=11 // pred_check
          %p375 = pneg %p256
        $region46: #{tpu_custom_call.1} parent=11 // pred_check_branch
          %377 = sbr.rel (%p375) target = $region48
        $region47: #{tpu_custom_call.1} parent=11 // pred_region
          _
        $region48: #{tpu_custom_call.1} parent=11 // pred_fallthru
          _
      $region12: #{tpu_custom_call.1} parent=5 // pred_fallthru
        _
      %p378 = scmp.lt.s32.totalorder %s27, 4
      // Predicated region
      $region49: #{tpu_custom_call.1} parent=5 // pred_check
        %p379 = pneg %p378
      $region50: #{tpu_custom_call.1} parent=5 // pred_check_branch
        %381 = sbr.rel (%p379) target = $region52
      $region51: #{tpu_custom_call.1} parent=5 // pred_region
        // Predicated region
        $region53: #{tpu_custom_call.1} parent=51 // pred_check
          %p382 = pneg %p61
        $region54: #{tpu_custom_call.1} parent=51 // pred_check_branch
          %384 = sbr.rel (%p382) target = $region56
        $region55: #{tpu_custom_call.1} parent=51 // pred_region
          %s385 = smul.u32 12, %s35
          %p386 = scmp.lt.s32.totalorder %s34, 1
          %s387 = scalar_select %p386, %s34, 1
          %p388 = scmp.lt.s32.totalorder %s385, 23
          %s389 = scalar_select %p388, %s385, 23
          %s390 = smul.addr %s387, 24
          %s391 = sadd.s32 %s389, %s390
          %s392 = smul.addr %s391, 2
          %s393 = scalar_lea.vmem %s0, %s392
          %s394 = smul.u32 12, %s35
        $region56: #{tpu_custom_call.1} parent=51 // pred_fallthru
          _
      $region52: #{tpu_custom_call.1} parent=5 // pred_fallthru
        _
      %p395 = scmp.le.s32.totalorder 1, %s27
      %p396 = scmp.lt.s32.totalorder %s27, 5
      %p397 = pnand %p395, %p396
      %p398 = pneg %p397
      // Predicated region
      $region57: #{tpu_custom_call.1} parent=5 // pred_check
        _
      $region58: #{tpu_custom_call.1} parent=5 // pred_check_branch
        %400 = sbr.rel (%p397) target = $region60
      $region59: #{tpu_custom_call.1} parent=5 // pred_region
        %s401 = ssub.s32 %s27, 1
        %s402 = smul.u32 12, %s37
        %p403 = scmp.lt.s32.totalorder %s36, 1
        %s404 = scalar_select %p403, %s36, 1
        %p405 = scmp.lt.s32.totalorder %s402, 23
        %s406 = scalar_select %p405, %s402, 23
        %s407 = smul.addr %s404, 24
        %s408 = sadd.s32 %s406, %s407
        %s409 = smul.addr %s408, 2
        %s410 = scalar_lea.vmem %s0, %s409
        %p411 = pneg %p67
        %p412 = pneg %p64
        %p413 = pneg %p88
        %p414 = pneg %p85
        %p415 = pneg %p109
        %p416 = pneg %p106
        %p417 = pneg %p130
        %p418 = pneg %p127
        %p419 = pneg %p151
        %p420 = pneg %p148
        %p421 = pneg %p172
        %p422 = pneg %p169
        %p423 = pneg %p193
        %p424 = pneg %p190
        %p425 = pneg %p214
        %p426 = pneg %p211
        %p427 = pneg %p235
        %p428 = pneg %p232
        %p429 = pneg %p256
        %p430 = pneg %p253
        %p431 = pneg %p284
        %p432 = pneg %p281
        %s433 = sand.u32 %s271, 1
        %s434 = scalar_lea.sflag [#allocation5], %s433
        %s435 = sand.u32 %s271, 1
        %s436 = smul.addr %s435, 12
        %s437 = scalar_lea.vmem [#allocation4], %s436
        %p438 = pneg %p310
        %p439 = pneg %p307
        %s440 = sand.u32 %s32, 1
        %s441 = scalar_lea.sflag [#allocation7], %s440
        %s442 = sand.u32 %s297, 1
        %s443 = smul.addr %s442, 16
        %s444 = scalar_lea.vmem [#allocation6], %s443
        %p445 = pneg %p336
        %p446 = pneg %p333
        %s447 = sand.u32 %s32, 1
        %s448 = scalar_lea.sflag [#allocation7], %s447
        %s449 = sand.u32 %s323, 1
        %s450 = smul.addr %s449, 16
        %s451 = scalar_lea.vmem [#allocation8], %s450
        %s452 = smul.u32 12, %s37
        %p453 = scmp.lt.s32.totalorder %s36, 1
        %s454 = scalar_select %p453, %s36, 1
        %p455 = scmp.lt.s32.totalorder %s452, 23
        %s456 = scalar_select %p455, %s452, 23
        %s457 = smul.addr %s454, 24
        %s458 = sadd.s32 %s456, %s457
        %s459 = smul.addr %s458, 2
        %s460 = scalar_lea.vmem %s0, %s459
        %s461 = smul.u32 12, %s37
        %s462 = smul.u32 12, %s37
        %p463 = scmp.eq.s32.totalorder %s37, 0
        // Predicated region
        $region61: #{tpu_custom_call.1} parent=59 // pred_check
          %p464 = pneg %p463
        $region62: #{tpu_custom_call.1} parent=59 // pred_check_branch
          %466 = sbr.rel (%p464) target = $region64
        $region63: #{tpu_custom_call.1} parent=59 // pred_region
          %467 = vst [vmem:[%s444] sm:$0xff] 0.0
          %468 = vst [vmem:[%s444 + $0x8] sm:$0xff] 0.0
          %469 = vst [vmem:[%s451] sm:$0xff] 0.0
          %470 = vst [vmem:[%s451 + $0x8] sm:$0xff] 0.0
          %471 = vst [vmem:[#allocation2] sm:$0x1] 0.0
        $region64: #{tpu_custom_call.1} parent=59 // pred_fallthru
          _
        %v472 = vld [vmem:[%s444] sm:$0xff]
        %v473 = vld [vmem:[%s444 + $0x8] sm:$0xff]
        %v474 = vld [vmem:[%s451] sm:$0xff]
        %v475 = vld [vmem:[%s451 + $0x8] sm:$0xff]
        %v476 = vld [vmem:[#allocation2] sm:$0x1]
        %v477 = vld [vmem:[%s1] sm:$0xff]
        %v478 = vld [vmem:[%s1 + $0x8] sm:$0xff]
        %v479 = vld [vmem:[%s1 + $0x10] sm:$0xff]
        %v480 = vld [vmem:[%s1 + $0x18] sm:$0xff]
        %v481 = vld [vmem:[%s1 + $0x20] sm:$0xff]
        %v482 = vld [vmem:[%s1 + $0x28] sm:$0xff]
        %v483 = vld [vmem:[%s1 + $0x30] sm:$0xff]
        %v484 = vld [vmem:[%s1 + $0x38] sm:$0xff]
        %v485 = vld [vmem:[%s1 + $0x40] sm:$0xff]
        %v486 = vld [vmem:[%s1 + $0x48] sm:$0xff]
        %v487 = vld [vmem:[%s1 + $0x50] sm:$0xff]
        %v488 = vld [vmem:[%s1 + $0x58] sm:$0xff]
        %v489 = vld [vmem:[%s1 + $0x60] sm:$0xff]
        %v490 = vld [vmem:[%s1 + $0x68] sm:$0xff]
        %v491 = vld [vmem:[%s1 + $0x70] sm:$0xff]
        %v492 = vld [vmem:[%s1 + $0x78] sm:$0xff]
        %v493 = vld [vmem:[%s4] sm:$0xff]
        %v494 = vld [vmem:[%s4 + $0x8] sm:$0xff]
        %v495 = vld [vmem:[%s4 + $0x10] sm:$0xff]
        %v496 = vld [vmem:[%s4 + $0x18] sm:$0xff]
        %v497 = vld [vmem:[%s4 + $0x20] sm:$0xff]
        %v498 = vld [vmem:[%s4 + $0x28] sm:$0xff]
        %v499 = vld [vmem:[%s4 + $0x30] sm:$0xff]
        %v500 = vld [vmem:[%s4 + $0x38] sm:$0xff]
        %v501 = vld [vmem:[%s5] sm:$0xff]
        %v502 = vld [vmem:[%s5 + $0x8] sm:$0xff]
        %v503 = vld [vmem:[%s5 + $0x10] sm:$0xff]
        %v504 = vld [vmem:[%s5 + $0x18] sm:$0xff]
        %v505 = vld [vmem:[%s5 + $0x20] sm:$0xff]
        %v506 = vld [vmem:[%s5 + $0x28] sm:$0xff]
        %v507 = vld [vmem:[%s5 + $0x30] sm:$0xff]
        %v508 = vld [vmem:[%s5 + $0x38] sm:$0xff]
        %v509 = vld [vmem:[%s7] sm:$0x1]
        %v510 = vld [vmem:[%s8] sm:$0x1]
        %v511 = vld [vmem:[%s2] sm:$0xff]
        %v512 = vld [vmem:[%s2 + $0x8] sm:$0xff]
        %514 = vset.pattern.permute.xlu0 0
        %515 = vperm.xlu0 %514, %v511
        %v516 = vpop.permute.xlu0 %515
        %519 = vset.pattern.permute.xlu0 0
        %520 = vperm.xlu0 %519, %v512
        %v521 = vpop.permute.xlu0 %520
        %v523 = vld [vmem:[%s3] sm:$0xff]
        %v524 = vld [vmem:[%s3 + $0x8] sm:$0xff]
        %526 = vset.pattern.permute.xlu0 0
        %527 = vperm.xlu0 %526, %v523
        %v528 = vpop.permute.xlu0 %527
        %531 = vset.pattern.permute.xlu0 0
        %532 = vperm.xlu0 %531, %v524
        %v533 = vpop.permute.xlu0 %532
        %v535 = vld [vmem:[%s6] sm:$0xff]
        %v536 = vld [vmem:[%s6 + $0x8] sm:$0xff]
        %v537 = vld [vmem:[%s6 + $0x10] sm:$0xff]
        %v538 = vld [vmem:[%s6 + $0x18] sm:$0xff]
        %v539 = vld [vmem:[%s6 + $0x20] sm:$0xff]
        %v540 = vld [vmem:[%s6 + $0x28] sm:$0xff]
        %v541 = vld [vmem:[%s6 + $0x30] sm:$0xff]
        %v542 = vld [vmem:[%s6 + $0x38] sm:$0xff]
        %544 = vset.pattern.permute.xlu0 0
        %545 = vperm.xlu0 %544, %v535
        %v546 = vpop.permute.xlu0 %545
        %549 = vset.pattern.permute.xlu0 0
        %550 = vperm.xlu0 %549, %v536
        %v551 = vpop.permute.xlu0 %550
        %554 = vset.pattern.permute.xlu0 0
        %555 = vperm.xlu0 %554, %v537
        %v556 = vpop.permute.xlu0 %555
        %559 = vset.pattern.permute.xlu0 0
        %560 = vperm.xlu0 %559, %v538
        %v561 = vpop.permute.xlu0 %560
        %564 = vset.pattern.permute.xlu0 0
        %565 = vperm.xlu0 %564, %v539
        %v566 = vpop.permute.xlu0 %565
        %569 = vset.pattern.permute.xlu0 0
        %570 = vperm.xlu0 %569, %v540
        %v571 = vpop.permute.xlu0 %570
        %574 = vset.pattern.permute.xlu0 0
        %575 = vperm.xlu0 %574, %v541
        %v576 = vpop.permute.xlu0 %575
        %579 = vset.pattern.permute.xlu0 0
        %580 = vperm.xlu0 %579, %v542
        %v581 = vpop.permute.xlu0 %580
        %v583 = vld [vmem:[#allocation3] sm:$0x1]
        %585 = vset.pattern.permute.xlu0 0
        %586 = vperm.xlu0 %585, %v583
        %v587 = vpop.permute.xlu0 %586
        %v589 = vlaneseq
        %v590 = vshrl.u32 %v589, 7
        %v591 = vsub.s32 0, %v590
        %v592 = vrot.slane %v587, %v591
        %v593 = vld [vmem:[%s460] sm:$0x3]
        %v595 = vlaneseq
        %v596 = vshrl.u32 %v595, 7
        %v597 = vsub.s32 0, %v596
        %v598 = vrot.slane %v476, %v597
        %v600 = vmul.f32 %v593, %v598
        %v602 = vrot.slane %v600, 1
        %v604 = vadd.f32 %v593, %v602
        %605 = vmatprep.subr.mxu0 0.0
        %606 = vmatpush1.msra.mxu0 %v477
        %607 = vmatprep.subr.mxu0 0.0
        %608 = vmatpush1.msra.mxu0 %v478
        %609 = vmatprep.subr.mxu0 0.0
        %610 = vmatpush1.msra.mxu0 %v479
        %611 = vmatprep.subr.mxu0 0.0
        %612 = vmatpush1.msra.mxu0 %v480
        %613 = vmatprep.subr.mxu0 0.0
        %614 = vmatpush1.msra.mxu0 %v481
        %615 = vmatprep.subr.mxu0 0.0
        %616 = vmatpush1.msra.mxu0 %v482
        %617 = vmatprep.subr.mxu0 0.0
        %618 = vmatpush1.msra.mxu0 %v483
        %619 = vmatprep.subr.mxu0 0.0
        %620 = vmatpush1.msra.mxu0 %v484
        %621 = vmatprep.subr.mxu0 0.0
        %622 = vmatpush1.msra.mxu0 %v485
        %623 = vmatprep.subr.mxu0 0.0
        %624 = vmatpush1.msra.mxu0 %v486
        %625 = vmatprep.subr.mxu0 0.0
        %626 = vmatpush1.msra.mxu0 %v487
        %627 = vmatprep.subr.mxu0 0.0
        %628 = vmatpush1.msra.mxu0 %v488
        %629 = vmatprep.subr.mxu0 0.0
        %630 = vmatpush1.msra.mxu0 %v489
        %631 = vmatprep.subr.mxu0 0.0
        %632 = vmatpush1.msra.mxu0 %v490
        %633 = vmatprep.subr.mxu0 0.0
        %634 = vmatpush1.msra.mxu0 %v491
        %635 = vmatprep.subr.mxu0 0.0
        %636 = vmatpush1.msra.mxu0 %v492
        %637 = vmatprep.subr.mxu0 0.0
        %638 = vmatpush1.msra.mxu0 0.0
        %639 = vmatprep.subr.mxu0 0.0
        %640 = vmatpush1.msra.mxu0 0.0
        %641 = vmatprep.subr.mxu0 0.0
        %642 = vmatpush1.msra.mxu0 0.0
        %643 = vmatprep.subr.mxu0 0.0
        %644 = vmatpush1.msra.mxu0 0.0
        %645 = vmatprep.subr.mxu0 0.0
        %646 = vmatpush1.msra.mxu0 0.0
        %647 = vmatprep.subr.mxu0 0.0
        %648 = vmatpush1.msra.mxu0 0.0
        %649 = vmatprep.subr.mxu0 0.0
        %650 = vmatpush1.msra.mxu0 0.0
        %651 = vmatprep.subr.mxu0 0.0
        %652 = vmatpush1.msra.mxu0 0.0
        %653 = vmatprep.subr.mxu0 0.0
        %654 = vmatpush1.msra.mxu0 0.0
        %655 = vmatprep.subr.mxu0 0.0
        %656 = vmatpush1.msra.mxu0 0.0
        %657 = vmatprep.subr.mxu0 0.0
        %658 = vmatpush1.msra.mxu0 0.0
        %659 = vmatprep.subr.mxu0 0.0
        %660 = vmatpush1.msra.mxu0 0.0
        %661 = vmatprep.subr.mxu0 0.0
        %662 = vmatpush1.msra.mxu0 0.0
        %663 = vmatprep.subr.mxu0 0.0
        %664 = vmatpush1.msra.mxu0 0.0
        %665 = vmatprep.subr.mxu0 0.0
        %666 = vmatpush1.msra.mxu0 0.0
        %667 = vmatprep.subr.mxu0 0.0
        %668 = vmatpush1.msra.mxu0 0.0
        %669 = vmatprep.mubr.f32.mxu0 0.0
        %670 = vmatmul.mubr.f32.gmra.mrb[0].mxu0 %v604
        %v671 = vpop.f32.mrb[0].mxu0
        %v672 = vadd.f32 0.0, %v671
        %v673 = vpop.f32.mrb[0].mxu0
        %674 = vdwg.mxu0
        %v675 = vlaneseq
        %v676 = vshrl.u32 %v675, 7
        %v677 = vsub.s32 0, %v676
        %v678 = vrot.slane %v672, %v677
        %v679 = vmul.f32 %v516, %v678
        %v680 = vmul.f32 %v521, %v678
        %v681 = vadd.f32 %v679, %v528
        %v682 = vadd.f32 %v680, %v533
        %v683 = vmax.f32 %v681, 0.0
        %v684 = vmax.f32 %v682, 0.0
        %vm685 = vcmask 130048
        %v687 = vsel %vm685, %v501, 0
        %v690 = vsel %vm685, %v502, 0
        %v693 = vsel %vm685, %v503, 0
        %v696 = vsel %vm685, %v504, 0
        %v699 = vsel %vm685, %v505, 0
        %v702 = vsel %vm685, %v506, 0
        %v705 = vsel %vm685, %v507, 0
        %v708 = vsel %vm685, %v508, 0
        %710 = vmatprep.subr.mxu0 0.0
        %711 = vmatpush1.msra.mxu0 %v472
        %712 = vmatprep.subr.mxu0 0.0
        %713 = vmatpush1.msra.mxu0 %v473
        %714 = vmatprep.subr.mxu0 0.0
        %715 = vmatpush1.msra.mxu0 0.0
        %716 = vmatprep.subr.mxu0 0.0
        %717 = vmatpush1.msra.mxu0 0.0
        %718 = vmatprep.subr.mxu0 0.0
        %719 = vmatpush1.msra.mxu0 0.0
        %720 = vmatprep.subr.mxu0 0.0
        %721 = vmatpush1.msra.mxu0 0.0
        %722 = vmatprep.subr.mxu0 0.0
        %723 = vmatpush1.msra.mxu0 0.0
        %724 = vmatprep.subr.mxu0 0.0
        %725 = vmatpush1.msra.mxu0 0.0
        %726 = vmatprep.subr.mxu0 0.0
        %727 = vmatpush1.msra.mxu0 0.0
        %728 = vmatprep.subr.mxu0 0.0
        %729 = vmatpush1.msra.mxu0 0.0
        %730 = vmatprep.subr.mxu0 0.0
        %731 = vmatpush1.msra.mxu0 0.0
        %732 = vmatprep.subr.mxu0 0.0
        %733 = vmatpush1.msra.mxu0 0.0
        %734 = vmatprep.subr.mxu0 0.0
        %735 = vmatpush1.msra.mxu0 0.0
        %736 = vmatprep.subr.mxu0 0.0
        %737 = vmatpush1.msra.mxu0 0.0
        %738 = vmatprep.subr.mxu0 0.0
        %739 = vmatpush1.msra.mxu0 0.0
        %740 = vmatprep.subr.mxu0 0.0
        %741 = vmatpush1.msra.mxu0 0.0
        %742 = vmatprep.subr.mxu0 0.0
        %743 = vmatpush1.msra.mxu0 0.0
        %744 = vmatprep.subr.mxu0 0.0
        %745 = vmatpush1.msra.mxu0 0.0
        %746 = vmatprep.subr.mxu0 0.0
        %747 = vmatpush1.msra.mxu0 0.0
        %748 = vmatprep.subr.mxu0 0.0
        %749 = vmatpush1.msra.mxu0 0.0
        %750 = vmatprep.subr.mxu0 0.0
        %751 = vmatpush1.msra.mxu0 0.0
        %752 = vmatprep.subr.mxu0 0.0
        %753 = vmatpush1.msra.mxu0 0.0
        %754 = vmatprep.subr.mxu0 0.0
        %755 = vmatpush1.msra.mxu0 0.0
        %756 = vmatprep.subr.mxu0 0.0
        %757 = vmatpush1.msra.mxu0 0.0
        %758 = vmatprep.subr.mxu0 0.0
        %759 = vmatpush1.msra.mxu0 0.0
        %760 = vmatprep.subr.mxu0 0.0
        %761 = vmatpush1.msra.mxu0 0.0
        %762 = vmatprep.subr.mxu0 0.0
        %763 = vmatpush1.msra.mxu0 0.0
        %764 = vmatprep.subr.mxu0 0.0
        %765 = vmatpush1.msra.mxu0 0.0
        %766 = vmatprep.subr.mxu0 0.0
        %767 = vmatpush1.msra.mxu0 0.0
        %768 = vmatprep.subr.mxu0 0.0
        %769 = vmatpush1.msra.mxu0 0.0
        %770 = vmatprep.subr.mxu0 0.0
        %771 = vmatpush1.msra.mxu0 0.0
        %772 = vmatprep.subr.mxu0 0.0
        %773 = vmatpush1.msra.mxu0 0.0
        %774 = vmatprep.mubr.f32.mxu0 0.0
        %775 = vmatmul.mubr.f32.gmra.mrb[0].mxu0 %v687
        %v776 = vpop.f32.mrb[0].mxu0
        %v777 = vadd.f32 0.0, %v776
        %v778 = vpop.f32.mrb[0].mxu0
        %779 = vmatprep.mubr.f32.mxu0 0.0
        %780 = vmatmul.mubr.f32.gmra.mrb[0].mxu0 %v690
        %v781 = vpop.f32.mrb[0].mxu0
        %v782 = vadd.f32 0.0, %v781
        %v783 = vpop.f32.mrb[0].mxu0
        %784 = vmatprep.mubr.f32.mxu0 0.0
        %785 = vmatmul.mubr.f32.gmra.mrb[0].mxu0 %v693
        %v786 = vpop.f32.mrb[0].mxu0
        %v787 = vadd.f32 0.0, %v786
        %v788 = vpop.f32.mrb[0].mxu0
        %789 = vmatprep.mubr.f32.mxu0 0.0
        %790 = vmatmul.mubr.f32.gmra.mrb[0].mxu0 %v696
        %v791 = vpop.f32.mrb[0].mxu0
        %v792 = vadd.f32 0.0, %v791
        %v793 = vpop.f32.mrb[0].mxu0
        %794 = vmatprep.mubr.f32.mxu0 0.0
        %795 = vmatmul.mubr.f32.gmra.mrb[0].mxu0 %v699
        %v796 = vpop.f32.mrb[0].mxu0
        %v797 = vadd.f32 0.0, %v796
        %v798 = vpop.f32.mrb[0].mxu0
        %799 = vmatprep.mubr.f32.mxu0 0.0
        %800 = vmatmul.mubr.f32.gmra.mrb[0].mxu0 %v702
        %v801 = vpop.f32.mrb[0].mxu0
        %v802 = vadd.f32 0.0, %v801
        %v803 = vpop.f32.mrb[0].mxu0
        %804 = vmatprep.mubr.f32.mxu0 0.0
        %805 = vmatmul.mubr.f32.gmra.mrb[0].mxu0 %v705
        %v806 = vpop.f32.mrb[0].mxu0
        %v807 = vadd.f32 0.0, %v806
        %v808 = vpop.f32.mrb[0].mxu0
        %809 = vmatprep.mubr.f32.mxu0 0.0
        %810 = vmatmul.mubr.f32.gmra.mrb[0].mxu0 %v708
        %v811 = vpop.f32.mrb[0].mxu0
        %v812 = vadd.f32 0.0, %v811
        %v813 = vpop.f32.mrb[0].mxu0
        %814 = vdwg.mxu0
        %v816 = vsel %vm685, %v493, 0
        %v819 = vsel %vm685, %v494, 0
        %v822 = vsel %vm685, %v495, 0
        %v825 = vsel %vm685, %v496, 0
        %v828 = vsel %vm685, %v497, 0
        %v831 = vsel %vm685, %v498, 0
        %v834 = vsel %vm685, %v499, 0
        %v837 = vsel %vm685, %v500, 0
        %839 = vmatprep.subr.mxu0 0.0
        %840 = vmatpush1.msra.mxu0 %v683
        %841 = vmatprep.subr.mxu0 0.0
        %842 = vmatpush1.msra.mxu0 %v684
        %843 = vmatprep.subr.mxu0 0.0
        %844 = vmatpush1.msra.mxu0 0.0
        %845 = vmatprep.subr.mxu0 0.0
        %846 = vmatpush1.msra.mxu0 0.0
        %847 = vmatprep.subr.mxu0 0.0
        %848 = vmatpush1.msra.mxu0 0.0
        %849 = vmatprep.subr.mxu0 0.0
        %850 = vmatpush1.msra.mxu0 0.0
        %851 = vmatprep.subr.mxu0 0.0
        %852 = vmatpush1.msra.mxu0 0.0
        %853 = vmatprep.subr.mxu0 0.0
        %854 = vmatpush1.msra.mxu0 0.0
        %855 = vmatprep.subr.mxu0 0.0
        %856 = vmatpush1.msra.mxu0 0.0
        %857 = vmatprep.subr.mxu0 0.0
        %858 = vmatpush1.msra.mxu0 0.0
        %859 = vmatprep.subr.mxu0 0.0
        %860 = vmatpush1.msra.mxu0 0.0
        %861 = vmatprep.subr.mxu0 0.0
        %862 = vmatpush1.msra.mxu0 0.0
        %863 = vmatprep.subr.mxu0 0.0
        %864 = vmatpush1.msra.mxu0 0.0
        %865 = vmatprep.subr.mxu0 0.0
        %866 = vmatpush1.msra.mxu0 0.0
        %867 = vmatprep.subr.mxu0 0.0
        %868 = vmatpush1.msra.mxu0 0.0
        %869 = vmatprep.subr.mxu0 0.0
        %870 = vmatpush1.msra.mxu0 0.0
        %871 = vmatprep.subr.mxu0 0.0
        %872 = vmatpush1.msra.mxu0 0.0
        %873 = vmatprep.subr.mxu0 0.0
        %874 = vmatpush1.msra.mxu0 0.0
        %875 = vmatprep.subr.mxu0 0.0
        %876 = vmatpush1.msra.mxu0 0.0
        %877 = vmatprep.subr.mxu0 0.0
        %878 = vmatpush1.msra.mxu0 0.0
        %879 = vmatprep.subr.mxu0 0.0
        %880 = vmatpush1.msra.mxu0 0.0
        %881 = vmatprep.subr.mxu0 0.0
        %882 = vmatpush1.msra.mxu0 0.0
        %883 = vmatprep.subr.mxu0 0.0
        %884 = vmatpush1.msra.mxu0 0.0
        %885 = vmatprep.subr.mxu0 0.0
        %886 = vmatpush1.msra.mxu0 0.0
        %887 = vmatprep.subr.mxu0 0.0
        %888 = vmatpush1.msra.mxu0 0.0
        %889 = vmatprep.subr.mxu0 0.0
        %890 = vmatpush1.msra.mxu0 0.0
        %891 = vmatprep.subr.mxu0 0.0
        %892 = vmatpush1.msra.mxu0 0.0
        %893 = vmatprep.subr.mxu0 0.0
        %894 = vmatpush1.msra.mxu0 0.0
        %895 = vmatprep.subr.mxu0 0.0
        %896 = vmatpush1.msra.mxu0 0.0
        %897 = vmatprep.subr.mxu0 0.0
        %898 = vmatpush1.msra.mxu0 0.0
        %899 = vmatprep.subr.mxu0 0.0
        %900 = vmatpush1.msra.mxu0 0.0
        %901 = vmatprep.subr.mxu0 0.0
        %902 = vmatpush1.msra.mxu0 0.0
        %903 = vmatprep.mubr.f32.mxu0 0.0
        %904 = vmatmul.mubr.f32.gmra.mrb[0].mxu0 %v816
        %v905 = vpop.f32.mrb[0].mxu0
        %v906 = vadd.f32 %v777, %v905
        %v907 = vpop.f32.mrb[0].mxu0
        %908 = vmatprep.mubr.f32.mxu0 0.0
        %909 = vmatmul.mubr.f32.gmra.mrb[0].mxu0 %v819
        %v910 = vpop.f32.mrb[0].mxu0
        %v911 = vadd.f32 %v782, %v910
        %v912 = vpop.f32.mrb[0].mxu0
        %913 = vmatprep.mubr.f32.mxu0 0.0
        %914 = vmatmul.mubr.f32.gmra.mrb[0].mxu0 %v822
        %v915 = vpop.f32.mrb[0].mxu0
        %v916 = vadd.f32 %v787, %v915
        %v917 = vpop.f32.mrb[0].mxu0
        %918 = vmatprep.mubr.f32.mxu0 0.0
        %919 = vmatmul.mubr.f32.gmra.mrb[0].mxu0 %v825
        %v920 = vpop.f32.mrb[0].mxu0
        %v921 = vadd.f32 %v792, %v920
        %v922 = vpop.f32.mrb[0].mxu0
        %923 = vmatprep.mubr.f32.mxu0 0.0
        %924 = vmatmul.mubr.f32.gmra.mrb[0].mxu0 %v828
        %v925 = vpop.f32.mrb[0].mxu0
        %v926 = vadd.f32 %v797, %v925
        %v927 = vpop.f32.mrb[0].mxu0
        %928 = vmatprep.mubr.f32.mxu0 0.0
        %929 = vmatmul.mubr.f32.gmra.mrb[0].mxu0 %v831
        %v930 = vpop.f32.mrb[0].mxu0
        %v931 = vadd.f32 %v802, %v930
        %v932 = vpop.f32.mrb[0].mxu0
        %933 = vmatprep.mubr.f32.mxu0 0.0
        %934 = vmatmul.mubr.f32.gmra.mrb[0].mxu0 %v834
        %v935 = vpop.f32.mrb[0].mxu0
        %v936 = vadd.f32 %v807, %v935
        %v937 = vpop.f32.mrb[0].mxu0
        %938 = vmatprep.mubr.f32.mxu0 0.0
        %939 = vmatmul.mubr.f32.gmra.mrb[0].mxu0 %v837
        %v940 = vpop.f32.mrb[0].mxu0
        %v941 = vadd.f32 %v812, %v940
        %v942 = vpop.f32.mrb[0].mxu0
        %943 = vdwg.mxu0
        %v944 = vadd.f32 %v906, %v546
        %v945 = vadd.f32 %v911, %v551
        %v946 = vadd.f32 %v916, %v556
        %v947 = vadd.f32 %v921, %v561
        %v948 = vadd.f32 %v926, %v566
        %v949 = vadd.f32 %v931, %v571
        %v950 = vadd.f32 %v936, %v576
        %v951 = vadd.f32 %v941, %v581
        %v952 = vxor.u32 %v944, 2147483648
        %v953 = vxor.u32 %v945, 2147483648
        %v954 = vmul.f32 %v952, 1.442695
        %v955 = vpow.pop %v954
        %v956 = vmul.f32 %v953, 1.442695
        %v957 = vpow.pop %v956
        %v958 = vadd.f32 %v955, 1.0
        %v959 = vadd.f32 %v957, 1.0
        %v960 = vrcp.pop %v958
        %v961 = vmul.f32 1.0, %v960
        %v962 = vrcp.pop %v959
        %v963 = vmul.f32 1.0, %v962
        %v964 = vxor.u32 %v946, 2147483648
        %v965 = vxor.u32 %v947, 2147483648
        %v966 = vmul.f32 %v964, 1.442695
        %v967 = vpow.pop %v966
        %v968 = vmul.f32 %v965, 1.442695
        %v969 = vpow.pop %v968
        %v970 = vadd.f32 %v967, 1.0
        %v971 = vadd.f32 %v969, 1.0
        %v972 = vrcp.pop %v970
        %v973 = vmul.f32 1.0, %v972
        %v974 = vrcp.pop %v971
        %v975 = vmul.f32 1.0, %v974
        %v976 = vtanh.pop %v948
        %v977 = vtanh.pop %v949
        %v978 = vxor.u32 %v950, 2147483648
        %v979 = vxor.u32 %v951, 2147483648
        %v980 = vmul.f32 %v978, 1.442695
        %v981 = vpow.pop %v980
        %v982 = vmul.f32 %v979, 1.442695
        %v983 = vpow.pop %v982
        %v984 = vadd.f32 %v981, 1.0
        %v985 = vadd.f32 %v983, 1.0
        %v986 = vrcp.pop %v984
        %v987 = vmul.f32 1.0, %v986
        %v988 = vrcp.pop %v985
        %v989 = vmul.f32 1.0, %v988
        %v990 = vmul.f32 %v973, %v474
        %v991 = vmul.f32 %v975, %v475
        %v992 = vmul.f32 %v961, %v976
        %v993 = vmul.f32 %v963, %v977
        %v994 = vadd.f32 %v990, %v992
        %v995 = vadd.f32 %v991, %v993
        %v996 = vtanh.pop %v994
        %v997 = vtanh.pop %v995
        %v998 = vmul.f32 %v987, %v996
        %v999 = vmul.f32 %v989, %v997
        %v1001 = vsel %vm685, %v510, 0
        %1003 = vmatprep.subr.mxu0 0.0
        %1004 = vmatpush1.msra.mxu0 %v683
        %1005 = vmatprep.subr.mxu0 0.0
        %1006 = vmatpush1.msra.mxu0 %v684
        %1007 = vmatprep.subr.mxu0 0.0
        %1008 = vmatpush1.msra.mxu0 0.0
        %1009 = vmatprep.subr.mxu0 0.0
        %1010 = vmatpush1.msra.mxu0 0.0
        %1011 = vmatprep.subr.mxu0 0.0
        %1012 = vmatpush1.msra.mxu0 0.0
        %1013 = vmatprep.subr.mxu0 0.0
        %1014 = vmatpush1.msra.mxu0 0.0
        %1015 = vmatprep.subr.mxu0 0.0
        %1016 = vmatpush1.msra.mxu0 0.0
        %1017 = vmatprep.subr.mxu0 0.0
        %1018 = vmatpush1.msra.mxu0 0.0
        %1019 = vmatprep.subr.mxu0 0.0
        %1020 = vmatpush1.msra.mxu0 0.0
        %1021 = vmatprep.subr.mxu0 0.0
        %1022 = vmatpush1.msra.mxu0 0.0
        %1023 = vmatprep.subr.mxu0 0.0
        %1024 = vmatpush1.msra.mxu0 0.0
        %1025 = vmatprep.subr.mxu0 0.0
        %1026 = vmatpush1.msra.mxu0 0.0
        %1027 = vmatprep.subr.mxu0 0.0
        %1028 = vmatpush1.msra.mxu0 0.0
        %1029 = vmatprep.subr.mxu0 0.0
        %1030 = vmatpush1.msra.mxu0 0.0
        %1031 = vmatprep.subr.mxu0 0.0
        %1032 = vmatpush1.msra.mxu0 0.0
        %1033 = vmatprep.subr.mxu0 0.0
        %1034 = vmatpush1.msra.mxu0 0.0
        %1035 = vmatprep.subr.mxu0 0.0
        %1036 = vmatpush1.msra.mxu0 0.0
        %1037 = vmatprep.subr.mxu0 0.0
        %1038 = vmatpush1.msra.mxu0 0.0
        %1039 = vmatprep.subr.mxu0 0.0
        %1040 = vmatpush1.msra.mxu0 0.0
        %1041 = vmatprep.subr.mxu0 0.0
        %1042 = vmatpush1.msra.mxu0 0.0
        %1043 = vmatprep.subr.mxu0 0.0
        %1044 = vmatpush1.msra.mxu0 0.0
        %1045 = vmatprep.subr.mxu0 0.0
        %1046 = vmatpush1.msra.mxu0 0.0
        %1047 = vmatprep.subr.mxu0 0.0
        %1048 = vmatpush1.msra.mxu0 0.0
        %1049 = vmatprep.subr.mxu0 0.0
        %1050 = vmatpush1.msra.mxu0 0.0
        %1051 = vmatprep.subr.mxu0 0.0
        %1052 = vmatpush1.msra.mxu0 0.0
        %1053 = vmatprep.subr.mxu0 0.0
        %1054 = vmatpush1.msra.mxu0 0.0
        %1055 = vmatprep.subr.mxu0 0.0
        %1056 = vmatpush1.msra.mxu0 0.0
        %1057 = vmatprep.subr.mxu0 0.0
        %1058 = vmatpush1.msra.mxu0 0.0
        %1059 = vmatprep.subr.mxu0 0.0
        %1060 = vmatpush1.msra.mxu0 0.0
        %1061 = vmatprep.subr.mxu0 0.0
        %1062 = vmatpush1.msra.mxu0 0.0
        %1063 = vmatprep.subr.mxu0 0.0
        %1064 = vmatpush1.msra.mxu0 0.0
        %1065 = vmatprep.subr.mxu0 0.0
        %1066 = vmatpush1.msra.mxu0 0.0
        %1067 = vmatprep.mubr.f32.mxu0 0.0
        %1068 = vmatmul.mubr.f32.gmra.mrb[0].mxu0 %v1001
        %v1069 = vpop.f32.mrb[0].mxu0
        %v1070 = vadd.f32 0.0, %v1069
        %v1071 = vpop.f32.mrb[0].mxu0
        %1072 = vdwg.mxu0
        %v1074 = vsel %vm685, %v509, 0
        %1076 = vmatprep.subr.mxu0 0.0
        %1077 = vmatpush1.msra.mxu0 %v998
        %1078 = vmatprep.subr.mxu0 0.0
        %1079 = vmatpush1.msra.mxu0 %v999
        %1080 = vmatprep.subr.mxu0 0.0
        %1081 = vmatpush1.msra.mxu0 0.0
        %1082 = vmatprep.subr.mxu0 0.0
        %1083 = vmatpush1.msra.mxu0 0.0
        %1084 = vmatprep.subr.mxu0 0.0
        %1085 = vmatpush1.msra.mxu0 0.0
        %1086 = vmatprep.subr.mxu0 0.0
        %1087 = vmatpush1.msra.mxu0 0.0
        %1088 = vmatprep.subr.mxu0 0.0
        %1089 = vmatpush1.msra.mxu0 0.0
        %1090 = vmatprep.subr.mxu0 0.0
        %1091 = vmatpush1.msra.mxu0 0.0
        %1092 = vmatprep.subr.mxu0 0.0
        %1093 = vmatpush1.msra.mxu0 0.0
        %1094 = vmatprep.subr.mxu0 0.0
        %1095 = vmatpush1.msra.mxu0 0.0
        %1096 = vmatprep.subr.mxu0 0.0
        %1097 = vmatpush1.msra.mxu0 0.0
        %1098 = vmatprep.subr.mxu0 0.0
        %1099 = vmatpush1.msra.mxu0 0.0
        %1100 = vmatprep.subr.mxu0 0.0
        %1101 = vmatpush1.msra.mxu0 0.0
        %1102 = vmatprep.subr.mxu0 0.0
        %1103 = vmatpush1.msra.mxu0 0.0
        %1104 = vmatprep.subr.mxu0 0.0
        %1105 = vmatpush1.msra.mxu0 0.0
        %1106 = vmatprep.subr.mxu0 0.0
        %1107 = vmatpush1.msra.mxu0 0.0
        %1108 = vmatprep.subr.mxu0 0.0
        %1109 = vmatpush1.msra.mxu0 0.0
        %1110 = vmatprep.subr.mxu0 0.0
        %1111 = vmatpush1.msra.mxu0 0.0
        %1112 = vmatprep.subr.mxu0 0.0
        %1113 = vmatpush1.msra.mxu0 0.0
        %1114 = vmatprep.subr.mxu0 0.0
        %1115 = vmatpush1.msra.mxu0 0.0
        %1116 = vmatprep.subr.mxu0 0.0
        %1117 = vmatpush1.msra.mxu0 0.0
        %1118 = vmatprep.subr.mxu0 0.0
        %1119 = vmatpush1.msra.mxu0 0.0
        %1120 = vmatprep.subr.mxu0 0.0
        %1121 = vmatpush1.msra.mxu0 0.0
        %1122 = vmatprep.subr.mxu0 0.0
        %1123 = vmatpush1.msra.mxu0 0.0
        %1124 = vmatprep.subr.mxu0 0.0
        %1125 = vmatpush1.msra.mxu0 0.0
        %1126 = vmatprep.subr.mxu0 0.0
        %1127 = vmatpush1.msra.mxu0 0.0
        %1128 = vmatprep.subr.mxu0 0.0
        %1129 = vmatpush1.msra.mxu0 0.0
        %1130 = vmatprep.subr.mxu0 0.0
        %1131 = vmatpush1.msra.mxu0 0.0
        %1132 = vmatprep.subr.mxu0 0.0
        %1133 = vmatpush1.msra.mxu0 0.0
        %1134 = vmatprep.subr.mxu0 0.0
        %1135 = vmatpush1.msra.mxu0 0.0
        %1136 = vmatprep.subr.mxu0 0.0
        %1137 = vmatpush1.msra.mxu0 0.0
        %1138 = vmatprep.subr.mxu0 0.0
        %1139 = vmatpush1.msra.mxu0 0.0
        %1140 = vmatprep.mubr.f32.mxu0 0.0
        %1141 = vmatmul.mubr.f32.gmra.mrb[0].mxu0 %v1074
        %v1142 = vpop.f32.mrb[0].mxu0
        %v1143 = vadd.f32 %v1070, %v1142
        %v1144 = vpop.f32.mrb[0].mxu0
        %1145 = vdwg.mxu0
        %v1146 = vadd.f32 %v1143, %v592
        %1147 = vst [vmem:[%s437] sm:$0x1] %v1146
        %s1148 = scalar_lea.vmem %s460, 2
        %v1149 = vld [vmem:[%s1148] sm:$0x3]
        %v1151 = vrot.slane %v1146, 7
        %v1153 = vmul.f32 %v1149, %v1151
        %v1155 = vrot.slane %v1153, 1
        %v1157 = vadd.f32 %v1149, %v1155
        %1158 = vmatprep.subr.mxu0 0.0
        %1159 = vmatpush1.msra.mxu0 %v477
        %1160 = vmatprep.subr.mxu0 0.0
        %1161 = vmatpush1.msra.mxu0 %v478
        %1162 = vmatprep.subr.mxu0 0.0
        %1163 = vmatpush1.msra.mxu0 %v479
        %1164 = vmatprep.subr.mxu0 0.0
        %1165 = vmatpush1.msra.mxu0 %v480
        %1166 = vmatprep.subr.mxu0 0.0
        %1167 = vmatpush1.msra.mxu0 %v481
        %1168 = vmatprep.subr.mxu0 0.0
        %1169 = vmatpush1.msra.mxu0 %v482
        %1170 = vmatprep.subr.mxu0 0.0
        %1171 = vmatpush1.msra.mxu0 %v483
        %1172 = vmatprep.subr.mxu0 0.0
        %1173 = vmatpush1.msra.mxu0 %v484
        %1174 = vmatprep.subr.mxu0 0.0
        %1175 = vmatpush1.msra.mxu0 %v485
        %1176 = vmatprep.subr.mxu0 0.0
        %1177 = vmatpush1.msra.mxu0 %v486
        %1178 = vmatprep.subr.mxu0 0.0
        %1179 = vmatpush1.msra.mxu0 %v487
        %1180 = vmatprep.subr.mxu0 0.0
        %1181 = vmatpush1.msra.mxu0 %v488
        %1182 = vmatprep.subr.mxu0 0.0
        %1183 = vmatpush1.msra.mxu0 %v489
        %1184 = vmatprep.subr.mxu0 0.0
        %1185 = vmatpush1.msra.mxu0 %v490
        %1186 = vmatprep.subr.mxu0 0.0
        %1187 = vmatpush1.msra.mxu0 %v491
        %1188 = vmatprep.subr.mxu0 0.0
        %1189 = vmatpush1.msra.mxu0 %v492
        %1190 = vmatprep.subr.mxu0 0.0
        %1191 = vmatpush1.msra.mxu0 0.0
        %1192 = vmatprep.subr.mxu0 0.0
        %1193 = vmatpush1.msra.mxu0 0.0
        %1194 = vmatprep.subr.mxu0 0.0
        %1195 = vmatpush1.msra.mxu0 0.0
        %1196 = vmatprep.subr.mxu0 0.0
        %1197 = vmatpush1.msra.mxu0 0.0
        %1198 = vmatprep.subr.mxu0 0.0
        %1199 = vmatpush1.msra.mxu0 0.0
        %1200 = vmatprep.subr.mxu0 0.0
        %1201 = vmatpush1.msra.mxu0 0.0
        %1202 = vmatprep.subr.mxu0 0.0
        %1203 = vmatpush1.msra.mxu0 0.0
        %1204 = vmatprep.subr.mxu0 0.0
        %1205 = vmatpush1.msra.mxu0 0.0
        %1206 = vmatprep.subr.mxu0 0.0
        %1207 = vmatpush1.msra.mxu0 0.0
        %1208 = vmatprep.subr.mxu0 0.0
        %1209 = vmatpush1.msra.mxu0 0.0
        %1210 = vmatprep.subr.mxu0 0.0
        %1211 = vmatpush1.msra.mxu0 0.0
        %1212 = vmatprep.subr.mxu0 0.0
        %1213 = vmatpush1.msra.mxu0 0.0
        %1214 = vmatprep.subr.mxu0 0.0
        %1215 = vmatpush1.msra.mxu0 0.0
        %1216 = vmatprep.subr.mxu0 0.0
        %1217 = vmatpush1.msra.mxu0 0.0
        %1218 = vmatprep.subr.mxu0 0.0
        %1219 = vmatpush1.msra.mxu0 0.0
        %1220 = vmatprep.subr.mxu0 0.0
        %1221 = vmatpush1.msra.mxu0 0.0
        %1222 = vmatprep.mubr.f32.mxu0 0.0
        %1223 = vmatmul.mubr.f32.gmra.mrb[0].mxu0 %v1157
        %v1224 = vpop.f32.mrb[0].mxu0
        %v1225 = vadd.f32 0.0, %v1224
        %v1226 = vpop.f32.mrb[0].mxu0
        %1227 = vdwg.mxu0
        %v1228 = vlaneseq
        %v1229 = vshrl.u32 %v1228, 7
        %v1230 = vsub.s32 0, %v1229
        %v1231 = vrot.slane %v1225, %v1230
        %v1232 = vmul.f32 %v516, %v1231
        %v1233 = vmul.f32 %v521, %v1231
        %v1234 = vadd.f32 %v1232, %v528
        %v1235 = vadd.f32 %v1233, %v533
        %v1236 = vmax.f32 %v1234, 0.0
        %v1237 = vmax.f32 %v1235, 0.0
        %1238 = vmatprep.subr.mxu0 0.0
        %1239 = vmatpush1.msra.mxu0 %v998
        %1240 = vmatprep.subr.mxu0 0.0
        %1241 = vmatpush1.msra.mxu0 %v999
        %1242 = vmatprep.subr.mxu0 0.0
        %1243 = vmatpush1.msra.mxu0 0.0
        %1244 = vmatprep.subr.mxu0 0.0
        %1245 = vmatpush1.msra.mxu0 0.0
        %1246 = vmatprep.subr.mxu0 0.0
        %1247 = vmatpush1.msra.mxu0 0.0
        %1248 = vmatprep.subr.mxu0 0.0
        %1249 = vmatpush1.msra.mxu0 0.0
        %1250 = vmatprep.subr.mxu0 0.0
        %1251 = vmatpush1.msra.mxu0 0.0
        %1252 = vmatprep.subr.mxu0 0.0
        %1253 = vmatpush1.msra.mxu0 0.0
        %1254 = vmatprep.subr.mxu0 0.0
        %1255 = vmatpush1.msra.mxu0 0.0
        %1256 = vmatprep.subr.mxu0 0.0
        %1257 = vmatpush1.msra.mxu0 0.0
        %1258 = vmatprep.subr.mxu0 0.0
        %1259 = vmatpush1.msra.mxu0 0.0
        %1260 = vmatprep.subr.mxu0 0.0
        %1261 = vmatpush1.msra.mxu0 0.0
        %1262 = vmatprep.subr.mxu0 0.0
        %1263 = vmatpush1.msra.mxu0 0.0
        %1264 = vmatprep.subr.mxu0 0.0
        %1265 = vmatpush1.msra.mxu0 0.0
        %1266 = vmatprep.subr.mxu0 0.0
        %1267 = vmatpush1.msra.mxu0 0.0
        %1268 = vmatprep.subr.mxu0 0.0
        %1269 = vmatpush1.msra.mxu0 0.0
        %1270 = vmatprep.subr.mxu0 0.0
        %1271 = vmatpush1.msra.mxu0 0.0
        %1272 = vmatprep.subr.mxu0 0.0
        %1273 = vmatpush1.msra.mxu0 0.0
        %1274 = vmatprep.subr.mxu0 0.0
        %1275 = vmatpush1.msra.mxu0 0.0
        %1276 = vmatprep.subr.mxu0 0.0
        %1277 = vmatpush1.msra.mxu0 0.0
        %1278 = vmatprep.subr.mxu0 0.0
        %1279 = vmatpush1.msra.mxu0 0.0
        %1280 = vmatprep.subr.mxu0 0.0
        %1281 = vmatpush1.msra.mxu0 0.0
        %1282 = vmatprep.subr.mxu0 0.0
        %1283 = vmatpush1.msra.mxu0 0.0
        %1284 = vmatprep.subr.mxu0 0.0
        %1285 = vmatpush1.msra.mxu0 0.0
        %1286 = vmatprep.subr.mxu0 0.0
        %1287 = vmatpush1.msra.mxu0 0.0
        %1288 = vmatprep.subr.mxu0 0.0
        %1289 = vmatpush1.msra.mxu0 0.0
        %1290 = vmatprep.subr.mxu0 0.0
        %1291 = vmatpush1.msra.mxu0 0.0
        %1292 = vmatprep.subr.mxu0 0.0
        %1293 = vmatpush1.msra.mxu0 0.0
        %1294 = vmatprep.subr.mxu0 0.0
        %1295 = vmatpush1.msra.mxu0 0.0
        %1296 = vmatprep.subr.mxu0 0.0
        %1297 = vmatpush1.msra.mxu0 0.0
        %1298 = vmatprep.subr.mxu0 0.0
        %1299 = vmatpush1.msra.mxu0 0.0
        %1300 = vmatprep.subr.mxu0 0.0
        %1301 = vmatpush1.msra.mxu0 0.0
        %1302 = vmatprep.mubr.f32.mxu0 0.0
        %1303 = vmatmul.mubr.f32.gmra.mrb[0].mxu0 %v687
        %v1304 = vpop.f32.mrb[0].mxu0
        %v1305 = vadd.f32 0.0, %v1304
        %v1306 = vpop.f32.mrb[0].mxu0
        %1307 = vmatprep.mubr.f32.mxu0 0.0
        %1308 = vmatmul.mubr.f32.gmra.mrb[0].mxu0 %v690
        %v1309 = vpop.f32.mrb[0].mxu0
        %v1310 = vadd.f32 0.0, %v1309
        %v1311 = vpop.f32.mrb[0].mxu0
        %1312 = vmatprep.mubr.f32.mxu0 0.0
        %1313 = vmatmul.mubr.f32.gmra.mrb[0].mxu0 %v693
        %v1314 = vpop.f32.mrb[0].mxu0
        %v1315 = vadd.f32 0.0, %v1314
        %v1316 = vpop.f32.mrb[0].mxu0
        %1317 = vmatprep.mubr.f32.mxu0 0.0
        %1318 = vmatmul.mubr.f32.gmra.mrb[0].mxu0 %v696
        %v1319 = vpop.f32.mrb[0].mxu0
        %v1320 = vadd.f32 0.0, %v1319
        %v1321 = vpop.f32.mrb[0].mxu0
        %1322 = vmatprep.mubr.f32.mxu0 0.0
        %1323 = vmatmul.mubr.f32.gmra.mrb[0].mxu0 %v699
        %v1324 = vpop.f32.mrb[0].mxu0
        %v1325 = vadd.f32 0.0, %v1324
        %v1326 = vpop.f32.mrb[0].mxu0
        %1327 = vmatprep.mubr.f32.mxu0 0.0
        %1328 = vmatmul.mubr.f32.gmra.mrb[0].mxu0 %v702
        %v1329 = vpop.f32.mrb[0].mxu0
        %v1330 = vadd.f32 0.0, %v1329
        %v1331 = vpop.f32.mrb[0].mxu0
        %1332 = vmatprep.mubr.f32.mxu0 0.0
        %1333 = vmatmul.mubr.f32.gmra.mrb[0].mxu0 %v705
        %v1334 = vpop.f32.mrb[0].mxu0
        %v1335 = vadd.f32 0.0, %v1334
        %v1336 = vpop.f32.mrb[0].mxu0
        %1337 = vmatprep.mubr.f32.mxu0 0.0
        %1338 = vmatmul.mubr.f32.gmra.mrb[0].mxu0 %v708
        %v1339 = vpop.f32.mrb[0].mxu0
        %v1340 = vadd.f32 0.0, %v1339
        %v1341 = vpop.f32.mrb[0].mxu0
        %1342 = vdwg.mxu0
        %1343 = vmatprep.subr.mxu0 0.0
        %1344 = vmatpush1.msra.mxu0 %v1236
        %1345 = vmatprep.subr.mxu0 0.0
        %1346 = vmatpush1.msra.mxu0 %v1237
        %1347 = vmatprep.subr.mxu0 0.0
        %1348 = vmatpush1.msra.mxu0 0.0
        %1349 = vmatprep.subr.mxu0 0.0
        %1350 = vmatpush1.msra.mxu0 0.0
        %1351 = vmatprep.subr.mxu0 0.0
        %1352 = vmatpush1.msra.mxu0 0.0
        %1353 = vmatprep.subr.mxu0 0.0
        %1354 = vmatpush1.msra.mxu0 0.0
        %1355 = vmatprep.subr.mxu0 0.0
        %1356 = vmatpush1.msra.mxu0 0.0
        %1357 = vmatprep.subr.mxu0 0.0
        %1358 = vmatpush1.msra.mxu0 0.0
        %1359 = vmatprep.subr.mxu0 0.0
        %1360 = vmatpush1.msra.mxu0 0.0
        %1361 = vmatprep.subr.mxu0 0.0
        %1362 = vmatpush1.msra.mxu0 0.0
        %1363 = vmatprep.subr.mxu0 0.0
        %1364 = vmatpush1.msra.mxu0 0.0
        %1365 = vmatprep.subr.mxu0 0.0
        %1366 = vmatpush1.msra.mxu0 0.0
        %1367 = vmatprep.subr.mxu0 0.0
        %1368 = vmatpush1.msra.mxu0 0.0
        %1369 = vmatprep.subr.mxu0 0.0
        %1370 = vmatpush1.msra.mxu0 0.0
        %1371 = vmatprep.subr.mxu0 0.0
        %1372 = vmatpush1.msra.mxu0 0.0
        %1373 = vmatprep.subr.mxu0 0.0
        %1374 = vmatpush1.msra.mxu0 0.0
        %1375 = vmatprep.subr.mxu0 0.0
        %1376 = vmatpush1.msra.mxu0 0.0
        %1377 = vmatprep.subr.mxu0 0.0
        %1378 = vmatpush1.msra.mxu0 0.0
        %1379 = vmatprep.subr.mxu0 0.0
        %1380 = vmatpush1.msra.mxu0 0.0
        %1381 = vmatprep.subr.mxu0 0.0
        %1382 = vmatpush1.msra.mxu0 0.0
        %1383 = vmatprep.subr.mxu0 0.0
        %1384 = vmatpush1.msra.mxu0 0.0
        %1385 = vmatprep.subr.mxu0 0.0
        %1386 = vmatpush1.msra.mxu0 0.0
        %1387 = vmatprep.subr.mxu0 0.0
        %1388 = vmatpush1.msra.mxu0 0.0
        %1389 = vmatprep.subr.mxu0 0.0
        %1390 = vmatpush1.msra.mxu0 0.0
        %1391 = vmatprep.subr.mxu0 0.0
        %1392 = vmatpush1.msra.mxu0 0.0
        %1393 = vmatprep.subr.mxu0 0.0
        %1394 = vmatpush1.msra.mxu0 0.0
        %1395 = vmatprep.subr.mxu0 0.0
        %1396 = vmatpush1.msra.mxu0 0.0
        %1397 = vmatprep.subr.mxu0 0.0
        %1398 = vmatpush1.msra.mxu0 0.0
        %1399 = vmatprep.subr.mxu0 0.0
        %1400 = vmatpush1.msra.mxu0 0.0
        %1401 = vmatprep.subr.mxu0 0.0
        %1402 = vmatpush1.msra.mxu0 0.0
        %1403 = vmatprep.subr.mxu0 0.0
        %1404 = vmatpush1.msra.mxu0 0.0
        %1405 = vmatprep.subr.mxu0 0.0
        %1406 = vmatpush1.msra.mxu0 0.0
        %1407 = vmatprep.mubr.f32.mxu0 0.0
        %1408 = vmatmul.mubr.f32.gmra.mrb[0].mxu0 %v816
        %v1409 = vpop.f32.mrb[0].mxu0
        %v1410 = vadd.f32 %v1305, %v1409
        %v1411 = vpop.f32.mrb[0].mxu0
        %1412 = vmatprep.mubr.f32.mxu0 0.0
        %1413 = vmatmul.mubr.f32.gmra.mrb[0].mxu0 %v819
        %v1414 = vpop.f32.mrb[0].mxu0
        %v1415 = vadd.f32 %v1310, %v1414
        %v1416 = vpop.f32.mrb[0].mxu0
        %1417 = vmatprep.mubr.f32.mxu0 0.0
        %1418 = vmatmul.mubr.f32.gmra.mrb[0].mxu0 %v822
        %v1419 = vpop.f32.mrb[0].mxu0
        %v1420 = vadd.f32 %v1315, %v1419
        %v1421 = vpop.f32.mrb[0].mxu0
        %1422 = vmatprep.mubr.f32.mxu0 0.0
        %1423 = vmatmul.mubr.f32.gmra.mrb[0].mxu0 %v825
        %v1424 = vpop.f32.mrb[0].mxu0
        %v1425 = vadd.f32 %v1320, %v1424
        %v1426 = vpop.f32.mrb[0].mxu0
        %1427 = vmatprep.mubr.f32.mxu0 0.0
        %1428 = vmatmul.mubr.f32.gmra.mrb[0].mxu0 %v828
        %v1429 = vpop.f32.mrb[0].mxu0
        %v1430 = vadd.f32 %v1325, %v1429
        %v1431 = vpop.f32.mrb[0].mxu0
        %1432 = vmatprep.mubr.f32.mxu0 0.0
        %1433 = vmatmul.mubr.f32.gmra.mrb[0].mxu0 %v831
        %v1434 = vpop.f32.mrb[0].mxu0
        %v1435 = vadd.f32 %v1330, %v1434
        %v1436 = vpop.f32.mrb[0].mxu0
        %1437 = vmatprep.mubr.f32.mxu0 0.0
        %1438 = vmatmul.mubr.f32.gmra.mrb[0].mxu0 %v834
        %v1439 = vpop.f32.mrb[0].mxu0
        %v1440 = vadd.f32 %v1335, %v1439
        %v1441 = vpop.f32.mrb[0].mxu0
        %1442 = vmatprep.mubr.f32.mxu0 0.0
        %1443 = vmatmul.mubr.f32.gmra.mrb[0].mxu0 %v837
        %v1444 = vpop.f32.mrb[0].mxu0
        %v1445 = vadd.f32 %v1340, %v1444
        %v1446 = vpop.f32.mrb[0].mxu0
        %1447 = vdwg.mxu0
        %v1448 = vadd.f32 %v1410, %v546
        %v1449 = vadd.f32 %v1415, %v551
        %v1450 = vadd.f32 %v1420, %v556
        %v1451 = vadd.f32 %v1425, %v561
        %v1452 = vadd.f32 %v1430, %v566
        %v1453 = vadd.f32 %v1435, %v571
        %v1454 = vadd.f32 %v1440, %v576
        %v1455 = vadd.f32 %v1445, %v581
        %v1456 = vxor.u32 %v1448, 2147483648
        %v1457 = vxor.u32 %v1449, 2147483648
        %v1458 = vmul.f32 %v1456, 1.442695
        %v1459 = vpow.pop %v1458
        %v1460 = vmul.f32 %v1457, 1.442695
        %v1461 = vpow.pop %v1460
        %v1462 = vadd.f32 %v1459, 1.0
        %v1463 = vadd.f32 %v1461, 1.0
        %v1464 = vrcp.pop %v1462
        %v1465 = vmul.f32 1.0, %v1464
        %v1466 = vrcp.pop %v1463
        %v1467 = vmul.f32 1.0, %v1466
        %v1468 = vxor.u32 %v1450, 2147483648
        %v1469 = vxor.u32 %v1451, 2147483648
        %v1470 = vmul.f32 %v1468, 1.442695
        %v1471 = vpow.pop %v1470
        %v1472 = vmul.f32 %v1469, 1.442695
        %v1473 = vpow.pop %v1472
        %v1474 = vadd.f32 %v1471, 1.0
        %v1475 = vadd.f32 %v1473, 1.0
        %v1476 = vrcp.pop %v1474
        %v1477 = vmul.f32 1.0, %v1476
        %v1478 = vrcp.pop %v1475
        %v1479 = vmul.f32 1.0, %v1478
        %v1480 = vtanh.pop %v1452
        %v1481 = vtanh.pop %v1453
        %v1482 = vxor.u32 %v1454, 2147483648
        %v1483 = vxor.u32 %v1455, 2147483648
        %v1484 = vmul.f32 %v1482, 1.442695
        %v1485 = vpow.pop %v1484
        %v1486 = vmul.f32 %v1483, 1.442695
        %v1487 = vpow.pop %v1486
        %v1488 = vadd.f32 %v1485, 1.0
        %v1489 = vadd.f32 %v1487, 1.0
        %v1490 = vrcp.pop %v1488
        %v1491 = vmul.f32 1.0, %v1490
        %v1492 = vrcp.pop %v1489
        %v1493 = vmul.f32 1.0, %v1492
        %v1494 = vmul.f32 %v1477, %v994
        %v1495 = vmul.f32 %v1479, %v995
        %v1496 = vmul.f32 %v1465, %v1480
        %v1497 = vmul.f32 %v1467, %v1481
        %v1498 = vadd.f32 %v1494, %v1496
        %v1499 = vadd.f32 %v1495, %v1497
        %v1500 = vtanh.pop %v1498
        %v1501 = vtanh.pop %v1499
        %v1502 = vmul.f32 %v1491, %v1500
        %v1503 = vmul.f32 %v1493, %v1501
        %1504 = vmatprep.subr.mxu0 0.0
        %1505 = vmatpush1.msra.mxu0 %v1236
        %1506 = vmatprep.subr.mxu0 0.0
        %1507 = vmatpush1.msra.mxu0 %v1237
        %1508 = vmatprep.subr.mxu0 0.0
        %1509 = vmatpush1.msra.mxu0 0.0
        %1510 = vmatprep.subr.mxu0 0.0
        %1511 = vmatpush1.msra.mxu0 0.0
        %1512 = vmatprep.subr.mxu0 0.0
        %1513 = vmatpush1.msra.mxu0 0.0
        %1514 = vmatprep.subr.mxu0 0.0
        %1515 = vmatpush1.msra.mxu0 0.0
        %1516 = vmatprep.subr.mxu0 0.0
        %1517 = vmatpush1.msra.mxu0 0.0
        %1518 = vmatprep.subr.mxu0 0.0
        %1519 = vmatpush1.msra.mxu0 0.0
        %1520 = vmatprep.subr.mxu0 0.0
        %1521 = vmatpush1.msra.mxu0 0.0
        %1522 = vmatprep.subr.mxu0 0.0
        %1523 = vmatpush1.msra.mxu0 0.0
        %1524 = vmatprep.subr.mxu0 0.0
        %1525 = vmatpush1.msra.mxu0 0.0
        %1526 = vmatprep.subr.mxu0 0.0
        %1527 = vmatpush1.msra.mxu0 0.0
        %1528 = vmatprep.subr.mxu0 0.0
        %1529 = vmatpush1.msra.mxu0 0.0
        %1530 = vmatprep.subr.mxu0 0.0
        %1531 = vmatpush1.msra.mxu0 0.0
        %1532 = vmatprep.subr.mxu0 0.0
        %1533 = vmatpush1.msra.mxu0 0.0
        %1534 = vmatprep.subr.mxu0 0.0
        %1535 = vmatpush1.msra.mxu0 0.0
        %1536 = vmatprep.subr.mxu0 0.0
        %1537 = vmatpush1.msra.mxu0 0.0
        %1538 = vmatprep.subr.mxu0 0.0
        %1539 = vmatpush1.msra.mxu0 0.0
        %1540 = vmatprep.subr.mxu0 0.0
        %1541 = vmatpush1.msra.mxu0 0.0
        %1542 = vmatprep.subr.mxu0 0.0
        %1543 = vmatpush1.msra.mxu0 0.0
        %1544 = vmatprep.subr.mxu0 0.0
        %1545 = vmatpush1.msra.mxu0 0.0
        %1546 = vmatprep.subr.mxu0 0.0
        %1547 = vmatpush1.msra.mxu0 0.0
        %1548 = vmatprep.subr.mxu0 0.0
        %1549 = vmatpush1.msra.mxu0 0.0
        %1550 = vmatprep.subr.mxu0 0.0
        %1551 = vmatpush1.msra.mxu0 0.0
        %1552 = vmatprep.subr.mxu0 0.0
        %1553 = vmatpush1.msra.mxu0 0.0
        %1554 = vmatprep.subr.mxu0 0.0
        %1555 = vmatpush1.msra.mxu0 0.0
        %1556 = vmatprep.subr.mxu0 0.0
        %1557 = vmatpush1.msra.mxu0 0.0
        %1558 = vmatprep.subr.mxu0 0.0
        %1559 = vmatpush1.msra.mxu0 0.0
        %1560 = vmatprep.subr.mxu0 0.0
        %1561 = vmatpush1.msra.mxu0 0.0
        %1562 = vmatprep.subr.mxu0 0.0
        %1563 = vmatpush1.msra.mxu0 0.0
        %1564 = vmatprep.subr.mxu0 0.0
        %1565 = vmatpush1.msra.mxu0 0.0
        %1566 = vmatprep.subr.mxu0 0.0
        %1567 = vmatpush1.msra.mxu0 0.0
        %1568 = vmatprep.mubr.f32.mxu0 0.0
        %1569 = vmatmul.mubr.f32.gmra.mrb[0].mxu0 %v1001
        %v1570 = vpop.f32.mrb[0].mxu0
        %v1571 = vadd.f32 0.0, %v1570
        %v1572 = vpop.f32.mrb[0].mxu0
        %1573 = vdwg.mxu0
        %1574 = vmatprep.subr.mxu0 0.0
        %1575 = vmatpush1.msra.mxu0 %v1502
        %1576 = vmatprep.subr.mxu0 0.0
        %1577 = vmatpush1.msra.mxu0 %v1503
        %1578 = vmatprep.subr.mxu0 0.0
        %1579 = vmatpush1.msra.mxu0 0.0
        %1580 = vmatprep.subr.mxu0 0.0
        %1581 = vmatpush1.msra.mxu0 0.0
        %1582 = vmatprep.subr.mxu0 0.0
        %1583 = vmatpush1.msra.mxu0 0.0
        %1584 = vmatprep.subr.mxu0 0.0
        %1585 = vmatpush1.msra.mxu0 0.0
        %1586 = vmatprep.subr.mxu0 0.0
        %1587 = vmatpush1.msra.mxu0 0.0
        %1588 = vmatprep.subr.mxu0 0.0
        %1589 = vmatpush1.msra.mxu0 0.0
        %1590 = vmatprep.subr.mxu0 0.0
        %1591 = vmatpush1.msra.mxu0 0.0
        %1592 = vmatprep.subr.mxu0 0.0
        %1593 = vmatpush1.msra.mxu0 0.0
        %1594 = vmatprep.subr.mxu0 0.0
        %1595 = vmatpush1.msra.mxu0 0.0
        %1596 = vmatprep.subr.mxu0 0.0
        %1597 = vmatpush1.msra.mxu0 0.0
        %1598 = vmatprep.subr.mxu0 0.0
        %1599 = vmatpush1.msra.mxu0 0.0
        %1600 = vmatprep.subr.mxu0 0.0
        %1601 = vmatpush1.msra.mxu0 0.0
        %1602 = vmatprep.subr.mxu0 0.0
        %1603 = vmatpush1.msra.mxu0 0.0
        %1604 = vmatprep.subr.mxu0 0.0
        %1605 = vmatpush1.msra.mxu0 0.0
        %1606 = vmatprep.subr.mxu0 0.0
        %1607 = vmatpush1.msra.mxu0 0.0
        %1608 = vmatprep.subr.mxu0 0.0
        %1609 = vmatpush1.msra.mxu0 0.0
        %1610 = vmatprep.subr.mxu0 0.0
        %1611 = vmatpush1.msra.mxu0 0.0
        %1612 = vmatprep.subr.mxu0 0.0
        %1613 = vmatpush1.msra.mxu0 0.0
        %1614 = vmatprep.subr.mxu0 0.0
        %1615 = vmatpush1.msra.mxu0 0.0
        %1616 = vmatprep.subr.mxu0 0.0
        %1617 = vmatpush1.msra.mxu0 0.0
        %1618 = vmatprep.subr.mxu0 0.0
        %1619 = vmatpush1.msra.mxu0 0.0
        %1620 = vmatprep.subr.mxu0 0.0
        %1621 = vmatpush1.msra.mxu0 0.0
        %1622 = vmatprep.subr.mxu0 0.0
        %1623 = vmatpush1.msra.mxu0 0.0
        %1624 = vmatprep.subr.mxu0 0.0
        %1625 = vmatpush1.msra.mxu0 0.0
        %1626 = vmatprep.subr.mxu0 0.0
        %1627 = vmatpush1.msra.mxu0 0.0
        %1628 = vmatprep.subr.mxu0 0.0
        %1629 = vmatpush1.msra.mxu0 0.0
        %1630 = vmatprep.subr.mxu0 0.0
        %1631 = vmatpush1.msra.mxu0 0.0
        %1632 = vmatprep.subr.mxu0 0.0
        %1633 = vmatpush1.msra.mxu0 0.0
        %1634 = vmatprep.subr.mxu0 0.0
        %1635 = vmatpush1.msra.mxu0 0.0
        %1636 = vmatprep.subr.mxu0 0.0
        %1637 = vmatpush1.msra.mxu0 0.0
        %1638 = vmatprep.mubr.f32.mxu0 0.0
        %1639 = vmatmul.mubr.f32.gmra.mrb[0].mxu0 %v1074
        %v1640 = vpop.f32.mrb[0].mxu0
        %v1641 = vadd.f32 %v1571, %v1640
        %v1642 = vpop.f32.mrb[0].mxu0
        %1643 = vdwg.mxu0
        %v1644 = vadd.f32 %v1641, %v592
        %s1645 = scalar_lea.vmem %s437, 1 [#allocation4]
        %1646 = vst [vmem:[%s1645] sm:$0x1] %v1644
        %s1647 = scalar_lea.vmem %s460, 4
        %v1648 = vld [vmem:[%s1647] sm:$0x3]
        %v1650 = vrot.slane %v1644, 7
        %v1652 = vmul.f32 %v1648, %v1650
        %v1654 = vrot.slane %v1652, 1
        %v1656 = vadd.f32 %v1648, %v1654
        %1657 = vmatprep.subr.mxu0 0.0
        %1658 = vmatpush1.msra.mxu0 %v477
        %1659 = vmatprep.subr.mxu0 0.0
        %1660 = vmatpush1.msra.mxu0 %v478
        %1661 = vmatprep.subr.mxu0 0.0
        %1662 = vmatpush1.msra.mxu0 %v479
        %1663 = vmatprep.subr.mxu0 0.0
        %1664 = vmatpush1.msra.mxu0 %v480
        %1665 = vmatprep.subr.mxu0 0.0
        %1666 = vmatpush1.msra.mxu0 %v481
        %1667 = vmatprep.subr.mxu0 0.0
        %1668 = vmatpush1.msra.mxu0 %v482
        %1669 = vmatprep.subr.mxu0 0.0
        %1670 = vmatpush1.msra.mxu0 %v483
        %1671 = vmatprep.subr.mxu0 0.0
        %1672 = vmatpush1.msra.mxu0 %v484
        %1673 = vmatprep.subr.mxu0 0.0
        %1674 = vmatpush1.msra.mxu0 %v485
        %1675 = vmatprep.subr.mxu0 0.0
        %1676 = vmatpush1.msra.mxu0 %v486
        %1677 = vmatprep.subr.mxu0 0.0
        %1678 = vmatpush1.msra.mxu0 %v487
        %1679 = vmatprep.subr.mxu0 0.0
        %1680 = vmatpush1.msra.mxu0 %v488
        %1681 = vmatprep.subr.mxu0 0.0
        %1682 = vmatpush1.msra.mxu0 %v489
        %1683 = vmatprep.subr.mxu0 0.0
        %1684 = vmatpush1.msra.mxu0 %v490
        %1685 = vmatprep.subr.mxu0 0.0
        %1686 = vmatpush1.msra.mxu0 %v491
        %1687 = vmatprep.subr.mxu0 0.0
        %1688 = vmatpush1.msra.mxu0 %v492
        %1689 = vmatprep.subr.mxu0 0.0
        %1690 = vmatpush1.msra.mxu0 0.0
        %1691 = vmatprep.subr.mxu0 0.0
        %1692 = vmatpush1.msra.mxu0 0.0
        %1693 = vmatprep.subr.mxu0 0.0
        %1694 = vmatpush1.msra.mxu0 0.0
        %1695 = vmatprep.subr.mxu0 0.0
        %1696 = vmatpush1.msra.mxu0 0.0
        %1697 = vmatprep.subr.mxu0 0.0
        %1698 = vmatpush1.msra.mxu0 0.0
        %1699 = vmatprep.subr.mxu0 0.0
        %1700 = vmatpush1.msra.mxu0 0.0
        %1701 = vmatprep.subr.mxu0 0.0
        %1702 = vmatpush1.msra.mxu0 0.0
        %1703 = vmatprep.subr.mxu0 0.0
        %1704 = vmatpush1.msra.mxu0 0.0
        %1705 = vmatprep.subr.mxu0 0.0
        %1706 = vmatpush1.msra.mxu0 0.0
        %1707 = vmatprep.subr.mxu0 0.0
        %1708 = vmatpush1.msra.mxu0 0.0
        %1709 = vmatprep.subr.mxu0 0.0
        %1710 = vmatpush1.msra.mxu0 0.0
        %1711 = vmatprep.subr.mxu0 0.0
        %1712 = vmatpush1.msra.mxu0 0.0
        %1713 = vmatprep.subr.mxu0 0.0
        %1714 = vmatpush1.msra.mxu0 0.0
        %1715 = vmatprep.subr.mxu0 0.0
        %1716 = vmatpush1.msra.mxu0 0.0
        %1717 = vmatprep.subr.mxu0 0.0
        %1718 = vmatpush1.msra.mxu0 0.0
        %1719 = vmatprep.subr.mxu0 0.0
        %1720 = vmatpush1.msra.mxu0 0.0
        %1721 = vmatprep.mubr.f32.mxu0 0.0
        %1722 = vmatmul.mubr.f32.gmra.mrb[0].mxu0 %v1656
        %v1723 = vpop.f32.mrb[0].mxu0
        %v1724 = vadd.f32 0.0, %v1723
        %v1725 = vpop.f32.mrb[0].mxu0
        %1726 = vdwg.mxu0
        %v1727 = vlaneseq
        %v1728 = vshrl.u32 %v1727, 7
        %v1729 = vsub.s32 0, %v1728
        %v1730 = vrot.slane %v1724, %v1729
        %v1731 = vmul.f32 %v516, %v1730
        %v1732 = vmul.f32 %v521, %v1730
        %v1733 = vadd.f32 %v1731, %v528
        %v1734 = vadd.f32 %v1732, %v533
        %v1735 = vmax.f32 %v1733, 0.0
        %v1736 = vmax.f32 %v1734, 0.0
        %1737 = vmatprep.subr.mxu0 0.0
        %1738 = vmatpush1.msra.mxu0 %v1502
        %1739 = vmatprep.subr.mxu0 0.0
        %1740 = vmatpush1.msra.mxu0 %v1503
        %1741 = vmatprep.subr.mxu0 0.0
        %1742 = vmatpush1.msra.mxu0 0.0
        %1743 = vmatprep.subr.mxu0 0.0
        %1744 = vmatpush1.msra.mxu0 0.0
        %1745 = vmatprep.subr.mxu0 0.0
        %1746 = vmatpush1.msra.mxu0 0.0
        %1747 = vmatprep.subr.mxu0 0.0
        %1748 = vmatpush1.msra.mxu0 0.0
        %1749 = vmatprep.subr.mxu0 0.0
        %1750 = vmatpush1.msra.mxu0 0.0
        %1751 = vmatprep.subr.mxu0 0.0
        %1752 = vmatpush1.msra.mxu0 0.0
        %1753 = vmatprep.subr.mxu0 0.0
        %1754 = vmatpush1.msra.mxu0 0.0
        %1755 = vmatprep.subr.mxu0 0.0
        %1756 = vmatpush1.msra.mxu0 0.0
        %1757 = vmatprep.subr.mxu0 0.0
        %1758 = vmatpush1.msra.mxu0 0.0
        %1759 = vmatprep.subr.mxu0 0.0
        %1760 = vmatpush1.msra.mxu0 0.0
        %1761 = vmatprep.subr.mxu0 0.0
        %1762 = vmatpush1.msra.mxu0 0.0
        %1763 = vmatprep.subr.mxu0 0.0
        %1764 = vmatpush1.msra.mxu0 0.0
        %1765 = vmatprep.subr.mxu0 0.0
        %1766 = vmatpush1.msra.mxu0 0.0
        %1767 = vmatprep.subr.mxu0 0.0
        %1768 = vmatpush1.msra.mxu0 0.0
        %1769 = vmatprep.subr.mxu0 0.0
        %1770 = vmatpush1.msra.mxu0 0.0
        %1771 = vmatprep.subr.mxu0 0.0
        %1772 = vmatpush1.msra.mxu0 0.0
        %1773 = vmatprep.subr.mxu0 0.0
        %1774 = vmatpush1.msra.mxu0 0.0
        %1775 = vmatprep.subr.mxu0 0.0
        %1776 = vmatpush1.msra.mxu0 0.0
        %1777 = vmatprep.subr.mxu0 0.0
        %1778 = vmatpush1.msra.mxu0 0.0
        %1779 = vmatprep.subr.mxu0 0.0
        %1780 = vmatpush1.msra.mxu0 0.0
        %1781 = vmatprep.subr.mxu0 0.0
        %1782 = vmatpush1.msra.mxu0 0.0
        %1783 = vmatprep.subr.mxu0 0.0
        %1784 = vmatpush1.msra.mxu0 0.0
        %1785 = vmatprep.subr.mxu0 0.0
        %1786 = vmatpush1.msra.mxu0 0.0
        %1787 = vmatprep.subr.mxu0 0.0
        %1788 = vmatpush1.msra.mxu0 0.0
        %1789 = vmatprep.subr.mxu0 0.0
        %1790 = vmatpush1.msra.mxu0 0.0
        %1791 = vmatprep.subr.mxu0 0.0
        %1792 = vmatpush1.msra.mxu0 0.0
        %1793 = vmatprep.subr.mxu0 0.0
        %1794 = vmatpush1.msra.mxu0 0.0
        %1795 = vmatprep.subr.mxu0 0.0
        %1796 = vmatpush1.msra.mxu0 0.0
        %1797 = vmatprep.subr.mxu0 0.0
        %1798 = vmatpush1.msra.mxu0 0.0
        %1799 = vmatprep.subr.mxu0 0.0
        %1800 = vmatpush1.msra.mxu0 0.0
        %1801 = vmatprep.mubr.f32.mxu0 0.0
        %1802 = vmatmul.mubr.f32.gmra.mrb[0].mxu0 %v687
        %v1803 = vpop.f32.mrb[0].mxu0
        %v1804 = vadd.f32 0.0, %v1803
        %v1805 = vpop.f32.mrb[0].mxu0
        %1806 = vmatprep.mubr.f32.mxu0 0.0
        %1807 = vmatmul.mubr.f32.gmra.mrb[0].mxu0 %v690
        %v1808 = vpop.f32.mrb[0].mxu0
        %v1809 = vadd.f32 0.0, %v1808
        %v1810 = vpop.f32.mrb[0].mxu0
        %1811 = vmatprep.mubr.f32.mxu0 0.0
        %1812 = vmatmul.mubr.f32.gmra.mrb[0].mxu0 %v693
        %v1813 = vpop.f32.mrb[0].mxu0
        %v1814 = vadd.f32 0.0, %v1813
        %v1815 = vpop.f32.mrb[0].mxu0
        %1816 = vmatprep.mubr.f32.mxu0 0.0
        %1817 = vmatmul.mubr.f32.gmra.mrb[0].mxu0 %v696
        %v1818 = vpop.f32.mrb[0].mxu0
        %v1819 = vadd.f32 0.0, %v1818
        %v1820 = vpop.f32.mrb[0].mxu0
        %1821 = vmatprep.mubr.f32.mxu0 0.0
        %1822 = vmatmul.mubr.f32.gmra.mrb[0].mxu0 %v699
        %v1823 = vpop.f32.mrb[0].mxu0
        %v1824 = vadd.f32 0.0, %v1823
        %v1825 = vpop.f32.mrb[0].mxu0
        %1826 = vmatprep.mubr.f32.mxu0 0.0
        %1827 = vmatmul.mubr.f32.gmra.mrb[0].mxu0 %v702
        %v1828 = vpop.f32.mrb[0].mxu0
        %v1829 = vadd.f32 0.0, %v1828
        %v1830 = vpop.f32.mrb[0].mxu0
        %1831 = vmatprep.mubr.f32.mxu0 0.0
        %1832 = vmatmul.mubr.f32.gmra.mrb[0].mxu0 %v705
        %v1833 = vpop.f32.mrb[0].mxu0
        %v1834 = vadd.f32 0.0, %v1833
        %v1835 = vpop.f32.mrb[0].mxu0
        %1836 = vmatprep.mubr.f32.mxu0 0.0
        %1837 = vmatmul.mubr.f32.gmra.mrb[0].mxu0 %v708
        %v1838 = vpop.f32.mrb[0].mxu0
        %v1839 = vadd.f32 0.0, %v1838
        %v1840 = vpop.f32.mrb[0].mxu0
        %1841 = vdwg.mxu0
        %1842 = vmatprep.subr.mxu0 0.0
        %1843 = vmatpush1.msra.mxu0 %v1735
        %1844 = vmatprep.subr.mxu0 0.0
        %1845 = vmatpush1.msra.mxu0 %v1736
        %1846 = vmatprep.subr.mxu0 0.0
        %1847 = vmatpush1.msra.mxu0 0.0
        %1848 = vmatprep.subr.mxu0 0.0
        %1849 = vmatpush1.msra.mxu0 0.0
        %1850 = vmatprep.subr.mxu0 0.0
        %1851 = vmatpush1.msra.mxu0 0.0
        %1852 = vmatprep.subr.mxu0 0.0
        %1853 = vmatpush1.msra.mxu0 0.0
        %1854 = vmatprep.subr.mxu0 0.0
        %1855 = vmatpush1.msra.mxu0 0.0
        %1856 = vmatprep.subr.mxu0 0.0
        %1857 = vmatpush1.msra.mxu0 0.0
        %1858 = vmatprep.subr.mxu0 0.0
        %1859 = vmatpush1.msra.mxu0 0.0
        %1860 = vmatprep.subr.mxu0 0.0
        %1861 = vmatpush1.msra.mxu0 0.0
        %1862 = vmatprep.subr.mxu0 0.0
        %1863 = vmatpush1.msra.mxu0 0.0
        %1864 = vmatprep.subr.mxu0 0.0
        %1865 = vmatpush1.msra.mxu0 0.0
        %1866 = vmatprep.subr.mxu0 0.0
        %1867 = vmatpush1.msra.mxu0 0.0
        %1868 = vmatprep.subr.mxu0 0.0
        %1869 = vmatpush1.msra.mxu0 0.0
        %1870 = vmatprep.subr.mxu0 0.0
        %1871 = vmatpush1.msra.mxu0 0.0
        %1872 = vmatprep.subr.mxu0 0.0
        %1873 = vmatpush1.msra.mxu0 0.0
        %1874 = vmatprep.subr.mxu0 0.0
        %1875 = vmatpush1.msra.mxu0 0.0
        %1876 = vmatprep.subr.mxu0 0.0
        %1877 = vmatpush1.msra.mxu0 0.0
        %1878 = vmatprep.subr.mxu0 0.0
        %1879 = vmatpush1.msra.mxu0 0.0
        %1880 = vmatprep.subr.mxu0 0.0
        %1881 = vmatpush1.msra.mxu0 0.0
        %1882 = vmatprep.subr.mxu0 0.0
        %1883 = vmatpush1.msra.mxu0 0.0
        %1884 = vmatprep.subr.mxu0 0.0
        %1885 = vmatpush1.msra.mxu0 0.0
        %1886 = vmatprep.subr.mxu0 0.0
        %1887 = vmatpush1.msra.mxu0 0.0
        %1888 = vmatprep.subr.mxu0 0.0
        %1889 = vmatpush1.msra.mxu0 0.0
        %1890 = vmatprep.subr.mxu0 0.0
        %1891 = vmatpush1.msra.mxu0 0.0
        %1892 = vmatprep.subr.mxu0 0.0
        %1893 = vmatpush1.msra.mxu0 0.0
        %1894 = vmatprep.subr.mxu0 0.0
        %1895 = vmatpush1.msra.mxu0 0.0
        %1896 = vmatprep.subr.mxu0 0.0
        %1897 = vmatpush1.msra.mxu0 0.0
        %1898 = vmatprep.subr.mxu0 0.0
        %1899 = vmatpush1.msra.mxu0 0.0
        %1900 = vmatprep.subr.mxu0 0.0
        %1901 = vmatpush1.msra.mxu0 0.0
        %1902 = vmatprep.subr.mxu0 0.0
        %1903 = vmatpush1.msra.mxu0 0.0
        %1904 = vmatprep.subr.mxu0 0.0
        %1905 = vmatpush1.msra.mxu0 0.0
        %1906 = vmatprep.mubr.f32.mxu0 0.0
        %1907 = vmatmul.mubr.f32.gmra.mrb[0].mxu0 %v816
        %v1908 = vpop.f32.mrb[0].mxu0
        %v1909 = vadd.f32 %v1804, %v1908
        %v1910 = vpop.f32.mrb[0].mxu0
        %1911 = vmatprep.mubr.f32.mxu0 0.0
        %1912 = vmatmul.mubr.f32.gmra.mrb[0].mxu0 %v819
        %v1913 = vpop.f32.mrb[0].mxu0
        %v1914 = vadd.f32 %v1809, %v1913
        %v1915 = vpop.f32.mrb[0].mxu0
        %1916 = vmatprep.mubr.f32.mxu0 0.0
        %1917 = vmatmul.mubr.f32.gmra.mrb[0].mxu0 %v822
        %v1918 = vpop.f32.mrb[0].mxu0
        %v1919 = vadd.f32 %v1814, %v1918
        %v1920 = vpop.f32.mrb[0].mxu0
        %1921 = vmatprep.mubr.f32.mxu0 0.0
        %1922 = vmatmul.mubr.f32.gmra.mrb[0].mxu0 %v825
        %v1923 = vpop.f32.mrb[0].mxu0
        %v1924 = vadd.f32 %v1819, %v1923
        %v1925 = vpop.f32.mrb[0].mxu0
        %1926 = vmatprep.mubr.f32.mxu0 0.0
        %1927 = vmatmul.mubr.f32.gmra.mrb[0].mxu0 %v828
        %v1928 = vpop.f32.mrb[0].mxu0
        %v1929 = vadd.f32 %v1824, %v1928
        %v1930 = vpop.f32.mrb[0].mxu0
        %1931 = vmatprep.mubr.f32.mxu0 0.0
        %1932 = vmatmul.mubr.f32.gmra.mrb[0].mxu0 %v831
        %v1933 = vpop.f32.mrb[0].mxu0
        %v1934 = vadd.f32 %v1829, %v1933
        %v1935 = vpop.f32.mrb[0].mxu0
        %1936 = vmatprep.mubr.f32.mxu0 0.0
        %1937 = vmatmul.mubr.f32.gmra.mrb[0].mxu0 %v834
        %v1938 = vpop.f32.mrb[0].mxu0
        %v1939 = vadd.f32 %v1834, %v1938
        %v1940 = vpop.f32.mrb[0].mxu0
        %1941 = vmatprep.mubr.f32.mxu0 0.0
        %1942 = vmatmul.mubr.f32.gmra.mrb[0].mxu0 %v837
        %v1943 = vpop.f32.mrb[0].mxu0
        %v1944 = vadd.f32 %v1839, %v1943
        %v1945 = vpop.f32.mrb[0].mxu0
        %1946 = vdwg.mxu0
        %v1947 = vadd.f32 %v1909, %v546
        %v1948 = vadd.f32 %v1914, %v551
        %v1949 = vadd.f32 %v1919, %v556
        %v1950 = vadd.f32 %v1924, %v561
        %v1951 = vadd.f32 %v1929, %v566
        %v1952 = vadd.f32 %v1934, %v571
        %v1953 = vadd.f32 %v1939, %v576
        %v1954 = vadd.f32 %v1944, %v581
        %v1955 = vxor.u32 %v1947, 2147483648
        %v1956 = vxor.u32 %v1948, 2147483648
        %v1957 = vmul.f32 %v1955, 1.442695
        %v1958 = vpow.pop %v1957
        %v1959 = vmul.f32 %v1956, 1.442695
        %v1960 = vpow.pop %v1959
        %v1961 = vadd.f32 %v1958, 1.0
        %v1962 = vadd.f32 %v1960, 1.0
        %v1963 = vrcp.pop %v1961
        %v1964 = vmul.f32 1.0, %v1963
        %v1965 = vrcp.pop %v1962
        %v1966 = vmul.f32 1.0, %v1965
        %v1967 = vxor.u32 %v1949, 2147483648
        %v1968 = vxor.u32 %v1950, 2147483648
        %v1969 = vmul.f32 %v1967, 1.442695
        %v1970 = vpow.pop %v1969
        %v1971 = vmul.f32 %v1968, 1.442695
        %v1972 = vpow.pop %v1971
        %v1973 = vadd.f32 %v1970, 1.0
        %v1974 = vadd.f32 %v1972, 1.0
        %v1975 = vrcp.pop %v1973
        %v1976 = vmul.f32 1.0, %v1975
        %v1977 = vrcp.pop %v1974
        %v1978 = vmul.f32 1.0, %v1977
        %v1979 = vtanh.pop %v1951
        %v1980 = vtanh.pop %v1952
        %v1981 = vxor.u32 %v1953, 2147483648
        %v1982 = vxor.u32 %v1954, 2147483648
        %v1983 = vmul.f32 %v1981, 1.442695
        %v1984 = vpow.pop %v1983
        %v1985 = vmul.f32 %v1982, 1.442695
        %v1986 = vpow.pop %v1985
        %v1987 = vadd.f32 %v1984, 1.0
        %v1988 = vadd.f32 %v1986, 1.0
        %v1989 = vrcp.pop %v1987
        %v1990 = vmul.f32 1.0, %v1989
        %v1991 = vrcp.pop %v1988
        %v1992 = vmul.f32 1.0, %v1991
        %v1993 = vmul.f32 %v1976, %v1498
        %v1994 = vmul.f32 %v1978, %v1499
        %v1995 = vmul.f32 %v1964, %v1979
        %v1996 = vmul.f32 %v1966, %v1980
        %v1997 = vadd.f32 %v1993, %v1995
        %v1998 = vadd.f32 %v1994, %v1996
        %v1999 = vtanh.pop %v1997
        %v2000 = vtanh.pop %v1998
        %v2001 = vmul.f32 %v1990, %v1999
        %v2002 = vmul.f32 %v1992, %v2000
        %2003 = vmatprep.subr.mxu0 0.0
        %2004 = vmatpush1.msra.mxu0 %v1735
        %2005 = vmatprep.subr.mxu0 0.0
        %2006 = vmatpush1.msra.mxu0 %v1736
        %2007 = vmatprep.subr.mxu0 0.0
        %2008 = vmatpush1.msra.mxu0 0.0
        %2009 = vmatprep.subr.mxu0 0.0
        %2010 = vmatpush1.msra.mxu0 0.0
        %2011 = vmatprep.subr.mxu0 0.0
        %2012 = vmatpush1.msra.mxu0 0.0
        %2013 = vmatprep.subr.mxu0 0.0
        %2014 = vmatpush1.msra.mxu0 0.0
        %2015 = vmatprep.subr.mxu0 0.0
        %2016 = vmatpush1.msra.mxu0 0.0
        %2017 = vmatprep.subr.mxu0 0.0
        %2018 = vmatpush1.msra.mxu0 0.0
        %2019 = vmatprep.subr.mxu0 0.0
        %2020 = vmatpush1.msra.mxu0 0.0
        %2021 = vmatprep.subr.mxu0 0.0
        %2022 = vmatpush1.msra.mxu0 0.0
        %2023 = vmatprep.subr.mxu0 0.0
        %2024 = vmatpush1.msra.mxu0 0.0
        %2025 = vmatprep.subr.mxu0 0.0
        %2026 = vmatpush1.msra.mxu0 0.0
        %2027 = vmatprep.subr.mxu0 0.0
        %2028 = vmatpush1.msra.mxu0 0.0
        %2029 = vmatprep.subr.mxu0 0.0
        %2030 = vmatpush1.msra.mxu0 0.0
        %2031 = vmatprep.subr.mxu0 0.0
        %2032 = vmatpush1.msra.mxu0 0.0
        %2033 = vmatprep.subr.mxu0 0.0
        %2034 = vmatpush1.msra.mxu0 0.0
        %2035 = vmatprep.subr.mxu0 0.0
        %2036 = vmatpush1.msra.mxu0 0.0
        %2037 = vmatprep.subr.mxu0 0.0
        %2038 = vmatpush1.msra.mxu0 0.0
        %2039 = vmatprep.subr.mxu0 0.0
        %2040 = vmatpush1.msra.mxu0 0.0
        %2041 = vmatprep.subr.mxu0 0.0
        %2042 = vmatpush1.msra.mxu0 0.0
        %2043 = vmatprep.subr.mxu0 0.0
        %2044 = vmatpush1.msra.mxu0 0.0
        %2045 = vmatprep.subr.mxu0 0.0
        %2046 = vmatpush1.msra.mxu0 0.0
        %2047 = vmatprep.subr.mxu0 0.0
        %2048 = vmatpush1.msra.mxu0 0.0
        %2049 = vmatprep.subr.mxu0 0.0
        %2050 = vmatpush1.msra.mxu0 0.0
        %2051 = vmatprep.subr.mxu0 0.0
        %2052 = vmatpush1.msra.mxu0 0.0
        %2053 = vmatprep.subr.mxu0 0.0
        %2054 = vmatpush1.msra.mxu0 0.0
        %2055 = vmatprep.subr.mxu0 0.0
        %2056 = vmatpush1.msra.mxu0 0.0
        %2057 = vmatprep.subr.mxu0 0.0
        %2058 = vmatpush1.msra.mxu0 0.0
        %2059 = vmatprep.subr.mxu0 0.0
        %2060 = vmatpush1.msra.mxu0 0.0
        %2061 = vmatprep.subr.mxu0 0.0
        %2062 = vmatpush1.msra.mxu0 0.0
        %2063 = vmatprep.subr.mxu0 0.0
        %2064 = vmatpush1.msra.mxu0 0.0
        %2065 = vmatprep.subr.mxu0 0.0
        %2066 = vmatpush1.msra.mxu0 0.0
        %2067 = vmatprep.mubr.f32.mxu0 0.0
        %2068 = vmatmul.mubr.f32.gmra.mrb[0].mxu0 %v1001
        %v2069 = vpop.f32.mrb[0].mxu0
        %v2070 = vadd.f32 0.0, %v2069
        %v2071 = vpop.f32.mrb[0].mxu0
        %2072 = vdwg.mxu0
        %2073 = vmatprep.subr.mxu0 0.0
        %2074 = vmatpush1.msra.mxu0 %v2001
        %2075 = vmatprep.subr.mxu0 0.0
        %2076 = vmatpush1.msra.mxu0 %v2002
        %2077 = vmatprep.subr.mxu0 0.0
        %2078 = vmatpush1.msra.mxu0 0.0
        %2079 = vmatprep.subr.mxu0 0.0
        %2080 = vmatpush1.msra.mxu0 0.0
        %2081 = vmatprep.subr.mxu0 0.0
        %2082 = vmatpush1.msra.mxu0 0.0
        %2083 = vmatprep.subr.mxu0 0.0
        %2084 = vmatpush1.msra.mxu0 0.0
        %2085 = vmatprep.subr.mxu0 0.0
        %2086 = vmatpush1.msra.mxu0 0.0
        %2087 = vmatprep.subr.mxu0 0.0
        %2088 = vmatpush1.msra.mxu0 0.0
        %2089 = vmatprep.subr.mxu0 0.0
        %2090 = vmatpush1.msra.mxu0 0.0
        %2091 = vmatprep.subr.mxu0 0.0
        %2092 = vmatpush1.msra.mxu0 0.0
        %2093 = vmatprep.subr.mxu0 0.0
        %2094 = vmatpush1.msra.mxu0 0.0
        %2095 = vmatprep.subr.mxu0 0.0
        %2096 = vmatpush1.msra.mxu0 0.0
        %2097 = vmatprep.subr.mxu0 0.0
        %2098 = vmatpush1.msra.mxu0 0.0
        %2099 = vmatprep.subr.mxu0 0.0
        %2100 = vmatpush1.msra.mxu0 0.0
        %2101 = vmatprep.subr.mxu0 0.0
        %2102 = vmatpush1.msra.mxu0 0.0
        %2103 = vmatprep.subr.mxu0 0.0
        %2104 = vmatpush1.msra.mxu0 0.0
        %2105 = vmatprep.subr.mxu0 0.0
        %2106 = vmatpush1.msra.mxu0 0.0
        %2107 = vmatprep.subr.mxu0 0.0
        %2108 = vmatpush1.msra.mxu0 0.0
        %2109 = vmatprep.subr.mxu0 0.0
        %2110 = vmatpush1.msra.mxu0 0.0
        %2111 = vmatprep.subr.mxu0 0.0
        %2112 = vmatpush1.msra.mxu0 0.0
        %2113 = vmatprep.subr.mxu0 0.0
        %2114 = vmatpush1.msra.mxu0 0.0
        %2115 = vmatprep.subr.mxu0 0.0
        %2116 = vmatpush1.msra.mxu0 0.0
        %2117 = vmatprep.subr.mxu0 0.0
        %2118 = vmatpush1.msra.mxu0 0.0
        %2119 = vmatprep.subr.mxu0 0.0
        %2120 = vmatpush1.msra.mxu0 0.0
        %2121 = vmatprep.subr.mxu0 0.0
        %2122 = vmatpush1.msra.mxu0 0.0
        %2123 = vmatprep.subr.mxu0 0.0
        %2124 = vmatpush1.msra.mxu0 0.0
        %2125 = vmatprep.subr.mxu0 0.0
        %2126 = vmatpush1.msra.mxu0 0.0
        %2127 = vmatprep.subr.mxu0 0.0
        %2128 = vmatpush1.msra.mxu0 0.0
        %2129 = vmatprep.subr.mxu0 0.0
        %2130 = vmatpush1.msra.mxu0 0.0
        %2131 = vmatprep.subr.mxu0 0.0
        %2132 = vmatpush1.msra.mxu0 0.0
        %2133 = vmatprep.subr.mxu0 0.0
        %2134 = vmatpush1.msra.mxu0 0.0
        %2135 = vmatprep.subr.mxu0 0.0
        %2136 = vmatpush1.msra.mxu0 0.0
        %2137 = vmatprep.mubr.f32.mxu0 0.0
        %2138 = vmatmul.mubr.f32.gmra.mrb[0].mxu0 %v1074
        %v2139 = vpop.f32.mrb[0].mxu0
        %v2140 = vadd.f32 %v2070, %v2139
        %v2141 = vpop.f32.mrb[0].mxu0
        %2142 = vdwg.mxu0
        %v2143 = vadd.f32 %v2140, %v592
        %s2144 = scalar_lea.vmem %s437, 2 [#allocation4]
        %2145 = vst [vmem:[%s2144] sm:$0x1] %v2143
        %s2146 = scalar_lea.vmem %s460, 6
        %v2147 = vld [vmem:[%s2146] sm:$0x3]
        %v2149 = vrot.slane %v2143, 7
        %v2151 = vmul.f32 %v2147, %v2149
        %v2153 = vrot.slane %v2151, 1
        %v2155 = vadd.f32 %v2147, %v2153
        %2156 = vmatprep.subr.mxu0 0.0
        %2157 = vmatpush1.msra.mxu0 %v477
        %2158 = vmatprep.subr.mxu0 0.0
        %2159 = vmatpush1.msra.mxu0 %v478
        %2160 = vmatprep.subr.mxu0 0.0
        %2161 = vmatpush1.msra.mxu0 %v479
        %2162 = vmatprep.subr.mxu0 0.0
        %2163 = vmatpush1.msra.mxu0 %v480
        %2164 = vmatprep.subr.mxu0 0.0
        %2165 = vmatpush1.msra.mxu0 %v481
        %2166 = vmatprep.subr.mxu0 0.0
        %2167 = vmatpush1.msra.mxu0 %v482
        %2168 = vmatprep.subr.mxu0 0.0
        %2169 = vmatpush1.msra.mxu0 %v483
        %2170 = vmatprep.subr.mxu0 0.0
        %2171 = vmatpush1.msra.mxu0 %v484
        %2172 = vmatprep.subr.mxu0 0.0
        %2173 = vmatpush1.msra.mxu0 %v485
        %2174 = vmatprep.subr.mxu0 0.0
        %2175 = vmatpush1.msra.mxu0 %v486
        %2176 = vmatprep.subr.mxu0 0.0
        %2177 = vmatpush1.msra.mxu0 %v487
        %2178 = vmatprep.subr.mxu0 0.0
        %2179 = vmatpush1.msra.mxu0 %v488
        %2180 = vmatprep.subr.mxu0 0.0
        %2181 = vmatpush1.msra.mxu0 %v489
        %2182 = vmatprep.subr.mxu0 0.0
        %2183 = vmatpush1.msra.mxu0 %v490
        %2184 = vmatprep.subr.mxu0 0.0
        %2185 = vmatpush1.msra.mxu0 %v491
        %2186 = vmatprep.subr.mxu0 0.0
        %2187 = vmatpush1.msra.mxu0 %v492
        %2188 = vmatprep.subr.mxu0 0.0
        %2189 = vmatpush1.msra.mxu0 0.0
        %2190 = vmatprep.subr.mxu0 0.0
        %2191 = vmatpush1.msra.mxu0 0.0
        %2192 = vmatprep.subr.mxu0 0.0
        %2193 = vmatpush1.msra.mxu0 0.0
        %2194 = vmatprep.subr.mxu0 0.0
        %2195 = vmatpush1.msra.mxu0 0.0
        %2196 = vmatprep.subr.mxu0 0.0
        %2197 = vmatpush1.msra.mxu0 0.0
        %2198 = vmatprep.subr.mxu0 0.0
        %2199 = vmatpush1.msra.mxu0 0.0
        %2200 = vmatprep.subr.mxu0 0.0
        %2201 = vmatpush1.msra.mxu0 0.0
        %2202 = vmatprep.subr.mxu0 0.0
        %2203 = vmatpush1.msra.mxu0 0.0
        %2204 = vmatprep.subr.mxu0 0.0
        %2205 = vmatpush1.msra.mxu0 0.0
        %2206 = vmatprep.subr.mxu0 0.0
        %2207 = vmatpush1.msra.mxu0 0.0
        %2208 = vmatprep.subr.mxu0 0.0
        %2209 = vmatpush1.msra.mxu0 0.0
        %2210 = vmatprep.subr.mxu0 0.0
        %2211 = vmatpush1.msra.mxu0 0.0
        %2212 = vmatprep.subr.mxu0 0.0
        %2213 = vmatpush1.msra.mxu0 0.0
        %2214 = vmatprep.subr.mxu0 0.0
        %2215 = vmatpush1.msra.mxu0 0.0
        %2216 = vmatprep.subr.mxu0 0.0
        %2217 = vmatpush1.msra.mxu0 0.0
        %2218 = vmatprep.subr.mxu0 0.0
        %2219 = vmatpush1.msra.mxu0 0.0
        %2220 = vmatprep.mubr.f32.mxu0 0.0
        %2221 = vmatmul.mubr.f32.gmra.mrb[0].mxu0 %v2155
        %v2222 = vpop.f32.mrb[0].mxu0
        %v2223 = vadd.f32 0.0, %v2222
        %v2224 = vpop.f32.mrb[0].mxu0
        %2225 = vdwg.mxu0
        %v2226 = vlaneseq
        %v2227 = vshrl.u32 %v2226, 7
        %v2228 = vsub.s32 0, %v2227
        %v2229 = vrot.slane %v2223, %v2228
        %v2230 = vmul.f32 %v516, %v2229
        %v2231 = vmul.f32 %v521, %v2229
        %v2232 = vadd.f32 %v2230, %v528
        %v2233 = vadd.f32 %v2231, %v533
        %v2234 = vmax.f32 %v2232, 0.0
        %v2235 = vmax.f32 %v2233, 0.0
        %2236 = vmatprep.subr.mxu0 0.0
        %2237 = vmatpush1.msra.mxu0 %v2001
        %2238 = vmatprep.subr.mxu0 0.0
        %2239 = vmatpush1.msra.mxu0 %v2002
        %2240 = vmatprep.subr.mxu0 0.0
        %2241 = vmatpush1.msra.mxu0 0.0
        %2242 = vmatprep.subr.mxu0 0.0
        %2243 = vmatpush1.msra.mxu0 0.0
        %2244 = vmatprep.subr.mxu0 0.0
        %2245 = vmatpush1.msra.mxu0 0.0
        %2246 = vmatprep.subr.mxu0 0.0
        %2247 = vmatpush1.msra.mxu0 0.0
        %2248 = vmatprep.subr.mxu0 0.0
        %2249 = vmatpush1.msra.mxu0 0.0
        %2250 = vmatprep.subr.mxu0 0.0
        %2251 = vmatpush1.msra.mxu0 0.0
        %2252 = vmatprep.subr.mxu0 0.0
        %2253 = vmatpush1.msra.mxu0 0.0
        %2254 = vmatprep.subr.mxu0 0.0
        %2255 = vmatpush1.msra.mxu0 0.0
        %2256 = vmatprep.subr.mxu0 0.0
        %2257 = vmatpush1.msra.mxu0 0.0
        %2258 = vmatprep.subr.mxu0 0.0
        %2259 = vmatpush1.msra.mxu0 0.0
        %2260 = vmatprep.subr.mxu0 0.0
        %2261 = vmatpush1.msra.mxu0 0.0
        %2262 = vmatprep.subr.mxu0 0.0
        %2263 = vmatpush1.msra.mxu0 0.0
        %2264 = vmatprep.subr.mxu0 0.0
        %2265 = vmatpush1.msra.mxu0 0.0
        %2266 = vmatprep.subr.mxu0 0.0
        %2267 = vmatpush1.msra.mxu0 0.0
        %2268 = vmatprep.subr.mxu0 0.0
        %2269 = vmatpush1.msra.mxu0 0.0
        %2270 = vmatprep.subr.mxu0 0.0
        %2271 = vmatpush1.msra.mxu0 0.0
        %2272 = vmatprep.subr.mxu0 0.0
        %2273 = vmatpush1.msra.mxu0 0.0
        %2274 = vmatprep.subr.mxu0 0.0
        %2275 = vmatpush1.msra.mxu0 0.0
        %2276 = vmatprep.subr.mxu0 0.0
        %2277 = vmatpush1.msra.mxu0 0.0
        %2278 = vmatprep.subr.mxu0 0.0
        %2279 = vmatpush1.msra.mxu0 0.0
        %2280 = vmatprep.subr.mxu0 0.0
        %2281 = vmatpush1.msra.mxu0 0.0
        %2282 = vmatprep.subr.mxu0 0.0
        %2283 = vmatpush1.msra.mxu0 0.0
        %2284 = vmatprep.subr.mxu0 0.0
        %2285 = vmatpush1.msra.mxu0 0.0
        %2286 = vmatprep.subr.mxu0 0.0
        %2287 = vmatpush1.msra.mxu0 0.0
        %2288 = vmatprep.subr.mxu0 0.0
        %2289 = vmatpush1.msra.mxu0 0.0
        %2290 = vmatprep.subr.mxu0 0.0
        %2291 = vmatpush1.msra.mxu0 0.0
        %2292 = vmatprep.subr.mxu0 0.0
        %2293 = vmatpush1.msra.mxu0 0.0
        %2294 = vmatprep.subr.mxu0 0.0
        %2295 = vmatpush1.msra.mxu0 0.0
        %2296 = vmatprep.subr.mxu0 0.0
        %2297 = vmatpush1.msra.mxu0 0.0
        %2298 = vmatprep.subr.mxu0 0.0
        %2299 = vmatpush1.msra.mxu0 0.0
        %2300 = vmatprep.mubr.f32.mxu0 0.0
        %2301 = vmatmul.mubr.f32.gmra.mrb[0].mxu0 %v687
        %v2302 = vpop.f32.mrb[0].mxu0
        %v2303 = vadd.f32 0.0, %v2302
        %v2304 = vpop.f32.mrb[0].mxu0
        %2305 = vmatprep.mubr.f32.mxu0 0.0
        %2306 = vmatmul.mubr.f32.gmra.mrb[0].mxu0 %v690
        %v2307 = vpop.f32.mrb[0].mxu0
        %v2308 = vadd.f32 0.0, %v2307
        %v2309 = vpop.f32.mrb[0].mxu0
        %2310 = vmatprep.mubr.f32.mxu0 0.0
        %2311 = vmatmul.mubr.f32.gmra.mrb[0].mxu0 %v693
        %v2312 = vpop.f32.mrb[0].mxu0
        %v2313 = vadd.f32 0.0, %v2312
        %v2314 = vpop.f32.mrb[0].mxu0
        %2315 = vmatprep.mubr.f32.mxu0 0.0
        %2316 = vmatmul.mubr.f32.gmra.mrb[0].mxu0 %v696
        %v2317 = vpop.f32.mrb[0].mxu0
        %v2318 = vadd.f32 0.0, %v2317
        %v2319 = vpop.f32.mrb[0].mxu0
        %2320 = vmatprep.mubr.f32.mxu0 0.0
        %2321 = vmatmul.mubr.f32.gmra.mrb[0].mxu0 %v699
        %v2322 = vpop.f32.mrb[0].mxu0
        %v2323 = vadd.f32 0.0, %v2322
        %v2324 = vpop.f32.mrb[0].mxu0
        %2325 = vmatprep.mubr.f32.mxu0 0.0
        %2326 = vmatmul.mubr.f32.gmra.mrb[0].mxu0 %v702
        %v2327 = vpop.f32.mrb[0].mxu0
        %v2328 = vadd.f32 0.0, %v2327
        %v2329 = vpop.f32.mrb[0].mxu0
        %2330 = vmatprep.mubr.f32.mxu0 0.0
        %2331 = vmatmul.mubr.f32.gmra.mrb[0].mxu0 %v705
        %v2332 = vpop.f32.mrb[0].mxu0
        %v2333 = vadd.f32 0.0, %v2332
        %v2334 = vpop.f32.mrb[0].mxu0
        %2335 = vmatprep.mubr.f32.mxu0 0.0
        %2336 = vmatmul.mubr.f32.gmra.mrb[0].mxu0 %v708
        %v2337 = vpop.f32.mrb[0].mxu0
        %v2338 = vadd.f32 0.0, %v2337
        %v2339 = vpop.f32.mrb[0].mxu0
        %2340 = vdwg.mxu0
        %2341 = vmatprep.subr.mxu0 0.0
        %2342 = vmatpush1.msra.mxu0 %v2234
        %2343 = vmatprep.subr.mxu0 0.0
        %2344 = vmatpush1.msra.mxu0 %v2235
        %2345 = vmatprep.subr.mxu0 0.0
        %2346 = vmatpush1.msra.mxu0 0.0
        %2347 = vmatprep.subr.mxu0 0.0
        %2348 = vmatpush1.msra.mxu0 0.0
        %2349 = vmatprep.subr.mxu0 0.0
        %2350 = vmatpush1.msra.mxu0 0.0
        %2351 = vmatprep.subr.mxu0 0.0
        %2352 = vmatpush1.msra.mxu0 0.0
        %2353 = vmatprep.subr.mxu0 0.0
        %2354 = vmatpush1.msra.mxu0 0.0
        %2355 = vmatprep.subr.mxu0 0.0
        %2356 = vmatpush1.msra.mxu0 0.0
        %2357 = vmatprep.subr.mxu0 0.0
        %2358 = vmatpush1.msra.mxu0 0.0
        %2359 = vmatprep.subr.mxu0 0.0
        %2360 = vmatpush1.msra.mxu0 0.0
        %2361 = vmatprep.subr.mxu0 0.0
        %2362 = vmatpush1.msra.mxu0 0.0
        %2363 = vmatprep.subr.mxu0 0.0
        %2364 = vmatpush1.msra.mxu0 0.0
        %2365 = vmatprep.subr.mxu0 0.0
        %2366 = vmatpush1.msra.mxu0 0.0
        %2367 = vmatprep.subr.mxu0 0.0
        %2368 = vmatpush1.msra.mxu0 0.0
        %2369 = vmatprep.subr.mxu0 0.0
        %2370 = vmatpush1.msra.mxu0 0.0
        %2371 = vmatprep.subr.mxu0 0.0
        %2372 = vmatpush1.msra.mxu0 0.0
        %2373 = vmatprep.subr.mxu0 0.0
        %2374 = vmatpush1.msra.mxu0 0.0
        %2375 = vmatprep.subr.mxu0 0.0
        %2376 = vmatpush1.msra.mxu0 0.0
        %2377 = vmatprep.subr.mxu0 0.0
        %2378 = vmatpush1.msra.mxu0 0.0
        %2379 = vmatprep.subr.mxu0 0.0
        %2380 = vmatpush1.msra.mxu0 0.0
        %2381 = vmatprep.subr.mxu0 0.0
        %2382 = vmatpush1.msra.mxu0 0.0
        %2383 = vmatprep.subr.mxu0 0.0
        %2384 = vmatpush1.msra.mxu0 0.0
        %2385 = vmatprep.subr.mxu0 0.0
        %2386 = vmatpush1.msra.mxu0 0.0
        %2387 = vmatprep.subr.mxu0 0.0
        %2388 = vmatpush1.msra.mxu0 0.0
        %2389 = vmatprep.subr.mxu0 0.0
        %2390 = vmatpush1.msra.mxu0 0.0
        %2391 = vmatprep.subr.mxu0 0.0
        %2392 = vmatpush1.msra.mxu0 0.0
        %2393 = vmatprep.subr.mxu0 0.0
        %2394 = vmatpush1.msra.mxu0 0.0
        %2395 = vmatprep.subr.mxu0 0.0
        %2396 = vmatpush1.msra.mxu0 0.0
        %2397 = vmatprep.subr.mxu0 0.0
        %2398 = vmatpush1.msra.mxu0 0.0
        %2399 = vmatprep.subr.mxu0 0.0
        %2400 = vmatpush1.msra.mxu0 0.0
        %2401 = vmatprep.subr.mxu0 0.0
        %2402 = vmatpush1.msra.mxu0 0.0
        %2403 = vmatprep.subr.mxu0 0.0
        %2404 = vmatpush1.msra.mxu0 0.0
        %2405 = vmatprep.mubr.f32.mxu0 0.0
        %2406 = vmatmul.mubr.f32.gmra.mrb[0].mxu0 %v816
        %v2407 = vpop.f32.mrb[0].mxu0
        %v2408 = vadd.f32 %v2303, %v2407
        %v2409 = vpop.f32.mrb[0].mxu0
        %2410 = vmatprep.mubr.f32.mxu0 0.0
        %2411 = vmatmul.mubr.f32.gmra.mrb[0].mxu0 %v819
        %v2412 = vpop.f32.mrb[0].mxu0
        %v2413 = vadd.f32 %v2308, %v2412
        %v2414 = vpop.f32.mrb[0].mxu0
        %2415 = vmatprep.mubr.f32.mxu0 0.0
        %2416 = vmatmul.mubr.f32.gmra.mrb[0].mxu0 %v822
        %v2417 = vpop.f32.mrb[0].mxu0
        %v2418 = vadd.f32 %v2313, %v2417
        %v2419 = vpop.f32.mrb[0].mxu0
        %2420 = vmatprep.mubr.f32.mxu0 0.0
        %2421 = vmatmul.mubr.f32.gmra.mrb[0].mxu0 %v825
        %v2422 = vpop.f32.mrb[0].mxu0
        %v2423 = vadd.f32 %v2318, %v2422
        %v2424 = vpop.f32.mrb[0].mxu0
        %2425 = vmatprep.mubr.f32.mxu0 0.0
        %2426 = vmatmul.mubr.f32.gmra.mrb[0].mxu0 %v828
        %v2427 = vpop.f32.mrb[0].mxu0
        %v2428 = vadd.f32 %v2323, %v2427
        %v2429 = vpop.f32.mrb[0].mxu0
        %2430 = vmatprep.mubr.f32.mxu0 0.0
        %2431 = vmatmul.mubr.f32.gmra.mrb[0].mxu0 %v831
        %v2432 = vpop.f32.mrb[0].mxu0
        %v2433 = vadd.f32 %v2328, %v2432
        %v2434 = vpop.f32.mrb[0].mxu0
        %2435 = vmatprep.mubr.f32.mxu0 0.0
        %2436 = vmatmul.mubr.f32.gmra.mrb[0].mxu0 %v834
        %v2437 = vpop.f32.mrb[0].mxu0
        %v2438 = vadd.f32 %v2333, %v2437
        %v2439 = vpop.f32.mrb[0].mxu0
        %2440 = vmatprep.mubr.f32.mxu0 0.0
        %2441 = vmatmul.mubr.f32.gmra.mrb[0].mxu0 %v837
        %v2442 = vpop.f32.mrb[0].mxu0
        %v2443 = vadd.f32 %v2338, %v2442
        %v2444 = vpop.f32.mrb[0].mxu0
        %2445 = vdwg.mxu0
        %v2446 = vadd.f32 %v2408, %v546
        %v2447 = vadd.f32 %v2413, %v551
        %v2448 = vadd.f32 %v2418, %v556
        %v2449 = vadd.f32 %v2423, %v561
        %v2450 = vadd.f32 %v2428, %v566
        %v2451 = vadd.f32 %v2433, %v571
        %v2452 = vadd.f32 %v2438, %v576
        %v2453 = vadd.f32 %v2443, %v581
        %v2454 = vxor.u32 %v2446, 2147483648
        %v2455 = vxor.u32 %v2447, 2147483648
        %v2456 = vmul.f32 %v2454, 1.442695
        %v2457 = vpow.pop %v2456
        %v2458 = vmul.f32 %v2455, 1.442695
        %v2459 = vpow.pop %v2458
        %v2460 = vadd.f32 %v2457, 1.0
        %v2461 = vadd.f32 %v2459, 1.0
        %v2462 = vrcp.pop %v2460
        %v2463 = vmul.f32 1.0, %v2462
        %v2464 = vrcp.pop %v2461
        %v2465 = vmul.f32 1.0, %v2464
        %v2466 = vxor.u32 %v2448, 2147483648
        %v2467 = vxor.u32 %v2449, 2147483648
        %v2468 = vmul.f32 %v2466, 1.442695
        %v2469 = vpow.pop %v2468
        %v2470 = vmul.f32 %v2467, 1.442695
        %v2471 = vpow.pop %v2470
        %v2472 = vadd.f32 %v2469, 1.0
        %v2473 = vadd.f32 %v2471, 1.0
        %v2474 = vrcp.pop %v2472
        %v2475 = vmul.f32 1.0, %v2474
        %v2476 = vrcp.pop %v2473
        %v2477 = vmul.f32 1.0, %v2476
        %v2478 = vtanh.pop %v2450
        %v2479 = vtanh.pop %v2451
        %v2480 = vxor.u32 %v2452, 2147483648
        %v2481 = vxor.u32 %v2453, 2147483648
        %v2482 = vmul.f32 %v2480, 1.442695
        %v2483 = vpow.pop %v2482
        %v2484 = vmul.f32 %v2481, 1.442695
        %v2485 = vpow.pop %v2484
        %v2486 = vadd.f32 %v2483, 1.0
        %v2487 = vadd.f32 %v2485, 1.0
        %v2488 = vrcp.pop %v2486
        %v2489 = vmul.f32 1.0, %v2488
        %v2490 = vrcp.pop %v2487
        %v2491 = vmul.f32 1.0, %v2490
        %v2492 = vmul.f32 %v2475, %v1997
        %v2493 = vmul.f32 %v2477, %v1998
        %v2494 = vmul.f32 %v2463, %v2478
        %v2495 = vmul.f32 %v2465, %v2479
        %v2496 = vadd.f32 %v2492, %v2494
        %v2497 = vadd.f32 %v2493, %v2495
        %v2498 = vtanh.pop %v2496
        %v2499 = vtanh.pop %v2497
        %v2500 = vmul.f32 %v2489, %v2498
        %v2501 = vmul.f32 %v2491, %v2499
        %2502 = vmatprep.subr.mxu0 0.0
        %2503 = vmatpush1.msra.mxu0 %v2234
        %2504 = vmatprep.subr.mxu0 0.0
        %2505 = vmatpush1.msra.mxu0 %v2235
        %2506 = vmatprep.subr.mxu0 0.0
        %2507 = vmatpush1.msra.mxu0 0.0
        %2508 = vmatprep.subr.mxu0 0.0
        %2509 = vmatpush1.msra.mxu0 0.0
        %2510 = vmatprep.subr.mxu0 0.0
        %2511 = vmatpush1.msra.mxu0 0.0
        %2512 = vmatprep.subr.mxu0 0.0
        %2513 = vmatpush1.msra.mxu0 0.0
        %2514 = vmatprep.subr.mxu0 0.0
        %2515 = vmatpush1.msra.mxu0 0.0
        %2516 = vmatprep.subr.mxu0 0.0
        %2517 = vmatpush1.msra.mxu0 0.0
        %2518 = vmatprep.subr.mxu0 0.0
        %2519 = vmatpush1.msra.mxu0 0.0
        %2520 = vmatprep.subr.mxu0 0.0
        %2521 = vmatpush1.msra.mxu0 0.0
        %2522 = vmatprep.subr.mxu0 0.0
        %2523 = vmatpush1.msra.mxu0 0.0
        %2524 = vmatprep.subr.mxu0 0.0
        %2525 = vmatpush1.msra.mxu0 0.0
        %2526 = vmatprep.subr.mxu0 0.0
        %2527 = vmatpush1.msra.mxu0 0.0
        %2528 = vmatprep.subr.mxu0 0.0
        %2529 = vmatpush1.msra.mxu0 0.0
        %2530 = vmatprep.subr.mxu0 0.0
        %2531 = vmatpush1.msra.mxu0 0.0
        %2532 = vmatprep.subr.mxu0 0.0
        %2533 = vmatpush1.msra.mxu0 0.0
        %2534 = vmatprep.subr.mxu0 0.0
        %2535 = vmatpush1.msra.mxu0 0.0
        %2536 = vmatprep.subr.mxu0 0.0
        %2537 = vmatpush1.msra.mxu0 0.0
        %2538 = vmatprep.subr.mxu0 0.0
        %2539 = vmatpush1.msra.mxu0 0.0
        %2540 = vmatprep.subr.mxu0 0.0
        %2541 = vmatpush1.msra.mxu0 0.0
        %2542 = vmatprep.subr.mxu0 0.0
        %2543 = vmatpush1.msra.mxu0 0.0
        %2544 = vmatprep.subr.mxu0 0.0
        %2545 = vmatpush1.msra.mxu0 0.0
        %2546 = vmatprep.subr.mxu0 0.0
        %2547 = vmatpush1.msra.mxu0 0.0
        %2548 = vmatprep.subr.mxu0 0.0
        %2549 = vmatpush1.msra.mxu0 0.0
        %2550 = vmatprep.subr.mxu0 0.0
        %2551 = vmatpush1.msra.mxu0 0.0
        %2552 = vmatprep.subr.mxu0 0.0
        %2553 = vmatpush1.msra.mxu0 0.0
        %2554 = vmatprep.subr.mxu0 0.0
        %2555 = vmatpush1.msra.mxu0 0.0
        %2556 = vmatprep.subr.mxu0 0.0
        %2557 = vmatpush1.msra.mxu0 0.0
        %2558 = vmatprep.subr.mxu0 0.0
        %2559 = vmatpush1.msra.mxu0 0.0
        %2560 = vmatprep.subr.mxu0 0.0
        %2561 = vmatpush1.msra.mxu0 0.0
        %2562 = vmatprep.subr.mxu0 0.0
        %2563 = vmatpush1.msra.mxu0 0.0
        %2564 = vmatprep.subr.mxu0 0.0
        %2565 = vmatpush1.msra.mxu0 0.0
        %2566 = vmatprep.mubr.f32.mxu0 0.0
        %2567 = vmatmul.mubr.f32.gmra.mrb[0].mxu0 %v1001
        %v2568 = vpop.f32.mrb[0].mxu0
        %v2569 = vadd.f32 0.0, %v2568
        %v2570 = vpop.f32.mrb[0].mxu0
        %2571 = vdwg.mxu0
        %2572 = vmatprep.subr.mxu0 0.0
        %2573 = vmatpush1.msra.mxu0 %v2500
        %2574 = vmatprep.subr.mxu0 0.0
        %2575 = vmatpush1.msra.mxu0 %v2501
        %2576 = vmatprep.subr.mxu0 0.0
        %2577 = vmatpush1.msra.mxu0 0.0
        %2578 = vmatprep.subr.mxu0 0.0
        %2579 = vmatpush1.msra.mxu0 0.0
        %2580 = vmatprep.subr.mxu0 0.0
        %2581 = vmatpush1.msra.mxu0 0.0
        %2582 = vmatprep.subr.mxu0 0.0
        %2583 = vmatpush1.msra.mxu0 0.0
        %2584 = vmatprep.subr.mxu0 0.0
        %2585 = vmatpush1.msra.mxu0 0.0
        %2586 = vmatprep.subr.mxu0 0.0
        %2587 = vmatpush1.msra.mxu0 0.0
        %2588 = vmatprep.subr.mxu0 0.0
        %2589 = vmatpush1.msra.mxu0 0.0
        %2590 = vmatprep.subr.mxu0 0.0
        %2591 = vmatpush1.msra.mxu0 0.0
        %2592 = vmatprep.subr.mxu0 0.0
        %2593 = vmatpush1.msra.mxu0 0.0
        %2594 = vmatprep.subr.mxu0 0.0
        %2595 = vmatpush1.msra.mxu0 0.0
        %2596 = vmatprep.subr.mxu0 0.0
        %2597 = vmatpush1.msra.mxu0 0.0
        %2598 = vmatprep.subr.mxu0 0.0
        %2599 = vmatpush1.msra.mxu0 0.0
        %2600 = vmatprep.subr.mxu0 0.0
        %2601 = vmatpush1.msra.mxu0 0.0
        %2602 = vmatprep.subr.mxu0 0.0
        %2603 = vmatpush1.msra.mxu0 0.0
        %2604 = vmatprep.subr.mxu0 0.0
        %2605 = vmatpush1.msra.mxu0 0.0
        %2606 = vmatprep.subr.mxu0 0.0
        %2607 = vmatpush1.msra.mxu0 0.0
        %2608 = vmatprep.subr.mxu0 0.0
        %2609 = vmatpush1.msra.mxu0 0.0
        %2610 = vmatprep.subr.mxu0 0.0
        %2611 = vmatpush1.msra.mxu0 0.0
        %2612 = vmatprep.subr.mxu0 0.0
        %2613 = vmatpush1.msra.mxu0 0.0
        %2614 = vmatprep.subr.mxu0 0.0
        %2615 = vmatpush1.msra.mxu0 0.0
        %2616 = vmatprep.subr.mxu0 0.0
        %2617 = vmatpush1.msra.mxu0 0.0
        %2618 = vmatprep.subr.mxu0 0.0
        %2619 = vmatpush1.msra.mxu0 0.0
        %2620 = vmatprep.subr.mxu0 0.0
        %2621 = vmatpush1.msra.mxu0 0.0
        %2622 = vmatprep.subr.mxu0 0.0
        %2623 = vmatpush1.msra.mxu0 0.0
        %2624 = vmatprep.subr.mxu0 0.0
        %2625 = vmatpush1.msra.mxu0 0.0
        %2626 = vmatprep.subr.mxu0 0.0
        %2627 = vmatpush1.msra.mxu0 0.0
        %2628 = vmatprep.subr.mxu0 0.0
        %2629 = vmatpush1.msra.mxu0 0.0
        %2630 = vmatprep.subr.mxu0 0.0
        %2631 = vmatpush1.msra.mxu0 0.0
        %2632 = vmatprep.subr.mxu0 0.0
        %2633 = vmatpush1.msra.mxu0 0.0
        %2634 = vmatprep.subr.mxu0 0.0
        %2635 = vmatpush1.msra.mxu0 0.0
        %2636 = vmatprep.mubr.f32.mxu0 0.0
        %2637 = vmatmul.mubr.f32.gmra.mrb[0].mxu0 %v1074
        %v2638 = vpop.f32.mrb[0].mxu0
        %v2639 = vadd.f32 %v2569, %v2638
        %v2640 = vpop.f32.mrb[0].mxu0
        %2641 = vdwg.mxu0
        %v2642 = vadd.f32 %v2639, %v592
        %s2643 = scalar_lea.vmem %s437, 3 [#allocation4]
        %2644 = vst [vmem:[%s2643] sm:$0x1] %v2642
        %s2645 = scalar_lea.vmem %s460, 8
        %v2646 = vld [vmem:[%s2645] sm:$0x3]
        %v2648 = vrot.slane %v2642, 7
        %v2650 = vmul.f32 %v2646, %v2648
        %v2652 = vrot.slane %v2650, 1
        %v2654 = vadd.f32 %v2646, %v2652
        %2655 = vmatprep.subr.mxu0 0.0
        %2656 = vmatpush1.msra.mxu0 %v477
        %2657 = vmatprep.subr.mxu0 0.0
        %2658 = vmatpush1.msra.mxu0 %v478
        %2659 = vmatprep.subr.mxu0 0.0
        %2660 = vmatpush1.msra.mxu0 %v479
        %2661 = vmatprep.subr.mxu0 0.0
        %2662 = vmatpush1.msra.mxu0 %v480
        %2663 = vmatprep.subr.mxu0 0.0
        %2664 = vmatpush1.msra.mxu0 %v481
        %2665 = vmatprep.subr.mxu0 0.0
        %2666 = vmatpush1.msra.mxu0 %v482
        %2667 = vmatprep.subr.mxu0 0.0
        %2668 = vmatpush1.msra.mxu0 %v483
        %2669 = vmatprep.subr.mxu0 0.0
        %2670 = vmatpush1.msra.mxu0 %v484
        %2671 = vmatprep.subr.mxu0 0.0
        %2672 = vmatpush1.msra.mxu0 %v485
        %2673 = vmatprep.subr.mxu0 0.0
        %2674 = vmatpush1.msra.mxu0 %v486
        %2675 = vmatprep.subr.mxu0 0.0
        %2676 = vmatpush1.msra.mxu0 %v487
        %2677 = vmatprep.subr.mxu0 0.0
        %2678 = vmatpush1.msra.mxu0 %v488
        %2679 = vmatprep.subr.mxu0 0.0
        %2680 = vmatpush1.msra.mxu0 %v489
        %2681 = vmatprep.subr.mxu0 0.0
        %2682 = vmatpush1.msra.mxu0 %v490
        %2683 = vmatprep.subr.mxu0 0.0
        %2684 = vmatpush1.msra.mxu0 %v491
        %2685 = vmatprep.subr.mxu0 0.0
        %2686 = vmatpush1.msra.mxu0 %v492
        %2687 = vmatprep.subr.mxu0 0.0
        %2688 = vmatpush1.msra.mxu0 0.0
        %2689 = vmatprep.subr.mxu0 0.0
        %2690 = vmatpush1.msra.mxu0 0.0
        %2691 = vmatprep.subr.mxu0 0.0
        %2692 = vmatpush1.msra.mxu0 0.0
        %2693 = vmatprep.subr.mxu0 0.0
        %2694 = vmatpush1.msra.mxu0 0.0
        %2695 = vmatprep.subr.mxu0 0.0
        %2696 = vmatpush1.msra.mxu0 0.0
        %2697 = vmatprep.subr.mxu0 0.0
        %2698 = vmatpush1.msra.mxu0 0.0
        %2699 = vmatprep.subr.mxu0 0.0
        %2700 = vmatpush1.msra.mxu0 0.0
        %2701 = vmatprep.subr.mxu0 0.0
        %2702 = vmatpush1.msra.mxu0 0.0
        %2703 = vmatprep.subr.mxu0 0.0
        %2704 = vmatpush1.msra.mxu0 0.0
        %2705 = vmatprep.subr.mxu0 0.0
        %2706 = vmatpush1.msra.mxu0 0.0
        %2707 = vmatprep.subr.mxu0 0.0
        %2708 = vmatpush1.msra.mxu0 0.0
        %2709 = vmatprep.subr.mxu0 0.0
        %2710 = vmatpush1.msra.mxu0 0.0
        %2711 = vmatprep.subr.mxu0 0.0
        %2712 = vmatpush1.msra.mxu0 0.0
        %2713 = vmatprep.subr.mxu0 0.0
        %2714 = vmatpush1.msra.mxu0 0.0
        %2715 = vmatprep.subr.mxu0 0.0
        %2716 = vmatpush1.msra.mxu0 0.0
        %2717 = vmatprep.subr.mxu0 0.0
        %2718 = vmatpush1.msra.mxu0 0.0
        %2719 = vmatprep.mubr.f32.mxu0 0.0
        %2720 = vmatmul.mubr.f32.gmra.mrb[0].mxu0 %v2654
        %v2721 = vpop.f32.mrb[0].mxu0
        %v2722 = vadd.f32 0.0, %v2721
        %v2723 = vpop.f32.mrb[0].mxu0
        %2724 = vdwg.mxu0
        %v2725 = vlaneseq
        %v2726 = vshrl.u32 %v2725, 7
        %v2727 = vsub.s32 0, %v2726
        %v2728 = vrot.slane %v2722, %v2727
        %v2729 = vmul.f32 %v516, %v2728
        %v2730 = vmul.f32 %v521, %v2728
        %v2731 = vadd.f32 %v2729, %v528
        %v2732 = vadd.f32 %v2730, %v533
        %v2733 = vmax.f32 %v2731, 0.0
        %v2734 = vmax.f32 %v2732, 0.0
        %2735 = vmatprep.subr.mxu0 0.0
        %2736 = vmatpush1.msra.mxu0 %v2500
        %2737 = vmatprep.subr.mxu0 0.0
        %2738 = vmatpush1.msra.mxu0 %v2501
        %2739 = vmatprep.subr.mxu0 0.0
        %2740 = vmatpush1.msra.mxu0 0.0
        %2741 = vmatprep.subr.mxu0 0.0
        %2742 = vmatpush1.msra.mxu0 0.0
        %2743 = vmatprep.subr.mxu0 0.0
        %2744 = vmatpush1.msra.mxu0 0.0
        %2745 = vmatprep.subr.mxu0 0.0
        %2746 = vmatpush1.msra.mxu0 0.0
        %2747 = vmatprep.subr.mxu0 0.0
        %2748 = vmatpush1.msra.mxu0 0.0
        %2749 = vmatprep.subr.mxu0 0.0
        %2750 = vmatpush1.msra.mxu0 0.0
        %2751 = vmatprep.subr.mxu0 0.0
        %2752 = vmatpush1.msra.mxu0 0.0
        %2753 = vmatprep.subr.mxu0 0.0
        %2754 = vmatpush1.msra.mxu0 0.0
        %2755 = vmatprep.subr.mxu0 0.0
        %2756 = vmatpush1.msra.mxu0 0.0
        %2757 = vmatprep.subr.mxu0 0.0
        %2758 = vmatpush1.msra.mxu0 0.0
        %2759 = vmatprep.subr.mxu0 0.0
        %2760 = vmatpush1.msra.mxu0 0.0
        %2761 = vmatprep.subr.mxu0 0.0
        %2762 = vmatpush1.msra.mxu0 0.0
        %2763 = vmatprep.subr.mxu0 0.0
        %2764 = vmatpush1.msra.mxu0 0.0
        %2765 = vmatprep.subr.mxu0 0.0
        %2766 = vmatpush1.msra.mxu0 0.0
        %2767 = vmatprep.subr.mxu0 0.0
        %2768 = vmatpush1.msra.mxu0 0.0
        %2769 = vmatprep.subr.mxu0 0.0
        %2770 = vmatpush1.msra.mxu0 0.0
        %2771 = vmatprep.subr.mxu0 0.0
        %2772 = vmatpush1.msra.mxu0 0.0
        %2773 = vmatprep.subr.mxu0 0.0
        %2774 = vmatpush1.msra.mxu0 0.0
        %2775 = vmatprep.subr.mxu0 0.0
        %2776 = vmatpush1.msra.mxu0 0.0
        %2777 = vmatprep.subr.mxu0 0.0
        %2778 = vmatpush1.msra.mxu0 0.0
        %2779 = vmatprep.subr.mxu0 0.0
        %2780 = vmatpush1.msra.mxu0 0.0
        %2781 = vmatprep.subr.mxu0 0.0
        %2782 = vmatpush1.msra.mxu0 0.0
        %2783 = vmatprep.subr.mxu0 0.0
        %2784 = vmatpush1.msra.mxu0 0.0
        %2785 = vmatprep.subr.mxu0 0.0
        %2786 = vmatpush1.msra.mxu0 0.0
        %2787 = vmatprep.subr.mxu0 0.0
        %2788 = vmatpush1.msra.mxu0 0.0
        %2789 = vmatprep.subr.mxu0 0.0
        %2790 = vmatpush1.msra.mxu0 0.0
        %2791 = vmatprep.subr.mxu0 0.0
        %2792 = vmatpush1.msra.mxu0 0.0
        %2793 = vmatprep.subr.mxu0 0.0
        %2794 = vmatpush1.msra.mxu0 0.0
        %2795 = vmatprep.subr.mxu0 0.0
        %2796 = vmatpush1.msra.mxu0 0.0
        %2797 = vmatprep.subr.mxu0 0.0
        %2798 = vmatpush1.msra.mxu0 0.0
        %2799 = vmatprep.mubr.f32.mxu0 0.0
        %2800 = vmatmul.mubr.f32.gmra.mrb[0].mxu0 %v687
        %v2801 = vpop.f32.mrb[0].mxu0
        %v2802 = vadd.f32 0.0, %v2801
        %v2803 = vpop.f32.mrb[0].mxu0
        %2804 = vmatprep.mubr.f32.mxu0 0.0
        %2805 = vmatmul.mubr.f32.gmra.mrb[0].mxu0 %v690
        %v2806 = vpop.f32.mrb[0].mxu0
        %v2807 = vadd.f32 0.0, %v2806
        %v2808 = vpop.f32.mrb[0].mxu0
        %2809 = vmatprep.mubr.f32.mxu0 0.0
        %2810 = vmatmul.mubr.f32.gmra.mrb[0].mxu0 %v693
        %v2811 = vpop.f32.mrb[0].mxu0
        %v2812 = vadd.f32 0.0, %v2811
        %v2813 = vpop.f32.mrb[0].mxu0
        %2814 = vmatprep.mubr.f32.mxu0 0.0
        %2815 = vmatmul.mubr.f32.gmra.mrb[0].mxu0 %v696
        %v2816 = vpop.f32.mrb[0].mxu0
        %v2817 = vadd.f32 0.0, %v2816
        %v2818 = vpop.f32.mrb[0].mxu0
        %2819 = vmatprep.mubr.f32.mxu0 0.0
        %2820 = vmatmul.mubr.f32.gmra.mrb[0].mxu0 %v699
        %v2821 = vpop.f32.mrb[0].mxu0
        %v2822 = vadd.f32 0.0, %v2821
        %v2823 = vpop.f32.mrb[0].mxu0
        %2824 = vmatprep.mubr.f32.mxu0 0.0
        %2825 = vmatmul.mubr.f32.gmra.mrb[0].mxu0 %v702
        %v2826 = vpop.f32.mrb[0].mxu0
        %v2827 = vadd.f32 0.0, %v2826
        %v2828 = vpop.f32.mrb[0].mxu0
        %2829 = vmatprep.mubr.f32.mxu0 0.0
        %2830 = vmatmul.mubr.f32.gmra.mrb[0].mxu0 %v705
        %v2831 = vpop.f32.mrb[0].mxu0
        %v2832 = vadd.f32 0.0, %v2831
        %v2833 = vpop.f32.mrb[0].mxu0
        %2834 = vmatprep.mubr.f32.mxu0 0.0
        %2835 = vmatmul.mubr.f32.gmra.mrb[0].mxu0 %v708
        %v2836 = vpop.f32.mrb[0].mxu0
        %v2837 = vadd.f32 0.0, %v2836
        %v2838 = vpop.f32.mrb[0].mxu0
        %2839 = vdwg.mxu0
        %2840 = vmatprep.subr.mxu0 0.0
        %2841 = vmatpush1.msra.mxu0 %v2733
        %2842 = vmatprep.subr.mxu0 0.0
        %2843 = vmatpush1.msra.mxu0 %v2734
        %2844 = vmatprep.subr.mxu0 0.0
        %2845 = vmatpush1.msra.mxu0 0.0
        %2846 = vmatprep.subr.mxu0 0.0
        %2847 = vmatpush1.msra.mxu0 0.0
        %2848 = vmatprep.subr.mxu0 0.0
        %2849 = vmatpush1.msra.mxu0 0.0
        %2850 = vmatprep.subr.mxu0 0.0
        %2851 = vmatpush1.msra.mxu0 0.0
        %2852 = vmatprep.subr.mxu0 0.0
        %2853 = vmatpush1.msra.mxu0 0.0
        %2854 = vmatprep.subr.mxu0 0.0
        %2855 = vmatpush1.msra.mxu0 0.0
        %2856 = vmatprep.subr.mxu0 0.0
        %2857 = vmatpush1.msra.mxu0 0.0
        %2858 = vmatprep.subr.mxu0 0.0
        %2859 = vmatpush1.msra.mxu0 0.0
        %2860 = vmatprep.subr.mxu0 0.0
        %2861 = vmatpush1.msra.mxu0 0.0
        %2862 = vmatprep.subr.mxu0 0.0
        %2863 = vmatpush1.msra.mxu0 0.0
        %2864 = vmatprep.subr.mxu0 0.0
        %2865 = vmatpush1.msra.mxu0 0.0
        %2866 = vmatprep.subr.mxu0 0.0
        %2867 = vmatpush1.msra.mxu0 0.0
        %2868 = vmatprep.subr.mxu0 0.0
        %2869 = vmatpush1.msra.mxu0 0.0
        %2870 = vmatprep.subr.mxu0 0.0
        %2871 = vmatpush1.msra.mxu0 0.0
        %2872 = vmatprep.subr.mxu0 0.0
        %2873 = vmatpush1.msra.mxu0 0.0
        %2874 = vmatprep.subr.mxu0 0.0
        %2875 = vmatpush1.msra.mxu0 0.0
        %2876 = vmatprep.subr.mxu0 0.0
        %2877 = vmatpush1.msra.mxu0 0.0
        %2878 = vmatprep.subr.mxu0 0.0
        %2879 = vmatpush1.msra.mxu0 0.0
        %2880 = vmatprep.subr.mxu0 0.0
        %2881 = vmatpush1.msra.mxu0 0.0
        %2882 = vmatprep.subr.mxu0 0.0
        %2883 = vmatpush1.msra.mxu0 0.0
        %2884 = vmatprep.subr.mxu0 0.0
        %2885 = vmatpush1.msra.mxu0 0.0
        %2886 = vmatprep.subr.mxu0 0.0
        %2887 = vmatpush1.msra.mxu0 0.0
        %2888 = vmatprep.subr.mxu0 0.0
        %2889 = vmatpush1.msra.mxu0 0.0
        %2890 = vmatprep.subr.mxu0 0.0
        %2891 = vmatpush1.msra.mxu0 0.0
        %2892 = vmatprep.subr.mxu0 0.0
        %2893 = vmatpush1.msra.mxu0 0.0
        %2894 = vmatprep.subr.mxu0 0.0
        %2895 = vmatpush1.msra.mxu0 0.0
        %2896 = vmatprep.subr.mxu0 0.0
        %2897 = vmatpush1.msra.mxu0 0.0
        %2898 = vmatprep.subr.mxu0 0.0
        %2899 = vmatpush1.msra.mxu0 0.0
        %2900 = vmatprep.subr.mxu0 0.0
        %2901 = vmatpush1.msra.mxu0 0.0
        %2902 = vmatprep.subr.mxu0 0.0
        %2903 = vmatpush1.msra.mxu0 0.0
        %2904 = vmatprep.mubr.f32.mxu0 0.0
        %2905 = vmatmul.mubr.f32.gmra.mrb[0].mxu0 %v816
        %v2906 = vpop.f32.mrb[0].mxu0
        %v2907 = vadd.f32 %v2802, %v2906
        %v2908 = vpop.f32.mrb[0].mxu0
        %2909 = vmatprep.mubr.f32.mxu0 0.0
        %2910 = vmatmul.mubr.f32.gmra.mrb[0].mxu0 %v819
        %v2911 = vpop.f32.mrb[0].mxu0
        %v2912 = vadd.f32 %v2807, %v2911
        %v2913 = vpop.f32.mrb[0].mxu0
        %2914 = vmatprep.mubr.f32.mxu0 0.0
        %2915 = vmatmul.mubr.f32.gmra.mrb[0].mxu0 %v822
        %v2916 = vpop.f32.mrb[0].mxu0
        %v2917 = vadd.f32 %v2812, %v2916
        %v2918 = vpop.f32.mrb[0].mxu0
        %2919 = vmatprep.mubr.f32.mxu0 0.0
        %2920 = vmatmul.mubr.f32.gmra.mrb[0].mxu0 %v825
        %v2921 = vpop.f32.mrb[0].mxu0
        %v2922 = vadd.f32 %v2817, %v2921
        %v2923 = vpop.f32.mrb[0].mxu0
        %2924 = vmatprep.mubr.f32.mxu0 0.0
        %2925 = vmatmul.mubr.f32.gmra.mrb[0].mxu0 %v828
        %v2926 = vpop.f32.mrb[0].mxu0
        %v2927 = vadd.f32 %v2822, %v2926
        %v2928 = vpop.f32.mrb[0].mxu0
        %2929 = vmatprep.mubr.f32.mxu0 0.0
        %2930 = vmatmul.mubr.f32.gmra.mrb[0].mxu0 %v831
        %v2931 = vpop.f32.mrb[0].mxu0
        %v2932 = vadd.f32 %v2827, %v2931
        %v2933 = vpop.f32.mrb[0].mxu0
        %2934 = vmatprep.mubr.f32.mxu0 0.0
        %2935 = vmatmul.mubr.f32.gmra.mrb[0].mxu0 %v834
        %v2936 = vpop.f32.mrb[0].mxu0
        %v2937 = vadd.f32 %v2832, %v2936
        %v2938 = vpop.f32.mrb[0].mxu0
        %2939 = vmatprep.mubr.f32.mxu0 0.0
        %2940 = vmatmul.mubr.f32.gmra.mrb[0].mxu0 %v837
        %v2941 = vpop.f32.mrb[0].mxu0
        %v2942 = vadd.f32 %v2837, %v2941
        %v2943 = vpop.f32.mrb[0].mxu0
        %2944 = vdwg.mxu0
        %v2945 = vadd.f32 %v2907, %v546
        %v2946 = vadd.f32 %v2912, %v551
        %v2947 = vadd.f32 %v2917, %v556
        %v2948 = vadd.f32 %v2922, %v561
        %v2949 = vadd.f32 %v2927, %v566
        %v2950 = vadd.f32 %v2932, %v571
        %v2951 = vadd.f32 %v2937, %v576
        %v2952 = vadd.f32 %v2942, %v581
        %v2953 = vxor.u32 %v2945, 2147483648
        %v2954 = vxor.u32 %v2946, 2147483648
        %v2955 = vmul.f32 %v2953, 1.442695
        %v2956 = vpow.pop %v2955
        %v2957 = vmul.f32 %v2954, 1.442695
        %v2958 = vpow.pop %v2957
        %v2959 = vadd.f32 %v2956, 1.0
        %v2960 = vadd.f32 %v2958, 1.0
        %v2961 = vrcp.pop %v2959
        %v2962 = vmul.f32 1.0, %v2961
        %v2963 = vrcp.pop %v2960
        %v2964 = vmul.f32 1.0, %v2963
        %v2965 = vxor.u32 %v2947, 2147483648
        %v2966 = vxor.u32 %v2948, 2147483648
        %v2967 = vmul.f32 %v2965, 1.442695
        %v2968 = vpow.pop %v2967
        %v2969 = vmul.f32 %v2966, 1.442695
        %v2970 = vpow.pop %v2969
        %v2971 = vadd.f32 %v2968, 1.0
        %v2972 = vadd.f32 %v2970, 1.0
        %v2973 = vrcp.pop %v2971
        %v2974 = vmul.f32 1.0, %v2973
        %v2975 = vrcp.pop %v2972
        %v2976 = vmul.f32 1.0, %v2975
        %v2977 = vtanh.pop %v2949
        %v2978 = vtanh.pop %v2950
        %v2979 = vxor.u32 %v2951, 2147483648
        %v2980 = vxor.u32 %v2952, 2147483648
        %v2981 = vmul.f32 %v2979, 1.442695
        %v2982 = vpow.pop %v2981
        %v2983 = vmul.f32 %v2980, 1.442695
        %v2984 = vpow.pop %v2983
        %v2985 = vadd.f32 %v2982, 1.0
        %v2986 = vadd.f32 %v2984, 1.0
        %v2987 = vrcp.pop %v2985
        %v2988 = vmul.f32 1.0, %v2987
        %v2989 = vrcp.pop %v2986
        %v2990 = vmul.f32 1.0, %v2989
        %v2991 = vmul.f32 %v2974, %v2496
        %v2992 = vmul.f32 %v2976, %v2497
        %v2993 = vmul.f32 %v2962, %v2977
        %v2994 = vmul.f32 %v2964, %v2978
        %v2995 = vadd.f32 %v2991, %v2993
        %v2996 = vadd.f32 %v2992, %v2994
        %v2997 = vtanh.pop %v2995
        %v2998 = vtanh.pop %v2996
        %v2999 = vmul.f32 %v2988, %v2997
        %v3000 = vmul.f32 %v2990, %v2998
        %3001 = vmatprep.subr.mxu0 0.0
        %3002 = vmatpush1.msra.mxu0 %v2733
        %3003 = vmatprep.subr.mxu0 0.0
        %3004 = vmatpush1.msra.mxu0 %v2734
        %3005 = vmatprep.subr.mxu0 0.0
        %3006 = vmatpush1.msra.mxu0 0.0
        %3007 = vmatprep.subr.mxu0 0.0
        %3008 = vmatpush1.msra.mxu0 0.0
        %3009 = vmatprep.subr.mxu0 0.0
        %3010 = vmatpush1.msra.mxu0 0.0
        %3011 = vmatprep.subr.mxu0 0.0
        %3012 = vmatpush1.msra.mxu0 0.0
        %3013 = vmatprep.subr.mxu0 0.0
        %3014 = vmatpush1.msra.mxu0 0.0
        %3015 = vmatprep.subr.mxu0 0.0
        %3016 = vmatpush1.msra.mxu0 0.0
        %3017 = vmatprep.subr.mxu0 0.0
        %3018 = vmatpush1.msra.mxu0 0.0
        %3019 = vmatprep.subr.mxu0 0.0
        %3020 = vmatpush1.msra.mxu0 0.0
        %3021 = vmatprep.subr.mxu0 0.0
        %3022 = vmatpush1.msra.mxu0 0.0
        %3023 = vmatprep.subr.mxu0 0.0
        %3024 = vmatpush1.msra.mxu0 0.0
        %3025 = vmatprep.subr.mxu0 0.0
        %3026 = vmatpush1.msra.mxu0 0.0
        %3027 = vmatprep.subr.mxu0 0.0
        %3028 = vmatpush1.msra.mxu0 0.0
        %3029 = vmatprep.subr.mxu0 0.0
        %3030 = vmatpush1.msra.mxu0 0.0
        %3031 = vmatprep.subr.mxu0 0.0
        %3032 = vmatpush1.msra.mxu0 0.0
        %3033 = vmatprep.subr.mxu0 0.0
        %3034 = vmatpush1.msra.mxu0 0.0
        %3035 = vmatprep.subr.mxu0 0.0
        %3036 = vmatpush1.msra.mxu0 0.0
        %3037 = vmatprep.subr.mxu0 0.0
        %3038 = vmatpush1.msra.mxu0 0.0
        %3039 = vmatprep.subr.mxu0 0.0
        %3040 = vmatpush1.msra.mxu0 0.0
        %3041 = vmatprep.subr.mxu0 0.0
        %3042 = vmatpush1.msra.mxu0 0.0
        %3043 = vmatprep.subr.mxu0 0.0
        %3044 = vmatpush1.msra.mxu0 0.0
        %3045 = vmatprep.subr.mxu0 0.0
        %3046 = vmatpush1.msra.mxu0 0.0
        %3047 = vmatprep.subr.mxu0 0.0
        %3048 = vmatpush1.msra.mxu0 0.0
        %3049 = vmatprep.subr.mxu0 0.0
        %3050 = vmatpush1.msra.mxu0 0.0
        %3051 = vmatprep.subr.mxu0 0.0
        %3052 = vmatpush1.msra.mxu0 0.0
        %3053 = vmatprep.subr.mxu0 0.0
        %3054 = vmatpush1.msra.mxu0 0.0
        %3055 = vmatprep.subr.mxu0 0.0
        %3056 = vmatpush1.msra.mxu0 0.0
        %3057 = vmatprep.subr.mxu0 0.0
        %3058 = vmatpush1.msra.mxu0 0.0
        %3059 = vmatprep.subr.mxu0 0.0
        %3060 = vmatpush1.msra.mxu0 0.0
        %3061 = vmatprep.subr.mxu0 0.0
        %3062 = vmatpush1.msra.mxu0 0.0
        %3063 = vmatprep.subr.mxu0 0.0
        %3064 = vmatpush1.msra.mxu0 0.0
        %3065 = vmatprep.mubr.f32.mxu0 0.0
        %3066 = vmatmul.mubr.f32.gmra.mrb[0].mxu0 %v1001
        %v3067 = vpop.f32.mrb[0].mxu0
        %v3068 = vadd.f32 0.0, %v3067
        %v3069 = vpop.f32.mrb[0].mxu0
        %3070 = vdwg.mxu0
        %3071 = vmatprep.subr.mxu0 0.0
        %3072 = vmatpush1.msra.mxu0 %v2999
        %3073 = vmatprep.subr.mxu0 0.0
        %3074 = vmatpush1.msra.mxu0 %v3000
        %3075 = vmatprep.subr.mxu0 0.0
        %3076 = vmatpush1.msra.mxu0 0.0
        %3077 = vmatprep.subr.mxu0 0.0
        %3078 = vmatpush1.msra.mxu0 0.0
        %3079 = vmatprep.subr.mxu0 0.0
        %3080 = vmatpush1.msra.mxu0 0.0
        %3081 = vmatprep.subr.mxu0 0.0
        %3082 = vmatpush1.msra.mxu0 0.0
        %3083 = vmatprep.subr.mxu0 0.0
        %3084 = vmatpush1.msra.mxu0 0.0
        %3085 = vmatprep.subr.mxu0 0.0
        %3086 = vmatpush1.msra.mxu0 0.0
        %3087 = vmatprep.subr.mxu0 0.0
        %3088 = vmatpush1.msra.mxu0 0.0
        %3089 = vmatprep.subr.mxu0 0.0
        %3090 = vmatpush1.msra.mxu0 0.0
        %3091 = vmatprep.subr.mxu0 0.0
        %3092 = vmatpush1.msra.mxu0 0.0
        %3093 = vmatprep.subr.mxu0 0.0
        %3094 = vmatpush1.msra.mxu0 0.0
        %3095 = vmatprep.subr.mxu0 0.0
        %3096 = vmatpush1.msra.mxu0 0.0
        %3097 = vmatprep.subr.mxu0 0.0
        %3098 = vmatpush1.msra.mxu0 0.0
        %3099 = vmatprep.subr.mxu0 0.0
        %3100 = vmatpush1.msra.mxu0 0.0
        %3101 = vmatprep.subr.mxu0 0.0
        %3102 = vmatpush1.msra.mxu0 0.0
        %3103 = vmatprep.subr.mxu0 0.0
        %3104 = vmatpush1.msra.mxu0 0.0
        %3105 = vmatprep.subr.mxu0 0.0
        %3106 = vmatpush1.msra.mxu0 0.0
        %3107 = vmatprep.subr.mxu0 0.0
        %3108 = vmatpush1.msra.mxu0 0.0
        %3109 = vmatprep.subr.mxu0 0.0
        %3110 = vmatpush1.msra.mxu0 0.0
        %3111 = vmatprep.subr.mxu0 0.0
        %3112 = vmatpush1.msra.mxu0 0.0
        %3113 = vmatprep.subr.mxu0 0.0
        %3114 = vmatpush1.msra.mxu0 0.0
        %3115 = vmatprep.subr.mxu0 0.0
        %3116 = vmatpush1.msra.mxu0 0.0
        %3117 = vmatprep.subr.mxu0 0.0
        %3118 = vmatpush1.msra.mxu0 0.0
        %3119 = vmatprep.subr.mxu0 0.0
        %3120 = vmatpush1.msra.mxu0 0.0
        %3121 = vmatprep.subr.mxu0 0.0
        %3122 = vmatpush1.msra.mxu0 0.0
        %3123 = vmatprep.subr.mxu0 0.0
        %3124 = vmatpush1.msra.mxu0 0.0
        %3125 = vmatprep.subr.mxu0 0.0
        %3126 = vmatpush1.msra.mxu0 0.0
        %3127 = vmatprep.subr.mxu0 0.0
        %3128 = vmatpush1.msra.mxu0 0.0
        %3129 = vmatprep.subr.mxu0 0.0
        %3130 = vmatpush1.msra.mxu0 0.0
        %3131 = vmatprep.subr.mxu0 0.0
        %3132 = vmatpush1.msra.mxu0 0.0
        %3133 = vmatprep.subr.mxu0 0.0
        %3134 = vmatpush1.msra.mxu0 0.0
        %3135 = vmatprep.mubr.f32.mxu0 0.0
        %3136 = vmatmul.mubr.f32.gmra.mrb[0].mxu0 %v1074
        %v3137 = vpop.f32.mrb[0].mxu0
        %v3138 = vadd.f32 %v3068, %v3137
        %v3139 = vpop.f32.mrb[0].mxu0
        %3140 = vdwg.mxu0
        %v3141 = vadd.f32 %v3138, %v592
        %s3142 = scalar_lea.vmem %s437, 4 [#allocation4]
        %3143 = vst [vmem:[%s3142] sm:$0x1] %v3141
        %s3144 = scalar_lea.vmem %s460, 10
        %v3145 = vld [vmem:[%s3144] sm:$0x3]
        %v3147 = vrot.slane %v3141, 7
        %v3149 = vmul.f32 %v3145, %v3147
        %v3151 = vrot.slane %v3149, 1
        %v3153 = vadd.f32 %v3145, %v3151
        %3154 = vmatprep.subr.mxu0 0.0
        %3155 = vmatpush1.msra.mxu0 %v477
        %3156 = vmatprep.subr.mxu0 0.0
        %3157 = vmatpush1.msra.mxu0 %v478
        %3158 = vmatprep.subr.mxu0 0.0
        %3159 = vmatpush1.msra.mxu0 %v479
        %3160 = vmatprep.subr.mxu0 0.0
        %3161 = vmatpush1.msra.mxu0 %v480
        %3162 = vmatprep.subr.mxu0 0.0
        %3163 = vmatpush1.msra.mxu0 %v481
        %3164 = vmatprep.subr.mxu0 0.0
        %3165 = vmatpush1.msra.mxu0 %v482
        %3166 = vmatprep.subr.mxu0 0.0
        %3167 = vmatpush1.msra.mxu0 %v483
        %3168 = vmatprep.subr.mxu0 0.0
        %3169 = vmatpush1.msra.mxu0 %v484
        %3170 = vmatprep.subr.mxu0 0.0
        %3171 = vmatpush1.msra.mxu0 %v485
        %3172 = vmatprep.subr.mxu0 0.0
        %3173 = vmatpush1.msra.mxu0 %v486
        %3174 = vmatprep.subr.mxu0 0.0
        %3175 = vmatpush1.msra.mxu0 %v487
        %3176 = vmatprep.subr.mxu0 0.0
        %3177 = vmatpush1.msra.mxu0 %v488
        %3178 = vmatprep.subr.mxu0 0.0
        %3179 = vmatpush1.msra.mxu0 %v489
        %3180 = vmatprep.subr.mxu0 0.0
        %3181 = vmatpush1.msra.mxu0 %v490
        %3182 = vmatprep.subr.mxu0 0.0
        %3183 = vmatpush1.msra.mxu0 %v491
        %3184 = vmatprep.subr.mxu0 0.0
        %3185 = vmatpush1.msra.mxu0 %v492
        %3186 = vmatprep.subr.mxu0 0.0
        %3187 = vmatpush1.msra.mxu0 0.0
        %3188 = vmatprep.subr.mxu0 0.0
        %3189 = vmatpush1.msra.mxu0 0.0
        %3190 = vmatprep.subr.mxu0 0.0
        %3191 = vmatpush1.msra.mxu0 0.0
        %3192 = vmatprep.subr.mxu0 0.0
        %3193 = vmatpush1.msra.mxu0 0.0
        %3194 = vmatprep.subr.mxu0 0.0
        %3195 = vmatpush1.msra.mxu0 0.0
        %3196 = vmatprep.subr.mxu0 0.0
        %3197 = vmatpush1.msra.mxu0 0.0
        %3198 = vmatprep.subr.mxu0 0.0
        %3199 = vmatpush1.msra.mxu0 0.0
        %3200 = vmatprep.subr.mxu0 0.0
        %3201 = vmatpush1.msra.mxu0 0.0
        %3202 = vmatprep.subr.mxu0 0.0
        %3203 = vmatpush1.msra.mxu0 0.0
        %3204 = vmatprep.subr.mxu0 0.0
        %3205 = vmatpush1.msra.mxu0 0.0
        %3206 = vmatprep.subr.mxu0 0.0
        %3207 = vmatpush1.msra.mxu0 0.0
        %3208 = vmatprep.subr.mxu0 0.0
        %3209 = vmatpush1.msra.mxu0 0.0
        %3210 = vmatprep.subr.mxu0 0.0
        %3211 = vmatpush1.msra.mxu0 0.0
        %3212 = vmatprep.subr.mxu0 0.0
        %3213 = vmatpush1.msra.mxu0 0.0
        %3214 = vmatprep.subr.mxu0 0.0
        %3215 = vmatpush1.msra.mxu0 0.0
        %3216 = vmatprep.subr.mxu0 0.0
        %3217 = vmatpush1.msra.mxu0 0.0
        %3218 = vmatprep.mubr.f32.mxu0 0.0
        %3219 = vmatmul.mubr.f32.gmra.mrb[0].mxu0 %v3153
        %v3220 = vpop.f32.mrb[0].mxu0
        %v3221 = vadd.f32 0.0, %v3220
        %v3222 = vpop.f32.mrb[0].mxu0
        %3223 = vdwg.mxu0
        %v3224 = vlaneseq
        %v3225 = vshrl.u32 %v3224, 7
        %v3226 = vsub.s32 0, %v3225
        %v3227 = vrot.slane %v3221, %v3226
        %v3228 = vmul.f32 %v516, %v3227
        %v3229 = vmul.f32 %v521, %v3227
        %v3230 = vadd.f32 %v3228, %v528
        %v3231 = vadd.f32 %v3229, %v533
        %v3232 = vmax.f32 %v3230, 0.0
        %v3233 = vmax.f32 %v3231, 0.0
        %3234 = vmatprep.subr.mxu0 0.0
        %3235 = vmatpush1.msra.mxu0 %v2999
        %3236 = vmatprep.subr.mxu0 0.0
        %3237 = vmatpush1.msra.mxu0 %v3000
        %3238 = vmatprep.subr.mxu0 0.0
        %3239 = vmatpush1.msra.mxu0 0.0
        %3240 = vmatprep.subr.mxu0 0.0
        %3241 = vmatpush1.msra.mxu0 0.0
        %3242 = vmatprep.subr.mxu0 0.0
        %3243 = vmatpush1.msra.mxu0 0.0
        %3244 = vmatprep.subr.mxu0 0.0
        %3245 = vmatpush1.msra.mxu0 0.0
        %3246 = vmatprep.subr.mxu0 0.0
        %3247 = vmatpush1.msra.mxu0 0.0
        %3248 = vmatprep.subr.mxu0 0.0
        %3249 = vmatpush1.msra.mxu0 0.0
        %3250 = vmatprep.subr.mxu0 0.0
        %3251 = vmatpush1.msra.mxu0 0.0
        %3252 = vmatprep.subr.mxu0 0.0
        %3253 = vmatpush1.msra.mxu0 0.0
        %3254 = vmatprep.subr.mxu0 0.0
        %3255 = vmatpush1.msra.mxu0 0.0
        %3256 = vmatprep.subr.mxu0 0.0
        %3257 = vmatpush1.msra.mxu0 0.0
        %3258 = vmatprep.subr.mxu0 0.0
        %3259 = vmatpush1.msra.mxu0 0.0
        %3260 = vmatprep.subr.mxu0 0.0
        %3261 = vmatpush1.msra.mxu0 0.0
        %3262 = vmatprep.subr.mxu0 0.0
        %3263 = vmatpush1.msra.mxu0 0.0
        %3264 = vmatprep.subr.mxu0 0.0
        %3265 = vmatpush1.msra.mxu0 0.0
        %3266 = vmatprep.subr.mxu0 0.0
        %3267 = vmatpush1.msra.mxu0 0.0
        %3268 = vmatprep.subr.mxu0 0.0
        %3269 = vmatpush1.msra.mxu0 0.0
        %3270 = vmatprep.subr.mxu0 0.0
        %3271 = vmatpush1.msra.mxu0 0.0
        %3272 = vmatprep.subr.mxu0 0.0
        %3273 = vmatpush1.msra.mxu0 0.0
        %3274 = vmatprep.subr.mxu0 0.0
        %3275 = vmatpush1.msra.mxu0 0.0
        %3276 = vmatprep.subr.mxu0 0.0
        %3277 = vmatpush1.msra.mxu0 0.0
        %3278 = vmatprep.subr.mxu0 0.0
        %3279 = vmatpush1.msra.mxu0 0.0
        %3280 = vmatprep.subr.mxu0 0.0
        %3281 = vmatpush1.msra.mxu0 0.0
        %3282 = vmatprep.subr.mxu0 0.0
        %3283 = vmatpush1.msra.mxu0 0.0
        %3284 = vmatprep.subr.mxu0 0.0
        %3285 = vmatpush1.msra.mxu0 0.0
        %3286 = vmatprep.subr.mxu0 0.0
        %3287 = vmatpush1.msra.mxu0 0.0
        %3288 = vmatprep.subr.mxu0 0.0
        %3289 = vmatpush1.msra.mxu0 0.0
        %3290 = vmatprep.subr.mxu0 0.0
        %3291 = vmatpush1.msra.mxu0 0.0
        %3292 = vmatprep.subr.mxu0 0.0
        %3293 = vmatpush1.msra.mxu0 0.0
        %3294 = vmatprep.subr.mxu0 0.0
        %3295 = vmatpush1.msra.mxu0 0.0
        %3296 = vmatprep.subr.mxu0 0.0
        %3297 = vmatpush1.msra.mxu0 0.0
        %3298 = vmatprep.mubr.f32.mxu0 0.0
        %3299 = vmatmul.mubr.f32.gmra.mrb[0].mxu0 %v687
        %v3300 = vpop.f32.mrb[0].mxu0
        %v3301 = vadd.f32 0.0, %v3300
        %v3302 = vpop.f32.mrb[0].mxu0
        %3303 = vmatprep.mubr.f32.mxu0 0.0
        %3304 = vmatmul.mubr.f32.gmra.mrb[0].mxu0 %v690
        %v3305 = vpop.f32.mrb[0].mxu0
        %v3306 = vadd.f32 0.0, %v3305
        %v3307 = vpop.f32.mrb[0].mxu0
        %3308 = vmatprep.mubr.f32.mxu0 0.0
        %3309 = vmatmul.mubr.f32.gmra.mrb[0].mxu0 %v693
        %v3310 = vpop.f32.mrb[0].mxu0
        %v3311 = vadd.f32 0.0, %v3310
        %v3312 = vpop.f32.mrb[0].mxu0
        %3313 = vmatprep.mubr.f32.mxu0 0.0
        %3314 = vmatmul.mubr.f32.gmra.mrb[0].mxu0 %v696
        %v3315 = vpop.f32.mrb[0].mxu0
        %v3316 = vadd.f32 0.0, %v3315
        %v3317 = vpop.f32.mrb[0].mxu0
        %3318 = vmatprep.mubr.f32.mxu0 0.0
        %3319 = vmatmul.mubr.f32.gmra.mrb[0].mxu0 %v699
        %v3320 = vpop.f32.mrb[0].mxu0
        %v3321 = vadd.f32 0.0, %v3320
        %v3322 = vpop.f32.mrb[0].mxu0
        %3323 = vmatprep.mubr.f32.mxu0 0.0
        %3324 = vmatmul.mubr.f32.gmra.mrb[0].mxu0 %v702
        %v3325 = vpop.f32.mrb[0].mxu0
        %v3326 = vadd.f32 0.0, %v3325
        %v3327 = vpop.f32.mrb[0].mxu0
        %3328 = vmatprep.mubr.f32.mxu0 0.0
        %3329 = vmatmul.mubr.f32.gmra.mrb[0].mxu0 %v705
        %v3330 = vpop.f32.mrb[0].mxu0
        %v3331 = vadd.f32 0.0, %v3330
        %v3332 = vpop.f32.mrb[0].mxu0
        %3333 = vmatprep.mubr.f32.mxu0 0.0
        %3334 = vmatmul.mubr.f32.gmra.mrb[0].mxu0 %v708
        %v3335 = vpop.f32.mrb[0].mxu0
        %v3336 = vadd.f32 0.0, %v3335
        %v3337 = vpop.f32.mrb[0].mxu0
        %3338 = vdwg.mxu0
        %3339 = vmatprep.subr.mxu0 0.0
        %3340 = vmatpush1.msra.mxu0 %v3232
        %3341 = vmatprep.subr.mxu0 0.0
        %3342 = vmatpush1.msra.mxu0 %v3233
        %3343 = vmatprep.subr.mxu0 0.0
        %3344 = vmatpush1.msra.mxu0 0.0
        %3345 = vmatprep.subr.mxu0 0.0
        %3346 = vmatpush1.msra.mxu0 0.0
        %3347 = vmatprep.subr.mxu0 0.0
        %3348 = vmatpush1.msra.mxu0 0.0
        %3349 = vmatprep.subr.mxu0 0.0
        %3350 = vmatpush1.msra.mxu0 0.0
        %3351 = vmatprep.subr.mxu0 0.0
        %3352 = vmatpush1.msra.mxu0 0.0
        %3353 = vmatprep.subr.mxu0 0.0
        %3354 = vmatpush1.msra.mxu0 0.0
        %3355 = vmatprep.subr.mxu0 0.0
        %3356 = vmatpush1.msra.mxu0 0.0
        %3357 = vmatprep.subr.mxu0 0.0
        %3358 = vmatpush1.msra.mxu0 0.0
        %3359 = vmatprep.subr.mxu0 0.0
        %3360 = vmatpush1.msra.mxu0 0.0
        %3361 = vmatprep.subr.mxu0 0.0
        %3362 = vmatpush1.msra.mxu0 0.0
        %3363 = vmatprep.subr.mxu0 0.0
        %3364 = vmatpush1.msra.mxu0 0.0
        %3365 = vmatprep.subr.mxu0 0.0
        %3366 = vmatpush1.msra.mxu0 0.0
        %3367 = vmatprep.subr.mxu0 0.0
        %3368 = vmatpush1.msra.mxu0 0.0
        %3369 = vmatprep.subr.mxu0 0.0
        %3370 = vmatpush1.msra.mxu0 0.0
        %3371 = vmatprep.subr.mxu0 0.0
        %3372 = vmatpush1.msra.mxu0 0.0
        %3373 = vmatprep.subr.mxu0 0.0
        %3374 = vmatpush1.msra.mxu0 0.0
        %3375 = vmatprep.subr.mxu0 0.0
        %3376 = vmatpush1.msra.mxu0 0.0
        %3377 = vmatprep.subr.mxu0 0.0
        %3378 = vmatpush1.msra.mxu0 0.0
        %3379 = vmatprep.subr.mxu0 0.0
        %3380 = vmatpush1.msra.mxu0 0.0
        %3381 = vmatprep.subr.mxu0 0.0
        %3382 = vmatpush1.msra.mxu0 0.0
        %3383 = vmatprep.subr.mxu0 0.0
        %3384 = vmatpush1.msra.mxu0 0.0
        %3385 = vmatprep.subr.mxu0 0.0
        %3386 = vmatpush1.msra.mxu0 0.0
        %3387 = vmatprep.subr.mxu0 0.0
        %3388 = vmatpush1.msra.mxu0 0.0
        %3389 = vmatprep.subr.mxu0 0.0
        %3390 = vmatpush1.msra.mxu0 0.0
        %3391 = vmatprep.subr.mxu0 0.0
        %3392 = vmatpush1.msra.mxu0 0.0
        %3393 = vmatprep.subr.mxu0 0.0
        %3394 = vmatpush1.msra.mxu0 0.0
        %3395 = vmatprep.subr.mxu0 0.0
        %3396 = vmatpush1.msra.mxu0 0.0
        %3397 = vmatprep.subr.mxu0 0.0
        %3398 = vmatpush1.msra.mxu0 0.0
        %3399 = vmatprep.subr.mxu0 0.0
        %3400 = vmatpush1.msra.mxu0 0.0
        %3401 = vmatprep.subr.mxu0 0.0
        %3402 = vmatpush1.msra.mxu0 0.0
        %3403 = vmatprep.mubr.f32.mxu0 0.0
        %3404 = vmatmul.mubr.f32.gmra.mrb[0].mxu0 %v816
        %v3405 = vpop.f32.mrb[0].mxu0
        %v3406 = vadd.f32 %v3301, %v3405
        %v3407 = vpop.f32.mrb[0].mxu0
        %3408 = vmatprep.mubr.f32.mxu0 0.0
        %3409 = vmatmul.mubr.f32.gmra.mrb[0].mxu0 %v819
        %v3410 = vpop.f32.mrb[0].mxu0
        %v3411 = vadd.f32 %v3306, %v3410
        %v3412 = vpop.f32.mrb[0].mxu0
        %3413 = vmatprep.mubr.f32.mxu0 0.0
        %3414 = vmatmul.mubr.f32.gmra.mrb[0].mxu0 %v822
        %v3415 = vpop.f32.mrb[0].mxu0
        %v3416 = vadd.f32 %v3311, %v3415
        %v3417 = vpop.f32.mrb[0].mxu0
        %3418 = vmatprep.mubr.f32.mxu0 0.0
        %3419 = vmatmul.mubr.f32.gmra.mrb[0].mxu0 %v825
        %v3420 = vpop.f32.mrb[0].mxu0
        %v3421 = vadd.f32 %v3316, %v3420
        %v3422 = vpop.f32.mrb[0].mxu0
        %3423 = vmatprep.mubr.f32.mxu0 0.0
        %3424 = vmatmul.mubr.f32.gmra.mrb[0].mxu0 %v828
        %v3425 = vpop.f32.mrb[0].mxu0
        %v3426 = vadd.f32 %v3321, %v3425
        %v3427 = vpop.f32.mrb[0].mxu0
        %3428 = vmatprep.mubr.f32.mxu0 0.0
        %3429 = vmatmul.mubr.f32.gmra.mrb[0].mxu0 %v831
        %v3430 = vpop.f32.mrb[0].mxu0
        %v3431 = vadd.f32 %v3326, %v3430
        %v3432 = vpop.f32.mrb[0].mxu0
        %3433 = vmatprep.mubr.f32.mxu0 0.0
        %3434 = vmatmul.mubr.f32.gmra.mrb[0].mxu0 %v834
        %v3435 = vpop.f32.mrb[0].mxu0
        %v3436 = vadd.f32 %v3331, %v3435
        %v3437 = vpop.f32.mrb[0].mxu0
        %3438 = vmatprep.mubr.f32.mxu0 0.0
        %3439 = vmatmul.mubr.f32.gmra.mrb[0].mxu0 %v837
        %v3440 = vpop.f32.mrb[0].mxu0
        %v3441 = vadd.f32 %v3336, %v3440
        %v3442 = vpop.f32.mrb[0].mxu0
        %3443 = vdwg.mxu0
        %v3444 = vadd.f32 %v3406, %v546
        %v3445 = vadd.f32 %v3411, %v551
        %v3446 = vadd.f32 %v3416, %v556
        %v3447 = vadd.f32 %v3421, %v561
        %v3448 = vadd.f32 %v3426, %v566
        %v3449 = vadd.f32 %v3431, %v571
        %v3450 = vadd.f32 %v3436, %v576
        %v3451 = vadd.f32 %v3441, %v581
        %v3452 = vxor.u32 %v3444, 2147483648
        %v3453 = vxor.u32 %v3445, 2147483648
        %v3454 = vmul.f32 %v3452, 1.442695
        %v3455 = vpow.pop %v3454
        %v3456 = vmul.f32 %v3453, 1.442695
        %v3457 = vpow.pop %v3456
        %v3458 = vadd.f32 %v3455, 1.0
        %v3459 = vadd.f32 %v3457, 1.0
        %v3460 = vrcp.pop %v3458
        %v3461 = vmul.f32 1.0, %v3460
        %v3462 = vrcp.pop %v3459
        %v3463 = vmul.f32 1.0, %v3462
        %v3464 = vxor.u32 %v3446, 2147483648
        %v3465 = vxor.u32 %v3447, 2147483648
        %v3466 = vmul.f32 %v3464, 1.442695
        %v3467 = vpow.pop %v3466
        %v3468 = vmul.f32 %v3465, 1.442695
        %v3469 = vpow.pop %v3468
        %v3470 = vadd.f32 %v3467, 1.0
        %v3471 = vadd.f32 %v3469, 1.0
        %v3472 = vrcp.pop %v3470
        %v3473 = vmul.f32 1.0, %v3472
        %v3474 = vrcp.pop %v3471
        %v3475 = vmul.f32 1.0, %v3474
        %v3476 = vtanh.pop %v3448
        %v3477 = vtanh.pop %v3449
        %v3478 = vxor.u32 %v3450, 2147483648
        %v3479 = vxor.u32 %v3451, 2147483648
        %v3480 = vmul.f32 %v3478, 1.442695
        %v3481 = vpow.pop %v3480
        %v3482 = vmul.f32 %v3479, 1.442695
        %v3483 = vpow.pop %v3482
        %v3484 = vadd.f32 %v3481, 1.0
        %v3485 = vadd.f32 %v3483, 1.0
        %v3486 = vrcp.pop %v3484
        %v3487 = vmul.f32 1.0, %v3486
        %v3488 = vrcp.pop %v3485
        %v3489 = vmul.f32 1.0, %v3488
        %v3490 = vmul.f32 %v3473, %v2995
        %v3491 = vmul.f32 %v3475, %v2996
        %v3492 = vmul.f32 %v3461, %v3476
        %v3493 = vmul.f32 %v3463, %v3477
        %v3494 = vadd.f32 %v3490, %v3492
        %v3495 = vadd.f32 %v3491, %v3493
        %v3496 = vtanh.pop %v3494
        %v3497 = vtanh.pop %v3495
        %v3498 = vmul.f32 %v3487, %v3496
        %v3499 = vmul.f32 %v3489, %v3497
        %3500 = vmatprep.subr.mxu0 0.0
        %3501 = vmatpush1.msra.mxu0 %v3232
        %3502 = vmatprep.subr.mxu0 0.0
        %3503 = vmatpush1.msra.mxu0 %v3233
        %3504 = vmatprep.subr.mxu0 0.0
        %3505 = vmatpush1.msra.mxu0 0.0
        %3506 = vmatprep.subr.mxu0 0.0
        %3507 = vmatpush1.msra.mxu0 0.0
        %3508 = vmatprep.subr.mxu0 0.0
        %3509 = vmatpush1.msra.mxu0 0.0
        %3510 = vmatprep.subr.mxu0 0.0
        %3511 = vmatpush1.msra.mxu0 0.0
        %3512 = vmatprep.subr.mxu0 0.0
        %3513 = vmatpush1.msra.mxu0 0.0
        %3514 = vmatprep.subr.mxu0 0.0
        %3515 = vmatpush1.msra.mxu0 0.0
        %3516 = vmatprep.subr.mxu0 0.0
        %3517 = vmatpush1.msra.mxu0 0.0
        %3518 = vmatprep.subr.mxu0 0.0
        %3519 = vmatpush1.msra.mxu0 0.0
        %3520 = vmatprep.subr.mxu0 0.0
        %3521 = vmatpush1.msra.mxu0 0.0
        %3522 = vmatprep.subr.mxu0 0.0
        %3523 = vmatpush1.msra.mxu0 0.0
        %3524 = vmatprep.subr.mxu0 0.0
        %3525 = vmatpush1.msra.mxu0 0.0
        %3526 = vmatprep.subr.mxu0 0.0
        %3527 = vmatpush1.msra.mxu0 0.0
        %3528 = vmatprep.subr.mxu0 0.0
        %3529 = vmatpush1.msra.mxu0 0.0
        %3530 = vmatprep.subr.mxu0 0.0
        %3531 = vmatpush1.msra.mxu0 0.0
        %3532 = vmatprep.subr.mxu0 0.0
        %3533 = vmatpush1.msra.mxu0 0.0
        %3534 = vmatprep.subr.mxu0 0.0
        %3535 = vmatpush1.msra.mxu0 0.0
        %3536 = vmatprep.subr.mxu0 0.0
        %3537 = vmatpush1.msra.mxu0 0.0
        %3538 = vmatprep.subr.mxu0 0.0
        %3539 = vmatpush1.msra.mxu0 0.0
        %3540 = vmatprep.subr.mxu0 0.0
        %3541 = vmatpush1.msra.mxu0 0.0
        %3542 = vmatprep.subr.mxu0 0.0
        %3543 = vmatpush1.msra.mxu0 0.0
        %3544 = vmatprep.subr.mxu0 0.0
        %3545 = vmatpush1.msra.mxu0 0.0
        %3546 = vmatprep.subr.mxu0 0.0
        %3547 = vmatpush1.msra.mxu0 0.0
        %3548 = vmatprep.subr.mxu0 0.0
        %3549 = vmatpush1.msra.mxu0 0.0
        %3550 = vmatprep.subr.mxu0 0.0
        %3551 = vmatpush1.msra.mxu0 0.0
        %3552 = vmatprep.subr.mxu0 0.0
        %3553 = vmatpush1.msra.mxu0 0.0
        %3554 = vmatprep.subr.mxu0 0.0
        %3555 = vmatpush1.msra.mxu0 0.0
        %3556 = vmatprep.subr.mxu0 0.0
        %3557 = vmatpush1.msra.mxu0 0.0
        %3558 = vmatprep.subr.mxu0 0.0
        %3559 = vmatpush1.msra.mxu0 0.0
        %3560 = vmatprep.subr.mxu0 0.0
        %3561 = vmatpush1.msra.mxu0 0.0
        %3562 = vmatprep.subr.mxu0 0.0
        %3563 = vmatpush1.msra.mxu0 0.0
        %3564 = vmatprep.mubr.f32.mxu0 0.0
        %3565 = vmatmul.mubr.f32.gmra.mrb[0].mxu0 %v1001
        %v3566 = vpop.f32.mrb[0].mxu0
        %v3567 = vadd.f32 0.0, %v3566
        %v3568 = vpop.f32.mrb[0].mxu0
        %3569 = vdwg.mxu0
        %3570 = vmatprep.subr.mxu0 0.0
        %3571 = vmatpush1.msra.mxu0 %v3498
        %3572 = vmatprep.subr.mxu0 0.0
        %3573 = vmatpush1.msra.mxu0 %v3499
        %3574 = vmatprep.subr.mxu0 0.0
        %3575 = vmatpush1.msra.mxu0 0.0
        %3576 = vmatprep.subr.mxu0 0.0
        %3577 = vmatpush1.msra.mxu0 0.0
        %3578 = vmatprep.subr.mxu0 0.0
        %3579 = vmatpush1.msra.mxu0 0.0
        %3580 = vmatprep.subr.mxu0 0.0
        %3581 = vmatpush1.msra.mxu0 0.0
        %3582 = vmatprep.subr.mxu0 0.0
        %3583 = vmatpush1.msra.mxu0 0.0
        %3584 = vmatprep.subr.mxu0 0.0
        %3585 = vmatpush1.msra.mxu0 0.0
        %3586 = vmatprep.subr.mxu0 0.0
        %3587 = vmatpush1.msra.mxu0 0.0
        %3588 = vmatprep.subr.mxu0 0.0
        %3589 = vmatpush1.msra.mxu0 0.0
        %3590 = vmatprep.subr.mxu0 0.0
        %3591 = vmatpush1.msra.mxu0 0.0
        %3592 = vmatprep.subr.mxu0 0.0
        %3593 = vmatpush1.msra.mxu0 0.0
        %3594 = vmatprep.subr.mxu0 0.0
        %3595 = vmatpush1.msra.mxu0 0.0
        %3596 = vmatprep.subr.mxu0 0.0
        %3597 = vmatpush1.msra.mxu0 0.0
        %3598 = vmatprep.subr.mxu0 0.0
        %3599 = vmatpush1.msra.mxu0 0.0
        %3600 = vmatprep.subr.mxu0 0.0
        %3601 = vmatpush1.msra.mxu0 0.0
        %3602 = vmatprep.subr.mxu0 0.0
        %3603 = vmatpush1.msra.mxu0 0.0
        %3604 = vmatprep.subr.mxu0 0.0
        %3605 = vmatpush1.msra.mxu0 0.0
        %3606 = vmatprep.subr.mxu0 0.0
        %3607 = vmatpush1.msra.mxu0 0.0
        %3608 = vmatprep.subr.mxu0 0.0
        %3609 = vmatpush1.msra.mxu0 0.0
        %3610 = vmatprep.subr.mxu0 0.0
        %3611 = vmatpush1.msra.mxu0 0.0
        %3612 = vmatprep.subr.mxu0 0.0
        %3613 = vmatpush1.msra.mxu0 0.0
        %3614 = vmatprep.subr.mxu0 0.0
        %3615 = vmatpush1.msra.mxu0 0.0
        %3616 = vmatprep.subr.mxu0 0.0
        %3617 = vmatpush1.msra.mxu0 0.0
        %3618 = vmatprep.subr.mxu0 0.0
        %3619 = vmatpush1.msra.mxu0 0.0
        %3620 = vmatprep.subr.mxu0 0.0
        %3621 = vmatpush1.msra.mxu0 0.0
        %3622 = vmatprep.subr.mxu0 0.0
        %3623 = vmatpush1.msra.mxu0 0.0
        %3624 = vmatprep.subr.mxu0 0.0
        %3625 = vmatpush1.msra.mxu0 0.0
        %3626 = vmatprep.subr.mxu0 0.0
        %3627 = vmatpush1.msra.mxu0 0.0
        %3628 = vmatprep.subr.mxu0 0.0
        %3629 = vmatpush1.msra.mxu0 0.0
        %3630 = vmatprep.subr.mxu0 0.0
        %3631 = vmatpush1.msra.mxu0 0.0
        %3632 = vmatprep.subr.mxu0 0.0
        %3633 = vmatpush1.msra.mxu0 0.0
        %3634 = vmatprep.mubr.f32.mxu0 0.0
        %3635 = vmatmul.mubr.f32.gmra.mrb[0].mxu0 %v1074
        %v3636 = vpop.f32.mrb[0].mxu0
        %v3637 = vadd.f32 %v3567, %v3636
        %v3638 = vpop.f32.mrb[0].mxu0
        %3639 = vdwg.mxu0
        %v3640 = vadd.f32 %v3637, %v592
        %s3641 = scalar_lea.vmem %s437, 5 [#allocation4]
        %3642 = vst [vmem:[%s3641] sm:$0x1] %v3640
        %s3643 = scalar_lea.vmem %s460, 12
        %v3644 = vld [vmem:[%s3643] sm:$0x3]
        %v3646 = vrot.slane %v3640, 7
        %v3648 = vmul.f32 %v3644, %v3646
        %v3650 = vrot.slane %v3648, 1
        %v3652 = vadd.f32 %v3644, %v3650
        %3653 = vmatprep.subr.mxu0 0.0
        %3654 = vmatpush1.msra.mxu0 %v477
        %3655 = vmatprep.subr.mxu0 0.0
        %3656 = vmatpush1.msra.mxu0 %v478
        %3657 = vmatprep.subr.mxu0 0.0
        %3658 = vmatpush1.msra.mxu0 %v479
        %3659 = vmatprep.subr.mxu0 0.0
        %3660 = vmatpush1.msra.mxu0 %v480
        %3661 = vmatprep.subr.mxu0 0.0
        %3662 = vmatpush1.msra.mxu0 %v481
        %3663 = vmatprep.subr.mxu0 0.0
        %3664 = vmatpush1.msra.mxu0 %v482
        %3665 = vmatprep.subr.mxu0 0.0
        %3666 = vmatpush1.msra.mxu0 %v483
        %3667 = vmatprep.subr.mxu0 0.0
        %3668 = vmatpush1.msra.mxu0 %v484
        %3669 = vmatprep.subr.mxu0 0.0
        %3670 = vmatpush1.msra.mxu0 %v485
        %3671 = vmatprep.subr.mxu0 0.0
        %3672 = vmatpush1.msra.mxu0 %v486
        %3673 = vmatprep.subr.mxu0 0.0
        %3674 = vmatpush1.msra.mxu0 %v487
        %3675 = vmatprep.subr.mxu0 0.0
        %3676 = vmatpush1.msra.mxu0 %v488
        %3677 = vmatprep.subr.mxu0 0.0
        %3678 = vmatpush1.msra.mxu0 %v489
        %3679 = vmatprep.subr.mxu0 0.0
        %3680 = vmatpush1.msra.mxu0 %v490
        %3681 = vmatprep.subr.mxu0 0.0
        %3682 = vmatpush1.msra.mxu0 %v491
        %3683 = vmatprep.subr.mxu0 0.0
        %3684 = vmatpush1.msra.mxu0 %v492
        %3685 = vmatprep.subr.mxu0 0.0
        %3686 = vmatpush1.msra.mxu0 0.0
        %3687 = vmatprep.subr.mxu0 0.0
        %3688 = vmatpush1.msra.mxu0 0.0
        %3689 = vmatprep.subr.mxu0 0.0
        %3690 = vmatpush1.msra.mxu0 0.0
        %3691 = vmatprep.subr.mxu0 0.0
        %3692 = vmatpush1.msra.mxu0 0.0
        %3693 = vmatprep.subr.mxu0 0.0
        %3694 = vmatpush1.msra.mxu0 0.0
        %3695 = vmatprep.subr.mxu0 0.0
        %3696 = vmatpush1.msra.mxu0 0.0
        %3697 = vmatprep.subr.mxu0 0.0
        %3698 = vmatpush1.msra.mxu0 0.0
        %3699 = vmatprep.subr.mxu0 0.0
        %3700 = vmatpush1.msra.mxu0 0.0
        %3701 = vmatprep.subr.mxu0 0.0
        %3702 = vmatpush1.msra.mxu0 0.0
        %3703 = vmatprep.subr.mxu0 0.0
        %3704 = vmatpush1.msra.mxu0 0.0
        %3705 = vmatprep.subr.mxu0 0.0
        %3706 = vmatpush1.msra.mxu0 0.0
        %3707 = vmatprep.subr.mxu0 0.0
        %3708 = vmatpush1.msra.mxu0 0.0
        %3709 = vmatprep.subr.mxu0 0.0
        %3710 = vmatpush1.msra.mxu0 0.0
        %3711 = vmatprep.subr.mxu0 0.0
        %3712 = vmatpush1.msra.mxu0 0.0
        %3713 = vmatprep.subr.mxu0 0.0
        %3714 = vmatpush1.msra.mxu0 0.0
        %3715 = vmatprep.subr.mxu0 0.0
        %3716 = vmatpush1.msra.mxu0 0.0
        %3717 = vmatprep.mubr.f32.mxu0 0.0
        %3718 = vmatmul.mubr.f32.gmra.mrb[0].mxu0 %v3652
        %v3719 = vpop.f32.mrb[0].mxu0
        %v3720 = vadd.f32 0.0, %v3719
        %v3721 = vpop.f32.mrb[0].mxu0
        %3722 = vdwg.mxu0
        %v3723 = vlaneseq
        %v3724 = vshrl.u32 %v3723, 7
        %v3725 = vsub.s32 0, %v3724
        %v3726 = vrot.slane %v3720, %v3725
        %v3727 = vmul.f32 %v516, %v3726
        %v3728 = vmul.f32 %v521, %v3726
        %v3729 = vadd.f32 %v3727, %v528
        %v3730 = vadd.f32 %v3728, %v533
        %v3731 = vmax.f32 %v3729, 0.0
        %v3732 = vmax.f32 %v3730, 0.0
        %3733 = vmatprep.subr.mxu0 0.0
        %3734 = vmatpush1.msra.mxu0 %v3498
        %3735 = vmatprep.subr.mxu0 0.0
        %3736 = vmatpush1.msra.mxu0 %v3499
        %3737 = vmatprep.subr.mxu0 0.0
        %3738 = vmatpush1.msra.mxu0 0.0
        %3739 = vmatprep.subr.mxu0 0.0
        %3740 = vmatpush1.msra.mxu0 0.0
        %3741 = vmatprep.subr.mxu0 0.0
        %3742 = vmatpush1.msra.mxu0 0.0
        %3743 = vmatprep.subr.mxu0 0.0
        %3744 = vmatpush1.msra.mxu0 0.0
        %3745 = vmatprep.subr.mxu0 0.0
        %3746 = vmatpush1.msra.mxu0 0.0
        %3747 = vmatprep.subr.mxu0 0.0
        %3748 = vmatpush1.msra.mxu0 0.0
        %3749 = vmatprep.subr.mxu0 0.0
        %3750 = vmatpush1.msra.mxu0 0.0
        %3751 = vmatprep.subr.mxu0 0.0
        %3752 = vmatpush1.msra.mxu0 0.0
        %3753 = vmatprep.subr.mxu0 0.0
        %3754 = vmatpush1.msra.mxu0 0.0
        %3755 = vmatprep.subr.mxu0 0.0
        %3756 = vmatpush1.msra.mxu0 0.0
        %3757 = vmatprep.subr.mxu0 0.0
        %3758 = vmatpush1.msra.mxu0 0.0
        %3759 = vmatprep.subr.mxu0 0.0
        %3760 = vmatpush1.msra.mxu0 0.0
        %3761 = vmatprep.subr.mxu0 0.0
        %3762 = vmatpush1.msra.mxu0 0.0
        %3763 = vmatprep.subr.mxu0 0.0
        %3764 = vmatpush1.msra.mxu0 0.0
        %3765 = vmatprep.subr.mxu0 0.0
        %3766 = vmatpush1.msra.mxu0 0.0
        %3767 = vmatprep.subr.mxu0 0.0
        %3768 = vmatpush1.msra.mxu0 0.0
        %3769 = vmatprep.subr.mxu0 0.0
        %3770 = vmatpush1.msra.mxu0 0.0
        %3771 = vmatprep.subr.mxu0 0.0
        %3772 = vmatpush1.msra.mxu0 0.0
        %3773 = vmatprep.subr.mxu0 0.0
        %3774 = vmatpush1.msra.mxu0 0.0
        %3775 = vmatprep.subr.mxu0 0.0
        %3776 = vmatpush1.msra.mxu0 0.0
        %3777 = vmatprep.subr.mxu0 0.0
        %3778 = vmatpush1.msra.mxu0 0.0
        %3779 = vmatprep.subr.mxu0 0.0
        %3780 = vmatpush1.msra.mxu0 0.0
        %3781 = vmatprep.subr.mxu0 0.0
        %3782 = vmatpush1.msra.mxu0 0.0
        %3783 = vmatprep.subr.mxu0 0.0
        %3784 = vmatpush1.msra.mxu0 0.0
        %3785 = vmatprep.subr.mxu0 0.0
        %3786 = vmatpush1.msra.mxu0 0.0
        %3787 = vmatprep.subr.mxu0 0.0
        %3788 = vmatpush1.msra.mxu0 0.0
        %3789 = vmatprep.subr.mxu0 0.0
        %3790 = vmatpush1.msra.mxu0 0.0
        %3791 = vmatprep.subr.mxu0 0.0
        %3792 = vmatpush1.msra.mxu0 0.0
        %3793 = vmatprep.subr.mxu0 0.0
        %3794 = vmatpush1.msra.mxu0 0.0
        %3795 = vmatprep.subr.mxu0 0.0
        %3796 = vmatpush1.msra.mxu0 0.0
        %3797 = vmatprep.mubr.f32.mxu0 0.0
        %3798 = vmatmul.mubr.f32.gmra.mrb[0].mxu0 %v687
        %v3799 = vpop.f32.mrb[0].mxu0
        %v3800 = vadd.f32 0.0, %v3799
        %v3801 = vpop.f32.mrb[0].mxu0
        %3802 = vmatprep.mubr.f32.mxu0 0.0
        %3803 = vmatmul.mubr.f32.gmra.mrb[0].mxu0 %v690
        %v3804 = vpop.f32.mrb[0].mxu0
        %v3805 = vadd.f32 0.0, %v3804
        %v3806 = vpop.f32.mrb[0].mxu0
        %3807 = vmatprep.mubr.f32.mxu0 0.0
        %3808 = vmatmul.mubr.f32.gmra.mrb[0].mxu0 %v693
        %v3809 = vpop.f32.mrb[0].mxu0
        %v3810 = vadd.f32 0.0, %v3809
        %v3811 = vpop.f32.mrb[0].mxu0
        %3812 = vmatprep.mubr.f32.mxu0 0.0
        %3813 = vmatmul.mubr.f32.gmra.mrb[0].mxu0 %v696
        %v3814 = vpop.f32.mrb[0].mxu0
        %v3815 = vadd.f32 0.0, %v3814
        %v3816 = vpop.f32.mrb[0].mxu0
        %3817 = vmatprep.mubr.f32.mxu0 0.0
        %3818 = vmatmul.mubr.f32.gmra.mrb[0].mxu0 %v699
        %v3819 = vpop.f32.mrb[0].mxu0
        %v3820 = vadd.f32 0.0, %v3819
        %v3821 = vpop.f32.mrb[0].mxu0
        %3822 = vmatprep.mubr.f32.mxu0 0.0
        %3823 = vmatmul.mubr.f32.gmra.mrb[0].mxu0 %v702
        %v3824 = vpop.f32.mrb[0].mxu0
        %v3825 = vadd.f32 0.0, %v3824
        %v3826 = vpop.f32.mrb[0].mxu0
        %3827 = vmatprep.mubr.f32.mxu0 0.0
        %3828 = vmatmul.mubr.f32.gmra.mrb[0].mxu0 %v705
        %v3829 = vpop.f32.mrb[0].mxu0
        %v3830 = vadd.f32 0.0, %v3829
        %v3831 = vpop.f32.mrb[0].mxu0
        %3832 = vmatprep.mubr.f32.mxu0 0.0
        %3833 = vmatmul.mubr.f32.gmra.mrb[0].mxu0 %v708
        %v3834 = vpop.f32.mrb[0].mxu0
        %v3835 = vadd.f32 0.0, %v3834
        %v3836 = vpop.f32.mrb[0].mxu0
        %3837 = vdwg.mxu0
        %3838 = vmatprep.subr.mxu0 0.0
        %3839 = vmatpush1.msra.mxu0 %v3731
        %3840 = vmatprep.subr.mxu0 0.0
        %3841 = vmatpush1.msra.mxu0 %v3732
        %3842 = vmatprep.subr.mxu0 0.0
        %3843 = vmatpush1.msra.mxu0 0.0
        %3844 = vmatprep.subr.mxu0 0.0
        %3845 = vmatpush1.msra.mxu0 0.0
        %3846 = vmatprep.subr.mxu0 0.0
        %3847 = vmatpush1.msra.mxu0 0.0
        %3848 = vmatprep.subr.mxu0 0.0
        %3849 = vmatpush1.msra.mxu0 0.0
        %3850 = vmatprep.subr.mxu0 0.0
        %3851 = vmatpush1.msra.mxu0 0.0
        %3852 = vmatprep.subr.mxu0 0.0
        %3853 = vmatpush1.msra.mxu0 0.0
        %3854 = vmatprep.subr.mxu0 0.0
        %3855 = vmatpush1.msra.mxu0 0.0
        %3856 = vmatprep.subr.mxu0 0.0
        %3857 = vmatpush1.msra.mxu0 0.0
        %3858 = vmatprep.subr.mxu0 0.0
        %3859 = vmatpush1.msra.mxu0 0.0
        %3860 = vmatprep.subr.mxu0 0.0
        %3861 = vmatpush1.msra.mxu0 0.0
        %3862 = vmatprep.subr.mxu0 0.0
        %3863 = vmatpush1.msra.mxu0 0.0
        %3864 = vmatprep.subr.mxu0 0.0
        %3865 = vmatpush1.msra.mxu0 0.0
        %3866 = vmatprep.subr.mxu0 0.0
        %3867 = vmatpush1.msra.mxu0 0.0
        %3868 = vmatprep.subr.mxu0 0.0
        %3869 = vmatpush1.msra.mxu0 0.0
        %3870 = vmatprep.subr.mxu0 0.0
        %3871 = vmatpush1.msra.mxu0 0.0
        %3872 = vmatprep.subr.mxu0 0.0
        %3873 = vmatpush1.msra.mxu0 0.0
        %3874 = vmatprep.subr.mxu0 0.0
        %3875 = vmatpush1.msra.mxu0 0.0
        %3876 = vmatprep.subr.mxu0 0.0
        %3877 = vmatpush1.msra.mxu0 0.0
        %3878 = vmatprep.subr.mxu0 0.0
        %3879 = vmatpush1.msra.mxu0 0.0
        %3880 = vmatprep.subr.mxu0 0.0
        %3881 = vmatpush1.msra.mxu0 0.0
        %3882 = vmatprep.subr.mxu0 0.0
        %3883 = vmatpush1.msra.mxu0 0.0
        %3884 = vmatprep.subr.mxu0 0.0
        %3885 = vmatpush1.msra.mxu0 0.0
        %3886 = vmatprep.subr.mxu0 0.0
        %3887 = vmatpush1.msra.mxu0 0.0
        %3888 = vmatprep.subr.mxu0 0.0
        %3889 = vmatpush1.msra.mxu0 0.0
        %3890 = vmatprep.subr.mxu0 0.0
        %3891 = vmatpush1.msra.mxu0 0.0
        %3892 = vmatprep.subr.mxu0 0.0
        %3893 = vmatpush1.msra.mxu0 0.0
        %3894 = vmatprep.subr.mxu0 0.0
        %3895 = vmatpush1.msra.mxu0 0.0
        %3896 = vmatprep.subr.mxu0 0.0
        %3897 = vmatpush1.msra.mxu0 0.0
        %3898 = vmatprep.subr.mxu0 0.0
        %3899 = vmatpush1.msra.mxu0 0.0
        %3900 = vmatprep.subr.mxu0 0.0
        %3901 = vmatpush1.msra.mxu0 0.0
        %3902 = vmatprep.mubr.f32.mxu0 0.0
        %3903 = vmatmul.mubr.f32.gmra.mrb[0].mxu0 %v816
        %v3904 = vpop.f32.mrb[0].mxu0
        %v3905 = vadd.f32 %v3800, %v3904
        %v3906 = vpop.f32.mrb[0].mxu0
        %3907 = vmatprep.mubr.f32.mxu0 0.0
        %3908 = vmatmul.mubr.f32.gmra.mrb[0].mxu0 %v819
        %v3909 = vpop.f32.mrb[0].mxu0
        %v3910 = vadd.f32 %v3805, %v3909
        %v3911 = vpop.f32.mrb[0].mxu0
        %3912 = vmatprep.mubr.f32.mxu0 0.0
        %3913 = vmatmul.mubr.f32.gmra.mrb[0].mxu0 %v822
        %v3914 = vpop.f32.mrb[0].mxu0
        %v3915 = vadd.f32 %v3810, %v3914
        %v3916 = vpop.f32.mrb[0].mxu0
        %3917 = vmatprep.mubr.f32.mxu0 0.0
        %3918 = vmatmul.mubr.f32.gmra.mrb[0].mxu0 %v825
        %v3919 = vpop.f32.mrb[0].mxu0
        %v3920 = vadd.f32 %v3815, %v3919
        %v3921 = vpop.f32.mrb[0].mxu0
        %3922 = vmatprep.mubr.f32.mxu0 0.0
        %3923 = vmatmul.mubr.f32.gmra.mrb[0].mxu0 %v828
        %v3924 = vpop.f32.mrb[0].mxu0
        %v3925 = vadd.f32 %v3820, %v3924
        %v3926 = vpop.f32.mrb[0].mxu0
        %3927 = vmatprep.mubr.f32.mxu0 0.0
        %3928 = vmatmul.mubr.f32.gmra.mrb[0].mxu0 %v831
        %v3929 = vpop.f32.mrb[0].mxu0
        %v3930 = vadd.f32 %v3825, %v3929
        %v3931 = vpop.f32.mrb[0].mxu0
        %3932 = vmatprep.mubr.f32.mxu0 0.0
        %3933 = vmatmul.mubr.f32.gmra.mrb[0].mxu0 %v834
        %v3934 = vpop.f32.mrb[0].mxu0
        %v3935 = vadd.f32 %v3830, %v3934
        %v3936 = vpop.f32.mrb[0].mxu0
        %3937 = vmatprep.mubr.f32.mxu0 0.0
        %3938 = vmatmul.mubr.f32.gmra.mrb[0].mxu0 %v837
        %v3939 = vpop.f32.mrb[0].mxu0
        %v3940 = vadd.f32 %v3835, %v3939
        %v3941 = vpop.f32.mrb[0].mxu0
        %3942 = vdwg.mxu0
        %v3943 = vadd.f32 %v3905, %v546
        %v3944 = vadd.f32 %v3910, %v551
        %v3945 = vadd.f32 %v3915, %v556
        %v3946 = vadd.f32 %v3920, %v561
        %v3947 = vadd.f32 %v3925, %v566
        %v3948 = vadd.f32 %v3930, %v571
        %v3949 = vadd.f32 %v3935, %v576
        %v3950 = vadd.f32 %v3940, %v581
        %v3951 = vxor.u32 %v3943, 2147483648
        %v3952 = vxor.u32 %v3944, 2147483648
        %v3953 = vmul.f32 %v3951, 1.442695
        %v3954 = vpow.pop %v3953
        %v3955 = vmul.f32 %v3952, 1.442695
        %v3956 = vpow.pop %v3955
        %v3957 = vadd.f32 %v3954, 1.0
        %v3958 = vadd.f32 %v3956, 1.0
        %v3959 = vrcp.pop %v3957
        %v3960 = vmul.f32 1.0, %v3959
        %v3961 = vrcp.pop %v3958
        %v3962 = vmul.f32 1.0, %v3961
        %v3963 = vxor.u32 %v3945, 2147483648
        %v3964 = vxor.u32 %v3946, 2147483648
        %v3965 = vmul.f32 %v3963, 1.442695
        %v3966 = vpow.pop %v3965
        %v3967 = vmul.f32 %v3964, 1.442695
        %v3968 = vpow.pop %v3967
        %v3969 = vadd.f32 %v3966, 1.0
        %v3970 = vadd.f32 %v3968, 1.0
        %v3971 = vrcp.pop %v3969
        %v3972 = vmul.f32 1.0, %v3971
        %v3973 = vrcp.pop %v3970
        %v3974 = vmul.f32 1.0, %v3973
        %v3975 = vtanh.pop %v3947
        %v3976 = vtanh.pop %v3948
        %v3977 = vxor.u32 %v3949, 2147483648
        %v3978 = vxor.u32 %v3950, 2147483648
        %v3979 = vmul.f32 %v3977, 1.442695
        %v3980 = vpow.pop %v3979
        %v3981 = vmul.f32 %v3978, 1.442695
        %v3982 = vpow.pop %v3981
        %v3983 = vadd.f32 %v3980, 1.0
        %v3984 = vadd.f32 %v3982, 1.0
        %v3985 = vrcp.pop %v3983
        %v3986 = vmul.f32 1.0, %v3985
        %v3987 = vrcp.pop %v3984
        %v3988 = vmul.f32 1.0, %v3987
        %v3989 = vmul.f32 %v3972, %v3494
        %v3990 = vmul.f32 %v3974, %v3495
        %v3991 = vmul.f32 %v3960, %v3975
        %v3992 = vmul.f32 %v3962, %v3976
        %v3993 = vadd.f32 %v3989, %v3991
        %v3994 = vadd.f32 %v3990, %v3992
        %v3995 = vtanh.pop %v3993
        %v3996 = vtanh.pop %v3994
        %v3997 = vmul.f32 %v3986, %v3995
        %v3998 = vmul.f32 %v3988, %v3996
        %3999 = vmatprep.subr.mxu0 0.0
        %4000 = vmatpush1.msra.mxu0 %v3731
        %4001 = vmatprep.subr.mxu0 0.0
        %4002 = vmatpush1.msra.mxu0 %v3732
        %4003 = vmatprep.subr.mxu0 0.0
        %4004 = vmatpush1.msra.mxu0 0.0
        %4005 = vmatprep.subr.mxu0 0.0
        %4006 = vmatpush1.msra.mxu0 0.0
        %4007 = vmatprep.subr.mxu0 0.0
        %4008 = vmatpush1.msra.mxu0 0.0
        %4009 = vmatprep.subr.mxu0 0.0
        %4010 = vmatpush1.msra.mxu0 0.0
        %4011 = vmatprep.subr.mxu0 0.0
        %4012 = vmatpush1.msra.mxu0 0.0
        %4013 = vmatprep.subr.mxu0 0.0
        %4014 = vmatpush1.msra.mxu0 0.0
        %4015 = vmatprep.subr.mxu0 0.0
        %4016 = vmatpush1.msra.mxu0 0.0
        %4017 = vmatprep.subr.mxu0 0.0
        %4018 = vmatpush1.msra.mxu0 0.0
        %4019 = vmatprep.subr.mxu0 0.0
        %4020 = vmatpush1.msra.mxu0 0.0
        %4021 = vmatprep.subr.mxu0 0.0
        %4022 = vmatpush1.msra.mxu0 0.0
        %4023 = vmatprep.subr.mxu0 0.0
        %4024 = vmatpush1.msra.mxu0 0.0
        %4025 = vmatprep.subr.mxu0 0.0
        %4026 = vmatpush1.msra.mxu0 0.0
        %4027 = vmatprep.subr.mxu0 0.0
        %4028 = vmatpush1.msra.mxu0 0.0
        %4029 = vmatprep.subr.mxu0 0.0
        %4030 = vmatpush1.msra.mxu0 0.0
        %4031 = vmatprep.subr.mxu0 0.0
        %4032 = vmatpush1.msra.mxu0 0.0
        %4033 = vmatprep.subr.mxu0 0.0
        %4034 = vmatpush1.msra.mxu0 0.0
        %4035 = vmatprep.subr.mxu0 0.0
        %4036 = vmatpush1.msra.mxu0 0.0
        %4037 = vmatprep.subr.mxu0 0.0
        %4038 = vmatpush1.msra.mxu0 0.0
        %4039 = vmatprep.subr.mxu0 0.0
        %4040 = vmatpush1.msra.mxu0 0.0
        %4041 = vmatprep.subr.mxu0 0.0
        %4042 = vmatpush1.msra.mxu0 0.0
        %4043 = vmatprep.subr.mxu0 0.0
        %4044 = vmatpush1.msra.mxu0 0.0
        %4045 = vmatprep.subr.mxu0 0.0
        %4046 = vmatpush1.msra.mxu0 0.0
        %4047 = vmatprep.subr.mxu0 0.0
        %4048 = vmatpush1.msra.mxu0 0.0
        %4049 = vmatprep.subr.mxu0 0.0
        %4050 = vmatpush1.msra.mxu0 0.0
        %4051 = vmatprep.subr.mxu0 0.0
        %4052 = vmatpush1.msra.mxu0 0.0
        %4053 = vmatprep.subr.mxu0 0.0
        %4054 = vmatpush1.msra.mxu0 0.0
        %4055 = vmatprep.subr.mxu0 0.0
        %4056 = vmatpush1.msra.mxu0 0.0
        %4057 = vmatprep.subr.mxu0 0.0
        %4058 = vmatpush1.msra.mxu0 0.0
        %4059 = vmatprep.subr.mxu0 0.0
        %4060 = vmatpush1.msra.mxu0 0.0
        %4061 = vmatprep.subr.mxu0 0.0
        %4062 = vmatpush1.msra.mxu0 0.0
        %4063 = vmatprep.mubr.f32.mxu0 0.0
        %4064 = vmatmul.mubr.f32.gmra.mrb[0].mxu0 %v1001
        %v4065 = vpop.f32.mrb[0].mxu0
        %v4066 = vadd.f32 0.0, %v4065
        %v4067 = vpop.f32.mrb[0].mxu0
        %4068 = vdwg.mxu0
        %4069 = vmatprep.subr.mxu0 0.0
        %4070 = vmatpush1.msra.mxu0 %v3997
        %4071 = vmatprep.subr.mxu0 0.0
        %4072 = vmatpush1.msra.mxu0 %v3998
        %4073 = vmatprep.subr.mxu0 0.0
        %4074 = vmatpush1.msra.mxu0 0.0
        %4075 = vmatprep.subr.mxu0 0.0
        %4076 = vmatpush1.msra.mxu0 0.0
        %4077 = vmatprep.subr.mxu0 0.0
        %4078 = vmatpush1.msra.mxu0 0.0
        %4079 = vmatprep.subr.mxu0 0.0
        %4080 = vmatpush1.msra.mxu0 0.0
        %4081 = vmatprep.subr.mxu0 0.0
        %4082 = vmatpush1.msra.mxu0 0.0
        %4083 = vmatprep.subr.mxu0 0.0
        %4084 = vmatpush1.msra.mxu0 0.0
        %4085 = vmatprep.subr.mxu0 0.0
        %4086 = vmatpush1.msra.mxu0 0.0
        %4087 = vmatprep.subr.mxu0 0.0
        %4088 = vmatpush1.msra.mxu0 0.0
        %4089 = vmatprep.subr.mxu0 0.0
        %4090 = vmatpush1.msra.mxu0 0.0
        %4091 = vmatprep.subr.mxu0 0.0
        %4092 = vmatpush1.msra.mxu0 0.0
        %4093 = vmatprep.subr.mxu0 0.0
        %4094 = vmatpush1.msra.mxu0 0.0
        %4095 = vmatprep.subr.mxu0 0.0
        %4096 = vmatpush1.msra.mxu0 0.0
        %4097 = vmatprep.subr.mxu0 0.0
        %4098 = vmatpush1.msra.mxu0 0.0
        %4099 = vmatprep.subr.mxu0 0.0
        %4100 = vmatpush1.msra.mxu0 0.0
        %4101 = vmatprep.subr.mxu0 0.0
        %4102 = vmatpush1.msra.mxu0 0.0
        %4103 = vmatprep.subr.mxu0 0.0
        %4104 = vmatpush1.msra.mxu0 0.0
        %4105 = vmatprep.subr.mxu0 0.0
        %4106 = vmatpush1.msra.mxu0 0.0
        %4107 = vmatprep.subr.mxu0 0.0
        %4108 = vmatpush1.msra.mxu0 0.0
        %4109 = vmatprep.subr.mxu0 0.0
        %4110 = vmatpush1.msra.mxu0 0.0
        %4111 = vmatprep.subr.mxu0 0.0
        %4112 = vmatpush1.msra.mxu0 0.0
        %4113 = vmatprep.subr.mxu0 0.0
        %4114 = vmatpush1.msra.mxu0 0.0
        %4115 = vmatprep.subr.mxu0 0.0
        %4116 = vmatpush1.msra.mxu0 0.0
        %4117 = vmatprep.subr.mxu0 0.0
        %4118 = vmatpush1.msra.mxu0 0.0
        %4119 = vmatprep.subr.mxu0 0.0
        %4120 = vmatpush1.msra.mxu0 0.0
        %4121 = vmatprep.subr.mxu0 0.0
        %4122 = vmatpush1.msra.mxu0 0.0
        %4123 = vmatprep.subr.mxu0 0.0
        %4124 = vmatpush1.msra.mxu0 0.0
        %4125 = vmatprep.subr.mxu0 0.0
        %4126 = vmatpush1.msra.mxu0 0.0
        %4127 = vmatprep.subr.mxu0 0.0
        %4128 = vmatpush1.msra.mxu0 0.0
        %4129 = vmatprep.subr.mxu0 0.0
        %4130 = vmatpush1.msra.mxu0 0.0
        %4131 = vmatprep.subr.mxu0 0.0
        %4132 = vmatpush1.msra.mxu0 0.0
        %4133 = vmatprep.mubr.f32.mxu0 0.0
        %4134 = vmatmul.mubr.f32.gmra.mrb[0].mxu0 %v1074
        %v4135 = vpop.f32.mrb[0].mxu0
        %v4136 = vadd.f32 %v4066, %v4135
        %v4137 = vpop.f32.mrb[0].mxu0
        %4138 = vdwg.mxu0
        %v4139 = vadd.f32 %v4136, %v592
        %s4140 = scalar_lea.vmem %s437, 6 [#allocation4]
        %4141 = vst [vmem:[%s4140] sm:$0x1] %v4139
        %s4142 = scalar_lea.vmem %s460, 14
        %v4143 = vld [vmem:[%s4142] sm:$0x3]
        %v4145 = vrot.slane %v4139, 7
        %v4147 = vmul.f32 %v4143, %v4145
        %v4149 = vrot.slane %v4147, 1
        %v4151 = vadd.f32 %v4143, %v4149
        %4152 = vmatprep.subr.mxu0 0.0
        %4153 = vmatpush1.msra.mxu0 %v477
        %4154 = vmatprep.subr.mxu0 0.0
        %4155 = vmatpush1.msra.mxu0 %v478
        %4156 = vmatprep.subr.mxu0 0.0
        %4157 = vmatpush1.msra.mxu0 %v479
        %4158 = vmatprep.subr.mxu0 0.0
        %4159 = vmatpush1.msra.mxu0 %v480
        %4160 = vmatprep.subr.mxu0 0.0
        %4161 = vmatpush1.msra.mxu0 %v481
        %4162 = vmatprep.subr.mxu0 0.0
        %4163 = vmatpush1.msra.mxu0 %v482
        %4164 = vmatprep.subr.mxu0 0.0
        %4165 = vmatpush1.msra.mxu0 %v483
        %4166 = vmatprep.subr.mxu0 0.0
        %4167 = vmatpush1.msra.mxu0 %v484
        %4168 = vmatprep.subr.mxu0 0.0
        %4169 = vmatpush1.msra.mxu0 %v485
        %4170 = vmatprep.subr.mxu0 0.0
        %4171 = vmatpush1.msra.mxu0 %v486
        %4172 = vmatprep.subr.mxu0 0.0
        %4173 = vmatpush1.msra.mxu0 %v487
        %4174 = vmatprep.subr.mxu0 0.0
        %4175 = vmatpush1.msra.mxu0 %v488
        %4176 = vmatprep.subr.mxu0 0.0
        %4177 = vmatpush1.msra.mxu0 %v489
        %4178 = vmatprep.subr.mxu0 0.0
        %4179 = vmatpush1.msra.mxu0 %v490
        %4180 = vmatprep.subr.mxu0 0.0
        %4181 = vmatpush1.msra.mxu0 %v491
        %4182 = vmatprep.subr.mxu0 0.0
        %4183 = vmatpush1.msra.mxu0 %v492
        %4184 = vmatprep.subr.mxu0 0.0
        %4185 = vmatpush1.msra.mxu0 0.0
        %4186 = vmatprep.subr.mxu0 0.0
        %4187 = vmatpush1.msra.mxu0 0.0
        %4188 = vmatprep.subr.mxu0 0.0
        %4189 = vmatpush1.msra.mxu0 0.0
        %4190 = vmatprep.subr.mxu0 0.0
        %4191 = vmatpush1.msra.mxu0 0.0
        %4192 = vmatprep.subr.mxu0 0.0
        %4193 = vmatpush1.msra.mxu0 0.0
        %4194 = vmatprep.subr.mxu0 0.0
        %4195 = vmatpush1.msra.mxu0 0.0
        %4196 = vmatprep.subr.mxu0 0.0
        %4197 = vmatpush1.msra.mxu0 0.0
        %4198 = vmatprep.subr.mxu0 0.0
        %4199 = vmatpush1.msra.mxu0 0.0
        %4200 = vmatprep.subr.mxu0 0.0
        %4201 = vmatpush1.msra.mxu0 0.0
        %4202 = vmatprep.subr.mxu0 0.0
        %4203 = vmatpush1.msra.mxu0 0.0
        %4204 = vmatprep.subr.mxu0 0.0
        %4205 = vmatpush1.msra.mxu0 0.0
        %4206 = vmatprep.subr.mxu0 0.0
        %4207 = vmatpush1.msra.mxu0 0.0
        %4208 = vmatprep.subr.mxu0 0.0
        %4209 = vmatpush1.msra.mxu0 0.0
        %4210 = vmatprep.subr.mxu0 0.0
        %4211 = vmatpush1.msra.mxu0 0.0
        %4212 = vmatprep.subr.mxu0 0.0
        %4213 = vmatpush1.msra.mxu0 0.0
        %4214 = vmatprep.subr.mxu0 0.0
        %4215 = vmatpush1.msra.mxu0 0.0
        %4216 = vmatprep.mubr.f32.mxu0 0.0
        %4217 = vmatmul.mubr.f32.gmra.mrb[0].mxu0 %v4151
        %v4218 = vpop.f32.mrb[0].mxu0
        %v4219 = vadd.f32 0.0, %v4218
        %v4220 = vpop.f32.mrb[0].mxu0
        %4221 = vdwg.mxu0
        %v4222 = vlaneseq
        %v4223 = vshrl.u32 %v4222, 7
        %v4224 = vsub.s32 0, %v4223
        %v4225 = vrot.slane %v4219, %v4224
        %v4226 = vmul.f32 %v516, %v4225
        %v4227 = vmul.f32 %v521, %v4225
        %v4228 = vadd.f32 %v4226, %v528
        %v4229 = vadd.f32 %v4227, %v533
        %v4230 = vmax.f32 %v4228, 0.0
        %v4231 = vmax.f32 %v4229, 0.0
        %4232 = vmatprep.subr.mxu0 0.0
        %4233 = vmatpush1.msra.mxu0 %v3997
        %4234 = vmatprep.subr.mxu0 0.0
        %4235 = vmatpush1.msra.mxu0 %v3998
        %4236 = vmatprep.subr.mxu0 0.0
        %4237 = vmatpush1.msra.mxu0 0.0
        %4238 = vmatprep.subr.mxu0 0.0
        %4239 = vmatpush1.msra.mxu0 0.0
        %4240 = vmatprep.subr.mxu0 0.0
        %4241 = vmatpush1.msra.mxu0 0.0
        %4242 = vmatprep.subr.mxu0 0.0
        %4243 = vmatpush1.msra.mxu0 0.0
        %4244 = vmatprep.subr.mxu0 0.0
        %4245 = vmatpush1.msra.mxu0 0.0
        %4246 = vmatprep.subr.mxu0 0.0
        %4247 = vmatpush1.msra.mxu0 0.0
        %4248 = vmatprep.subr.mxu0 0.0
        %4249 = vmatpush1.msra.mxu0 0.0
        %4250 = vmatprep.subr.mxu0 0.0
        %4251 = vmatpush1.msra.mxu0 0.0
        %4252 = vmatprep.subr.mxu0 0.0
        %4253 = vmatpush1.msra.mxu0 0.0
        %4254 = vmatprep.subr.mxu0 0.0
        %4255 = vmatpush1.msra.mxu0 0.0
        %4256 = vmatprep.subr.mxu0 0.0
        %4257 = vmatpush1.msra.mxu0 0.0
        %4258 = vmatprep.subr.mxu0 0.0
        %4259 = vmatpush1.msra.mxu0 0.0
        %4260 = vmatprep.subr.mxu0 0.0
        %4261 = vmatpush1.msra.mxu0 0.0
        %4262 = vmatprep.subr.mxu0 0.0
        %4263 = vmatpush1.msra.mxu0 0.0
        %4264 = vmatprep.subr.mxu0 0.0
        %4265 = vmatpush1.msra.mxu0 0.0
        %4266 = vmatprep.subr.mxu0 0.0
        %4267 = vmatpush1.msra.mxu0 0.0
        %4268 = vmatprep.subr.mxu0 0.0
        %4269 = vmatpush1.msra.mxu0 0.0
        %4270 = vmatprep.subr.mxu0 0.0
        %4271 = vmatpush1.msra.mxu0 0.0
        %4272 = vmatprep.subr.mxu0 0.0
        %4273 = vmatpush1.msra.mxu0 0.0
        %4274 = vmatprep.subr.mxu0 0.0
        %4275 = vmatpush1.msra.mxu0 0.0
        %4276 = vmatprep.subr.mxu0 0.0
        %4277 = vmatpush1.msra.mxu0 0.0
        %4278 = vmatprep.subr.mxu0 0.0
        %4279 = vmatpush1.msra.mxu0 0.0
        %4280 = vmatprep.subr.mxu0 0.0
        %4281 = vmatpush1.msra.mxu0 0.0
        %4282 = vmatprep.subr.mxu0 0.0
        %4283 = vmatpush1.msra.mxu0 0.0
        %4284 = vmatprep.subr.mxu0 0.0
        %4285 = vmatpush1.msra.mxu0 0.0
        %4286 = vmatprep.subr.mxu0 0.0
        %4287 = vmatpush1.msra.mxu0 0.0
        %4288 = vmatprep.subr.mxu0 0.0
        %4289 = vmatpush1.msra.mxu0 0.0
        %4290 = vmatprep.subr.mxu0 0.0
        %4291 = vmatpush1.msra.mxu0 0.0
        %4292 = vmatprep.subr.mxu0 0.0
        %4293 = vmatpush1.msra.mxu0 0.0
        %4294 = vmatprep.subr.mxu0 0.0
        %4295 = vmatpush1.msra.mxu0 0.0
        %4296 = vmatprep.mubr.f32.mxu0 0.0
        %4297 = vmatmul.mubr.f32.gmra.mrb[0].mxu0 %v687
        %v4298 = vpop.f32.mrb[0].mxu0
        %v4299 = vadd.f32 0.0, %v4298
        %v4300 = vpop.f32.mrb[0].mxu0
        %4301 = vmatprep.mubr.f32.mxu0 0.0
        %4302 = vmatmul.mubr.f32.gmra.mrb[0].mxu0 %v690
        %v4303 = vpop.f32.mrb[0].mxu0
        %v4304 = vadd.f32 0.0, %v4303
        %v4305 = vpop.f32.mrb[0].mxu0
        %4306 = vmatprep.mubr.f32.mxu0 0.0
        %4307 = vmatmul.mubr.f32.gmra.mrb[0].mxu0 %v693
        %v4308 = vpop.f32.mrb[0].mxu0
        %v4309 = vadd.f32 0.0, %v4308
        %v4310 = vpop.f32.mrb[0].mxu0
        %4311 = vmatprep.mubr.f32.mxu0 0.0
        %4312 = vmatmul.mubr.f32.gmra.mrb[0].mxu0 %v696
        %v4313 = vpop.f32.mrb[0].mxu0
        %v4314 = vadd.f32 0.0, %v4313
        %v4315 = vpop.f32.mrb[0].mxu0
        %4316 = vmatprep.mubr.f32.mxu0 0.0
        %4317 = vmatmul.mubr.f32.gmra.mrb[0].mxu0 %v699
        %v4318 = vpop.f32.mrb[0].mxu0
        %v4319 = vadd.f32 0.0, %v4318
        %v4320 = vpop.f32.mrb[0].mxu0
        %4321 = vmatprep.mubr.f32.mxu0 0.0
        %4322 = vmatmul.mubr.f32.gmra.mrb[0].mxu0 %v702
        %v4323 = vpop.f32.mrb[0].mxu0
        %v4324 = vadd.f32 0.0, %v4323
        %v4325 = vpop.f32.mrb[0].mxu0
        %4326 = vmatprep.mubr.f32.mxu0 0.0
        %4327 = vmatmul.mubr.f32.gmra.mrb[0].mxu0 %v705
        %v4328 = vpop.f32.mrb[0].mxu0
        %v4329 = vadd.f32 0.0, %v4328
        %v4330 = vpop.f32.mrb[0].mxu0
        %4331 = vmatprep.mubr.f32.mxu0 0.0
        %4332 = vmatmul.mubr.f32.gmra.mrb[0].mxu0 %v708
        %v4333 = vpop.f32.mrb[0].mxu0
        %v4334 = vadd.f32 0.0, %v4333
        %v4335 = vpop.f32.mrb[0].mxu0
        %4336 = vdwg.mxu0
        %4337 = vmatprep.subr.mxu0 0.0
        %4338 = vmatpush1.msra.mxu0 %v4230
        %4339 = vmatprep.subr.mxu0 0.0
        %4340 = vmatpush1.msra.mxu0 %v4231
        %4341 = vmatprep.subr.mxu0 0.0
        %4342 = vmatpush1.msra.mxu0 0.0
        %4343 = vmatprep.subr.mxu0 0.0
        %4344 = vmatpush1.msra.mxu0 0.0
        %4345 = vmatprep.subr.mxu0 0.0
        %4346 = vmatpush1.msra.mxu0 0.0
        %4347 = vmatprep.subr.mxu0 0.0
        %4348 = vmatpush1.msra.mxu0 0.0
        %4349 = vmatprep.subr.mxu0 0.0
        %4350 = vmatpush1.msra.mxu0 0.0
        %4351 = vmatprep.subr.mxu0 0.0
        %4352 = vmatpush1.msra.mxu0 0.0
        %4353 = vmatprep.subr.mxu0 0.0
        %4354 = vmatpush1.msra.mxu0 0.0
        %4355 = vmatprep.subr.mxu0 0.0
        %4356 = vmatpush1.msra.mxu0 0.0
        %4357 = vmatprep.subr.mxu0 0.0
        %4358 = vmatpush1.msra.mxu0 0.0
        %4359 = vmatprep.subr.mxu0 0.0
        %4360 = vmatpush1.msra.mxu0 0.0
        %4361 = vmatprep.subr.mxu0 0.0
        %4362 = vmatpush1.msra.mxu0 0.0
        %4363 = vmatprep.subr.mxu0 0.0
        %4364 = vmatpush1.msra.mxu0 0.0
        %4365 = vmatprep.subr.mxu0 0.0
        %4366 = vmatpush1.msra.mxu0 0.0
        %4367 = vmatprep.subr.mxu0 0.0
        %4368 = vmatpush1.msra.mxu0 0.0
        %4369 = vmatprep.subr.mxu0 0.0
        %4370 = vmatpush1.msra.mxu0 0.0
        %4371 = vmatprep.subr.mxu0 0.0
        %4372 = vmatpush1.msra.mxu0 0.0
        %4373 = vmatprep.subr.mxu0 0.0
        %4374 = vmatpush1.msra.mxu0 0.0
        %4375 = vmatprep.subr.mxu0 0.0
        %4376 = vmatpush1.msra.mxu0 0.0
        %4377 = vmatprep.subr.mxu0 0.0
        %4378 = vmatpush1.msra.mxu0 0.0
        %4379 = vmatprep.subr.mxu0 0.0
        %4380 = vmatpush1.msra.mxu0 0.0
        %4381 = vmatprep.subr.mxu0 0.0
        %4382 = vmatpush1.msra.mxu0 0.0
        %4383 = vmatprep.subr.mxu0 0.0
        %4384 = vmatpush1.msra.mxu0 0.0
        %4385 = vmatprep.subr.mxu0 0.0
        %4386 = vmatpush1.msra.mxu0 0.0
        %4387 = vmatprep.subr.mxu0 0.0
        %4388 = vmatpush1.msra.mxu0 0.0
        %4389 = vmatprep.subr.mxu0 0.0
        %4390 = vmatpush1.msra.mxu0 0.0
        %4391 = vmatprep.subr.mxu0 0.0
        %4392 = vmatpush1.msra.mxu0 0.0
        %4393 = vmatprep.subr.mxu0 0.0
        %4394 = vmatpush1.msra.mxu0 0.0
        %4395 = vmatprep.subr.mxu0 0.0
        %4396 = vmatpush1.msra.mxu0 0.0
        %4397 = vmatprep.subr.mxu0 0.0
        %4398 = vmatpush1.msra.mxu0 0.0
        %4399 = vmatprep.subr.mxu0 0.0
        %4400 = vmatpush1.msra.mxu0 0.0
        %4401 = vmatprep.mubr.f32.mxu0 0.0
        %4402 = vmatmul.mubr.f32.gmra.mrb[0].mxu0 %v816
        %v4403 = vpop.f32.mrb[0].mxu0
        %v4404 = vadd.f32 %v4299, %v4403
        %v4405 = vpop.f32.mrb[0].mxu0
        %4406 = vmatprep.mubr.f32.mxu0 0.0
        %4407 = vmatmul.mubr.f32.gmra.mrb[0].mxu0 %v819
        %v4408 = vpop.f32.mrb[0].mxu0
        %v4409 = vadd.f32 %v4304, %v4408
        %v4410 = vpop.f32.mrb[0].mxu0
        %4411 = vmatprep.mubr.f32.mxu0 0.0
        %4412 = vmatmul.mubr.f32.gmra.mrb[0].mxu0 %v822
        %v4413 = vpop.f32.mrb[0].mxu0
        %v4414 = vadd.f32 %v4309, %v4413
        %v4415 = vpop.f32.mrb[0].mxu0
        %4416 = vmatprep.mubr.f32.mxu0 0.0
        %4417 = vmatmul.mubr.f32.gmra.mrb[0].mxu0 %v825
        %v4418 = vpop.f32.mrb[0].mxu0
        %v4419 = vadd.f32 %v4314, %v4418
        %v4420 = vpop.f32.mrb[0].mxu0
        %4421 = vmatprep.mubr.f32.mxu0 0.0
        %4422 = vmatmul.mubr.f32.gmra.mrb[0].mxu0 %v828
        %v4423 = vpop.f32.mrb[0].mxu0
        %v4424 = vadd.f32 %v4319, %v4423
        %v4425 = vpop.f32.mrb[0].mxu0
        %4426 = vmatprep.mubr.f32.mxu0 0.0
        %4427 = vmatmul.mubr.f32.gmra.mrb[0].mxu0 %v831
        %v4428 = vpop.f32.mrb[0].mxu0
        %v4429 = vadd.f32 %v4324, %v4428
        %v4430 = vpop.f32.mrb[0].mxu0
        %4431 = vmatprep.mubr.f32.mxu0 0.0
        %4432 = vmatmul.mubr.f32.gmra.mrb[0].mxu0 %v834
        %v4433 = vpop.f32.mrb[0].mxu0
        %v4434 = vadd.f32 %v4329, %v4433
        %v4435 = vpop.f32.mrb[0].mxu0
        %4436 = vmatprep.mubr.f32.mxu0 0.0
        %4437 = vmatmul.mubr.f32.gmra.mrb[0].mxu0 %v837
        %v4438 = vpop.f32.mrb[0].mxu0
        %v4439 = vadd.f32 %v4334, %v4438
        %v4440 = vpop.f32.mrb[0].mxu0
        %4441 = vdwg.mxu0
        %v4442 = vadd.f32 %v4404, %v546
        %v4443 = vadd.f32 %v4409, %v551
        %v4444 = vadd.f32 %v4414, %v556
        %v4445 = vadd.f32 %v4419, %v561
        %v4446 = vadd.f32 %v4424, %v566
        %v4447 = vadd.f32 %v4429, %v571
        %v4448 = vadd.f32 %v4434, %v576
        %v4449 = vadd.f32 %v4439, %v581
        %v4450 = vxor.u32 %v4442, 2147483648
        %v4451 = vxor.u32 %v4443, 2147483648
        %v4452 = vmul.f32 %v4450, 1.442695
        %v4453 = vpow.pop %v4452
        %v4454 = vmul.f32 %v4451, 1.442695
        %v4455 = vpow.pop %v4454
        %v4456 = vadd.f32 %v4453, 1.0
        %v4457 = vadd.f32 %v4455, 1.0
        %v4458 = vrcp.pop %v4456
        %v4459 = vmul.f32 1.0, %v4458
        %v4460 = vrcp.pop %v4457
        %v4461 = vmul.f32 1.0, %v4460
        %v4462 = vxor.u32 %v4444, 2147483648
        %v4463 = vxor.u32 %v4445, 2147483648
        %v4464 = vmul.f32 %v4462, 1.442695
        %v4465 = vpow.pop %v4464
        %v4466 = vmul.f32 %v4463, 1.442695
        %v4467 = vpow.pop %v4466
        %v4468 = vadd.f32 %v4465, 1.0
        %v4469 = vadd.f32 %v4467, 1.0
        %v4470 = vrcp.pop %v4468
        %v4471 = vmul.f32 1.0, %v4470
        %v4472 = vrcp.pop %v4469
        %v4473 = vmul.f32 1.0, %v4472
        %v4474 = vtanh.pop %v4446
        %v4475 = vtanh.pop %v4447
        %v4476 = vxor.u32 %v4448, 2147483648
        %v4477 = vxor.u32 %v4449, 2147483648
        %v4478 = vmul.f32 %v4476, 1.442695
        %v4479 = vpow.pop %v4478
        %v4480 = vmul.f32 %v4477, 1.442695
        %v4481 = vpow.pop %v4480
        %v4482 = vadd.f32 %v4479, 1.0
        %v4483 = vadd.f32 %v4481, 1.0
        %v4484 = vrcp.pop %v4482
        %v4485 = vmul.f32 1.0, %v4484
        %v4486 = vrcp.pop %v4483
        %v4487 = vmul.f32 1.0, %v4486
        %v4488 = vmul.f32 %v4471, %v3993
        %v4489 = vmul.f32 %v4473, %v3994
        %v4490 = vmul.f32 %v4459, %v4474
        %v4491 = vmul.f32 %v4461, %v4475
        %v4492 = vadd.f32 %v4488, %v4490
        %v4493 = vadd.f32 %v4489, %v4491
        %v4494 = vtanh.pop %v4492
        %v4495 = vtanh.pop %v4493
        %v4496 = vmul.f32 %v4485, %v4494
        %v4497 = vmul.f32 %v4487, %v4495
        %4498 = vmatprep.subr.mxu0 0.0
        %4499 = vmatpush1.msra.mxu0 %v4230
        %4500 = vmatprep.subr.mxu0 0.0
        %4501 = vmatpush1.msra.mxu0 %v4231
        %4502 = vmatprep.subr.mxu0 0.0
        %4503 = vmatpush1.msra.mxu0 0.0
        %4504 = vmatprep.subr.mxu0 0.0
        %4505 = vmatpush1.msra.mxu0 0.0
        %4506 = vmatprep.subr.mxu0 0.0
        %4507 = vmatpush1.msra.mxu0 0.0
        %4508 = vmatprep.subr.mxu0 0.0
        %4509 = vmatpush1.msra.mxu0 0.0
        %4510 = vmatprep.subr.mxu0 0.0
        %4511 = vmatpush1.msra.mxu0 0.0
        %4512 = vmatprep.subr.mxu0 0.0
        %4513 = vmatpush1.msra.mxu0 0.0
        %4514 = vmatprep.subr.mxu0 0.0
        %4515 = vmatpush1.msra.mxu0 0.0
        %4516 = vmatprep.subr.mxu0 0.0
        %4517 = vmatpush1.msra.mxu0 0.0
        %4518 = vmatprep.subr.mxu0 0.0
        %4519 = vmatpush1.msra.mxu0 0.0
        %4520 = vmatprep.subr.mxu0 0.0
        %4521 = vmatpush1.msra.mxu0 0.0
        %4522 = vmatprep.subr.mxu0 0.0
        %4523 = vmatpush1.msra.mxu0 0.0
        %4524 = vmatprep.subr.mxu0 0.0
        %4525 = vmatpush1.msra.mxu0 0.0
        %4526 = vmatprep.subr.mxu0 0.0
        %4527 = vmatpush1.msra.mxu0 0.0
        %4528 = vmatprep.subr.mxu0 0.0
        %4529 = vmatpush1.msra.mxu0 0.0
        %4530 = vmatprep.subr.mxu0 0.0
        %4531 = vmatpush1.msra.mxu0 0.0
        %4532 = vmatprep.subr.mxu0 0.0
        %4533 = vmatpush1.msra.mxu0 0.0
        %4534 = vmatprep.subr.mxu0 0.0
        %4535 = vmatpush1.msra.mxu0 0.0
        %4536 = vmatprep.subr.mxu0 0.0
        %4537 = vmatpush1.msra.mxu0 0.0
        %4538 = vmatprep.subr.mxu0 0.0
        %4539 = vmatpush1.msra.mxu0 0.0
        %4540 = vmatprep.subr.mxu0 0.0
        %4541 = vmatpush1.msra.mxu0 0.0
        %4542 = vmatprep.subr.mxu0 0.0
        %4543 = vmatpush1.msra.mxu0 0.0
        %4544 = vmatprep.subr.mxu0 0.0
        %4545 = vmatpush1.msra.mxu0 0.0
        %4546 = vmatprep.subr.mxu0 0.0
        %4547 = vmatpush1.msra.mxu0 0.0
        %4548 = vmatprep.subr.mxu0 0.0
        %4549 = vmatpush1.msra.mxu0 0.0
        %4550 = vmatprep.subr.mxu0 0.0
        %4551 = vmatpush1.msra.mxu0 0.0
        %4552 = vmatprep.subr.mxu0 0.0
        %4553 = vmatpush1.msra.mxu0 0.0
        %4554 = vmatprep.subr.mxu0 0.0
        %4555 = vmatpush1.msra.mxu0 0.0
        %4556 = vmatprep.subr.mxu0 0.0
        %4557 = vmatpush1.msra.mxu0 0.0
        %4558 = vmatprep.subr.mxu0 0.0
        %4559 = vmatpush1.msra.mxu0 0.0
        %4560 = vmatprep.subr.mxu0 0.0
        %4561 = vmatpush1.msra.mxu0 0.0
        %4562 = vmatprep.mubr.f32.mxu0 0.0
        %4563 = vmatmul.mubr.f32.gmra.mrb[0].mxu0 %v1001
        %v4564 = vpop.f32.mrb[0].mxu0
        %v4565 = vadd.f32 0.0, %v4564
        %v4566 = vpop.f32.mrb[0].mxu0
        %4567 = vdwg.mxu0
        %4568 = vmatprep.subr.mxu0 0.0
        %4569 = vmatpush1.msra.mxu0 %v4496
        %4570 = vmatprep.subr.mxu0 0.0
        %4571 = vmatpush1.msra.mxu0 %v4497
        %4572 = vmatprep.subr.mxu0 0.0
        %4573 = vmatpush1.msra.mxu0 0.0
        %4574 = vmatprep.subr.mxu0 0.0
        %4575 = vmatpush1.msra.mxu0 0.0
        %4576 = vmatprep.subr.mxu0 0.0
        %4577 = vmatpush1.msra.mxu0 0.0
        %4578 = vmatprep.subr.mxu0 0.0
        %4579 = vmatpush1.msra.mxu0 0.0
        %4580 = vmatprep.subr.mxu0 0.0
        %4581 = vmatpush1.msra.mxu0 0.0
        %4582 = vmatprep.subr.mxu0 0.0
        %4583 = vmatpush1.msra.mxu0 0.0
        %4584 = vmatprep.subr.mxu0 0.0
        %4585 = vmatpush1.msra.mxu0 0.0
        %4586 = vmatprep.subr.mxu0 0.0
        %4587 = vmatpush1.msra.mxu0 0.0
        %4588 = vmatprep.subr.mxu0 0.0
        %4589 = vmatpush1.msra.mxu0 0.0
        %4590 = vmatprep.subr.mxu0 0.0
        %4591 = vmatpush1.msra.mxu0 0.0
        %4592 = vmatprep.subr.mxu0 0.0
        %4593 = vmatpush1.msra.mxu0 0.0
        %4594 = vmatprep.subr.mxu0 0.0
        %4595 = vmatpush1.msra.mxu0 0.0
        %4596 = vmatprep.subr.mxu0 0.0
        %4597 = vmatpush1.msra.mxu0 0.0
        %4598 = vmatprep.subr.mxu0 0.0
        %4599 = vmatpush1.msra.mxu0 0.0
        %4600 = vmatprep.subr.mxu0 0.0
        %4601 = vmatpush1.msra.mxu0 0.0
        %4602 = vmatprep.subr.mxu0 0.0
        %4603 = vmatpush1.msra.mxu0 0.0
        %4604 = vmatprep.subr.mxu0 0.0
        %4605 = vmatpush1.msra.mxu0 0.0
        %4606 = vmatprep.subr.mxu0 0.0
        %4607 = vmatpush1.msra.mxu0 0.0
        %4608 = vmatprep.subr.mxu0 0.0
        %4609 = vmatpush1.msra.mxu0 0.0
        %4610 = vmatprep.subr.mxu0 0.0
        %4611 = vmatpush1.msra.mxu0 0.0
        %4612 = vmatprep.subr.mxu0 0.0
        %4613 = vmatpush1.msra.mxu0 0.0
        %4614 = vmatprep.subr.mxu0 0.0
        %4615 = vmatpush1.msra.mxu0 0.0
        %4616 = vmatprep.subr.mxu0 0.0
        %4617 = vmatpush1.msra.mxu0 0.0
        %4618 = vmatprep.subr.mxu0 0.0
        %4619 = vmatpush1.msra.mxu0 0.0
        %4620 = vmatprep.subr.mxu0 0.0
        %4621 = vmatpush1.msra.mxu0 0.0
        %4622 = vmatprep.subr.mxu0 0.0
        %4623 = vmatpush1.msra.mxu0 0.0
        %4624 = vmatprep.subr.mxu0 0.0
        %4625 = vmatpush1.msra.mxu0 0.0
        %4626 = vmatprep.subr.mxu0 0.0
        %4627 = vmatpush1.msra.mxu0 0.0
        %4628 = vmatprep.subr.mxu0 0.0
        %4629 = vmatpush1.msra.mxu0 0.0
        %4630 = vmatprep.subr.mxu0 0.0
        %4631 = vmatpush1.msra.mxu0 0.0
        %4632 = vmatprep.mubr.f32.mxu0 0.0
        %4633 = vmatmul.mubr.f32.gmra.mrb[0].mxu0 %v1074
        %v4634 = vpop.f32.mrb[0].mxu0
        %v4635 = vadd.f32 %v4565, %v4634
        %v4636 = vpop.f32.mrb[0].mxu0
        %4637 = vdwg.mxu0
        %v4638 = vadd.f32 %v4635, %v592
        %s4639 = scalar_lea.vmem %s437, 7 [#allocation4]
        %4640 = vst [vmem:[%s4639] sm:$0x1] %v4638
        %s4641 = scalar_lea.vmem %s460, 16
        %v4642 = vld [vmem:[%s4641] sm:$0x3]
        %v4644 = vrot.slane %v4638, 7
        %v4646 = vmul.f32 %v4642, %v4644
        %v4648 = vrot.slane %v4646, 1
        %v4650 = vadd.f32 %v4642, %v4648
        %4651 = vmatprep.subr.mxu0 0.0
        %4652 = vmatpush1.msra.mxu0 %v477
        %4653 = vmatprep.subr.mxu0 0.0
        %4654 = vmatpush1.msra.mxu0 %v478
        %4655 = vmatprep.subr.mxu0 0.0
        %4656 = vmatpush1.msra.mxu0 %v479
        %4657 = vmatprep.subr.mxu0 0.0
        %4658 = vmatpush1.msra.mxu0 %v480
        %4659 = vmatprep.subr.mxu0 0.0
        %4660 = vmatpush1.msra.mxu0 %v481
        %4661 = vmatprep.subr.mxu0 0.0
        %4662 = vmatpush1.msra.mxu0 %v482
        %4663 = vmatprep.subr.mxu0 0.0
        %4664 = vmatpush1.msra.mxu0 %v483
        %4665 = vmatprep.subr.mxu0 0.0
        %4666 = vmatpush1.msra.mxu0 %v484
        %4667 = vmatprep.subr.mxu0 0.0
        %4668 = vmatpush1.msra.mxu0 %v485
        %4669 = vmatprep.subr.mxu0 0.0
        %4670 = vmatpush1.msra.mxu0 %v486
        %4671 = vmatprep.subr.mxu0 0.0
        %4672 = vmatpush1.msra.mxu0 %v487
        %4673 = vmatprep.subr.mxu0 0.0
        %4674 = vmatpush1.msra.mxu0 %v488
        %4675 = vmatprep.subr.mxu0 0.0
        %4676 = vmatpush1.msra.mxu0 %v489
        %4677 = vmatprep.subr.mxu0 0.0
        %4678 = vmatpush1.msra.mxu0 %v490
        %4679 = vmatprep.subr.mxu0 0.0
        %4680 = vmatpush1.msra.mxu0 %v491
        %4681 = vmatprep.subr.mxu0 0.0
        %4682 = vmatpush1.msra.mxu0 %v492
        %4683 = vmatprep.subr.mxu0 0.0
        %4684 = vmatpush1.msra.mxu0 0.0
        %4685 = vmatprep.subr.mxu0 0.0
        %4686 = vmatpush1.msra.mxu0 0.0
        %4687 = vmatprep.subr.mxu0 0.0
        %4688 = vmatpush1.msra.mxu0 0.0
        %4689 = vmatprep.subr.mxu0 0.0
        %4690 = vmatpush1.msra.mxu0 0.0
        %4691 = vmatprep.subr.mxu0 0.0
        %4692 = vmatpush1.msra.mxu0 0.0
        %4693 = vmatprep.subr.mxu0 0.0
        %4694 = vmatpush1.msra.mxu0 0.0
        %4695 = vmatprep.subr.mxu0 0.0
        %4696 = vmatpush1.msra.mxu0 0.0
        %4697 = vmatprep.subr.mxu0 0.0
        %4698 = vmatpush1.msra.mxu0 0.0
        %4699 = vmatprep.subr.mxu0 0.0
        %4700 = vmatpush1.msra.mxu0 0.0
        %4701 = vmatprep.subr.mxu0 0.0
        %4702 = vmatpush1.msra.mxu0 0.0
        %4703 = vmatprep.subr.mxu0 0.0
        %4704 = vmatpush1.msra.mxu0 0.0
        %4705 = vmatprep.subr.mxu0 0.0
        %4706 = vmatpush1.msra.mxu0 0.0
        %4707 = vmatprep.subr.mxu0 0.0
        %4708 = vmatpush1.msra.mxu0 0.0
        %4709 = vmatprep.subr.mxu0 0.0
        %4710 = vmatpush1.msra.mxu0 0.0
        %4711 = vmatprep.subr.mxu0 0.0
        %4712 = vmatpush1.msra.mxu0 0.0
        %4713 = vmatprep.subr.mxu0 0.0
        %4714 = vmatpush1.msra.mxu0 0.0
        %4715 = vmatprep.mubr.f32.mxu0 0.0
        %4716 = vmatmul.mubr.f32.gmra.mrb[0].mxu0 %v4650
        %v4717 = vpop.f32.mrb[0].mxu0
        %v4718 = vadd.f32 0.0, %v4717
        %v4719 = vpop.f32.mrb[0].mxu0
        %4720 = vdwg.mxu0
        %v4721 = vlaneseq
        %v4722 = vshrl.u32 %v4721, 7
        %v4723 = vsub.s32 0, %v4722
        %v4724 = vrot.slane %v4718, %v4723
        %v4725 = vmul.f32 %v516, %v4724
        %v4726 = vmul.f32 %v521, %v4724
        %v4727 = vadd.f32 %v4725, %v528
        %v4728 = vadd.f32 %v4726, %v533
        %v4729 = vmax.f32 %v4727, 0.0
        %v4730 = vmax.f32 %v4728, 0.0
        %4731 = vmatprep.subr.mxu0 0.0
        %4732 = vmatpush1.msra.mxu0 %v4496
        %4733 = vmatprep.subr.mxu0 0.0
        %4734 = vmatpush1.msra.mxu0 %v4497
        %4735 = vmatprep.subr.mxu0 0.0
        %4736 = vmatpush1.msra.mxu0 0.0
        %4737 = vmatprep.subr.mxu0 0.0
        %4738 = vmatpush1.msra.mxu0 0.0
        %4739 = vmatprep.subr.mxu0 0.0
        %4740 = vmatpush1.msra.mxu0 0.0
        %4741 = vmatprep.subr.mxu0 0.0
        %4742 = vmatpush1.msra.mxu0 0.0
        %4743 = vmatprep.subr.mxu0 0.0
        %4744 = vmatpush1.msra.mxu0 0.0
        %4745 = vmatprep.subr.mxu0 0.0
        %4746 = vmatpush1.msra.mxu0 0.0
        %4747 = vmatprep.subr.mxu0 0.0
        %4748 = vmatpush1.msra.mxu0 0.0
        %4749 = vmatprep.subr.mxu0 0.0
        %4750 = vmatpush1.msra.mxu0 0.0
        %4751 = vmatprep.subr.mxu0 0.0
        %4752 = vmatpush1.msra.mxu0 0.0
        %4753 = vmatprep.subr.mxu0 0.0
        %4754 = vmatpush1.msra.mxu0 0.0
        %4755 = vmatprep.subr.mxu0 0.0
        %4756 = vmatpush1.msra.mxu0 0.0
        %4757 = vmatprep.subr.mxu0 0.0
        %4758 = vmatpush1.msra.mxu0 0.0
        %4759 = vmatprep.subr.mxu0 0.0
        %4760 = vmatpush1.msra.mxu0 0.0
        %4761 = vmatprep.subr.mxu0 0.0
        %4762 = vmatpush1.msra.mxu0 0.0
        %4763 = vmatprep.subr.mxu0 0.0
        %4764 = vmatpush1.msra.mxu0 0.0
        %4765 = vmatprep.subr.mxu0 0.0
        %4766 = vmatpush1.msra.mxu0 0.0
        %4767 = vmatprep.subr.mxu0 0.0
        %4768 = vmatpush1.msra.mxu0 0.0
        %4769 = vmatprep.subr.mxu0 0.0
        %4770 = vmatpush1.msra.mxu0 0.0
        %4771 = vmatprep.subr.mxu0 0.0
        %4772 = vmatpush1.msra.mxu0 0.0
        %4773 = vmatprep.subr.mxu0 0.0
        %4774 = vmatpush1.msra.mxu0 0.0
        %4775 = vmatprep.subr.mxu0 0.0
        %4776 = vmatpush1.msra.mxu0 0.0
        %4777 = vmatprep.subr.mxu0 0.0
        %4778 = vmatpush1.msra.mxu0 0.0
        %4779 = vmatprep.subr.mxu0 0.0
        %4780 = vmatpush1.msra.mxu0 0.0
        %4781 = vmatprep.subr.mxu0 0.0
        %4782 = vmatpush1.msra.mxu0 0.0
        %4783 = vmatprep.subr.mxu0 0.0
        %4784 = vmatpush1.msra.mxu0 0.0
        %4785 = vmatprep.subr.mxu0 0.0
        %4786 = vmatpush1.msra.mxu0 0.0
        %4787 = vmatprep.subr.mxu0 0.0
        %4788 = vmatpush1.msra.mxu0 0.0
        %4789 = vmatprep.subr.mxu0 0.0
        %4790 = vmatpush1.msra.mxu0 0.0
        %4791 = vmatprep.subr.mxu0 0.0
        %4792 = vmatpush1.msra.mxu0 0.0
        %4793 = vmatprep.subr.mxu0 0.0
        %4794 = vmatpush1.msra.mxu0 0.0
        %4795 = vmatprep.mubr.f32.mxu0 0.0
        %4796 = vmatmul.mubr.f32.gmra.mrb[0].mxu0 %v687
        %v4797 = vpop.f32.mrb[0].mxu0
        %v4798 = vadd.f32 0.0, %v4797
        %v4799 = vpop.f32.mrb[0].mxu0
        %4800 = vmatprep.mubr.f32.mxu0 0.0
        %4801 = vmatmul.mubr.f32.gmra.mrb[0].mxu0 %v690
        %v4802 = vpop.f32.mrb[0].mxu0
        %v4803 = vadd.f32 0.0, %v4802
        %v4804 = vpop.f32.mrb[0].mxu0
        %4805 = vmatprep.mubr.f32.mxu0 0.0
        %4806 = vmatmul.mubr.f32.gmra.mrb[0].mxu0 %v693
        %v4807 = vpop.f32.mrb[0].mxu0
        %v4808 = vadd.f32 0.0, %v4807
        %v4809 = vpop.f32.mrb[0].mxu0
        %4810 = vmatprep.mubr.f32.mxu0 0.0
        %4811 = vmatmul.mubr.f32.gmra.mrb[0].mxu0 %v696
        %v4812 = vpop.f32.mrb[0].mxu0
        %v4813 = vadd.f32 0.0, %v4812
        %v4814 = vpop.f32.mrb[0].mxu0
        %4815 = vmatprep.mubr.f32.mxu0 0.0
        %4816 = vmatmul.mubr.f32.gmra.mrb[0].mxu0 %v699
        %v4817 = vpop.f32.mrb[0].mxu0
        %v4818 = vadd.f32 0.0, %v4817
        %v4819 = vpop.f32.mrb[0].mxu0
        %4820 = vmatprep.mubr.f32.mxu0 0.0
        %4821 = vmatmul.mubr.f32.gmra.mrb[0].mxu0 %v702
        %v4822 = vpop.f32.mrb[0].mxu0
        %v4823 = vadd.f32 0.0, %v4822
        %v4824 = vpop.f32.mrb[0].mxu0
        %4825 = vmatprep.mubr.f32.mxu0 0.0
        %4826 = vmatmul.mubr.f32.gmra.mrb[0].mxu0 %v705
        %v4827 = vpop.f32.mrb[0].mxu0
        %v4828 = vadd.f32 0.0, %v4827
        %v4829 = vpop.f32.mrb[0].mxu0
        %4830 = vmatprep.mubr.f32.mxu0 0.0
        %4831 = vmatmul.mubr.f32.gmra.mrb[0].mxu0 %v708
        %v4832 = vpop.f32.mrb[0].mxu0
        %v4833 = vadd.f32 0.0, %v4832
        %v4834 = vpop.f32.mrb[0].mxu0
        %4835 = vdwg.mxu0
        %4836 = vmatprep.subr.mxu0 0.0
        %4837 = vmatpush1.msra.mxu0 %v4729
        %4838 = vmatprep.subr.mxu0 0.0
        %4839 = vmatpush1.msra.mxu0 %v4730
        %4840 = vmatprep.subr.mxu0 0.0
        %4841 = vmatpush1.msra.mxu0 0.0
        %4842 = vmatprep.subr.mxu0 0.0
        %4843 = vmatpush1.msra.mxu0 0.0
        %4844 = vmatprep.subr.mxu0 0.0
        %4845 = vmatpush1.msra.mxu0 0.0
        %4846 = vmatprep.subr.mxu0 0.0
        %4847 = vmatpush1.msra.mxu0 0.0
        %4848 = vmatprep.subr.mxu0 0.0
        %4849 = vmatpush1.msra.mxu0 0.0
        %4850 = vmatprep.subr.mxu0 0.0
        %4851 = vmatpush1.msra.mxu0 0.0
        %4852 = vmatprep.subr.mxu0 0.0
        %4853 = vmatpush1.msra.mxu0 0.0
        %4854 = vmatprep.subr.mxu0 0.0
        %4855 = vmatpush1.msra.mxu0 0.0
        %4856 = vmatprep.subr.mxu0 0.0
        %4857 = vmatpush1.msra.mxu0 0.0
        %4858 = vmatprep.subr.mxu0 0.0
        %4859 = vmatpush1.msra.mxu0 0.0
        %4860 = vmatprep.subr.mxu0 0.0
        %4861 = vmatpush1.msra.mxu0 0.0
        %4862 = vmatprep.subr.mxu0 0.0
        %4863 = vmatpush1.msra.mxu0 0.0
        %4864 = vmatprep.subr.mxu0 0.0
        %4865 = vmatpush1.msra.mxu0 0.0
        %4866 = vmatprep.subr.mxu0 0.0
        %4867 = vmatpush1.msra.mxu0 0.0
        %4868 = vmatprep.subr.mxu0 0.0
        %4869 = vmatpush1.msra.mxu0 0.0
        %4870 = vmatprep.subr.mxu0 0.0
        %4871 = vmatpush1.msra.mxu0 0.0
        %4872 = vmatprep.subr.mxu0 0.0
        %4873 = vmatpush1.msra.mxu0 0.0
        %4874 = vmatprep.subr.mxu0 0.0
        %4875 = vmatpush1.msra.mxu0 0.0
        %4876 = vmatprep.subr.mxu0 0.0
        %4877 = vmatpush1.msra.mxu0 0.0
        %4878 = vmatprep.subr.mxu0 0.0
        %4879 = vmatpush1.msra.mxu0 0.0
        %4880 = vmatprep.subr.mxu0 0.0
        %4881 = vmatpush1.msra.mxu0 0.0
        %4882 = vmatprep.subr.mxu0 0.0
        %4883 = vmatpush1.msra.mxu0 0.0
        %4884 = vmatprep.subr.mxu0 0.0
        %4885 = vmatpush1.msra.mxu0 0.0
        %4886 = vmatprep.subr.mxu0 0.0
        %4887 = vmatpush1.msra.mxu0 0.0
        %4888 = vmatprep.subr.mxu0 0.0
        %4889 = vmatpush1.msra.mxu0 0.0
        %4890 = vmatprep.subr.mxu0 0.0
        %4891 = vmatpush1.msra.mxu0 0.0
        %4892 = vmatprep.subr.mxu0 0.0
        %4893 = vmatpush1.msra.mxu0 0.0
        %4894 = vmatprep.subr.mxu0 0.0
        %4895 = vmatpush1.msra.mxu0 0.0
        %4896 = vmatprep.subr.mxu0 0.0
        %4897 = vmatpush1.msra.mxu0 0.0
        %4898 = vmatprep.subr.mxu0 0.0
        %4899 = vmatpush1.msra.mxu0 0.0
        %4900 = vmatprep.mubr.f32.mxu0 0.0
        %4901 = vmatmul.mubr.f32.gmra.mrb[0].mxu0 %v816
        %v4902 = vpop.f32.mrb[0].mxu0
        %v4903 = vadd.f32 %v4798, %v4902
        %v4904 = vpop.f32.mrb[0].mxu0
        %4905 = vmatprep.mubr.f32.mxu0 0.0
        %4906 = vmatmul.mubr.f32.gmra.mrb[0].mxu0 %v819
        %v4907 = vpop.f32.mrb[0].mxu0
        %v4908 = vadd.f32 %v4803, %v4907
        %v4909 = vpop.f32.mrb[0].mxu0
        %4910 = vmatprep.mubr.f32.mxu0 0.0
        %4911 = vmatmul.mubr.f32.gmra.mrb[0].mxu0 %v822
        %v4912 = vpop.f32.mrb[0].mxu0
        %v4913 = vadd.f32 %v4808, %v4912
        %v4914 = vpop.f32.mrb[0].mxu0
        %4915 = vmatprep.mubr.f32.mxu0 0.0
        %4916 = vmatmul.mubr.f32.gmra.mrb[0].mxu0 %v825
        %v4917 = vpop.f32.mrb[0].mxu0
        %v4918 = vadd.f32 %v4813, %v4917
        %v4919 = vpop.f32.mrb[0].mxu0
        %4920 = vmatprep.mubr.f32.mxu0 0.0
        %4921 = vmatmul.mubr.f32.gmra.mrb[0].mxu0 %v828
        %v4922 = vpop.f32.mrb[0].mxu0
        %v4923 = vadd.f32 %v4818, %v4922
        %v4924 = vpop.f32.mrb[0].mxu0
        %4925 = vmatprep.mubr.f32.mxu0 0.0
        %4926 = vmatmul.mubr.f32.gmra.mrb[0].mxu0 %v831
        %v4927 = vpop.f32.mrb[0].mxu0
        %v4928 = vadd.f32 %v4823, %v4927
        %v4929 = vpop.f32.mrb[0].mxu0
        %4930 = vmatprep.mubr.f32.mxu0 0.0
        %4931 = vmatmul.mubr.f32.gmra.mrb[0].mxu0 %v834
        %v4932 = vpop.f32.mrb[0].mxu0
        %v4933 = vadd.f32 %v4828, %v4932
        %v4934 = vpop.f32.mrb[0].mxu0
        %4935 = vmatprep.mubr.f32.mxu0 0.0
        %4936 = vmatmul.mubr.f32.gmra.mrb[0].mxu0 %v837
        %v4937 = vpop.f32.mrb[0].mxu0
        %v4938 = vadd.f32 %v4833, %v4937
        %v4939 = vpop.f32.mrb[0].mxu0
        %4940 = vdwg.mxu0
        %v4941 = vadd.f32 %v4903, %v546
        %v4942 = vadd.f32 %v4908, %v551
        %v4943 = vadd.f32 %v4913, %v556
        %v4944 = vadd.f32 %v4918, %v561
        %v4945 = vadd.f32 %v4923, %v566
        %v4946 = vadd.f32 %v4928, %v571
        %v4947 = vadd.f32 %v4933, %v576
        %v4948 = vadd.f32 %v4938, %v581
        %v4949 = vxor.u32 %v4941, 2147483648
        %v4950 = vxor.u32 %v4942, 2147483648
        %v4951 = vmul.f32 %v4949, 1.442695
        %v4952 = vpow.pop %v4951
        %v4953 = vmul.f32 %v4950, 1.442695
        %v4954 = vpow.pop %v4953
        %v4955 = vadd.f32 %v4952, 1.0
        %v4956 = vadd.f32 %v4954, 1.0
        %v4957 = vrcp.pop %v4955
        %v4958 = vmul.f32 1.0, %v4957
        %v4959 = vrcp.pop %v4956
        %v4960 = vmul.f32 1.0, %v4959
        %v4961 = vxor.u32 %v4943, 2147483648
        %v4962 = vxor.u32 %v4944, 2147483648
        %v4963 = vmul.f32 %v4961, 1.442695
        %v4964 = vpow.pop %v4963
        %v4965 = vmul.f32 %v4962, 1.442695
        %v4966 = vpow.pop %v4965
        %v4967 = vadd.f32 %v4964, 1.0
        %v4968 = vadd.f32 %v4966, 1.0
        %v4969 = vrcp.pop %v4967
        %v4970 = vmul.f32 1.0, %v4969
        %v4971 = vrcp.pop %v4968
        %v4972 = vmul.f32 1.0, %v4971
        %v4973 = vtanh.pop %v4945
        %v4974 = vtanh.pop %v4946
        %v4975 = vxor.u32 %v4947, 2147483648
        %v4976 = vxor.u32 %v4948, 2147483648
        %v4977 = vmul.f32 %v4975, 1.442695
        %v4978 = vpow.pop %v4977
        %v4979 = vmul.f32 %v4976, 1.442695
        %v4980 = vpow.pop %v4979
        %v4981 = vadd.f32 %v4978, 1.0
        %v4982 = vadd.f32 %v4980, 1.0
        %v4983 = vrcp.pop %v4981
        %v4984 = vmul.f32 1.0, %v4983
        %v4985 = vrcp.pop %v4982
        %v4986 = vmul.f32 1.0, %v4985
        %v4987 = vmul.f32 %v4970, %v4492
        %v4988 = vmul.f32 %v4972, %v4493
        %v4989 = vmul.f32 %v4958, %v4973
        %v4990 = vmul.f32 %v4960, %v4974
        %v4991 = vadd.f32 %v4987, %v4989
        %v4992 = vadd.f32 %v4988, %v4990
        %v4993 = vtanh.pop %v4991
        %v4994 = vtanh.pop %v4992
        %v4995 = vmul.f32 %v4984, %v4993
        %v4996 = vmul.f32 %v4986, %v4994
        %4997 = vmatprep.subr.mxu0 0.0
        %4998 = vmatpush1.msra.mxu0 %v4729
        %4999 = vmatprep.subr.mxu0 0.0
        %5000 = vmatpush1.msra.mxu0 %v4730
        %5001 = vmatprep.subr.mxu0 0.0
        %5002 = vmatpush1.msra.mxu0 0.0
        %5003 = vmatprep.subr.mxu0 0.0
        %5004 = vmatpush1.msra.mxu0 0.0
        %5005 = vmatprep.subr.mxu0 0.0
        %5006 = vmatpush1.msra.mxu0 0.0
        %5007 = vmatprep.subr.mxu0 0.0
        %5008 = vmatpush1.msra.mxu0 0.0
        %5009 = vmatprep.subr.mxu0 0.0
        %5010 = vmatpush1.msra.mxu0 0.0
        %5011 = vmatprep.subr.mxu0 0.0
        %5012 = vmatpush1.msra.mxu0 0.0
        %5013 = vmatprep.subr.mxu0 0.0
        %5014 = vmatpush1.msra.mxu0 0.0
        %5015 = vmatprep.subr.mxu0 0.0
        %5016 = vmatpush1.msra.mxu0 0.0
        %5017 = vmatprep.subr.mxu0 0.0
        %5018 = vmatpush1.msra.mxu0 0.0
        %5019 = vmatprep.subr.mxu0 0.0
        %5020 = vmatpush1.msra.mxu0 0.0
        %5021 = vmatprep.subr.mxu0 0.0
        %5022 = vmatpush1.msra.mxu0 0.0
        %5023 = vmatprep.subr.mxu0 0.0
        %5024 = vmatpush1.msra.mxu0 0.0
        %5025 = vmatprep.subr.mxu0 0.0
        %5026 = vmatpush1.msra.mxu0 0.0
        %5027 = vmatprep.subr.mxu0 0.0
        %5028 = vmatpush1.msra.mxu0 0.0
        %5029 = vmatprep.subr.mxu0 0.0
        %5030 = vmatpush1.msra.mxu0 0.0
        %5031 = vmatprep.subr.mxu0 0.0
        %5032 = vmatpush1.msra.mxu0 0.0
        %5033 = vmatprep.subr.mxu0 0.0
        %5034 = vmatpush1.msra.mxu0 0.0
        %5035 = vmatprep.subr.mxu0 0.0
        %5036 = vmatpush1.msra.mxu0 0.0
        %5037 = vmatprep.subr.mxu0 0.0
        %5038 = vmatpush1.msra.mxu0 0.0
        %5039 = vmatprep.subr.mxu0 0.0
        %5040 = vmatpush1.msra.mxu0 0.0
        %5041 = vmatprep.subr.mxu0 0.0
        %5042 = vmatpush1.msra.mxu0 0.0
        %5043 = vmatprep.subr.mxu0 0.0
        %5044 = vmatpush1.msra.mxu0 0.0
        %5045 = vmatprep.subr.mxu0 0.0
        %5046 = vmatpush1.msra.mxu0 0.0
        %5047 = vmatprep.subr.mxu0 0.0
        %5048 = vmatpush1.msra.mxu0 0.0
        %5049 = vmatprep.subr.mxu0 0.0
        %5050 = vmatpush1.msra.mxu0 0.0
        %5051 = vmatprep.subr.mxu0 0.0
        %5052 = vmatpush1.msra.mxu0 0.0
        %5053 = vmatprep.subr.mxu0 0.0
        %5054 = vmatpush1.msra.mxu0 0.0
        %5055 = vmatprep.subr.mxu0 0.0
        %5056 = vmatpush1.msra.mxu0 0.0
        %5057 = vmatprep.subr.mxu0 0.0
        %5058 = vmatpush1.msra.mxu0 0.0
        %5059 = vmatprep.subr.mxu0 0.0
        %5060 = vmatpush1.msra.mxu0 0.0
        %5061 = vmatprep.mubr.f32.mxu0 0.0
        %5062 = vmatmul.mubr.f32.gmra.mrb[0].mxu0 %v1001
        %v5063 = vpop.f32.mrb[0].mxu0
        %v5064 = vadd.f32 0.0, %v5063
        %v5065 = vpop.f32.mrb[0].mxu0
        %5066 = vdwg.mxu0
        %5067 = vmatprep.subr.mxu0 0.0
        %5068 = vmatpush1.msra.mxu0 %v4995
        %5069 = vmatprep.subr.mxu0 0.0
        %5070 = vmatpush1.msra.mxu0 %v4996
        %5071 = vmatprep.subr.mxu0 0.0
        %5072 = vmatpush1.msra.mxu0 0.0
        %5073 = vmatprep.subr.mxu0 0.0
        %5074 = vmatpush1.msra.mxu0 0.0
        %5075 = vmatprep.subr.mxu0 0.0
        %5076 = vmatpush1.msra.mxu0 0.0
        %5077 = vmatprep.subr.mxu0 0.0
        %5078 = vmatpush1.msra.mxu0 0.0
        %5079 = vmatprep.subr.mxu0 0.0
        %5080 = vmatpush1.msra.mxu0 0.0
        %5081 = vmatprep.subr.mxu0 0.0
        %5082 = vmatpush1.msra.mxu0 0.0
        %5083 = vmatprep.subr.mxu0 0.0
        %5084 = vmatpush1.msra.mxu0 0.0
        %5085 = vmatprep.subr.mxu0 0.0
        %5086 = vmatpush1.msra.mxu0 0.0
        %5087 = vmatprep.subr.mxu0 0.0
        %5088 = vmatpush1.msra.mxu0 0.0
        %5089 = vmatprep.subr.mxu0 0.0
        %5090 = vmatpush1.msra.mxu0 0.0
        %5091 = vmatprep.subr.mxu0 0.0
        %5092 = vmatpush1.msra.mxu0 0.0
        %5093 = vmatprep.subr.mxu0 0.0
        %5094 = vmatpush1.msra.mxu0 0.0
        %5095 = vmatprep.subr.mxu0 0.0
        %5096 = vmatpush1.msra.mxu0 0.0
        %5097 = vmatprep.subr.mxu0 0.0
        %5098 = vmatpush1.msra.mxu0 0.0
        %5099 = vmatprep.subr.mxu0 0.0
        %5100 = vmatpush1.msra.mxu0 0.0
        %5101 = vmatprep.subr.mxu0 0.0
        %5102 = vmatpush1.msra.mxu0 0.0
        %5103 = vmatprep.subr.mxu0 0.0
        %5104 = vmatpush1.msra.mxu0 0.0
        %5105 = vmatprep.subr.mxu0 0.0
        %5106 = vmatpush1.msra.mxu0 0.0
        %5107 = vmatprep.subr.mxu0 0.0
        %5108 = vmatpush1.msra.mxu0 0.0
        %5109 = vmatprep.subr.mxu0 0.0
        %5110 = vmatpush1.msra.mxu0 0.0
        %5111 = vmatprep.subr.mxu0 0.0
        %5112 = vmatpush1.msra.mxu0 0.0
        %5113 = vmatprep.subr.mxu0 0.0
        %5114 = vmatpush1.msra.mxu0 0.0
        %5115 = vmatprep.subr.mxu0 0.0
        %5116 = vmatpush1.msra.mxu0 0.0
        %5117 = vmatprep.subr.mxu0 0.0
        %5118 = vmatpush1.msra.mxu0 0.0
        %5119 = vmatprep.subr.mxu0 0.0
        %5120 = vmatpush1.msra.mxu0 0.0
        %5121 = vmatprep.subr.mxu0 0.0
        %5122 = vmatpush1.msra.mxu0 0.0
        %5123 = vmatprep.subr.mxu0 0.0
        %5124 = vmatpush1.msra.mxu0 0.0
        %5125 = vmatprep.subr.mxu0 0.0
        %5126 = vmatpush1.msra.mxu0 0.0
        %5127 = vmatprep.subr.mxu0 0.0
        %5128 = vmatpush1.msra.mxu0 0.0
        %5129 = vmatprep.subr.mxu0 0.0
        %5130 = vmatpush1.msra.mxu0 0.0
        %5131 = vmatprep.mubr.f32.mxu0 0.0
        %5132 = vmatmul.mubr.f32.gmra.mrb[0].mxu0 %v1074
        %v5133 = vpop.f32.mrb[0].mxu0
        %v5134 = vadd.f32 %v5064, %v5133
        %v5135 = vpop.f32.mrb[0].mxu0
        %5136 = vdwg.mxu0
        %v5137 = vadd.f32 %v5134, %v592
        %s5138 = scalar_lea.vmem %s437, 8 [#allocation4]
        %5139 = vst [vmem:[%s5138] sm:$0x1] %v5137
        %s5140 = scalar_lea.vmem %s460, 18
        %v5141 = vld [vmem:[%s5140] sm:$0x3]
        %v5143 = vrot.slane %v5137, 7
        %v5145 = vmul.f32 %v5141, %v5143
        %v5147 = vrot.slane %v5145, 1
        %v5149 = vadd.f32 %v5141, %v5147
        %5150 = vmatprep.subr.mxu0 0.0
        %5151 = vmatpush1.msra.mxu0 %v477
        %5152 = vmatprep.subr.mxu0 0.0
        %5153 = vmatpush1.msra.mxu0 %v478
        %5154 = vmatprep.subr.mxu0 0.0
        %5155 = vmatpush1.msra.mxu0 %v479
        %5156 = vmatprep.subr.mxu0 0.0
        %5157 = vmatpush1.msra.mxu0 %v480
        %5158 = vmatprep.subr.mxu0 0.0
        %5159 = vmatpush1.msra.mxu0 %v481
        %5160 = vmatprep.subr.mxu0 0.0
        %5161 = vmatpush1.msra.mxu0 %v482
        %5162 = vmatprep.subr.mxu0 0.0
        %5163 = vmatpush1.msra.mxu0 %v483
        %5164 = vmatprep.subr.mxu0 0.0
        %5165 = vmatpush1.msra.mxu0 %v484
        %5166 = vmatprep.subr.mxu0 0.0
        %5167 = vmatpush1.msra.mxu0 %v485
        %5168 = vmatprep.subr.mxu0 0.0
        %5169 = vmatpush1.msra.mxu0 %v486
        %5170 = vmatprep.subr.mxu0 0.0
        %5171 = vmatpush1.msra.mxu0 %v487
        %5172 = vmatprep.subr.mxu0 0.0
        %5173 = vmatpush1.msra.mxu0 %v488
        %5174 = vmatprep.subr.mxu0 0.0
        %5175 = vmatpush1.msra.mxu0 %v489
        %5176 = vmatprep.subr.mxu0 0.0
        %5177 = vmatpush1.msra.mxu0 %v490
        %5178 = vmatprep.subr.mxu0 0.0
        %5179 = vmatpush1.msra.mxu0 %v491
        %5180 = vmatprep.subr.mxu0 0.0
        %5181 = vmatpush1.msra.mxu0 %v492
        %5182 = vmatprep.subr.mxu0 0.0
        %5183 = vmatpush1.msra.mxu0 0.0
        %5184 = vmatprep.subr.mxu0 0.0
        %5185 = vmatpush1.msra.mxu0 0.0
        %5186 = vmatprep.subr.mxu0 0.0
        %5187 = vmatpush1.msra.mxu0 0.0
        %5188 = vmatprep.subr.mxu0 0.0
        %5189 = vmatpush1.msra.mxu0 0.0
        %5190 = vmatprep.subr.mxu0 0.0
        %5191 = vmatpush1.msra.mxu0 0.0
        %5192 = vmatprep.subr.mxu0 0.0
        %5193 = vmatpush1.msra.mxu0 0.0
        %5194 = vmatprep.subr.mxu0 0.0
        %5195 = vmatpush1.msra.mxu0 0.0
        %5196 = vmatprep.subr.mxu0 0.0
        %5197 = vmatpush1.msra.mxu0 0.0
        %5198 = vmatprep.subr.mxu0 0.0
        %5199 = vmatpush1.msra.mxu0 0.0
        %5200 = vmatprep.subr.mxu0 0.0
        %5201 = vmatpush1.msra.mxu0 0.0
        %5202 = vmatprep.subr.mxu0 0.0
        %5203 = vmatpush1.msra.mxu0 0.0
        %5204 = vmatprep.subr.mxu0 0.0
        %5205 = vmatpush1.msra.mxu0 0.0
        %5206 = vmatprep.subr.mxu0 0.0
        %5207 = vmatpush1.msra.mxu0 0.0
        %5208 = vmatprep.subr.mxu0 0.0
        %5209 = vmatpush1.msra.mxu0 0.0
        %5210 = vmatprep.subr.mxu0 0.0
        %5211 = vmatpush1.msra.mxu0 0.0
        %5212 = vmatprep.subr.mxu0 0.0
        %5213 = vmatpush1.msra.mxu0 0.0
        %5214 = vmatprep.mubr.f32.mxu0 0.0
        %5215 = vmatmul.mubr.f32.gmra.mrb[0].mxu0 %v5149
        %v5216 = vpop.f32.mrb[0].mxu0
        %v5217 = vadd.f32 0.0, %v5216
        %v5218 = vpop.f32.mrb[0].mxu0
        %5219 = vdwg.mxu0
        %v5220 = vlaneseq
        %v5221 = vshrl.u32 %v5220, 7
        %v5222 = vsub.s32 0, %v5221
        %v5223 = vrot.slane %v5217, %v5222
        %v5224 = vmul.f32 %v516, %v5223
        %v5225 = vmul.f32 %v521, %v5223
        %v5226 = vadd.f32 %v5224, %v528
        %v5227 = vadd.f32 %v5225, %v533
        %v5228 = vmax.f32 %v5226, 0.0
        %v5229 = vmax.f32 %v5227, 0.0
        %5230 = vmatprep.subr.mxu0 0.0
        %5231 = vmatpush1.msra.mxu0 %v4995
        %5232 = vmatprep.subr.mxu0 0.0
        %5233 = vmatpush1.msra.mxu0 %v4996
        %5234 = vmatprep.subr.mxu0 0.0
        %5235 = vmatpush1.msra.mxu0 0.0
        %5236 = vmatprep.subr.mxu0 0.0
        %5237 = vmatpush1.msra.mxu0 0.0
        %5238 = vmatprep.subr.mxu0 0.0
        %5239 = vmatpush1.msra.mxu0 0.0
        %5240 = vmatprep.subr.mxu0 0.0
        %5241 = vmatpush1.msra.mxu0 0.0
        %5242 = vmatprep.subr.mxu0 0.0
        %5243 = vmatpush1.msra.mxu0 0.0
        %5244 = vmatprep.subr.mxu0 0.0
        %5245 = vmatpush1.msra.mxu0 0.0
        %5246 = vmatprep.subr.mxu0 0.0
        %5247 = vmatpush1.msra.mxu0 0.0
        %5248 = vmatprep.subr.mxu0 0.0
        %5249 = vmatpush1.msra.mxu0 0.0
        %5250 = vmatprep.subr.mxu0 0.0
        %5251 = vmatpush1.msra.mxu0 0.0
        %5252 = vmatprep.subr.mxu0 0.0
        %5253 = vmatpush1.msra.mxu0 0.0
        %5254 = vmatprep.subr.mxu0 0.0
        %5255 = vmatpush1.msra.mxu0 0.0
        %5256 = vmatprep.subr.mxu0 0.0
        %5257 = vmatpush1.msra.mxu0 0.0
        %5258 = vmatprep.subr.mxu0 0.0
        %5259 = vmatpush1.msra.mxu0 0.0
        %5260 = vmatprep.subr.mxu0 0.0
        %5261 = vmatpush1.msra.mxu0 0.0
        %5262 = vmatprep.subr.mxu0 0.0
        %5263 = vmatpush1.msra.mxu0 0.0
        %5264 = vmatprep.subr.mxu0 0.0
        %5265 = vmatpush1.msra.mxu0 0.0
        %5266 = vmatprep.subr.mxu0 0.0
        %5267 = vmatpush1.msra.mxu0 0.0
        %5268 = vmatprep.subr.mxu0 0.0
        %5269 = vmatpush1.msra.mxu0 0.0
        %5270 = vmatprep.subr.mxu0 0.0
        %5271 = vmatpush1.msra.mxu0 0.0
        %5272 = vmatprep.subr.mxu0 0.0
        %5273 = vmatpush1.msra.mxu0 0.0
        %5274 = vmatprep.subr.mxu0 0.0
        %5275 = vmatpush1.msra.mxu0 0.0
        %5276 = vmatprep.subr.mxu0 0.0
        %5277 = vmatpush1.msra.mxu0 0.0
        %5278 = vmatprep.subr.mxu0 0.0
        %5279 = vmatpush1.msra.mxu0 0.0
        %5280 = vmatprep.subr.mxu0 0.0
        %5281 = vmatpush1.msra.mxu0 0.0
        %5282 = vmatprep.subr.mxu0 0.0
        %5283 = vmatpush1.msra.mxu0 0.0
        %5284 = vmatprep.subr.mxu0 0.0
        %5285 = vmatpush1.msra.mxu0 0.0
        %5286 = vmatprep.subr.mxu0 0.0
        %5287 = vmatpush1.msra.mxu0 0.0
        %5288 = vmatprep.subr.mxu0 0.0
        %5289 = vmatpush1.msra.mxu0 0.0
        %5290 = vmatprep.subr.mxu0 0.0
        %5291 = vmatpush1.msra.mxu0 0.0
        %5292 = vmatprep.subr.mxu0 0.0
        %5293 = vmatpush1.msra.mxu0 0.0
        %5294 = vmatprep.mubr.f32.mxu0 0.0
        %5295 = vmatmul.mubr.f32.gmra.mrb[0].mxu0 %v687
        %v5296 = vpop.f32.mrb[0].mxu0
        %v5297 = vadd.f32 0.0, %v5296
        %v5298 = vpop.f32.mrb[0].mxu0
        %5299 = vmatprep.mubr.f32.mxu0 0.0
        %5300 = vmatmul.mubr.f32.gmra.mrb[0].mxu0 %v690
        %v5301 = vpop.f32.mrb[0].mxu0
        %v5302 = vadd.f32 0.0, %v5301
        %v5303 = vpop.f32.mrb[0].mxu0
        %5304 = vmatprep.mubr.f32.mxu0 0.0
        %5305 = vmatmul.mubr.f32.gmra.mrb[0].mxu0 %v693
        %v5306 = vpop.f32.mrb[0].mxu0
        %v5307 = vadd.f32 0.0, %v5306
        %v5308 = vpop.f32.mrb[0].mxu0
        %5309 = vmatprep.mubr.f32.mxu0 0.0
        %5310 = vmatmul.mubr.f32.gmra.mrb[0].mxu0 %v696
        %v5311 = vpop.f32.mrb[0].mxu0
        %v5312 = vadd.f32 0.0, %v5311
        %v5313 = vpop.f32.mrb[0].mxu0
        %5314 = vmatprep.mubr.f32.mxu0 0.0
        %5315 = vmatmul.mubr.f32.gmra.mrb[0].mxu0 %v699
        %v5316 = vpop.f32.mrb[0].mxu0
        %v5317 = vadd.f32 0.0, %v5316
        %v5318 = vpop.f32.mrb[0].mxu0
        %5319 = vmatprep.mubr.f32.mxu0 0.0
        %5320 = vmatmul.mubr.f32.gmra.mrb[0].mxu0 %v702
        %v5321 = vpop.f32.mrb[0].mxu0
        %v5322 = vadd.f32 0.0, %v5321
        %v5323 = vpop.f32.mrb[0].mxu0
        %5324 = vmatprep.mubr.f32.mxu0 0.0
        %5325 = vmatmul.mubr.f32.gmra.mrb[0].mxu0 %v705
        %v5326 = vpop.f32.mrb[0].mxu0
        %v5327 = vadd.f32 0.0, %v5326
        %v5328 = vpop.f32.mrb[0].mxu0
        %5329 = vmatprep.mubr.f32.mxu0 0.0
        %5330 = vmatmul.mubr.f32.gmra.mrb[0].mxu0 %v708
        %v5331 = vpop.f32.mrb[0].mxu0
        %v5332 = vadd.f32 0.0, %v5331
        %v5333 = vpop.f32.mrb[0].mxu0
        %5334 = vdwg.mxu0
        %5335 = vmatprep.subr.mxu0 0.0
        %5336 = vmatpush1.msra.mxu0 %v5228
        %5337 = vmatprep.subr.mxu0 0.0
        %5338 = vmatpush1.msra.mxu0 %v5229
        %5339 = vmatprep.subr.mxu0 0.0
        %5340 = vmatpush1.msra.mxu0 0.0
        %5341 = vmatprep.subr.mxu0 0.0
        %5342 = vmatpush1.msra.mxu0 0.0
        %5343 = vmatprep.subr.mxu0 0.0
        %5344 = vmatpush1.msra.mxu0 0.0
        %5345 = vmatprep.subr.mxu0 0.0
        %5346 = vmatpush1.msra.mxu0 0.0
        %5347 = vmatprep.subr.mxu0 0.0
        %5348 = vmatpush1.msra.mxu0 0.0
        %5349 = vmatprep.subr.mxu0 0.0
        %5350 = vmatpush1.msra.mxu0 0.0
        %5351 = vmatprep.subr.mxu0 0.0
        %5352 = vmatpush1.msra.mxu0 0.0
        %5353 = vmatprep.subr.mxu0 0.0
        %5354 = vmatpush1.msra.mxu0 0.0
        %5355 = vmatprep.subr.mxu0 0.0
        %5356 = vmatpush1.msra.mxu0 0.0
        %5357 = vmatprep.subr.mxu0 0.0
        %5358 = vmatpush1.msra.mxu0 0.0
        %5359 = vmatprep.subr.mxu0 0.0
        %5360 = vmatpush1.msra.mxu0 0.0
        %5361 = vmatprep.subr.mxu0 0.0
        %5362 = vmatpush1.msra.mxu0 0.0
        %5363 = vmatprep.subr.mxu0 0.0
        %5364 = vmatpush1.msra.mxu0 0.0
        %5365 = vmatprep.subr.mxu0 0.0
        %5366 = vmatpush1.msra.mxu0 0.0
        %5367 = vmatprep.subr.mxu0 0.0
        %5368 = vmatpush1.msra.mxu0 0.0
        %5369 = vmatprep.subr.mxu0 0.0
        %5370 = vmatpush1.msra.mxu0 0.0
        %5371 = vmatprep.subr.mxu0 0.0
        %5372 = vmatpush1.msra.mxu0 0.0
        %5373 = vmatprep.subr.mxu0 0.0
        %5374 = vmatpush1.msra.mxu0 0.0
        %5375 = vmatprep.subr.mxu0 0.0
        %5376 = vmatpush1.msra.mxu0 0.0
        %5377 = vmatprep.subr.mxu0 0.0
        %5378 = vmatpush1.msra.mxu0 0.0
        %5379 = vmatprep.subr.mxu0 0.0
        %5380 = vmatpush1.msra.mxu0 0.0
        %5381 = vmatprep.subr.mxu0 0.0
        %5382 = vmatpush1.msra.mxu0 0.0
        %5383 = vmatprep.subr.mxu0 0.0
        %5384 = vmatpush1.msra.mxu0 0.0
        %5385 = vmatprep.subr.mxu0 0.0
        %5386 = vmatpush1.msra.mxu0 0.0
        %5387 = vmatprep.subr.mxu0 0.0
        %5388 = vmatpush1.msra.mxu0 0.0
        %5389 = vmatprep.subr.mxu0 0.0
        %5390 = vmatpush1.msra.mxu0 0.0
        %5391 = vmatprep.subr.mxu0 0.0
        %5392 = vmatpush1.msra.mxu0 0.0
        %5393 = vmatprep.subr.mxu0 0.0
        %5394 = vmatpush1.msra.mxu0 0.0
        %5395 = vmatprep.subr.mxu0 0.0
        %5396 = vmatpush1.msra.mxu0 0.0
        %5397 = vmatprep.subr.mxu0 0.0
        %5398 = vmatpush1.msra.mxu0 0.0
        %5399 = vmatprep.mubr.f32.mxu0 0.0
        %5400 = vmatmul.mubr.f32.gmra.mrb[0].mxu0 %v816
        %v5401 = vpop.f32.mrb[0].mxu0
        %v5402 = vadd.f32 %v5297, %v5401
        %v5403 = vpop.f32.mrb[0].mxu0
        %5404 = vmatprep.mubr.f32.mxu0 0.0
        %5405 = vmatmul.mubr.f32.gmra.mrb[0].mxu0 %v819
        %v5406 = vpop.f32.mrb[0].mxu0
        %v5407 = vadd.f32 %v5302, %v5406
        %v5408 = vpop.f32.mrb[0].mxu0
        %5409 = vmatprep.mubr.f32.mxu0 0.0
        %5410 = vmatmul.mubr.f32.gmra.mrb[0].mxu0 %v822
        %v5411 = vpop.f32.mrb[0].mxu0
        %v5412 = vadd.f32 %v5307, %v5411
        %v5413 = vpop.f32.mrb[0].mxu0
        %5414 = vmatprep.mubr.f32.mxu0 0.0
        %5415 = vmatmul.mubr.f32.gmra.mrb[0].mxu0 %v825
        %v5416 = vpop.f32.mrb[0].mxu0
        %v5417 = vadd.f32 %v5312, %v5416
        %v5418 = vpop.f32.mrb[0].mxu0
        %5419 = vmatprep.mubr.f32.mxu0 0.0
        %5420 = vmatmul.mubr.f32.gmra.mrb[0].mxu0 %v828
        %v5421 = vpop.f32.mrb[0].mxu0
        %v5422 = vadd.f32 %v5317, %v5421
        %v5423 = vpop.f32.mrb[0].mxu0
        %5424 = vmatprep.mubr.f32.mxu0 0.0
        %5425 = vmatmul.mubr.f32.gmra.mrb[0].mxu0 %v831
        %v5426 = vpop.f32.mrb[0].mxu0
        %v5427 = vadd.f32 %v5322, %v5426
        %v5428 = vpop.f32.mrb[0].mxu0
        %5429 = vmatprep.mubr.f32.mxu0 0.0
        %5430 = vmatmul.mubr.f32.gmra.mrb[0].mxu0 %v834
        %v5431 = vpop.f32.mrb[0].mxu0
        %v5432 = vadd.f32 %v5327, %v5431
        %v5433 = vpop.f32.mrb[0].mxu0
        %5434 = vmatprep.mubr.f32.mxu0 0.0
        %5435 = vmatmul.mubr.f32.gmra.mrb[0].mxu0 %v837
        %v5436 = vpop.f32.mrb[0].mxu0
        %v5437 = vadd.f32 %v5332, %v5436
        %v5438 = vpop.f32.mrb[0].mxu0
        %5439 = vdwg.mxu0
        %v5440 = vadd.f32 %v5402, %v546
        %v5441 = vadd.f32 %v5407, %v551
        %v5442 = vadd.f32 %v5412, %v556
        %v5443 = vadd.f32 %v5417, %v561
        %v5444 = vadd.f32 %v5422, %v566
        %v5445 = vadd.f32 %v5427, %v571
        %v5446 = vadd.f32 %v5432, %v576
        %v5447 = vadd.f32 %v5437, %v581
        %v5448 = vxor.u32 %v5440, 2147483648
        %v5449 = vxor.u32 %v5441, 2147483648
        %v5450 = vmul.f32 %v5448, 1.442695
        %v5451 = vpow.pop %v5450
        %v5452 = vmul.f32 %v5449, 1.442695
        %v5453 = vpow.pop %v5452
        %v5454 = vadd.f32 %v5451, 1.0
        %v5455 = vadd.f32 %v5453, 1.0
        %v5456 = vrcp.pop %v5454
        %v5457 = vmul.f32 1.0, %v5456
        %v5458 = vrcp.pop %v5455
        %v5459 = vmul.f32 1.0, %v5458
        %v5460 = vxor.u32 %v5442, 2147483648
        %v5461 = vxor.u32 %v5443, 2147483648
        %v5462 = vmul.f32 %v5460, 1.442695
        %v5463 = vpow.pop %v5462
        %v5464 = vmul.f32 %v5461, 1.442695
        %v5465 = vpow.pop %v5464
        %v5466 = vadd.f32 %v5463, 1.0
        %v5467 = vadd.f32 %v5465, 1.0
        %v5468 = vrcp.pop %v5466
        %v5469 = vmul.f32 1.0, %v5468
        %v5470 = vrcp.pop %v5467
        %v5471 = vmul.f32 1.0, %v5470
        %v5472 = vtanh.pop %v5444
        %v5473 = vtanh.pop %v5445
        %v5474 = vxor.u32 %v5446, 2147483648
        %v5475 = vxor.u32 %v5447, 2147483648
        %v5476 = vmul.f32 %v5474, 1.442695
        %v5477 = vpow.pop %v5476
        %v5478 = vmul.f32 %v5475, 1.442695
        %v5479 = vpow.pop %v5478
        %v5480 = vadd.f32 %v5477, 1.0
        %v5481 = vadd.f32 %v5479, 1.0
        %v5482 = vrcp.pop %v5480
        %v5483 = vmul.f32 1.0, %v5482
        %v5484 = vrcp.pop %v5481
        %v5485 = vmul.f32 1.0, %v5484
        %v5486 = vmul.f32 %v5469, %v4991
        %v5487 = vmul.f32 %v5471, %v4992
        %v5488 = vmul.f32 %v5457, %v5472
        %v5489 = vmul.f32 %v5459, %v5473
        %v5490 = vadd.f32 %v5486, %v5488
        %v5491 = vadd.f32 %v5487, %v5489
        %v5492 = vtanh.pop %v5490
        %v5493 = vtanh.pop %v5491
        %v5494 = vmul.f32 %v5483, %v5492
        %v5495 = vmul.f32 %v5485, %v5493
        %5496 = vmatprep.subr.mxu0 0.0
        %5497 = vmatpush1.msra.mxu0 %v5228
        %5498 = vmatprep.subr.mxu0 0.0
        %5499 = vmatpush1.msra.mxu0 %v5229
        %5500 = vmatprep.subr.mxu0 0.0
        %5501 = vmatpush1.msra.mxu0 0.0
        %5502 = vmatprep.subr.mxu0 0.0
        %5503 = vmatpush1.msra.mxu0 0.0
        %5504 = vmatprep.subr.mxu0 0.0
        %5505 = vmatpush1.msra.mxu0 0.0
        %5506 = vmatprep.subr.mxu0 0.0
        %5507 = vmatpush1.msra.mxu0 0.0
        %5508 = vmatprep.subr.mxu0 0.0
        %5509 = vmatpush1.msra.mxu0 0.0
        %5510 = vmatprep.subr.mxu0 0.0
        %5511 = vmatpush1.msra.mxu0 0.0
        %5512 = vmatprep.subr.mxu0 0.0
        %5513 = vmatpush1.msra.mxu0 0.0
        %5514 = vmatprep.subr.mxu0 0.0
        %5515 = vmatpush1.msra.mxu0 0.0
        %5516 = vmatprep.subr.mxu0 0.0
        %5517 = vmatpush1.msra.mxu0 0.0
        %5518 = vmatprep.subr.mxu0 0.0
        %5519 = vmatpush1.msra.mxu0 0.0
        %5520 = vmatprep.subr.mxu0 0.0
        %5521 = vmatpush1.msra.mxu0 0.0
        %5522 = vmatprep.subr.mxu0 0.0
        %5523 = vmatpush1.msra.mxu0 0.0
        %5524 = vmatprep.subr.mxu0 0.0
        %5525 = vmatpush1.msra.mxu0 0.0
        %5526 = vmatprep.subr.mxu0 0.0
        %5527 = vmatpush1.msra.mxu0 0.0
        %5528 = vmatprep.subr.mxu0 0.0
        %5529 = vmatpush1.msra.mxu0 0.0
        %5530 = vmatprep.subr.mxu0 0.0
        %5531 = vmatpush1.msra.mxu0 0.0
        %5532 = vmatprep.subr.mxu0 0.0
        %5533 = vmatpush1.msra.mxu0 0.0
        %5534 = vmatprep.subr.mxu0 0.0
        %5535 = vmatpush1.msra.mxu0 0.0
        %5536 = vmatprep.subr.mxu0 0.0
        %5537 = vmatpush1.msra.mxu0 0.0
        %5538 = vmatprep.subr.mxu0 0.0
        %5539 = vmatpush1.msra.mxu0 0.0
        %5540 = vmatprep.subr.mxu0 0.0
        %5541 = vmatpush1.msra.mxu0 0.0
        %5542 = vmatprep.subr.mxu0 0.0
        %5543 = vmatpush1.msra.mxu0 0.0
        %5544 = vmatprep.subr.mxu0 0.0
        %5545 = vmatpush1.msra.mxu0 0.0
        %5546 = vmatprep.subr.mxu0 0.0
        %5547 = vmatpush1.msra.mxu0 0.0
        %5548 = vmatprep.subr.mxu0 0.0
        %5549 = vmatpush1.msra.mxu0 0.0
        %5550 = vmatprep.subr.mxu0 0.0
        %5551 = vmatpush1.msra.mxu0 0.0
        %5552 = vmatprep.subr.mxu0 0.0
        %5553 = vmatpush1.msra.mxu0 0.0
        %5554 = vmatprep.subr.mxu0 0.0
        %5555 = vmatpush1.msra.mxu0 0.0
        %5556 = vmatprep.subr.mxu0 0.0
        %5557 = vmatpush1.msra.mxu0 0.0
        %5558 = vmatprep.subr.mxu0 0.0
        %5559 = vmatpush1.msra.mxu0 0.0
        %5560 = vmatprep.mubr.f32.mxu0 0.0
        %5561 = vmatmul.mubr.f32.gmra.mrb[0].mxu0 %v1001
        %v5562 = vpop.f32.mrb[0].mxu0
        %v5563 = vadd.f32 0.0, %v5562
        %v5564 = vpop.f32.mrb[0].mxu0
        %5565 = vdwg.mxu0
        %5566 = vmatprep.subr.mxu0 0.0
        %5567 = vmatpush1.msra.mxu0 %v5494
        %5568 = vmatprep.subr.mxu0 0.0
        %5569 = vmatpush1.msra.mxu0 %v5495
        %5570 = vmatprep.subr.mxu0 0.0
        %5571 = vmatpush1.msra.mxu0 0.0
        %5572 = vmatprep.subr.mxu0 0.0
        %5573 = vmatpush1.msra.mxu0 0.0
        %5574 = vmatprep.subr.mxu0 0.0
        %5575 = vmatpush1.msra.mxu0 0.0
        %5576 = vmatprep.subr.mxu0 0.0
        %5577 = vmatpush1.msra.mxu0 0.0
        %5578 = vmatprep.subr.mxu0 0.0
        %5579 = vmatpush1.msra.mxu0 0.0
        %5580 = vmatprep.subr.mxu0 0.0
        %5581 = vmatpush1.msra.mxu0 0.0
        %5582 = vmatprep.subr.mxu0 0.0
        %5583 = vmatpush1.msra.mxu0 0.0
        %5584 = vmatprep.subr.mxu0 0.0
        %5585 = vmatpush1.msra.mxu0 0.0
        %5586 = vmatprep.subr.mxu0 0.0
        %5587 = vmatpush1.msra.mxu0 0.0
        %5588 = vmatprep.subr.mxu0 0.0
        %5589 = vmatpush1.msra.mxu0 0.0
        %5590 = vmatprep.subr.mxu0 0.0
        %5591 = vmatpush1.msra.mxu0 0.0
        %5592 = vmatprep.subr.mxu0 0.0
        %5593 = vmatpush1.msra.mxu0 0.0
        %5594 = vmatprep.subr.mxu0 0.0
        %5595 = vmatpush1.msra.mxu0 0.0
        %5596 = vmatprep.subr.mxu0 0.0
        %5597 = vmatpush1.msra.mxu0 0.0
        %5598 = vmatprep.subr.mxu0 0.0
        %5599 = vmatpush1.msra.mxu0 0.0
        %5600 = vmatprep.subr.mxu0 0.0
        %5601 = vmatpush1.msra.mxu0 0.0
        %5602 = vmatprep.subr.mxu0 0.0
        %5603 = vmatpush1.msra.mxu0 0.0
        %5604 = vmatprep.subr.mxu0 0.0
        %5605 = vmatpush1.msra.mxu0 0.0
        %5606 = vmatprep.subr.mxu0 0.0
        %5607 = vmatpush1.msra.mxu0 0.0
        %5608 = vmatprep.subr.mxu0 0.0
        %5609 = vmatpush1.msra.mxu0 0.0
        %5610 = vmatprep.subr.mxu0 0.0
        %5611 = vmatpush1.msra.mxu0 0.0
        %5612 = vmatprep.subr.mxu0 0.0
        %5613 = vmatpush1.msra.mxu0 0.0
        %5614 = vmatprep.subr.mxu0 0.0
        %5615 = vmatpush1.msra.mxu0 0.0
        %5616 = vmatprep.subr.mxu0 0.0
        %5617 = vmatpush1.msra.mxu0 0.0
        %5618 = vmatprep.subr.mxu0 0.0
        %5619 = vmatpush1.msra.mxu0 0.0
        %5620 = vmatprep.subr.mxu0 0.0
        %5621 = vmatpush1.msra.mxu0 0.0
        %5622 = vmatprep.subr.mxu0 0.0
        %5623 = vmatpush1.msra.mxu0 0.0
        %5624 = vmatprep.subr.mxu0 0.0
        %5625 = vmatpush1.msra.mxu0 0.0
        %5626 = vmatprep.subr.mxu0 0.0
        %5627 = vmatpush1.msra.mxu0 0.0
        %5628 = vmatprep.subr.mxu0 0.0
        %5629 = vmatpush1.msra.mxu0 0.0
        %5630 = vmatprep.mubr.f32.mxu0 0.0
        %5631 = vmatmul.mubr.f32.gmra.mrb[0].mxu0 %v1074
        %v5632 = vpop.f32.mrb[0].mxu0
        %v5633 = vadd.f32 %v5563, %v5632
        %v5634 = vpop.f32.mrb[0].mxu0
        %5635 = vdwg.mxu0
        %v5636 = vadd.f32 %v5633, %v592
        %s5637 = scalar_lea.vmem %s437, 9 [#allocation4]
        %5638 = vst [vmem:[%s5637] sm:$0x1] %v5636
        %s5639 = scalar_lea.vmem %s460, 20
        %v5640 = vld [vmem:[%s5639] sm:$0x3]
        %v5642 = vrot.slane %v5636, 7
        %v5644 = vmul.f32 %v5640, %v5642
        %v5646 = vrot.slane %v5644, 1
        %v5648 = vadd.f32 %v5640, %v5646
        %5649 = vmatprep.subr.mxu0 0.0
        %5650 = vmatpush1.msra.mxu0 %v477
        %5651 = vmatprep.subr.mxu0 0.0
        %5652 = vmatpush1.msra.mxu0 %v478
        %5653 = vmatprep.subr.mxu0 0.0
        %5654 = vmatpush1.msra.mxu0 %v479
        %5655 = vmatprep.subr.mxu0 0.0
        %5656 = vmatpush1.msra.mxu0 %v480
        %5657 = vmatprep.subr.mxu0 0.0
        %5658 = vmatpush1.msra.mxu0 %v481
        %5659 = vmatprep.subr.mxu0 0.0
        %5660 = vmatpush1.msra.mxu0 %v482
        %5661 = vmatprep.subr.mxu0 0.0
        %5662 = vmatpush1.msra.mxu0 %v483
        %5663 = vmatprep.subr.mxu0 0.0
        %5664 = vmatpush1.msra.mxu0 %v484
        %5665 = vmatprep.subr.mxu0 0.0
        %5666 = vmatpush1.msra.mxu0 %v485
        %5667 = vmatprep.subr.mxu0 0.0
        %5668 = vmatpush1.msra.mxu0 %v486
        %5669 = vmatprep.subr.mxu0 0.0
        %5670 = vmatpush1.msra.mxu0 %v487
        %5671 = vmatprep.subr.mxu0 0.0
        %5672 = vmatpush1.msra.mxu0 %v488
        %5673 = vmatprep.subr.mxu0 0.0
        %5674 = vmatpush1.msra.mxu0 %v489
        %5675 = vmatprep.subr.mxu0 0.0
        %5676 = vmatpush1.msra.mxu0 %v490
        %5677 = vmatprep.subr.mxu0 0.0
        %5678 = vmatpush1.msra.mxu0 %v491
        %5679 = vmatprep.subr.mxu0 0.0
        %5680 = vmatpush1.msra.mxu0 %v492
        %5681 = vmatprep.subr.mxu0 0.0
        %5682 = vmatpush1.msra.mxu0 0.0
        %5683 = vmatprep.subr.mxu0 0.0
        %5684 = vmatpush1.msra.mxu0 0.0
        %5685 = vmatprep.subr.mxu0 0.0
        %5686 = vmatpush1.msra.mxu0 0.0
        %5687 = vmatprep.subr.mxu0 0.0
        %5688 = vmatpush1.msra.mxu0 0.0
        %5689 = vmatprep.subr.mxu0 0.0
        %5690 = vmatpush1.msra.mxu0 0.0
        %5691 = vmatprep.subr.mxu0 0.0
        %5692 = vmatpush1.msra.mxu0 0.0
        %5693 = vmatprep.subr.mxu0 0.0
        %5694 = vmatpush1.msra.mxu0 0.0
        %5695 = vmatprep.subr.mxu0 0.0
        %5696 = vmatpush1.msra.mxu0 0.0
        %5697 = vmatprep.subr.mxu0 0.0
        %5698 = vmatpush1.msra.mxu0 0.0
        %5699 = vmatprep.subr.mxu0 0.0
        %5700 = vmatpush1.msra.mxu0 0.0
        %5701 = vmatprep.subr.mxu0 0.0
        %5702 = vmatpush1.msra.mxu0 0.0
        %5703 = vmatprep.subr.mxu0 0.0
        %5704 = vmatpush1.msra.mxu0 0.0
        %5705 = vmatprep.subr.mxu0 0.0
        %5706 = vmatpush1.msra.mxu0 0.0
        %5707 = vmatprep.subr.mxu0 0.0
        %5708 = vmatpush1.msra.mxu0 0.0
        %5709 = vmatprep.subr.mxu0 0.0
        %5710 = vmatpush1.msra.mxu0 0.0
        %5711 = vmatprep.subr.mxu0 0.0
        %5712 = vmatpush1.msra.mxu0 0.0
        %5713 = vmatprep.mubr.f32.mxu0 0.0
        %5714 = vmatmul.mubr.f32.gmra.mrb[0].mxu0 %v5648
        %v5715 = vpop.f32.mrb[0].mxu0
        %v5716 = vadd.f32 0.0, %v5715
        %v5717 = vpop.f32.mrb[0].mxu0
        %5718 = vdwg.mxu0
        %v5719 = vlaneseq
        %v5720 = vshrl.u32 %v5719, 7
        %v5721 = vsub.s32 0, %v5720
        %v5722 = vrot.slane %v5716, %v5721
        %v5723 = vmul.f32 %v516, %v5722
        %v5724 = vmul.f32 %v521, %v5722
        %v5725 = vadd.f32 %v5723, %v528
        %v5726 = vadd.f32 %v5724, %v533
        %v5727 = vmax.f32 %v5725, 0.0
        %v5728 = vmax.f32 %v5726, 0.0
        %5729 = vmatprep.subr.mxu0 0.0
        %5730 = vmatpush1.msra.mxu0 %v5494
        %5731 = vmatprep.subr.mxu0 0.0
        %5732 = vmatpush1.msra.mxu0 %v5495
        %5733 = vmatprep.subr.mxu0 0.0
        %5734 = vmatpush1.msra.mxu0 0.0
        %5735 = vmatprep.subr.mxu0 0.0
        %5736 = vmatpush1.msra.mxu0 0.0
        %5737 = vmatprep.subr.mxu0 0.0
        %5738 = vmatpush1.msra.mxu0 0.0
        %5739 = vmatprep.subr.mxu0 0.0
        %5740 = vmatpush1.msra.mxu0 0.0
        %5741 = vmatprep.subr.mxu0 0.0
        %5742 = vmatpush1.msra.mxu0 0.0
        %5743 = vmatprep.subr.mxu0 0.0
        %5744 = vmatpush1.msra.mxu0 0.0
        %5745 = vmatprep.subr.mxu0 0.0
        %5746 = vmatpush1.msra.mxu0 0.0
        %5747 = vmatprep.subr.mxu0 0.0
        %5748 = vmatpush1.msra.mxu0 0.0
        %5749 = vmatprep.subr.mxu0 0.0
        %5750 = vmatpush1.msra.mxu0 0.0
        %5751 = vmatprep.subr.mxu0 0.0
        %5752 = vmatpush1.msra.mxu0 0.0
        %5753 = vmatprep.subr.mxu0 0.0
        %5754 = vmatpush1.msra.mxu0 0.0
        %5755 = vmatprep.subr.mxu0 0.0
        %5756 = vmatpush1.msra.mxu0 0.0
        %5757 = vmatprep.subr.mxu0 0.0
        %5758 = vmatpush1.msra.mxu0 0.0
        %5759 = vmatprep.subr.mxu0 0.0
        %5760 = vmatpush1.msra.mxu0 0.0
        %5761 = vmatprep.subr.mxu0 0.0
        %5762 = vmatpush1.msra.mxu0 0.0
        %5763 = vmatprep.subr.mxu0 0.0
        %5764 = vmatpush1.msra.mxu0 0.0
        %5765 = vmatprep.subr.mxu0 0.0
        %5766 = vmatpush1.msra.mxu0 0.0
        %5767 = vmatprep.subr.mxu0 0.0
        %5768 = vmatpush1.msra.mxu0 0.0
        %5769 = vmatprep.subr.mxu0 0.0
        %5770 = vmatpush1.msra.mxu0 0.0
        %5771 = vmatprep.subr.mxu0 0.0
        %5772 = vmatpush1.msra.mxu0 0.0
        %5773 = vmatprep.subr.mxu0 0.0
        %5774 = vmatpush1.msra.mxu0 0.0
        %5775 = vmatprep.subr.mxu0 0.0
        %5776 = vmatpush1.msra.mxu0 0.0
        %5777 = vmatprep.subr.mxu0 0.0
        %5778 = vmatpush1.msra.mxu0 0.0
        %5779 = vmatprep.subr.mxu0 0.0
        %5780 = vmatpush1.msra.mxu0 0.0
        %5781 = vmatprep.subr.mxu0 0.0
        %5782 = vmatpush1.msra.mxu0 0.0
        %5783 = vmatprep.subr.mxu0 0.0
        %5784 = vmatpush1.msra.mxu0 0.0
        %5785 = vmatprep.subr.mxu0 0.0
        %5786 = vmatpush1.msra.mxu0 0.0
        %5787 = vmatprep.subr.mxu0 0.0
        %5788 = vmatpush1.msra.mxu0 0.0
        %5789 = vmatprep.subr.mxu0 0.0
        %5790 = vmatpush1.msra.mxu0 0.0
        %5791 = vmatprep.subr.mxu0 0.0
        %5792 = vmatpush1.msra.mxu0 0.0
        %5793 = vmatprep.mubr.f32.mxu0 0.0
        %5794 = vmatmul.mubr.f32.gmra.mrb[0].mxu0 %v687
        %v5795 = vpop.f32.mrb[0].mxu0
        %v5796 = vadd.f32 0.0, %v5795
        %v5797 = vpop.f32.mrb[0].mxu0
        %5798 = vmatprep.mubr.f32.mxu0 0.0
        %5799 = vmatmul.mubr.f32.gmra.mrb[0].mxu0 %v690
        %v5800 = vpop.f32.mrb[0].mxu0
        %v5801 = vadd.f32 0.0, %v5800
        %v5802 = vpop.f32.mrb[0].mxu0
        %5803 = vmatprep.mubr.f32.mxu0 0.0
        %5804 = vmatmul.mubr.f32.gmra.mrb[0].mxu0 %v693
        %v5805 = vpop.f32.mrb[0].mxu0
        %v5806 = vadd.f32 0.0, %v5805
        %v5807 = vpop.f32.mrb[0].mxu0
        %5808 = vmatprep.mubr.f32.mxu0 0.0
        %5809 = vmatmul.mubr.f32.gmra.mrb[0].mxu0 %v696
        %v5810 = vpop.f32.mrb[0].mxu0
        %v5811 = vadd.f32 0.0, %v5810
        %v5812 = vpop.f32.mrb[0].mxu0
        %5813 = vmatprep.mubr.f32.mxu0 0.0
        %5814 = vmatmul.mubr.f32.gmra.mrb[0].mxu0 %v699
        %v5815 = vpop.f32.mrb[0].mxu0
        %v5816 = vadd.f32 0.0, %v5815
        %v5817 = vpop.f32.mrb[0].mxu0
        %5818 = vmatprep.mubr.f32.mxu0 0.0
        %5819 = vmatmul.mubr.f32.gmra.mrb[0].mxu0 %v702
        %v5820 = vpop.f32.mrb[0].mxu0
        %v5821 = vadd.f32 0.0, %v5820
        %v5822 = vpop.f32.mrb[0].mxu0
        %5823 = vmatprep.mubr.f32.mxu0 0.0
        %5824 = vmatmul.mubr.f32.gmra.mrb[0].mxu0 %v705
        %v5825 = vpop.f32.mrb[0].mxu0
        %v5826 = vadd.f32 0.0, %v5825
        %v5827 = vpop.f32.mrb[0].mxu0
        %5828 = vmatprep.mubr.f32.mxu0 0.0
        %5829 = vmatmul.mubr.f32.gmra.mrb[0].mxu0 %v708
        %v5830 = vpop.f32.mrb[0].mxu0
        %v5831 = vadd.f32 0.0, %v5830
        %v5832 = vpop.f32.mrb[0].mxu0
        %5833 = vdwg.mxu0
        %5834 = vmatprep.subr.mxu0 0.0
        %5835 = vmatpush1.msra.mxu0 %v5727
        %5836 = vmatprep.subr.mxu0 0.0
        %5837 = vmatpush1.msra.mxu0 %v5728
        %5838 = vmatprep.subr.mxu0 0.0
        %5839 = vmatpush1.msra.mxu0 0.0
        %5840 = vmatprep.subr.mxu0 0.0
        %5841 = vmatpush1.msra.mxu0 0.0
        %5842 = vmatprep.subr.mxu0 0.0
        %5843 = vmatpush1.msra.mxu0 0.0
        %5844 = vmatprep.subr.mxu0 0.0
        %5845 = vmatpush1.msra.mxu0 0.0
        %5846 = vmatprep.subr.mxu0 0.0
        %5847 = vmatpush1.msra.mxu0 0.0
        %5848 = vmatprep.subr.mxu0 0.0
        %5849 = vmatpush1.msra.mxu0 0.0
        %5850 = vmatprep.subr.mxu0 0.0
        %5851 = vmatpush1.msra.mxu0 0.0
        %5852 = vmatprep.subr.mxu0 0.0
        %5853 = vmatpush1.msra.mxu0 0.0
        %5854 = vmatprep.subr.mxu0 0.0
        %5855 = vmatpush1.msra.mxu0 0.0
        %5856 = vmatprep.subr.mxu0 0.0
        %5857 = vmatpush1.msra.mxu0 0.0
        %5858 = vmatprep.subr.mxu0 0.0
        %5859 = vmatpush1.msra.mxu0 0.0
        %5860 = vmatprep.subr.mxu0 0.0
        %5861 = vmatpush1.msra.mxu0 0.0
        %5862 = vmatprep.subr.mxu0 0.0
        %5863 = vmatpush1.msra.mxu0 0.0
        %5864 = vmatprep.subr.mxu0 0.0
        %5865 = vmatpush1.msra.mxu0 0.0
        %5866 = vmatprep.subr.mxu0 0.0
        %5867 = vmatpush1.msra.mxu0 0.0
        %5868 = vmatprep.subr.mxu0 0.0
        %5869 = vmatpush1.msra.mxu0 0.0
        %5870 = vmatprep.subr.mxu0 0.0
        %5871 = vmatpush1.msra.mxu0 0.0
        %5872 = vmatprep.subr.mxu0 0.0
        %5873 = vmatpush1.msra.mxu0 0.0
        %5874 = vmatprep.subr.mxu0 0.0
        %5875 = vmatpush1.msra.mxu0 0.0
        %5876 = vmatprep.subr.mxu0 0.0
        %5877 = vmatpush1.msra.mxu0 0.0
        %5878 = vmatprep.subr.mxu0 0.0
        %5879 = vmatpush1.msra.mxu0 0.0
        %5880 = vmatprep.subr.mxu0 0.0
        %5881 = vmatpush1.msra.mxu0 0.0
        %5882 = vmatprep.subr.mxu0 0.0
        %5883 = vmatpush1.msra.mxu0 0.0
        %5884 = vmatprep.subr.mxu0 0.0
        %5885 = vmatpush1.msra.mxu0 0.0
        %5886 = vmatprep.subr.mxu0 0.0
        %5887 = vmatpush1.msra.mxu0 0.0
        %5888 = vmatprep.subr.mxu0 0.0
        %5889 = vmatpush1.msra.mxu0 0.0
        %5890 = vmatprep.subr.mxu0 0.0
        %5891 = vmatpush1.msra.mxu0 0.0
        %5892 = vmatprep.subr.mxu0 0.0
        %5893 = vmatpush1.msra.mxu0 0.0
        %5894 = vmatprep.subr.mxu0 0.0
        %5895 = vmatpush1.msra.mxu0 0.0
        %5896 = vmatprep.subr.mxu0 0.0
        %5897 = vmatpush1.msra.mxu0 0.0
        %5898 = vmatprep.mubr.f32.mxu0 0.0
        %5899 = vmatmul.mubr.f32.gmra.mrb[0].mxu0 %v816
        %v5900 = vpop.f32.mrb[0].mxu0
        %v5901 = vadd.f32 %v5796, %v5900
        %v5902 = vpop.f32.mrb[0].mxu0
        %5903 = vmatprep.mubr.f32.mxu0 0.0
        %5904 = vmatmul.mubr.f32.gmra.mrb[0].mxu0 %v819
        %v5905 = vpop.f32.mrb[0].mxu0
        %v5906 = vadd.f32 %v5801, %v5905
        %v5907 = vpop.f32.mrb[0].mxu0
        %5908 = vmatprep.mubr.f32.mxu0 0.0
        %5909 = vmatmul.mubr.f32.gmra.mrb[0].mxu0 %v822
        %v5910 = vpop.f32.mrb[0].mxu0
        %v5911 = vadd.f32 %v5806, %v5910
        %v5912 = vpop.f32.mrb[0].mxu0
        %5913 = vmatprep.mubr.f32.mxu0 0.0
        %5914 = vmatmul.mubr.f32.gmra.mrb[0].mxu0 %v825
        %v5915 = vpop.f32.mrb[0].mxu0
        %v5916 = vadd.f32 %v5811, %v5915
        %v5917 = vpop.f32.mrb[0].mxu0
        %5918 = vmatprep.mubr.f32.mxu0 0.0
        %5919 = vmatmul.mubr.f32.gmra.mrb[0].mxu0 %v828
        %v5920 = vpop.f32.mrb[0].mxu0
        %v5921 = vadd.f32 %v5816, %v5920
        %v5922 = vpop.f32.mrb[0].mxu0
        %5923 = vmatprep.mubr.f32.mxu0 0.0
        %5924 = vmatmul.mubr.f32.gmra.mrb[0].mxu0 %v831
        %v5925 = vpop.f32.mrb[0].mxu0
        %v5926 = vadd.f32 %v5821, %v5925
        %v5927 = vpop.f32.mrb[0].mxu0
        %5928 = vmatprep.mubr.f32.mxu0 0.0
        %5929 = vmatmul.mubr.f32.gmra.mrb[0].mxu0 %v834
        %v5930 = vpop.f32.mrb[0].mxu0
        %v5931 = vadd.f32 %v5826, %v5930
        %v5932 = vpop.f32.mrb[0].mxu0
        %5933 = vmatprep.mubr.f32.mxu0 0.0
        %5934 = vmatmul.mubr.f32.gmra.mrb[0].mxu0 %v837
        %v5935 = vpop.f32.mrb[0].mxu0
        %v5936 = vadd.f32 %v5831, %v5935
        %v5937 = vpop.f32.mrb[0].mxu0
        %5938 = vdwg.mxu0
        %v5939 = vadd.f32 %v5901, %v546
        %v5940 = vadd.f32 %v5906, %v551
        %v5941 = vadd.f32 %v5911, %v556
        %v5942 = vadd.f32 %v5916, %v561
        %v5943 = vadd.f32 %v5921, %v566
        %v5944 = vadd.f32 %v5926, %v571
        %v5945 = vadd.f32 %v5931, %v576
        %v5946 = vadd.f32 %v5936, %v581
        %v5947 = vxor.u32 %v5939, 2147483648
        %v5948 = vxor.u32 %v5940, 2147483648
        %v5949 = vmul.f32 %v5947, 1.442695
        %v5950 = vpow.pop %v5949
        %v5951 = vmul.f32 %v5948, 1.442695
        %v5952 = vpow.pop %v5951
        %v5953 = vadd.f32 %v5950, 1.0
        %v5954 = vadd.f32 %v5952, 1.0
        %v5955 = vrcp.pop %v5953
        %v5956 = vmul.f32 1.0, %v5955
        %v5957 = vrcp.pop %v5954
        %v5958 = vmul.f32 1.0, %v5957
        %v5959 = vxor.u32 %v5941, 2147483648
        %v5960 = vxor.u32 %v5942, 2147483648
        %v5961 = vmul.f32 %v5959, 1.442695
        %v5962 = vpow.pop %v5961
        %v5963 = vmul.f32 %v5960, 1.442695
        %v5964 = vpow.pop %v5963
        %v5965 = vadd.f32 %v5962, 1.0
        %v5966 = vadd.f32 %v5964, 1.0
        %v5967 = vrcp.pop %v5965
        %v5968 = vmul.f32 1.0, %v5967
        %v5969 = vrcp.pop %v5966
        %v5970 = vmul.f32 1.0, %v5969
        %v5971 = vtanh.pop %v5943
        %v5972 = vtanh.pop %v5944
        %v5973 = vxor.u32 %v5945, 2147483648
        %v5974 = vxor.u32 %v5946, 2147483648
        %v5975 = vmul.f32 %v5973, 1.442695
        %v5976 = vpow.pop %v5975
        %v5977 = vmul.f32 %v5974, 1.442695
        %v5978 = vpow.pop %v5977
        %v5979 = vadd.f32 %v5976, 1.0
        %v5980 = vadd.f32 %v5978, 1.0
        %v5981 = vrcp.pop %v5979
        %v5982 = vmul.f32 1.0, %v5981
        %v5983 = vrcp.pop %v5980
        %v5984 = vmul.f32 1.0, %v5983
        %v5985 = vmul.f32 %v5968, %v5490
        %v5986 = vmul.f32 %v5970, %v5491
        %v5987 = vmul.f32 %v5956, %v5971
        %v5988 = vmul.f32 %v5958, %v5972
        %v5989 = vadd.f32 %v5985, %v5987
        %v5990 = vadd.f32 %v5986, %v5988
        %v5991 = vtanh.pop %v5989
        %v5992 = vtanh.pop %v5990
        %v5993 = vmul.f32 %v5982, %v5991
        %v5994 = vmul.f32 %v5984, %v5992
        %5995 = vmatprep.subr.mxu0 0.0
        %5996 = vmatpush1.msra.mxu0 %v5727
        %5997 = vmatprep.subr.mxu0 0.0
        %5998 = vmatpush1.msra.mxu0 %v5728
        %5999 = vmatprep.subr.mxu0 0.0
        %6000 = vmatpush1.msra.mxu0 0.0
        %6001 = vmatprep.subr.mxu0 0.0
        %6002 = vmatpush1.msra.mxu0 0.0
        %6003 = vmatprep.subr.mxu0 0.0
        %6004 = vmatpush1.msra.mxu0 0.0
        %6005 = vmatprep.subr.mxu0 0.0
        %6006 = vmatpush1.msra.mxu0 0.0
        %6007 = vmatprep.subr.mxu0 0.0
        %6008 = vmatpush1.msra.mxu0 0.0
        %6009 = vmatprep.subr.mxu0 0.0
        %6010 = vmatpush1.msra.mxu0 0.0
        %6011 = vmatprep.subr.mxu0 0.0
        %6012 = vmatpush1.msra.mxu0 0.0
        %6013 = vmatprep.subr.mxu0 0.0
        %6014 = vmatpush1.msra.mxu0 0.0
        %6015 = vmatprep.subr.mxu0 0.0
        %6016 = vmatpush1.msra.mxu0 0.0
        %6017 = vmatprep.subr.mxu0 0.0
        %6018 = vmatpush1.msra.mxu0 0.0
        %6019 = vmatprep.subr.mxu0 0.0
        %6020 = vmatpush1.msra.mxu0 0.0
        %6021 = vmatprep.subr.mxu0 0.0
        %6022 = vmatpush1.msra.mxu0 0.0
        %6023 = vmatprep.subr.mxu0 0.0
        %6024 = vmatpush1.msra.mxu0 0.0
        %6025 = vmatprep.subr.mxu0 0.0
        %6026 = vmatpush1.msra.mxu0 0.0
        %6027 = vmatprep.subr.mxu0 0.0
        %6028 = vmatpush1.msra.mxu0 0.0
        %6029 = vmatprep.subr.mxu0 0.0
        %6030 = vmatpush1.msra.mxu0 0.0
        %6031 = vmatprep.subr.mxu0 0.0
        %6032 = vmatpush1.msra.mxu0 0.0
        %6033 = vmatprep.subr.mxu0 0.0
        %6034 = vmatpush1.msra.mxu0 0.0
        %6035 = vmatprep.subr.mxu0 0.0
        %6036 = vmatpush1.msra.mxu0 0.0
        %6037 = vmatprep.subr.mxu0 0.0
        %6038 = vmatpush1.msra.mxu0 0.0
        %6039 = vmatprep.subr.mxu0 0.0
        %6040 = vmatpush1.msra.mxu0 0.0
        %6041 = vmatprep.subr.mxu0 0.0
        %6042 = vmatpush1.msra.mxu0 0.0
        %6043 = vmatprep.subr.mxu0 0.0
        %6044 = vmatpush1.msra.mxu0 0.0
        %6045 = vmatprep.subr.mxu0 0.0
        %6046 = vmatpush1.msra.mxu0 0.0
        %6047 = vmatprep.subr.mxu0 0.0
        %6048 = vmatpush1.msra.mxu0 0.0
        %6049 = vmatprep.subr.mxu0 0.0
        %6050 = vmatpush1.msra.mxu0 0.0
        %6051 = vmatprep.subr.mxu0 0.0
        %6052 = vmatpush1.msra.mxu0 0.0
        %6053 = vmatprep.subr.mxu0 0.0
        %6054 = vmatpush1.msra.mxu0 0.0
        %6055 = vmatprep.subr.mxu0 0.0
        %6056 = vmatpush1.msra.mxu0 0.0
        %6057 = vmatprep.subr.mxu0 0.0
        %6058 = vmatpush1.msra.mxu0 0.0
        %6059 = vmatprep.mubr.f32.mxu0 0.0
        %6060 = vmatmul.mubr.f32.gmra.mrb[0].mxu0 %v1001
        %v6061 = vpop.f32.mrb[0].mxu0
        %v6062 = vadd.f32 0.0, %v6061
        %v6063 = vpop.f32.mrb[0].mxu0
        %6064 = vdwg.mxu0
        %6065 = vmatprep.subr.mxu0 0.0
        %6066 = vmatpush1.msra.mxu0 %v5993
        %6067 = vmatprep.subr.mxu0 0.0
        %6068 = vmatpush1.msra.mxu0 %v5994
        %6069 = vmatprep.subr.mxu0 0.0
        %6070 = vmatpush1.msra.mxu0 0.0
        %6071 = vmatprep.subr.mxu0 0.0
        %6072 = vmatpush1.msra.mxu0 0.0
        %6073 = vmatprep.subr.mxu0 0.0
        %6074 = vmatpush1.msra.mxu0 0.0
        %6075 = vmatprep.subr.mxu0 0.0
        %6076 = vmatpush1.msra.mxu0 0.0
        %6077 = vmatprep.subr.mxu0 0.0
        %6078 = vmatpush1.msra.mxu0 0.0
        %6079 = vmatprep.subr.mxu0 0.0
        %6080 = vmatpush1.msra.mxu0 0.0
        %6081 = vmatprep.subr.mxu0 0.0
        %6082 = vmatpush1.msra.mxu0 0.0
        %6083 = vmatprep.subr.mxu0 0.0
        %6084 = vmatpush1.msra.mxu0 0.0
        %6085 = vmatprep.subr.mxu0 0.0
        %6086 = vmatpush1.msra.mxu0 0.0
        %6087 = vmatprep.subr.mxu0 0.0
        %6088 = vmatpush1.msra.mxu0 0.0
        %6089 = vmatprep.subr.mxu0 0.0
        %6090 = vmatpush1.msra.mxu0 0.0
        %6091 = vmatprep.subr.mxu0 0.0
        %6092 = vmatpush1.msra.mxu0 0.0
        %6093 = vmatprep.subr.mxu0 0.0
        %6094 = vmatpush1.msra.mxu0 0.0
        %6095 = vmatprep.subr.mxu0 0.0
        %6096 = vmatpush1.msra.mxu0 0.0
        %6097 = vmatprep.subr.mxu0 0.0
        %6098 = vmatpush1.msra.mxu0 0.0
        %6099 = vmatprep.subr.mxu0 0.0
        %6100 = vmatpush1.msra.mxu0 0.0
        %6101 = vmatprep.subr.mxu0 0.0
        %6102 = vmatpush1.msra.mxu0 0.0
        %6103 = vmatprep.subr.mxu0 0.0
        %6104 = vmatpush1.msra.mxu0 0.0
        %6105 = vmatprep.subr.mxu0 0.0
        %6106 = vmatpush1.msra.mxu0 0.0
        %6107 = vmatprep.subr.mxu0 0.0
        %6108 = vmatpush1.msra.mxu0 0.0
        %6109 = vmatprep.subr.mxu0 0.0
        %6110 = vmatpush1.msra.mxu0 0.0
        %6111 = vmatprep.subr.mxu0 0.0
        %6112 = vmatpush1.msra.mxu0 0.0
        %6113 = vmatprep.subr.mxu0 0.0
        %6114 = vmatpush1.msra.mxu0 0.0
        %6115 = vmatprep.subr.mxu0 0.0
        %6116 = vmatpush1.msra.mxu0 0.0
        %6117 = vmatprep.subr.mxu0 0.0
        %6118 = vmatpush1.msra.mxu0 0.0
        %6119 = vmatprep.subr.mxu0 0.0
        %6120 = vmatpush1.msra.mxu0 0.0
        %6121 = vmatprep.subr.mxu0 0.0
        %6122 = vmatpush1.msra.mxu0 0.0
        %6123 = vmatprep.subr.mxu0 0.0
        %6124 = vmatpush1.msra.mxu0 0.0
        %6125 = vmatprep.subr.mxu0 0.0
        %6126 = vmatpush1.msra.mxu0 0.0
        %6127 = vmatprep.subr.mxu0 0.0
        %6128 = vmatpush1.msra.mxu0 0.0
        %6129 = vmatprep.mubr.f32.mxu0 0.0
        %6130 = vmatmul.mubr.f32.gmra.mrb[0].mxu0 %v1074
        %v6131 = vpop.f32.mrb[0].mxu0
        %v6132 = vadd.f32 %v6062, %v6131
        %v6133 = vpop.f32.mrb[0].mxu0
        %6134 = vdwg.mxu0
        %v6135 = vadd.f32 %v6132, %v592
        %s6136 = scalar_lea.vmem %s437, 10 [#allocation4]
        %6137 = vst [vmem:[%s6136] sm:$0x1] %v6135
        %s6138 = scalar_lea.vmem %s460, 22
        %v6139 = vld [vmem:[%s6138] sm:$0x3]
        %v6141 = vrot.slane %v6135, 7
        %v6143 = vmul.f32 %v6139, %v6141
        %v6145 = vrot.slane %v6143, 1
        %v6147 = vadd.f32 %v6139, %v6145
        %6148 = vmatprep.subr.mxu0 0.0
        %6149 = vmatpush1.msra.mxu0 %v477
        %6150 = vmatprep.subr.mxu0 0.0
        %6151 = vmatpush1.msra.mxu0 %v478
        %6152 = vmatprep.subr.mxu0 0.0
        %6153 = vmatpush1.msra.mxu0 %v479
        %6154 = vmatprep.subr.mxu0 0.0
        %6155 = vmatpush1.msra.mxu0 %v480
        %6156 = vmatprep.subr.mxu0 0.0
        %6157 = vmatpush1.msra.mxu0 %v481
        %6158 = vmatprep.subr.mxu0 0.0
        %6159 = vmatpush1.msra.mxu0 %v482
        %6160 = vmatprep.subr.mxu0 0.0
        %6161 = vmatpush1.msra.mxu0 %v483
        %6162 = vmatprep.subr.mxu0 0.0
        %6163 = vmatpush1.msra.mxu0 %v484
        %6164 = vmatprep.subr.mxu0 0.0
        %6165 = vmatpush1.msra.mxu0 %v485
        %6166 = vmatprep.subr.mxu0 0.0
        %6167 = vmatpush1.msra.mxu0 %v486
        %6168 = vmatprep.subr.mxu0 0.0
        %6169 = vmatpush1.msra.mxu0 %v487
        %6170 = vmatprep.subr.mxu0 0.0
        %6171 = vmatpush1.msra.mxu0 %v488
        %6172 = vmatprep.subr.mxu0 0.0
        %6173 = vmatpush1.msra.mxu0 %v489
        %6174 = vmatprep.subr.mxu0 0.0
        %6175 = vmatpush1.msra.mxu0 %v490
        %6176 = vmatprep.subr.mxu0 0.0
        %6177 = vmatpush1.msra.mxu0 %v491
        %6178 = vmatprep.subr.mxu0 0.0
        %6179 = vmatpush1.msra.mxu0 %v492
        %6180 = vmatprep.subr.mxu0 0.0
        %6181 = vmatpush1.msra.mxu0 0.0
        %6182 = vmatprep.subr.mxu0 0.0
        %6183 = vmatpush1.msra.mxu0 0.0
        %6184 = vmatprep.subr.mxu0 0.0
        %6185 = vmatpush1.msra.mxu0 0.0
        %6186 = vmatprep.subr.mxu0 0.0
        %6187 = vmatpush1.msra.mxu0 0.0
        %6188 = vmatprep.subr.mxu0 0.0
        %6189 = vmatpush1.msra.mxu0 0.0
        %6190 = vmatprep.subr.mxu0 0.0
        %6191 = vmatpush1.msra.mxu0 0.0
        %6192 = vmatprep.subr.mxu0 0.0
        %6193 = vmatpush1.msra.mxu0 0.0
        %6194 = vmatprep.subr.mxu0 0.0
        %6195 = vmatpush1.msra.mxu0 0.0
        %6196 = vmatprep.subr.mxu0 0.0
        %6197 = vmatpush1.msra.mxu0 0.0
        %6198 = vmatprep.subr.mxu0 0.0
        %6199 = vmatpush1.msra.mxu0 0.0
        %6200 = vmatprep.subr.mxu0 0.0
        %6201 = vmatpush1.msra.mxu0 0.0
        %6202 = vmatprep.subr.mxu0 0.0
        %6203 = vmatpush1.msra.mxu0 0.0
        %6204 = vmatprep.subr.mxu0 0.0
        %6205 = vmatpush1.msra.mxu0 0.0
        %6206 = vmatprep.subr.mxu0 0.0
        %6207 = vmatpush1.msra.mxu0 0.0
        %6208 = vmatprep.subr.mxu0 0.0
        %6209 = vmatpush1.msra.mxu0 0.0
        %6210 = vmatprep.subr.mxu0 0.0
        %6211 = vmatpush1.msra.mxu0 0.0
        %6212 = vmatprep.mubr.f32.mxu0 0.0
        %6213 = vmatmul.mubr.f32.gmra.mrb[0].mxu0 %v6147
        %v6214 = vpop.f32.mrb[0].mxu0
        %v6215 = vadd.f32 0.0, %v6214
        %v6216 = vpop.f32.mrb[0].mxu0
        %6217 = vdwg.mxu0
        %v6218 = vlaneseq
        %v6219 = vshrl.u32 %v6218, 7
        %v6220 = vsub.s32 0, %v6219
        %v6221 = vrot.slane %v6215, %v6220
        %v6222 = vmul.f32 %v516, %v6221
        %v6223 = vmul.f32 %v521, %v6221
        %v6224 = vadd.f32 %v6222, %v528
        %v6225 = vadd.f32 %v6223, %v533
        %v6226 = vmax.f32 %v6224, 0.0
        %v6227 = vmax.f32 %v6225, 0.0
        %6228 = vmatprep.subr.mxu0 0.0
        %6229 = vmatpush1.msra.mxu0 %v5993
        %6230 = vmatprep.subr.mxu0 0.0
        %6231 = vmatpush1.msra.mxu0 %v5994
        %6232 = vmatprep.subr.mxu0 0.0
        %6233 = vmatpush1.msra.mxu0 0.0
        %6234 = vmatprep.subr.mxu0 0.0
        %6235 = vmatpush1.msra.mxu0 0.0
        %6236 = vmatprep.subr.mxu0 0.0
        %6237 = vmatpush1.msra.mxu0 0.0
        %6238 = vmatprep.subr.mxu0 0.0
        %6239 = vmatpush1.msra.mxu0 0.0
        %6240 = vmatprep.subr.mxu0 0.0
        %6241 = vmatpush1.msra.mxu0 0.0
        %6242 = vmatprep.subr.mxu0 0.0
        %6243 = vmatpush1.msra.mxu0 0.0
        %6244 = vmatprep.subr.mxu0 0.0
        %6245 = vmatpush1.msra.mxu0 0.0
        %6246 = vmatprep.subr.mxu0 0.0
        %6247 = vmatpush1.msra.mxu0 0.0
        %6248 = vmatprep.subr.mxu0 0.0
        %6249 = vmatpush1.msra.mxu0 0.0
        %6250 = vmatprep.subr.mxu0 0.0
        %6251 = vmatpush1.msra.mxu0 0.0
        %6252 = vmatprep.subr.mxu0 0.0
        %6253 = vmatpush1.msra.mxu0 0.0
        %6254 = vmatprep.subr.mxu0 0.0
        %6255 = vmatpush1.msra.mxu0 0.0
        %6256 = vmatprep.subr.mxu0 0.0
        %6257 = vmatpush1.msra.mxu0 0.0
        %6258 = vmatprep.subr.mxu0 0.0
        %6259 = vmatpush1.msra.mxu0 0.0
        %6260 = vmatprep.subr.mxu0 0.0
        %6261 = vmatpush1.msra.mxu0 0.0
        %6262 = vmatprep.subr.mxu0 0.0
        %6263 = vmatpush1.msra.mxu0 0.0
        %6264 = vmatprep.subr.mxu0 0.0
        %6265 = vmatpush1.msra.mxu0 0.0
        %6266 = vmatprep.subr.mxu0 0.0
        %6267 = vmatpush1.msra.mxu0 0.0
        %6268 = vmatprep.subr.mxu0 0.0
        %6269 = vmatpush1.msra.mxu0 0.0
        %6270 = vmatprep.subr.mxu0 0.0
        %6271 = vmatpush1.msra.mxu0 0.0
        %6272 = vmatprep.subr.mxu0 0.0
        %6273 = vmatpush1.msra.mxu0 0.0
        %6274 = vmatprep.subr.mxu0 0.0
        %6275 = vmatpush1.msra.mxu0 0.0
        %6276 = vmatprep.subr.mxu0 0.0
        %6277 = vmatpush1.msra.mxu0 0.0
        %6278 = vmatprep.subr.mxu0 0.0
        %6279 = vmatpush1.msra.mxu0 0.0
        %6280 = vmatprep.subr.mxu0 0.0
        %6281 = vmatpush1.msra.mxu0 0.0
        %6282 = vmatprep.subr.mxu0 0.0
        %6283 = vmatpush1.msra.mxu0 0.0
        %6284 = vmatprep.subr.mxu0 0.0
        %6285 = vmatpush1.msra.mxu0 0.0
        %6286 = vmatprep.subr.mxu0 0.0
        %6287 = vmatpush1.msra.mxu0 0.0
        %6288 = vmatprep.subr.mxu0 0.0
        %6289 = vmatpush1.msra.mxu0 0.0
        %6290 = vmatprep.subr.mxu0 0.0
        %6291 = vmatpush1.msra.mxu0 0.0
        %6292 = vmatprep.mubr.f32.mxu0 0.0
        %6293 = vmatmul.mubr.f32.gmra.mrb[0].mxu0 %v687
        %v6294 = vpop.f32.mrb[0].mxu0
        %v6295 = vadd.f32 0.0, %v6294
        %v6296 = vpop.f32.mrb[0].mxu0
        %6297 = vmatprep.mubr.f32.mxu0 0.0
        %6298 = vmatmul.mubr.f32.gmra.mrb[0].mxu0 %v690
        %v6299 = vpop.f32.mrb[0].mxu0
        %v6300 = vadd.f32 0.0, %v6299
        %v6301 = vpop.f32.mrb[0].mxu0
        %6302 = vmatprep.mubr.f32.mxu0 0.0
        %6303 = vmatmul.mubr.f32.gmra.mrb[0].mxu0 %v693
        %v6304 = vpop.f32.mrb[0].mxu0
        %v6305 = vadd.f32 0.0, %v6304
        %v6306 = vpop.f32.mrb[0].mxu0
        %6307 = vmatprep.mubr.f32.mxu0 0.0
        %6308 = vmatmul.mubr.f32.gmra.mrb[0].mxu0 %v696
        %v6309 = vpop.f32.mrb[0].mxu0
        %v6310 = vadd.f32 0.0, %v6309
        %v6311 = vpop.f32.mrb[0].mxu0
        %6312 = vmatprep.mubr.f32.mxu0 0.0
        %6313 = vmatmul.mubr.f32.gmra.mrb[0].mxu0 %v699
        %v6314 = vpop.f32.mrb[0].mxu0
        %v6315 = vadd.f32 0.0, %v6314
        %v6316 = vpop.f32.mrb[0].mxu0
        %6317 = vmatprep.mubr.f32.mxu0 0.0
        %6318 = vmatmul.mubr.f32.gmra.mrb[0].mxu0 %v702
        %v6319 = vpop.f32.mrb[0].mxu0
        %v6320 = vadd.f32 0.0, %v6319
        %v6321 = vpop.f32.mrb[0].mxu0
        %6322 = vmatprep.mubr.f32.mxu0 0.0
        %6323 = vmatmul.mubr.f32.gmra.mrb[0].mxu0 %v705
        %v6324 = vpop.f32.mrb[0].mxu0
        %v6325 = vadd.f32 0.0, %v6324
        %v6326 = vpop.f32.mrb[0].mxu0
        %6327 = vmatprep.mubr.f32.mxu0 0.0
        %6328 = vmatmul.mubr.f32.gmra.mrb[0].mxu0 %v708
        %v6329 = vpop.f32.mrb[0].mxu0
        %v6330 = vadd.f32 0.0, %v6329
        %v6331 = vpop.f32.mrb[0].mxu0
        %6332 = vdwg.mxu0
        %6333 = vmatprep.subr.mxu0 0.0
        %6334 = vmatpush1.msra.mxu0 %v6226
        %6335 = vmatprep.subr.mxu0 0.0
        %6336 = vmatpush1.msra.mxu0 %v6227
        %6337 = vmatprep.subr.mxu0 0.0
        %6338 = vmatpush1.msra.mxu0 0.0
        %6339 = vmatprep.subr.mxu0 0.0
        %6340 = vmatpush1.msra.mxu0 0.0
        %6341 = vmatprep.subr.mxu0 0.0
        %6342 = vmatpush1.msra.mxu0 0.0
        %6343 = vmatprep.subr.mxu0 0.0
        %6344 = vmatpush1.msra.mxu0 0.0
        %6345 = vmatprep.subr.mxu0 0.0
        %6346 = vmatpush1.msra.mxu0 0.0
        %6347 = vmatprep.subr.mxu0 0.0
        %6348 = vmatpush1.msra.mxu0 0.0
        %6349 = vmatprep.subr.mxu0 0.0
        %6350 = vmatpush1.msra.mxu0 0.0
        %6351 = vmatprep.subr.mxu0 0.0
        %6352 = vmatpush1.msra.mxu0 0.0
        %6353 = vmatprep.subr.mxu0 0.0
        %6354 = vmatpush1.msra.mxu0 0.0
        %6355 = vmatprep.subr.mxu0 0.0
        %6356 = vmatpush1.msra.mxu0 0.0
        %6357 = vmatprep.subr.mxu0 0.0
        %6358 = vmatpush1.msra.mxu0 0.0
        %6359 = vmatprep.subr.mxu0 0.0
        %6360 = vmatpush1.msra.mxu0 0.0
        %6361 = vmatprep.subr.mxu0 0.0
        %6362 = vmatpush1.msra.mxu0 0.0
        %6363 = vmatprep.subr.mxu0 0.0
        %6364 = vmatpush1.msra.mxu0 0.0
        %6365 = vmatprep.subr.mxu0 0.0
        %6366 = vmatpush1.msra.mxu0 0.0
        %6367 = vmatprep.subr.mxu0 0.0
        %6368 = vmatpush1.msra.mxu0 0.0
        %6369 = vmatprep.subr.mxu0 0.0
        %6370 = vmatpush1.msra.mxu0 0.0
        %6371 = vmatprep.subr.mxu0 0.0
        %6372 = vmatpush1.msra.mxu0 0.0
        %6373 = vmatprep.subr.mxu0 0.0
        %6374 = vmatpush1.msra.mxu0 0.0
        %6375 = vmatprep.subr.mxu0 0.0
        %6376 = vmatpush1.msra.mxu0 0.0
        %6377 = vmatprep.subr.mxu0 0.0
        %6378 = vmatpush1.msra.mxu0 0.0
        %6379 = vmatprep.subr.mxu0 0.0
        %6380 = vmatpush1.msra.mxu0 0.0
        %6381 = vmatprep.subr.mxu0 0.0
        %6382 = vmatpush1.msra.mxu0 0.0
        %6383 = vmatprep.subr.mxu0 0.0
        %6384 = vmatpush1.msra.mxu0 0.0
        %6385 = vmatprep.subr.mxu0 0.0
        %6386 = vmatpush1.msra.mxu0 0.0
        %6387 = vmatprep.subr.mxu0 0.0
        %6388 = vmatpush1.msra.mxu0 0.0
        %6389 = vmatprep.subr.mxu0 0.0
        %6390 = vmatpush1.msra.mxu0 0.0
        %6391 = vmatprep.subr.mxu0 0.0
        %6392 = vmatpush1.msra.mxu0 0.0
        %6393 = vmatprep.subr.mxu0 0.0
        %6394 = vmatpush1.msra.mxu0 0.0
        %6395 = vmatprep.subr.mxu0 0.0
        %6396 = vmatpush1.msra.mxu0 0.0
        %6397 = vmatprep.mubr.f32.mxu0 0.0
        %6398 = vmatmul.mubr.f32.gmra.mrb[0].mxu0 %v816
        %v6399 = vpop.f32.mrb[0].mxu0
        %v6400 = vadd.f32 %v6295, %v6399
        %v6401 = vpop.f32.mrb[0].mxu0
        %6402 = vmatprep.mubr.f32.mxu0 0.0
        %6403 = vmatmul.mubr.f32.gmra.mrb[0].mxu0 %v819
        %v6404 = vpop.f32.mrb[0].mxu0
        %v6405 = vadd.f32 %v6300, %v6404
        %v6406 = vpop.f32.mrb[0].mxu0
        %6407 = vmatprep.mubr.f32.mxu0 0.0
        %6408 = vmatmul.mubr.f32.gmra.mrb[0].mxu0 %v822
        %v6409 = vpop.f32.mrb[0].mxu0
        %v6410 = vadd.f32 %v6305, %v6409
        %v6411 = vpop.f32.mrb[0].mxu0
        %6412 = vmatprep.mubr.f32.mxu0 0.0
        %6413 = vmatmul.mubr.f32.gmra.mrb[0].mxu0 %v825
        %v6414 = vpop.f32.mrb[0].mxu0
        %v6415 = vadd.f32 %v6310, %v6414
        %v6416 = vpop.f32.mrb[0].mxu0
        %6417 = vmatprep.mubr.f32.mxu0 0.0
        %6418 = vmatmul.mubr.f32.gmra.mrb[0].mxu0 %v828
        %v6419 = vpop.f32.mrb[0].mxu0
        %v6420 = vadd.f32 %v6315, %v6419
        %v6421 = vpop.f32.mrb[0].mxu0
        %6422 = vmatprep.mubr.f32.mxu0 0.0
        %6423 = vmatmul.mubr.f32.gmra.mrb[0].mxu0 %v831
        %v6424 = vpop.f32.mrb[0].mxu0
        %v6425 = vadd.f32 %v6320, %v6424
        %v6426 = vpop.f32.mrb[0].mxu0
        %6427 = vmatprep.mubr.f32.mxu0 0.0
        %6428 = vmatmul.mubr.f32.gmra.mrb[0].mxu0 %v834
        %v6429 = vpop.f32.mrb[0].mxu0
        %v6430 = vadd.f32 %v6325, %v6429
        %v6431 = vpop.f32.mrb[0].mxu0
        %6432 = vmatprep.mubr.f32.mxu0 0.0
        %6433 = vmatmul.mubr.f32.gmra.mrb[0].mxu0 %v837
        %v6434 = vpop.f32.mrb[0].mxu0
        %v6435 = vadd.f32 %v6330, %v6434
        %v6436 = vpop.f32.mrb[0].mxu0
        %6437 = vdwg.mxu0
        %v6438 = vadd.f32 %v6400, %v546
        %v6439 = vadd.f32 %v6405, %v551
        %v6440 = vadd.f32 %v6410, %v556
        %v6441 = vadd.f32 %v6415, %v561
        %v6442 = vadd.f32 %v6420, %v566
        %v6443 = vadd.f32 %v6425, %v571
        %v6444 = vadd.f32 %v6430, %v576
        %v6445 = vadd.f32 %v6435, %v581
        %v6446 = vxor.u32 %v6438, 2147483648
        %v6447 = vxor.u32 %v6439, 2147483648
        %v6448 = vmul.f32 %v6446, 1.442695
        %v6449 = vpow.pop %v6448
        %v6450 = vmul.f32 %v6447, 1.442695
        %v6451 = vpow.pop %v6450
        %v6452 = vadd.f32 %v6449, 1.0
        %v6453 = vadd.f32 %v6451, 1.0
        %v6454 = vrcp.pop %v6452
        %v6455 = vmul.f32 1.0, %v6454
        %v6456 = vrcp.pop %v6453
        %v6457 = vmul.f32 1.0, %v6456
        %v6458 = vxor.u32 %v6440, 2147483648
        %v6459 = vxor.u32 %v6441, 2147483648
        %v6460 = vmul.f32 %v6458, 1.442695
        %v6461 = vpow.pop %v6460
        %v6462 = vmul.f32 %v6459, 1.442695
        %v6463 = vpow.pop %v6462
        %v6464 = vadd.f32 %v6461, 1.0
        %v6465 = vadd.f32 %v6463, 1.0
        %v6466 = vrcp.pop %v6464
        %v6467 = vmul.f32 1.0, %v6466
        %v6468 = vrcp.pop %v6465
        %v6469 = vmul.f32 1.0, %v6468
        %v6470 = vtanh.pop %v6442
        %v6471 = vtanh.pop %v6443
        %v6472 = vxor.u32 %v6444, 2147483648
        %v6473 = vxor.u32 %v6445, 2147483648
        %v6474 = vmul.f32 %v6472, 1.442695
        %v6475 = vpow.pop %v6474
        %v6476 = vmul.f32 %v6473, 1.442695
        %v6477 = vpow.pop %v6476
        %v6478 = vadd.f32 %v6475, 1.0
        %v6479 = vadd.f32 %v6477, 1.0
        %v6480 = vrcp.pop %v6478
        %v6481 = vmul.f32 1.0, %v6480
        %v6482 = vrcp.pop %v6479
        %v6483 = vmul.f32 1.0, %v6482
        %v6484 = vmul.f32 %v6467, %v5989
        %v6485 = vmul.f32 %v6469, %v5990
        %v6486 = vmul.f32 %v6455, %v6470
        %v6487 = vmul.f32 %v6457, %v6471
        %v6488 = vadd.f32 %v6484, %v6486
        %v6489 = vadd.f32 %v6485, %v6487
        %v6490 = vtanh.pop %v6488
        %v6491 = vtanh.pop %v6489
        %v6492 = vmul.f32 %v6481, %v6490
        %v6493 = vmul.f32 %v6483, %v6491
        %6494 = vmatprep.subr.mxu0 0.0
        %6495 = vmatpush1.msra.mxu0 %v6226
        %6496 = vmatprep.subr.mxu0 0.0
        %6497 = vmatpush1.msra.mxu0 %v6227
        %6498 = vmatprep.subr.mxu0 0.0
        %6499 = vmatpush1.msra.mxu0 0.0
        %6500 = vmatprep.subr.mxu0 0.0
        %6501 = vmatpush1.msra.mxu0 0.0
        %6502 = vmatprep.subr.mxu0 0.0
        %6503 = vmatpush1.msra.mxu0 0.0
        %6504 = vmatprep.subr.mxu0 0.0
        %6505 = vmatpush1.msra.mxu0 0.0
        %6506 = vmatprep.subr.mxu0 0.0
        %6507 = vmatpush1.msra.mxu0 0.0
        %6508 = vmatprep.subr.mxu0 0.0
        %6509 = vmatpush1.msra.mxu0 0.0
        %6510 = vmatprep.subr.mxu0 0.0
        %6511 = vmatpush1.msra.mxu0 0.0
        %6512 = vmatprep.subr.mxu0 0.0
        %6513 = vmatpush1.msra.mxu0 0.0
        %6514 = vmatprep.subr.mxu0 0.0
        %6515 = vmatpush1.msra.mxu0 0.0
        %6516 = vmatprep.subr.mxu0 0.0
        %6517 = vmatpush1.msra.mxu0 0.0
        %6518 = vmatprep.subr.mxu0 0.0
        %6519 = vmatpush1.msra.mxu0 0.0
        %6520 = vmatprep.subr.mxu0 0.0
        %6521 = vmatpush1.msra.mxu0 0.0
        %6522 = vmatprep.subr.mxu0 0.0
        %6523 = vmatpush1.msra.mxu0 0.0
        %6524 = vmatprep.subr.mxu0 0.0
        %6525 = vmatpush1.msra.mxu0 0.0
        %6526 = vmatprep.subr.mxu0 0.0
        %6527 = vmatpush1.msra.mxu0 0.0
        %6528 = vmatprep.subr.mxu0 0.0
        %6529 = vmatpush1.msra.mxu0 0.0
        %6530 = vmatprep.subr.mxu0 0.0
        %6531 = vmatpush1.msra.mxu0 0.0
        %6532 = vmatprep.subr.mxu0 0.0
        %6533 = vmatpush1.msra.mxu0 0.0
        %6534 = vmatprep.subr.mxu0 0.0
        %6535 = vmatpush1.msra.mxu0 0.0
        %6536 = vmatprep.subr.mxu0 0.0
        %6537 = vmatpush1.msra.mxu0 0.0
        %6538 = vmatprep.subr.mxu0 0.0
        %6539 = vmatpush1.msra.mxu0 0.0
        %6540 = vmatprep.subr.mxu0 0.0
        %6541 = vmatpush1.msra.mxu0 0.0
        %6542 = vmatprep.subr.mxu0 0.0
        %6543 = vmatpush1.msra.mxu0 0.0
        %6544 = vmatprep.subr.mxu0 0.0
        %6545 = vmatpush1.msra.mxu0 0.0
        %6546 = vmatprep.subr.mxu0 0.0
        %6547 = vmatpush1.msra.mxu0 0.0
        %6548 = vmatprep.subr.mxu0 0.0
        %6549 = vmatpush1.msra.mxu0 0.0
        %6550 = vmatprep.subr.mxu0 0.0
        %6551 = vmatpush1.msra.mxu0 0.0
        %6552 = vmatprep.subr.mxu0 0.0
        %6553 = vmatpush1.msra.mxu0 0.0
        %6554 = vmatprep.subr.mxu0 0.0
        %6555 = vmatpush1.msra.mxu0 0.0
        %6556 = vmatprep.subr.mxu0 0.0
        %6557 = vmatpush1.msra.mxu0 0.0
        %6558 = vmatprep.mubr.f32.mxu0 0.0
        %6559 = vmatmul.mubr.f32.gmra.mrb[0].mxu0 %v1001
        %v6560 = vpop.f32.mrb[0].mxu0
        %v6561 = vadd.f32 0.0, %v6560
        %v6562 = vpop.f32.mrb[0].mxu0
        %6563 = vdwg.mxu0
        %6564 = vmatprep.subr.mxu0 0.0
        %6565 = vmatpush1.msra.mxu0 %v6492
        %6566 = vmatprep.subr.mxu0 0.0
        %6567 = vmatpush1.msra.mxu0 %v6493
        %6568 = vmatprep.subr.mxu0 0.0
        %6569 = vmatpush1.msra.mxu0 0.0
        %6570 = vmatprep.subr.mxu0 0.0
        %6571 = vmatpush1.msra.mxu0 0.0
        %6572 = vmatprep.subr.mxu0 0.0
        %6573 = vmatpush1.msra.mxu0 0.0
        %6574 = vmatprep.subr.mxu0 0.0
        %6575 = vmatpush1.msra.mxu0 0.0
        %6576 = vmatprep.subr.mxu0 0.0
        %6577 = vmatpush1.msra.mxu0 0.0
        %6578 = vmatprep.subr.mxu0 0.0
        %6579 = vmatpush1.msra.mxu0 0.0
        %6580 = vmatprep.subr.mxu0 0.0
        %6581 = vmatpush1.msra.mxu0 0.0
        %6582 = vmatprep.subr.mxu0 0.0
        %6583 = vmatpush1.msra.mxu0 0.0
        %6584 = vmatprep.subr.mxu0 0.0
        %6585 = vmatpush1.msra.mxu0 0.0
        %6586 = vmatprep.subr.mxu0 0.0
        %6587 = vmatpush1.msra.mxu0 0.0
        %6588 = vmatprep.subr.mxu0 0.0
        %6589 = vmatpush1.msra.mxu0 0.0
        %6590 = vmatprep.subr.mxu0 0.0
        %6591 = vmatpush1.msra.mxu0 0.0
        %6592 = vmatprep.subr.mxu0 0.0
        %6593 = vmatpush1.msra.mxu0 0.0
        %6594 = vmatprep.subr.mxu0 0.0
        %6595 = vmatpush1.msra.mxu0 0.0
        %6596 = vmatprep.subr.mxu0 0.0
        %6597 = vmatpush1.msra.mxu0 0.0
        %6598 = vmatprep.subr.mxu0 0.0
        %6599 = vmatpush1.msra.mxu0 0.0
        %6600 = vmatprep.subr.mxu0 0.0
        %6601 = vmatpush1.msra.mxu0 0.0
        %6602 = vmatprep.subr.mxu0 0.0
        %6603 = vmatpush1.msra.mxu0 0.0
        %6604 = vmatprep.subr.mxu0 0.0
        %6605 = vmatpush1.msra.mxu0 0.0
        %6606 = vmatprep.subr.mxu0 0.0
        %6607 = vmatpush1.msra.mxu0 0.0
        %6608 = vmatprep.subr.mxu0 0.0
        %6609 = vmatpush1.msra.mxu0 0.0
        %6610 = vmatprep.subr.mxu0 0.0
        %6611 = vmatpush1.msra.mxu0 0.0
        %6612 = vmatprep.subr.mxu0 0.0
        %6613 = vmatpush1.msra.mxu0 0.0
        %6614 = vmatprep.subr.mxu0 0.0
        %6615 = vmatpush1.msra.mxu0 0.0
        %6616 = vmatprep.subr.mxu0 0.0
        %6617 = vmatpush1.msra.mxu0 0.0
        %6618 = vmatprep.subr.mxu0 0.0
        %6619 = vmatpush1.msra.mxu0 0.0
        %6620 = vmatprep.subr.mxu0 0.0
        %6621 = vmatpush1.msra.mxu0 0.0
        %6622 = vmatprep.subr.mxu0 0.0
        %6623 = vmatpush1.msra.mxu0 0.0
        %6624 = vmatprep.subr.mxu0 0.0
        %6625 = vmatpush1.msra.mxu0 0.0
        %6626 = vmatprep.subr.mxu0 0.0
        %6627 = vmatpush1.msra.mxu0 0.0
        %6628 = vmatprep.mubr.f32.mxu0 0.0
        %6629 = vmatmul.mubr.f32.gmra.mrb[0].mxu0 %v1074
        %v6630 = vpop.f32.mrb[0].mxu0
        %v6631 = vadd.f32 %v6561, %v6630
        %v6632 = vpop.f32.mrb[0].mxu0
        %6633 = vdwg.mxu0
        %v6634 = vadd.f32 %v6631, %v592
        %s6635 = scalar_lea.vmem %s437, 11 [#allocation4]
        %6636 = vst [vmem:[%s6635] sm:$0x1] %v6634
        %6637 = vst [vmem:[%s444] sm:$0xff] %v6492
        %6638 = vst [vmem:[%s444 + $0x8] sm:$0xff] %v6493
        %6639 = vst [vmem:[%s451] sm:$0xff] %v6488
        %6640 = vst [vmem:[%s451 + $0x8] sm:$0xff] %v6489
        %6641 = vst [vmem:[#allocation2] sm:$0x1] %v6634
        %s6642 = sand.u32 %s271, 1
        %s6643 = scalar_lea.sflag [#allocation5], %s6642
        %s6644 = sand.u32 %s271, 1
        %s6645 = smul.addr %s6644, 12
        %s6646 = scalar_lea.vmem [#allocation4], %s6645
        %s6647 = sand.u32 %s32, 1
        %s6648 = scalar_lea.sflag [#allocation7], %s6647
        %s6649 = sand.u32 %s297, 1
        %s6650 = smul.addr %s6649, 16
        %s6651 = scalar_lea.vmem [#allocation6], %s6650
        %s6652 = sand.u32 %s32, 1
        %s6653 = scalar_lea.sflag [#allocation7], %s6652
        %s6654 = sand.u32 %s323, 1
        %s6655 = smul.addr %s6654, 16
        %s6656 = scalar_lea.vmem [#allocation8], %s6655
        // Predicated region
        $region65: #{tpu_custom_call.1} parent=59 // pred_check
          %p6657 = pneg %p281
        $region66: #{tpu_custom_call.1} parent=59 // pred_check_branch
          %6659 = sbr.rel (%p6657) target = $region68
        $region67: #{tpu_custom_call.1} parent=59 // pred_region
          %s6660 = smul.u32 12, %s37
          %s6662 = ssub.s32 192, 192
          %6663 = vsyncadd %s6643, %s6662
          %s6664 = smul.addr %s36, 24
          %s6665 = sadd.s32 %s6660, %s6664
          %s6666 = smul.addr %s6665, 16
          %s6667 = scalar_lea.hbm %s10, %s6666
          %s6668 = sshll.u32 %s6646, 4
          %s6669 = int_to_ptr.vmem [resolvable:$true] %s6668
          %6674 = dma.vmem_to_hbm [thread:$0]  %s6669, 192, %s6667, %s6643, 16, 16, 1
        $region68: #{tpu_custom_call.1} parent=59 // pred_fallthru
          _
        // Predicated region
        $region69: #{tpu_custom_call.1} parent=59 // pred_check
          %p6675 = pneg %p307
        $region70: #{tpu_custom_call.1} parent=59 // pred_check_branch
          %6677 = sbr.rel (%p6675) target = $region72
        $region71: #{tpu_custom_call.1} parent=59 // pred_region
          %s6679 = ssub.s32 256, 256
          %6680 = vsyncadd %s6648, %s6679
          %s6681 = smul.addr %s36, 2
          %s6682 = smul.addr %s6681, 128
          %s6683 = scalar_lea.hbm %s11, %s6682
          %s6684 = sshll.u32 %s6651, 4
          %s6685 = int_to_ptr.vmem [resolvable:$true] %s6684
          %6690 = dma.vmem_to_hbm [thread:$0]  %s6685, 256, %s6683, %s6648, 128, 128, 8
        $region72: #{tpu_custom_call.1} parent=59 // pred_fallthru
          _
        // Predicated region
        $region73: #{tpu_custom_call.1} parent=59 // pred_check
          %p6691 = pneg %p333
        $region74: #{tpu_custom_call.1} parent=59 // pred_check_branch
          %6693 = sbr.rel (%p6691) target = $region76
        $region75: #{tpu_custom_call.1} parent=59 // pred_region
          %s6695 = ssub.s32 256, 256
          %6696 = vsyncadd %s6653, %s6695
          %s6697 = smul.addr %s36, 2
          %s6698 = smul.addr %s6697, 128
          %s6699 = scalar_lea.hbm %s12, %s6698
          %s6700 = sshll.u32 %s6656, 4
          %s6701 = int_to_ptr.vmem [resolvable:$true] %s6700
          %6706 = dma.vmem_to_hbm [thread:$0]  %s6701, 256, %s6699, %s6653, 128, 128, 8
        $region76: #{tpu_custom_call.1} parent=59 // pred_fallthru
          _
      $region60: #{tpu_custom_call.1} parent=5 // pred_fallthru
        _
      %p6707 = scmp.le.s32.totalorder 2, %s27
      // Predicated region
      $region77: #{tpu_custom_call.1} parent=5 // pred_check
        %p6708 = pneg %p6707
      $region78: #{tpu_custom_call.1} parent=5 // pred_check_branch
        %6710 = sbr.rel (%p6708) target = $region80
      $region79: #{tpu_custom_call.1} parent=5 // pred_region
        %s6711 = ssub.s32 %s27, 2
        // Predicated region
        $region81: #{tpu_custom_call.1} parent=79 // pred_check
          %p6712 = pneg %p287
        $region82: #{tpu_custom_call.1} parent=79 // pred_check_branch
          %6714 = sbr.rel (%p6712) target = $region84
        $region83: #{tpu_custom_call.1} parent=79 // pred_region
          %s6715 = sand.u32 %s272, 1
          %s6716 = scalar_lea.sflag [#allocation5], %s6715
          %s6717 = sand.u32 %s272, 1
          %s6718 = smul.addr %s6717, 12
          %s6719 = scalar_lea.vmem [#allocation4], %s6718
          %6720 = dma.done %s6716, 192
        $region84: #{tpu_custom_call.1} parent=79 // pred_fallthru
          _
        // Predicated region
        $region85: #{tpu_custom_call.1} parent=79 // pred_check
          %p6721 = pneg %p313
        $region86: #{tpu_custom_call.1} parent=79 // pred_check_branch
          %6723 = sbr.rel (%p6721) target = $region88
        $region87: #{tpu_custom_call.1} parent=79 // pred_region
          %s6724 = sand.u32 %s33, 1
          %s6725 = scalar_lea.sflag [#allocation7], %s6724
          %s6726 = sand.u32 %s298, 1
          %s6727 = smul.addr %s6726, 16
          %s6728 = scalar_lea.vmem [#allocation6], %s6727
          %6729 = dma.done %s6725, 256
        $region88: #{tpu_custom_call.1} parent=79 // pred_fallthru
          _
        // Predicated region
        $region89: #{tpu_custom_call.1} parent=79 // pred_check
          %p6730 = pneg %p339
        $region90: #{tpu_custom_call.1} parent=79 // pred_check_branch
          %6732 = sbr.rel (%p6730) target = $region92
        $region91: #{tpu_custom_call.1} parent=79 // pred_region
          %s6733 = sand.u32 %s33, 1
          %s6734 = scalar_lea.sflag [#allocation7], %s6733
          %s6735 = sand.u32 %s324, 1
          %s6736 = smul.addr %s6735, 16
          %s6737 = scalar_lea.vmem [#allocation8], %s6736
          %6738 = dma.done %s6734, 256
        $region92: #{tpu_custom_call.1} parent=79 // pred_fallthru
          _
      $region80: #{tpu_custom_call.1} parent=5 // pred_fallthru
        _
    $region6: #{tpu_custom_call.1} parent=1 // loop_footer
      %s31 = sadd.s32 1, %s27
    $region7: #{tpu_custom_call.1} parent=1 // loop_footer_branch
      %26 = sbr.rel target = $region3
    $region8: #{tpu_custom_call.1} parent=1 // loop_exit
      _
    %6739 = vsyncpa [#allocation5], 1
    %s6740 = scalar_lea.sflag [#allocation5], 1
    %6741 = vsyncpa %s6740, 1
    %6742 = vsyncpa [#allocation7], 1
    %s6743 = scalar_lea.sflag [#allocation7], 1
    %6744 = vsyncpa %s6743, 1

</llo_original>
